<compile_context>
chip_gen: v7x
topology: tpu7x:2x2x1
jax: 0.10.0
libtpu: 0.0.40
codegen_flags: <defaults>
</compile_context>

<pallas_src>
import math

import jax
import jax.numpy as jnp
from jax import lax
from jax.experimental import pallas as pl
from jax.experimental.pallas import tpu as pltpu

CIN_PAD = 8          # block-1 input channels zero-padded to 8 lanes
_BN_EPS = 1e-5


def _geom(hw):
    """Padded-flat geometry for a conv block whose valid input is hw x hw."""
    h = w = hw
    wp = w + 2                        # padded row width
    return dict(H=h, W=w, Wp=wp,
                M=h * wp,             # conv-output rows computed (2 junk cols/row)
                R=(h + 3) * wp)       # padded-flat input rows (incl. zero tail)


def _pool_select_mats(hw, dtype=jnp.bfloat16):
    """Four one-hot matrices S[d] (d = 2*dh + dw), shape (R_next, M_cur).

    (S[d] @ y_flat)[r] = y_flat[(2*ho+dh)*Wp + (2*wo+dw)] when
    r == (ho+1)*Wp_next + (wo+1) (interior row of the next block's padded-flat
    activation) and 0 for every border / tail row, so max_d(S[d] @ y) IS the
    next block's fully zero-padded input — no scratch zeroing needed."""
    g, gn = _geom(hw), _geom(hw // 2)
    ho = jnp.arange(gn["H"])[:, None]
    wo = jnp.arange(gn["W"])[None, :]
    rows = ((ho + 1) * gn["Wp"] + (wo + 1)).reshape(-1)
    mats = []
    for dh in range(2):
        for dw in range(2):
            cols = ((2 * ho + dh) * g["Wp"] + (2 * wo + dw)).reshape(-1)
            s = jnp.zeros((gn["R"], g["M"]), jnp.float32).at[rows, cols].set(1.0)
            mats.append(s)
    return jnp.stack(mats).astype(dtype)


def _make_kernel(spatial, hid):
    geoms = [_geom(s) for s in spatial]
    taps = [[dy * g["Wp"] + dx for dy in range(3) for dx in range(3)] for g in geoms]

    def conv_bn_relu(load, w_ref, scale_ref, shift_ref, g, offs):
        # 9 accumulated per-tap matmuls over the whole image: (M, Cin) x (Cin, hid).
        acc = jnp.zeros((g["M"], hid), jnp.float32)
        for t, off in enumerate(offs):
            acc = acc + jnp.dot(load(off), w_ref[t],
                                preferred_element_type=jnp.float32)
        y = acc * scale_ref[...] + shift_ref[...]        # folded eval-mode BN
        return jnp.maximum(y, 0.0)                       # ReLU

    def pool_to_next(y, sel_ref):
        # 2x2/2 max-pool + zero re-padding via 4 one-hot bf16 selection matmuls.
        yb = y.astype(jnp.bfloat16)
        out = None
        for d in range(4):
            s = jnp.dot(sel_ref[d], yb, preferred_element_type=jnp.float32)
            out = s if out is None else jnp.maximum(out, s)
        return out.astype(jnp.bfloat16)

    def kernel(x_ref,
               w1, sc1, sh1, sel1,
               w2, sc2, sh2, sel2,
               w3, sc3, sh3, sel3,
               w4, sc4, sh4,
               wc, bc,
               out_ref):
        g1, g2, g3, g4 = geoms
        y1 = conv_bn_relu(lambda o: x_ref[0, o:o + g1["M"], :],
                          w1, sc1, sh1, g1, taps[0])
        a2 = pool_to_next(y1, sel1)
        y2 = conv_bn_relu(lambda o: a2[o:o + g2["M"], :],
                          w2, sc2, sh2, g2, taps[1])
        a3 = pool_to_next(y2, sel2)
        y3 = conv_bn_relu(lambda o: a3[o:o + g3["M"], :],
                          w3, sc3, sh3, g3, taps[2])
        a4 = pool_to_next(y3, sel3)
        y4 = conv_bn_relu(lambda o: a4[o:o + g4["M"], :],
                          w4, sc4, sh4, g4, taps[3])
        # last block: 2x2 -> 1x1; the four pool taps are flat rows {0, 1, Wp, Wp+1}
        wp = g4["Wp"]
        feat = jnp.maximum(jnp.maximum(y4[0:1, :], y4[1:2, :]),
                           jnp.maximum(y4[wp:wp + 1, :], y4[wp + 1:wp + 2, :]))
        scores = jnp.dot(feat.astype(jnp.bfloat16), wc[...],
                         preferred_element_type=jnp.float32) + bc[...]
        out_ref[0] = scores

    return kernel


@jax.jit
def pretrain_forward(packed, x_nchw):
    """PreTrain.forward: scores = classifier(feature(x)) as one fused Pallas call."""
    n, c, h, w = x_nchw.shape
    assert h == w == 16, "specialized to 16x16 inputs (four 2x pool halvings -> 1x1)"
    assert c <= CIN_PAD
    hid = packed["w"][0].shape[-1]
    num_class = packed["cls_w"].shape[-1]
    spatial = [16, 8, 4, 2]
    geoms = [_geom(s) for s in spatial]
    assert geoms[-1]["H"] // 2 == 1 and geoms[-1]["W"] // 2 == 1   # 1x1 feature map

    # Layout plumbing (plain XLA): NCHW -> zero-padded flat NHWC slab, bf16.
    x = jnp.transpose(x_nchw, (0, 2, 3, 1)).astype(jnp.float32)
    x = jnp.pad(x, ((0, 0), (1, 1), (1, 1), (0, CIN_PAD - c)))
    x = x.reshape(n, (h + 2) * (w + 2), CIN_PAD)
    x = jnp.pad(x, ((0, 0), (0, geoms[0]["R"] - (h + 2) * (w + 2)), (0, 0)))
    x = x.astype(jnp.bfloat16)

    def full_spec(a):
        nd = a.ndim
        return pl.BlockSpec(a.shape, lambda i, _nd=nd: (0,) * _nd)

    flat_in = [x]
    in_specs = [pl.BlockSpec((1, geoms[0]["R"], CIN_PAD), lambda i: (i, 0, 0))]
    for b in range(4):
        for arr in (packed["w"][b], packed["scale"][b], packed["shift"][b]):
            flat_in.append(arr)
            in_specs.append(full_spec(arr))
        if b < 3:
            flat_in.append(packed["sel"][b])
            in_specs.append(full_spec(packed["sel"][b]))
    flat_in += [packed["cls_w"], packed["cls_b"]]
    in_specs += [full_spec(packed["cls_w"]), full_spec(packed["cls_b"])]

    # Advisory cost estimate with the REAL (unpadded) contraction sizes.
    kdims = [CIN_PAD, hid, hid, hid]
    flops = 0
    for g, k in zip(geoms, kdims):
        flops += 2 * 9 * g["M"] * k * hid                          # conv taps
    for b in range(3):
        flops += 2 * 4 * geoms[b + 1]["R"] * geoms[b]["M"] * hid   # pool selects
    flops += 2 * hid * num_class                                   # classifier
    flops *= n
    bytes_accessed = sum(int(a.size) * a.dtype.itemsize for a in flat_in)
    bytes_accessed += n * num_class * 4

    out = pl.pallas_call(
        _make_kernel(spatial, hid),
        out_shape=jax.ShapeDtypeStruct((n, 1, num_class), jnp.float32),
        grid=(n,),
        in_specs=in_specs,
        out_specs=pl.BlockSpec((1, 1, num_class), lambda i: (i, 0, 0)),
        compiler_params=pltpu.CompilerParams(
            dimension_semantics=("parallel",),
            vmem_limit_bytes=32 * 1024 * 1024),
        cost_estimate=pl.CostEstimate(flops=int(flops), transcendentals=0,
                                      bytes_accessed=int(bytes_accessed)),
    )(*flat_in)
    return out.reshape(n, num_class)


# --------------------------------------------------------------------------
# Parameter construction (PyTorch layouts) and packing for the kernel
# --------------------------------------------------------------------------
def init_params(key, in_ch=3, hid=32, num_class=5):
    """PyTorch-layout Conv-4 + Linear parameters (deterministic)."""
    p = {"conv_w": [], "conv_b": [], "gamma": [], "beta": [], "mean": [], "var": []}
    for b in range(4):
        cin = in_ch if b == 0 else hid
        key, k1, k2, k3, k4, k5 = jax.random.split(key, 6)
        p["conv_w"].append(jax.random.normal(k1, (hid, cin, 3, 3), jnp.float32)
                           / math.sqrt(9 * cin))                 # OIHW
        p["conv_b"].append(0.1 * jax.random.normal(k2, (hid,), jnp.float32))
        p["gamma"].append(1.0 + 0.1 * jax.random.normal(k3, (hid,), jnp.float32))
        p["beta"].append(0.1 * jax.random.normal(k4, (hid,), jnp.float32))
        p["mean"].append(0.1 * jax.random.normal(k5, (hid,), jnp.float32))
        p["var"].append(jnp.ones((hid,), jnp.float32))
    key, kc = jax.random.split(key)
    p["cls_w"] = jax.random.normal(kc, (num_class, hid), jnp.float32) / math.sqrt(hid)
    p["cls_b"] = jnp.zeros((num_class,), jnp.float32)   # classifier.bias.data.fill_(0)
    return p


def pack_params(p, spatial=(16, 8, 4, 2)):
    """Fold BN (+ conv bias) and repack weights into per-tap / padded-flat form."""
    hid = p["conv_w"][0].shape[0]
    packed = {"w": [], "scale": [], "shift": [], "sel": []}
    for b in range(4):
        w = p["conv_w"][b]                                     # (hid, cin, 3, 3)
        cin = w.shape[1]
        cpad = CIN_PAD if b == 0 else hid
        wt = jnp.transpose(w, (2, 3, 1, 0)).reshape(9, cin, hid)    # tap-major
        wt = jnp.zeros((9, cpad, hid), jnp.float32).at[:, :cin, :].set(wt)
        scale = p["gamma"][b] / jnp.sqrt(p["var"][b] + _BN_EPS)
        shift = p["beta"][b] + scale * (p["conv_b"][b] - p["mean"][b])
        packed["w"].append(wt.astype(jnp.bfloat16))
        packed["scale"].append(scale.reshape(1, hid).astype(jnp.float32))
        packed["shift"].append(shift.reshape(1, hid).astype(jnp.float32))
        if b < 3:
            packed["sel"].append(_pool_select_mats(spatial[b]))
    packed["cls_w"] = jnp.transpose(p["cls_w"]).astype(jnp.bfloat16)   # (hid, n_cls)
    packed["cls_b"] = p["cls_b"].reshape(1, -1).astype(jnp.float32)
    return packed


# --------------------------------------------------------------------------
# Pure-JAX f32 reference (eval-mode BN) for the correctness check
# --------------------------------------------------------------------------
def reference_forward(p, x_nchw):
    x = jnp.transpose(x_nchw, (0, 2, 3, 1)).astype(jnp.float32)
    for b in range(4):
        w = jnp.transpose(p["conv_w"][b], (2, 3, 1, 0))        # OIHW -> HWIO
        y = lax.conv_general_dilated(x, w, (1, 1), "SAME",
                                     dimension_numbers=("NHWC", "HWIO", "NHWC"))
        y = y + p["conv_b"][b]
        y = (y - p["mean"][b]) / jnp.sqrt(p["var"][b] + _BN_EPS) * p["gamma"][b] \
            + p["beta"][b]
        y = jnp.maximum(y, 0.0)
        x = lax.reduce_window(y, -jnp.inf, lax.max,
                              (1, 2, 2, 1), (1, 2, 2, 1), "VALID")
    feat = x.reshape(x.shape[0], -1)
    return feat @ p["cls_w"].T + p["cls_b"]


# --------------------------------------------------------------------------
if __name__ == "__main__":
    key = jax.random.PRNGKey(0)
    key, kx = jax.random.split(key)

    N, C, H, W = 2, 3, 16, 16
    HID, NUM_CLASS = 32, 5

    x = jax.random.normal(kx, (N, C, H, W), jnp.float32)       # PyTorch NCHW input
    params = init_params(key, in_ch=C, hid=HID, num_class=NUM_CLASS)
    packed = pack_params(params)

    scores = jax.block_until_ready(pretrain_forward(packed, x))

    assert scores.shape == (N, NUM_CLASS), scores.shape
    assert bool(jnp.all(jnp.isfinite(scores)))

    ref = reference_forward(params, x)
    assert bool(jnp.allclose(scores, ref, atol=2e-2, rtol=2e-2)), (scores, ref)

    print("KERNEL_OK")
</pallas_src>

<mosaic_0001>
module attributes {stable_mosaic.version = 11 : i64} {
  func.func @kernel(%arg0: i32, %arg1: memref<1x342x8xbf16, #tpu.memory_space<vmem>>, %arg2: memref<9x8x32xbf16, #tpu.memory_space<vmem>>, %arg3: memref<1x32xf32, #tpu.memory_space<vmem>>, %arg4: memref<1x32xf32, #tpu.memory_space<vmem>>, %arg5: memref<4x110x288xbf16, #tpu.memory_space<vmem>>, %arg6: memref<9x32x32xbf16, #tpu.memory_space<vmem>>, %arg7: memref<1x32xf32, #tpu.memory_space<vmem>>, %arg8: memref<1x32xf32, #tpu.memory_space<vmem>>, %arg9: memref<4x42x80xbf16, #tpu.memory_space<vmem>>, %arg10: memref<9x32x32xbf16, #tpu.memory_space<vmem>>, %arg11: memref<1x32xf32, #tpu.memory_space<vmem>>, %arg12: memref<1x32xf32, #tpu.memory_space<vmem>>, %arg13: memref<4x20x24xbf16, #tpu.memory_space<vmem>>, %arg14: memref<9x32x32xbf16, #tpu.memory_space<vmem>>, %arg15: memref<1x32xf32, #tpu.memory_space<vmem>>, %arg16: memref<1x32xf32, #tpu.memory_space<vmem>>, %arg17: memref<32x5xbf16, #tpu.memory_space<vmem>>, %arg18: memref<1x5xf32, #tpu.memory_space<vmem>>, %arg19: memref<1x1x5xf32, #tpu.memory_space<vmem>>) attributes {dimension_semantics = [#tpu.dimension_semantics<parallel>], iteration_bounds = array<i64: 2>, scalar_prefetch = 0 : i64, scratch_operands = 0 : i64, tpu.core_type = #tpu.core_type<tc>, window_params = [{transform_indices = @transform_0, window_bounds = array<i64: 1, 342, 8>}, {pipeline_mode = #tpu.pipeline_mode<synchronous>, transform_indices = @transform_1, window_bounds = array<i64: 9, 8, 32>}, {pipeline_mode = #tpu.pipeline_mode<synchronous>, transform_indices = @transform_2, window_bounds = array<i64: 1, 32>}, {pipeline_mode = #tpu.pipeline_mode<synchronous>, transform_indices = @transform_3, window_bounds = array<i64: 1, 32>}, {pipeline_mode = #tpu.pipeline_mode<synchronous>, transform_indices = @transform_4, window_bounds = array<i64: 4, 110, 288>}, {pipeline_mode = #tpu.pipeline_mode<synchronous>, transform_indices = @transform_5, window_bounds = array<i64: 9, 32, 32>}, {pipeline_mode = #tpu.pipeline_mode<synchronous>, transform_indices = @transform_6, window_bounds = array<i64: 1, 32>}, {pipeline_mode = #tpu.pipeline_mode<synchronous>, transform_indices = @transform_7, window_bounds = array<i64: 1, 32>}, {pipeline_mode = #tpu.pipeline_mode<synchronous>, transform_indices = @transform_8, window_bounds = array<i64: 4, 42, 80>}, {pipeline_mode = #tpu.pipeline_mode<synchronous>, transform_indices = @transform_9, window_bounds = array<i64: 9, 32, 32>}, {pipeline_mode = #tpu.pipeline_mode<synchronous>, transform_indices = @transform_10, window_bounds = array<i64: 1, 32>}, {pipeline_mode = #tpu.pipeline_mode<synchronous>, transform_indices = @transform_11, window_bounds = array<i64: 1, 32>}, {pipeline_mode = #tpu.pipeline_mode<synchronous>, transform_indices = @transform_12, window_bounds = array<i64: 4, 20, 24>}, {pipeline_mode = #tpu.pipeline_mode<synchronous>, transform_indices = @transform_13, window_bounds = array<i64: 9, 32, 32>}, {pipeline_mode = #tpu.pipeline_mode<synchronous>, transform_indices = @transform_14, window_bounds = array<i64: 1, 32>}, {pipeline_mode = #tpu.pipeline_mode<synchronous>, transform_indices = @transform_15, window_bounds = array<i64: 1, 32>}, {pipeline_mode = #tpu.pipeline_mode<synchronous>, transform_indices = @transform_16, window_bounds = array<i64: 32, 5>}, {pipeline_mode = #tpu.pipeline_mode<synchronous>, transform_indices = @transform_17, window_bounds = array<i64: 1, 5>}, {transform_indices = @transform_18, window_bounds = array<i64: 1, 1, 5>}]} {
    %cst = arith.constant 0.000000e+00 : f32
    %0 = vector.broadcast %cst : f32 to vector<288x32xf32>
    %c0 = arith.constant 0 : index
    %c0_0 = arith.constant 0 : index
    %c0_1 = arith.constant 0 : index
    %1 = vector.load %arg1[%c0, %c0_0, %c0_1] : memref<1x342x8xbf16, #tpu.memory_space<vmem>>, vector<1x288x8xbf16>
    %2 = vector.shape_cast %1 : vector<1x288x8xbf16> to vector<288x8xbf16>
    %c0_2 = arith.constant 0 : index
    %c0_3 = arith.constant 0 : index
    %c0_4 = arith.constant 0 : index
    %3 = vector.load %arg2[%c0_2, %c0_3, %c0_4] : memref<9x8x32xbf16, #tpu.memory_space<vmem>>, vector<1x8x32xbf16>
    %4 = vector.shape_cast %3 : vector<1x8x32xbf16> to vector<8x32xbf16>
    %cst_5 = arith.constant dense<0.000000e+00> : vector<288x32xf32>
    %5 = tpu.matmul %2, %4, %cst_5 {dimension_numbers = #tpu.dot_dimension_numbers<[1], [0], [0], [1], [0, 0, 1, 1], [], []>} : vector<288x8xbf16>, vector<8x32xbf16>, vector<288x32xf32> -> vector<288x32xf32>
    %6 = arith.addf %0, %5 : vector<288x32xf32>
    %c0_6 = arith.constant 0 : index
    %c1 = arith.constant 1 : index
    %c0_7 = arith.constant 0 : index
    %7 = vector.load %arg1[%c0_6, %c1, %c0_7] : memref<1x342x8xbf16, #tpu.memory_space<vmem>>, vector<1x288x8xbf16>
    %8 = vector.shape_cast %7 : vector<1x288x8xbf16> to vector<288x8xbf16>
    %c1_8 = arith.constant 1 : index
    %c0_9 = arith.constant 0 : index
    %c0_10 = arith.constant 0 : index
    %9 = vector.load %arg2[%c1_8, %c0_9, %c0_10] : memref<9x8x32xbf16, #tpu.memory_space<vmem>>, vector<1x8x32xbf16>
    %10 = vector.shape_cast %9 : vector<1x8x32xbf16> to vector<8x32xbf16>
    %cst_11 = arith.constant dense<0.000000e+00> : vector<288x32xf32>
    %11 = tpu.matmul %8, %10, %cst_11 {dimension_numbers = #tpu.dot_dimension_numbers<[1], [0], [0], [1], [0, 0, 1, 1], [], []>} : vector<288x8xbf16>, vector<8x32xbf16>, vector<288x32xf32> -> vector<288x32xf32>
    %12 = arith.addf %6, %11 : vector<288x32xf32>
    %c0_12 = arith.constant 0 : index
    %c2 = arith.constant 2 : index
    %c0_13 = arith.constant 0 : index
    %13 = vector.load %arg1[%c0_12, %c2, %c0_13] : memref<1x342x8xbf16, #tpu.memory_space<vmem>>, vector<1x288x8xbf16>
    %14 = vector.shape_cast %13 : vector<1x288x8xbf16> to vector<288x8xbf16>
    %c2_14 = arith.constant 2 : index
    %c0_15 = arith.constant 0 : index
    %c0_16 = arith.constant 0 : index
    %15 = vector.load %arg2[%c2_14, %c0_15, %c0_16] : memref<9x8x32xbf16, #tpu.memory_space<vmem>>, vector<1x8x32xbf16>
    %16 = vector.shape_cast %15 : vector<1x8x32xbf16> to vector<8x32xbf16>
    %cst_17 = arith.constant dense<0.000000e+00> : vector<288x32xf32>
    %17 = tpu.matmul %14, %16, %cst_17 {dimension_numbers = #tpu.dot_dimension_numbers<[1], [0], [0], [1], [0, 0, 1, 1], [], []>} : vector<288x8xbf16>, vector<8x32xbf16>, vector<288x32xf32> -> vector<288x32xf32>
    %18 = arith.addf %12, %17 : vector<288x32xf32>
    %c0_18 = arith.constant 0 : index
    %c18 = arith.constant 18 : index
    %c0_19 = arith.constant 0 : index
    %19 = vector.load %arg1[%c0_18, %c18, %c0_19] : memref<1x342x8xbf16, #tpu.memory_space<vmem>>, vector<1x288x8xbf16>
    %20 = vector.shape_cast %19 : vector<1x288x8xbf16> to vector<288x8xbf16>
    %c3 = arith.constant 3 : index
    %c0_20 = arith.constant 0 : index
    %c0_21 = arith.constant 0 : index
    %21 = vector.load %arg2[%c3, %c0_20, %c0_21] : memref<9x8x32xbf16, #tpu.memory_space<vmem>>, vector<1x8x32xbf16>
    %22 = vector.shape_cast %21 : vector<1x8x32xbf16> to vector<8x32xbf16>
    %cst_22 = arith.constant dense<0.000000e+00> : vector<288x32xf32>
    %23 = tpu.matmul %20, %22, %cst_22 {dimension_numbers = #tpu.dot_dimension_numbers<[1], [0], [0], [1], [0, 0, 1, 1], [], []>} : vector<288x8xbf16>, vector<8x32xbf16>, vector<288x32xf32> -> vector<288x32xf32>
    %24 = arith.addf %18, %23 : vector<288x32xf32>
    %c0_23 = arith.constant 0 : index
    %c19 = arith.constant 19 : index
    %c0_24 = arith.constant 0 : index
    %25 = vector.load %arg1[%c0_23, %c19, %c0_24] : memref<1x342x8xbf16, #tpu.memory_space<vmem>>, vector<1x288x8xbf16>
    %26 = vector.shape_cast %25 : vector<1x288x8xbf16> to vector<288x8xbf16>
    %c4 = arith.constant 4 : index
    %c0_25 = arith.constant 0 : index
    %c0_26 = arith.constant 0 : index
    %27 = vector.load %arg2[%c4, %c0_25, %c0_26] : memref<9x8x32xbf16, #tpu.memory_space<vmem>>, vector<1x8x32xbf16>
    %28 = vector.shape_cast %27 : vector<1x8x32xbf16> to vector<8x32xbf16>
    %cst_27 = arith.constant dense<0.000000e+00> : vector<288x32xf32>
    %29 = tpu.matmul %26, %28, %cst_27 {dimension_numbers = #tpu.dot_dimension_numbers<[1], [0], [0], [1], [0, 0, 1, 1], [], []>} : vector<288x8xbf16>, vector<8x32xbf16>, vector<288x32xf32> -> vector<288x32xf32>
    %30 = arith.addf %24, %29 : vector<288x32xf32>
    %c0_28 = arith.constant 0 : index
    %c20 = arith.constant 20 : index
    %c0_29 = arith.constant 0 : index
    %31 = vector.load %arg1[%c0_28, %c20, %c0_29] : memref<1x342x8xbf16, #tpu.memory_space<vmem>>, vector<1x288x8xbf16>
    %32 = vector.shape_cast %31 : vector<1x288x8xbf16> to vector<288x8xbf16>
    %c5 = arith.constant 5 : index
    %c0_30 = arith.constant 0 : index
    %c0_31 = arith.constant 0 : index
    %33 = vector.load %arg2[%c5, %c0_30, %c0_31] : memref<9x8x32xbf16, #tpu.memory_space<vmem>>, vector<1x8x32xbf16>
    %34 = vector.shape_cast %33 : vector<1x8x32xbf16> to vector<8x32xbf16>
    %cst_32 = arith.constant dense<0.000000e+00> : vector<288x32xf32>
    %35 = tpu.matmul %32, %34, %cst_32 {dimension_numbers = #tpu.dot_dimension_numbers<[1], [0], [0], [1], [0, 0, 1, 1], [], []>} : vector<288x8xbf16>, vector<8x32xbf16>, vector<288x32xf32> -> vector<288x32xf32>
    %36 = arith.addf %30, %35 : vector<288x32xf32>
    %c0_33 = arith.constant 0 : index
    %c36 = arith.constant 36 : index
    %c0_34 = arith.constant 0 : index
    %37 = vector.load %arg1[%c0_33, %c36, %c0_34] : memref<1x342x8xbf16, #tpu.memory_space<vmem>>, vector<1x288x8xbf16>
    %38 = vector.shape_cast %37 : vector<1x288x8xbf16> to vector<288x8xbf16>
    %c6 = arith.constant 6 : index
    %c0_35 = arith.constant 0 : index
    %c0_36 = arith.constant 0 : index
    %39 = vector.load %arg2[%c6, %c0_35, %c0_36] : memref<9x8x32xbf16, #tpu.memory_space<vmem>>, vector<1x8x32xbf16>
    %40 = vector.shape_cast %39 : vector<1x8x32xbf16> to vector<8x32xbf16>
    %cst_37 = arith.constant dense<0.000000e+00> : vector<288x32xf32>
    %41 = tpu.matmul %38, %40, %cst_37 {dimension_numbers = #tpu.dot_dimension_numbers<[1], [0], [0], [1], [0, 0, 1, 1], [], []>} : vector<288x8xbf16>, vector<8x32xbf16>, vector<288x32xf32> -> vector<288x32xf32>
    %42 = arith.addf %36, %41 : vector<288x32xf32>
    %c0_38 = arith.constant 0 : index
    %c37 = arith.constant 37 : index
    %c0_39 = arith.constant 0 : index
    %43 = vector.load %arg1[%c0_38, %c37, %c0_39] : memref<1x342x8xbf16, #tpu.memory_space<vmem>>, vector<1x288x8xbf16>
    %44 = vector.shape_cast %43 : vector<1x288x8xbf16> to vector<288x8xbf16>
    %c7 = arith.constant 7 : index
    %c0_40 = arith.constant 0 : index
    %c0_41 = arith.constant 0 : index
    %45 = vector.load %arg2[%c7, %c0_40, %c0_41] : memref<9x8x32xbf16, #tpu.memory_space<vmem>>, vector<1x8x32xbf16>
    %46 = vector.shape_cast %45 : vector<1x8x32xbf16> to vector<8x32xbf16>
    %cst_42 = arith.constant dense<0.000000e+00> : vector<288x32xf32>
    %47 = tpu.matmul %44, %46, %cst_42 {dimension_numbers = #tpu.dot_dimension_numbers<[1], [0], [0], [1], [0, 0, 1, 1], [], []>} : vector<288x8xbf16>, vector<8x32xbf16>, vector<288x32xf32> -> vector<288x32xf32>
    %48 = arith.addf %42, %47 : vector<288x32xf32>
    %c0_43 = arith.constant 0 : index
    %c38 = arith.constant 38 : index
    %c0_44 = arith.constant 0 : index
    %49 = vector.load %arg1[%c0_43, %c38, %c0_44] : memref<1x342x8xbf16, #tpu.memory_space<vmem>>, vector<1x288x8xbf16>
    %50 = vector.shape_cast %49 : vector<1x288x8xbf16> to vector<288x8xbf16>
    %c8 = arith.constant 8 : index
    %c0_45 = arith.constant 0 : index
    %c0_46 = arith.constant 0 : index
    %51 = vector.load %arg2[%c8, %c0_45, %c0_46] : memref<9x8x32xbf16, #tpu.memory_space<vmem>>, vector<1x8x32xbf16>
    %52 = vector.shape_cast %51 : vector<1x8x32xbf16> to vector<8x32xbf16>
    %cst_47 = arith.constant dense<0.000000e+00> : vector<288x32xf32>
    %53 = tpu.matmul %50, %52, %cst_47 {dimension_numbers = #tpu.dot_dimension_numbers<[1], [0], [0], [1], [0, 0, 1, 1], [], []>} : vector<288x8xbf16>, vector<8x32xbf16>, vector<288x32xf32> -> vector<288x32xf32>
    %54 = arith.addf %48, %53 : vector<288x32xf32>
    %c0_48 = arith.constant 0 : index
    %c0_49 = arith.constant 0 : index
    %55 = vector.load %arg3[%c0_48, %c0_49] : memref<1x32xf32, #tpu.memory_space<vmem>>, vector<1x32xf32>
    %56 = vector.broadcast %55 : vector<1x32xf32> to vector<288x32xf32>
    %57 = arith.mulf %54, %56 : vector<288x32xf32>
    %c0_50 = arith.constant 0 : index
    %c0_51 = arith.constant 0 : index
    %58 = vector.load %arg4[%c0_50, %c0_51] : memref<1x32xf32, #tpu.memory_space<vmem>>, vector<1x32xf32>
    %59 = vector.broadcast %58 : vector<1x32xf32> to vector<288x32xf32>
    %60 = arith.addf %57, %59 : vector<288x32xf32>
    %cst_52 = arith.constant 0.000000e+00 : f32
    %61 = vector.broadcast %cst_52 : f32 to vector<288x32xf32>
    %62 = arith.maximumf %60, %61 : vector<288x32xf32>
    %63 = arith.truncf %62 : vector<288x32xf32> to vector<288x32xbf16>
    %c0_53 = arith.constant 0 : index
    %c0_54 = arith.constant 0 : index
    %c0_55 = arith.constant 0 : index
    %64 = vector.load %arg5[%c0_53, %c0_54, %c0_55] : memref<4x110x288xbf16, #tpu.memory_space<vmem>>, vector<1x110x288xbf16>
    %65 = vector.shape_cast %64 : vector<1x110x288xbf16> to vector<110x288xbf16>
    %cst_56 = arith.constant dense<0.000000e+00> : vector<110x32xf32>
    %66 = tpu.matmul %65, %63, %cst_56 {dimension_numbers = #tpu.dot_dimension_numbers<[1], [0], [0], [1], [0, 0, 1, 1], [], []>} : vector<110x288xbf16>, vector<288x32xbf16>, vector<110x32xf32> -> vector<110x32xf32>
    %c1_57 = arith.constant 1 : index
    %c0_58 = arith.constant 0 : index
    %c0_59 = arith.constant 0 : index
    %67 = vector.load %arg5[%c1_57, %c0_58, %c0_59] : memref<4x110x288xbf16, #tpu.memory_space<vmem>>, vector<1x110x288xbf16>
    %68 = vector.shape_cast %67 : vector<1x110x288xbf16> to vector<110x288xbf16>
    %cst_60 = arith.constant dense<0.000000e+00> : vector<110x32xf32>
    %69 = tpu.matmul %68, %63, %cst_60 {dimension_numbers = #tpu.dot_dimension_numbers<[1], [0], [0], [1], [0, 0, 1, 1], [], []>} : vector<110x288xbf16>, vector<288x32xbf16>, vector<110x32xf32> -> vector<110x32xf32>
    %70 = arith.maximumf %66, %69 : vector<110x32xf32>
    %c2_61 = arith.constant 2 : index
    %c0_62 = arith.constant 0 : index
    %c0_63 = arith.constant 0 : index
    %71 = vector.load %arg5[%c2_61, %c0_62, %c0_63] : memref<4x110x288xbf16, #tpu.memory_space<vmem>>, vector<1x110x288xbf16>
    %72 = vector.shape_cast %71 : vector<1x110x288xbf16> to vector<110x288xbf16>
    %cst_64 = arith.constant dense<0.000000e+00> : vector<110x32xf32>
    %73 = tpu.matmul %72, %63, %cst_64 {dimension_numbers = #tpu.dot_dimension_numbers<[1], [0], [0], [1], [0, 0, 1, 1], [], []>} : vector<110x288xbf16>, vector<288x32xbf16>, vector<110x32xf32> -> vector<110x32xf32>
    %74 = arith.maximumf %70, %73 : vector<110x32xf32>
    %c3_65 = arith.constant 3 : index
    %c0_66 = arith.constant 0 : index
    %c0_67 = arith.constant 0 : index
    %75 = vector.load %arg5[%c3_65, %c0_66, %c0_67] : memref<4x110x288xbf16, #tpu.memory_space<vmem>>, vector<1x110x288xbf16>
    %76 = vector.shape_cast %75 : vector<1x110x288xbf16> to vector<110x288xbf16>
    %cst_68 = arith.constant dense<0.000000e+00> : vector<110x32xf32>
    %77 = tpu.matmul %76, %63, %cst_68 {dimension_numbers = #tpu.dot_dimension_numbers<[1], [0], [0], [1], [0, 0, 1, 1], [], []>} : vector<110x288xbf16>, vector<288x32xbf16>, vector<110x32xf32> -> vector<110x32xf32>
    %78 = arith.maximumf %74, %77 : vector<110x32xf32>
    %79 = arith.truncf %78 : vector<110x32xf32> to vector<110x32xbf16>
    %cst_69 = arith.constant 0.000000e+00 : f32
    %80 = vector.broadcast %cst_69 : f32 to vector<80x32xf32>
    %81 = vector.extract_strided_slice %79 {offsets = [0, 0], sizes = [80, 32], strides = [1, 1]} : vector<110x32xbf16> to vector<80x32xbf16>
    %c0_70 = arith.constant 0 : index
    %c0_71 = arith.constant 0 : index
    %c0_72 = arith.constant 0 : index
    %82 = vector.load %arg6[%c0_70, %c0_71, %c0_72] : memref<9x32x32xbf16, #tpu.memory_space<vmem>>, vector<1x32x32xbf16>
    %83 = vector.shape_cast %82 : vector<1x32x32xbf16> to vector<32x32xbf16>
    %cst_73 = arith.constant dense<0.000000e+00> : vector<80x32xf32>
    %84 = tpu.matmul %81, %83, %cst_73 {dimension_numbers = #tpu.dot_dimension_numbers<[1], [0], [0], [1], [0, 0, 1, 1], [], []>} : vector<80x32xbf16>, vector<32x32xbf16>, vector<80x32xf32> -> vector<80x32xf32>
    %85 = arith.addf %80, %84 : vector<80x32xf32>
    %86 = vector.extract_strided_slice %79 {offsets = [1, 0], sizes = [80, 32], strides = [1, 1]} : vector<110x32xbf16> to vector<80x32xbf16>
    %c1_74 = arith.constant 1 : index
    %c0_75 = arith.constant 0 : index
    %c0_76 = arith.constant 0 : index
    %87 = vector.load %arg6[%c1_74, %c0_75, %c0_76] : memref<9x32x32xbf16, #tpu.memory_space<vmem>>, vector<1x32x32xbf16>
    %88 = vector.shape_cast %87 : vector<1x32x32xbf16> to vector<32x32xbf16>
    %cst_77 = arith.constant dense<0.000000e+00> : vector<80x32xf32>
    %89 = tpu.matmul %86, %88, %cst_77 {dimension_numbers = #tpu.dot_dimension_numbers<[1], [0], [0], [1], [0, 0, 1, 1], [], []>} : vector<80x32xbf16>, vector<32x32xbf16>, vector<80x32xf32> -> vector<80x32xf32>
    %90 = arith.addf %85, %89 : vector<80x32xf32>
    %91 = vector.extract_strided_slice %79 {offsets = [2, 0], sizes = [80, 32], strides = [1, 1]} : vector<110x32xbf16> to vector<80x32xbf16>
    %c2_78 = arith.constant 2 : index
    %c0_79 = arith.constant 0 : index
    %c0_80 = arith.constant 0 : index
    %92 = vector.load %arg6[%c2_78, %c0_79, %c0_80] : memref<9x32x32xbf16, #tpu.memory_space<vmem>>, vector<1x32x32xbf16>
    %93 = vector.shape_cast %92 : vector<1x32x32xbf16> to vector<32x32xbf16>
    %cst_81 = arith.constant dense<0.000000e+00> : vector<80x32xf32>
    %94 = tpu.matmul %91, %93, %cst_81 {dimension_numbers = #tpu.dot_dimension_numbers<[1], [0], [0], [1], [0, 0, 1, 1], [], []>} : vector<80x32xbf16>, vector<32x32xbf16>, vector<80x32xf32> -> vector<80x32xf32>
    %95 = arith.addf %90, %94 : vector<80x32xf32>
    %96 = vector.extract_strided_slice %79 {offsets = [10, 0], sizes = [80, 32], strides = [1, 1]} : vector<110x32xbf16> to vector<80x32xbf16>
    %c3_82 = arith.constant 3 : index
    %c0_83 = arith.constant 0 : index
    %c0_84 = arith.constant 0 : index
    %97 = vector.load %arg6[%c3_82, %c0_83, %c0_84] : memref<9x32x32xbf16, #tpu.memory_space<vmem>>, vector<1x32x32xbf16>
    %98 = vector.shape_cast %97 : vector<1x32x32xbf16> to vector<32x32xbf16>
    %cst_85 = arith.constant dense<0.000000e+00> : vector<80x32xf32>
    %99 = tpu.matmul %96, %98, %cst_85 {dimension_numbers = #tpu.dot_dimension_numbers<[1], [0], [0], [1], [0, 0, 1, 1], [], []>} : vector<80x32xbf16>, vector<32x32xbf16>, vector<80x32xf32> -> vector<80x32xf32>
    %100 = arith.addf %95, %99 : vector<80x32xf32>
    %101 = vector.extract_strided_slice %79 {offsets = [11, 0], sizes = [80, 32], strides = [1, 1]} : vector<110x32xbf16> to vector<80x32xbf16>
    %c4_86 = arith.constant 4 : index
    %c0_87 = arith.constant 0 : index
    %c0_88 = arith.constant 0 : index
    %102 = vector.load %arg6[%c4_86, %c0_87, %c0_88] : memref<9x32x32xbf16, #tpu.memory_space<vmem>>, vector<1x32x32xbf16>
    %103 = vector.shape_cast %102 : vector<1x32x32xbf16> to vector<32x32xbf16>
    %cst_89 = arith.constant dense<0.000000e+00> : vector<80x32xf32>
    %104 = tpu.matmul %101, %103, %cst_89 {dimension_numbers = #tpu.dot_dimension_numbers<[1], [0], [0], [1], [0, 0, 1, 1], [], []>} : vector<80x32xbf16>, vector<32x32xbf16>, vector<80x32xf32> -> vector<80x32xf32>
    %105 = arith.addf %100, %104 : vector<80x32xf32>
    %106 = vector.extract_strided_slice %79 {offsets = [12, 0], sizes = [80, 32], strides = [1, 1]} : vector<110x32xbf16> to vector<80x32xbf16>
    %c5_90 = arith.constant 5 : index
    %c0_91 = arith.constant 0 : index
    %c0_92 = arith.constant 0 : index
    %107 = vector.load %arg6[%c5_90, %c0_91, %c0_92] : memref<9x32x32xbf16, #tpu.memory_space<vmem>>, vector<1x32x32xbf16>
    %108 = vector.shape_cast %107 : vector<1x32x32xbf16> to vector<32x32xbf16>
    %cst_93 = arith.constant dense<0.000000e+00> : vector<80x32xf32>
    %109 = tpu.matmul %106, %108, %cst_93 {dimension_numbers = #tpu.dot_dimension_numbers<[1], [0], [0], [1], [0, 0, 1, 1], [], []>} : vector<80x32xbf16>, vector<32x32xbf16>, vector<80x32xf32> -> vector<80x32xf32>
    %110 = arith.addf %105, %109 : vector<80x32xf32>
    %111 = vector.extract_strided_slice %79 {offsets = [20, 0], sizes = [80, 32], strides = [1, 1]} : vector<110x32xbf16> to vector<80x32xbf16>
    %c6_94 = arith.constant 6 : index
    %c0_95 = arith.constant 0 : index
    %c0_96 = arith.constant 0 : index
    %112 = vector.load %arg6[%c6_94, %c0_95, %c0_96] : memref<9x32x32xbf16, #tpu.memory_space<vmem>>, vector<1x32x32xbf16>
    %113 = vector.shape_cast %112 : vector<1x32x32xbf16> to vector<32x32xbf16>
    %cst_97 = arith.constant dense<0.000000e+00> : vector<80x32xf32>
    %114 = tpu.matmul %111, %113, %cst_97 {dimension_numbers = #tpu.dot_dimension_numbers<[1], [0], [0], [1], [0, 0, 1, 1], [], []>} : vector<80x32xbf16>, vector<32x32xbf16>, vector<80x32xf32> -> vector<80x32xf32>
    %115 = arith.addf %110, %114 : vector<80x32xf32>
    %116 = vector.extract_strided_slice %79 {offsets = [21, 0], sizes = [80, 32], strides = [1, 1]} : vector<110x32xbf16> to vector<80x32xbf16>
    %c7_98 = arith.constant 7 : index
    %c0_99 = arith.constant 0 : index
    %c0_100 = arith.constant 0 : index
    %117 = vector.load %arg6[%c7_98, %c0_99, %c0_100] : memref<9x32x32xbf16, #tpu.memory_space<vmem>>, vector<1x32x32xbf16>
    %118 = vector.shape_cast %117 : vector<1x32x32xbf16> to vector<32x32xbf16>
    %cst_101 = arith.constant dense<0.000000e+00> : vector<80x32xf32>
    %119 = tpu.matmul %116, %118, %cst_101 {dimension_numbers = #tpu.dot_dimension_numbers<[1], [0], [0], [1], [0, 0, 1, 1], [], []>} : vector<80x32xbf16>, vector<32x32xbf16>, vector<80x32xf32> -> vector<80x32xf32>
    %120 = arith.addf %115, %119 : vector<80x32xf32>
    %121 = vector.extract_strided_slice %79 {offsets = [22, 0], sizes = [80, 32], strides = [1, 1]} : vector<110x32xbf16> to vector<80x32xbf16>
    %c8_102 = arith.constant 8 : index
    %c0_103 = arith.constant 0 : index
    %c0_104 = arith.constant 0 : index
    %122 = vector.load %arg6[%c8_102, %c0_103, %c0_104] : memref<9x32x32xbf16, #tpu.memory_space<vmem>>, vector<1x32x32xbf16>
    %123 = vector.shape_cast %122 : vector<1x32x32xbf16> to vector<32x32xbf16>
    %cst_105 = arith.constant dense<0.000000e+00> : vector<80x32xf32>
    %124 = tpu.matmul %121, %123, %cst_105 {dimension_numbers = #tpu.dot_dimension_numbers<[1], [0], [0], [1], [0, 0, 1, 1], [], []>} : vector<80x32xbf16>, vector<32x32xbf16>, vector<80x32xf32> -> vector<80x32xf32>
    %125 = arith.addf %120, %124 : vector<80x32xf32>
    %c0_106 = arith.constant 0 : index
    %c0_107 = arith.constant 0 : index
    %126 = vector.load %arg7[%c0_106, %c0_107] : memref<1x32xf32, #tpu.memory_space<vmem>>, vector<1x32xf32>
    %127 = vector.broadcast %126 : vector<1x32xf32> to vector<80x32xf32>
    %128 = arith.mulf %125, %127 : vector<80x32xf32>
    %c0_108 = arith.constant 0 : index
    %c0_109 = arith.constant 0 : index
    %129 = vector.load %arg8[%c0_108, %c0_109] : memref<1x32xf32, #tpu.memory_space<vmem>>, vector<1x32xf32>
    %130 = vector.broadcast %129 : vector<1x32xf32> to vector<80x32xf32>
    %131 = arith.addf %128, %130 : vector<80x32xf32>
    %cst_110 = arith.constant 0.000000e+00 : f32
    %132 = vector.broadcast %cst_110 : f32 to vector<80x32xf32>
    %133 = arith.maximumf %131, %132 : vector<80x32xf32>
    %134 = arith.truncf %133 : vector<80x32xf32> to vector<80x32xbf16>
    %c0_111 = arith.constant 0 : index
    %c0_112 = arith.constant 0 : index
    %c0_113 = arith.constant 0 : index
    %135 = vector.load %arg9[%c0_111, %c0_112, %c0_113] : memref<4x42x80xbf16, #tpu.memory_space<vmem>>, vector<1x42x80xbf16>
    %136 = vector.shape_cast %135 : vector<1x42x80xbf16> to vector<42x80xbf16>
    %cst_114 = arith.constant dense<0.000000e+00> : vector<42x32xf32>
    %137 = tpu.matmul %136, %134, %cst_114 {dimension_numbers = #tpu.dot_dimension_numbers<[1], [0], [0], [1], [0, 0, 1, 1], [], []>} : vector<42x80xbf16>, vector<80x32xbf16>, vector<42x32xf32> -> vector<42x32xf32>
    %c1_115 = arith.constant 1 : index
    %c0_116 = arith.constant 0 : index
    %c0_117 = arith.constant 0 : index
    %138 = vector.load %arg9[%c1_115, %c0_116, %c0_117] : memref<4x42x80xbf16, #tpu.memory_space<vmem>>, vector<1x42x80xbf16>
    %139 = vector.shape_cast %138 : vector<1x42x80xbf16> to vector<42x80xbf16>
    %cst_118 = arith.constant dense<0.000000e+00> : vector<42x32xf32>
    %140 = tpu.matmul %139, %134, %cst_118 {dimension_numbers = #tpu.dot_dimension_numbers<[1], [0], [0], [1], [0, 0, 1, 1], [], []>} : vector<42x80xbf16>, vector<80x32xbf16>, vector<42x32xf32> -> vector<42x32xf32>
    %141 = arith.maximumf %137, %140 : vector<42x32xf32>
    %c2_119 = arith.constant 2 : index
    %c0_120 = arith.constant 0 : index
    %c0_121 = arith.constant 0 : index
    %142 = vector.load %arg9[%c2_119, %c0_120, %c0_121] : memref<4x42x80xbf16, #tpu.memory_space<vmem>>, vector<1x42x80xbf16>
    %143 = vector.shape_cast %142 : vector<1x42x80xbf16> to vector<42x80xbf16>
    %cst_122 = arith.constant dense<0.000000e+00> : vector<42x32xf32>
    %144 = tpu.matmul %143, %134, %cst_122 {dimension_numbers = #tpu.dot_dimension_numbers<[1], [0], [0], [1], [0, 0, 1, 1], [], []>} : vector<42x80xbf16>, vector<80x32xbf16>, vector<42x32xf32> -> vector<42x32xf32>
    %145 = arith.maximumf %141, %144 : vector<42x32xf32>
    %c3_123 = arith.constant 3 : index
    %c0_124 = arith.constant 0 : index
    %c0_125 = arith.constant 0 : index
    %146 = vector.load %arg9[%c3_123, %c0_124, %c0_125] : memref<4x42x80xbf16, #tpu.memory_space<vmem>>, vector<1x42x80xbf16>
    %147 = vector.shape_cast %146 : vector<1x42x80xbf16> to vector<42x80xbf16>
    %cst_126 = arith.constant dense<0.000000e+00> : vector<42x32xf32>
    %148 = tpu.matmul %147, %134, %cst_126 {dimension_numbers = #tpu.dot_dimension_numbers<[1], [0], [0], [1], [0, 0, 1, 1], [], []>} : vector<42x80xbf16>, vector<80x32xbf16>, vector<42x32xf32> -> vector<42x32xf32>
    %149 = arith.maximumf %145, %148 : vector<42x32xf32>
    %150 = arith.truncf %149 : vector<42x32xf32> to vector<42x32xbf16>
    %cst_127 = arith.constant 0.000000e+00 : f32
    %151 = vector.broadcast %cst_127 : f32 to vector<24x32xf32>
    %152 = vector.extract_strided_slice %150 {offsets = [0, 0], sizes = [24, 32], strides = [1, 1]} : vector<42x32xbf16> to vector<24x32xbf16>
    %c0_128 = arith.constant 0 : index
    %c0_129 = arith.constant 0 : index
    %c0_130 = arith.constant 0 : index
    %153 = vector.load %arg10[%c0_128, %c0_129, %c0_130] : memref<9x32x32xbf16, #tpu.memory_space<vmem>>, vector<1x32x32xbf16>
    %154 = vector.shape_cast %153 : vector<1x32x32xbf16> to vector<32x32xbf16>
    %cst_131 = arith.constant dense<0.000000e+00> : vector<24x32xf32>
    %155 = tpu.matmul %152, %154, %cst_131 {dimension_numbers = #tpu.dot_dimension_numbers<[1], [0], [0], [1], [0, 0, 1, 1], [], []>} : vector<24x32xbf16>, vector<32x32xbf16>, vector<24x32xf32> -> vector<24x32xf32>
    %156 = arith.addf %151, %155 : vector<24x32xf32>
    %157 = vector.extract_strided_slice %150 {offsets = [1, 0], sizes = [24, 32], strides = [1, 1]} : vector<42x32xbf16> to vector<24x32xbf16>
    %c1_132 = arith.constant 1 : index
    %c0_133 = arith.constant 0 : index
    %c0_134 = arith.constant 0 : index
    %158 = vector.load %arg10[%c1_132, %c0_133, %c0_134] : memref<9x32x32xbf16, #tpu.memory_space<vmem>>, vector<1x32x32xbf16>
    %159 = vector.shape_cast %158 : vector<1x32x32xbf16> to vector<32x32xbf16>
    %cst_135 = arith.constant dense<0.000000e+00> : vector<24x32xf32>
    %160 = tpu.matmul %157, %159, %cst_135 {dimension_numbers = #tpu.dot_dimension_numbers<[1], [0], [0], [1], [0, 0, 1, 1], [], []>} : vector<24x32xbf16>, vector<32x32xbf16>, vector<24x32xf32> -> vector<24x32xf32>
    %161 = arith.addf %156, %160 : vector<24x32xf32>
    %162 = vector.extract_strided_slice %150 {offsets = [2, 0], sizes = [24, 32], strides = [1, 1]} : vector<42x32xbf16> to vector<24x32xbf16>
    %c2_136 = arith.constant 2 : index
    %c0_137 = arith.constant 0 : index
    %c0_138 = arith.constant 0 : index
    %163 = vector.load %arg10[%c2_136, %c0_137, %c0_138] : memref<9x32x32xbf16, #tpu.memory_space<vmem>>, vector<1x32x32xbf16>
    %164 = vector.shape_cast %163 : vector<1x32x32xbf16> to vector<32x32xbf16>
    %cst_139 = arith.constant dense<0.000000e+00> : vector<24x32xf32>
    %165 = tpu.matmul %162, %164, %cst_139 {dimension_numbers = #tpu.dot_dimension_numbers<[1], [0], [0], [1], [0, 0, 1, 1], [], []>} : vector<24x32xbf16>, vector<32x32xbf16>, vector<24x32xf32> -> vector<24x32xf32>
    %166 = arith.addf %161, %165 : vector<24x32xf32>
    %167 = vector.extract_strided_slice %150 {offsets = [6, 0], sizes = [24, 32], strides = [1, 1]} : vector<42x32xbf16> to vector<24x32xbf16>
    %c3_140 = arith.constant 3 : index
    %c0_141 = arith.constant 0 : index
    %c0_142 = arith.constant 0 : index
    %168 = vector.load %arg10[%c3_140, %c0_141, %c0_142] : memref<9x32x32xbf16, #tpu.memory_space<vmem>>, vector<1x32x32xbf16>
    %169 = vector.shape_cast %168 : vector<1x32x32xbf16> to vector<32x32xbf16>
    %cst_143 = arith.constant dense<0.000000e+00> : vector<24x32xf32>
    %170 = tpu.matmul %167, %169, %cst_143 {dimension_numbers = #tpu.dot_dimension_numbers<[1], [0], [0], [1], [0, 0, 1, 1], [], []>} : vector<24x32xbf16>, vector<32x32xbf16>, vector<24x32xf32> -> vector<24x32xf32>
    %171 = arith.addf %166, %170 : vector<24x32xf32>
    %172 = vector.extract_strided_slice %150 {offsets = [7, 0], sizes = [24, 32], strides = [1, 1]} : vector<42x32xbf16> to vector<24x32xbf16>
    %c4_144 = arith.constant 4 : index
    %c0_145 = arith.constant 0 : index
    %c0_146 = arith.constant 0 : index
    %173 = vector.load %arg10[%c4_144, %c0_145, %c0_146] : memref<9x32x32xbf16, #tpu.memory_space<vmem>>, vector<1x32x32xbf16>
    %174 = vector.shape_cast %173 : vector<1x32x32xbf16> to vector<32x32xbf16>
    %cst_147 = arith.constant dense<0.000000e+00> : vector<24x32xf32>
    %175 = tpu.matmul %172, %174, %cst_147 {dimension_numbers = #tpu.dot_dimension_numbers<[1], [0], [0], [1], [0, 0, 1, 1], [], []>} : vector<24x32xbf16>, vector<32x32xbf16>, vector<24x32xf32> -> vector<24x32xf32>
    %176 = arith.addf %171, %175 : vector<24x32xf32>
    %177 = vector.extract_strided_slice %150 {offsets = [8, 0], sizes = [24, 32], strides = [1, 1]} : vector<42x32xbf16> to vector<24x32xbf16>
    %c5_148 = arith.constant 5 : index
    %c0_149 = arith.constant 0 : index
    %c0_150 = arith.constant 0 : index
    %178 = vector.load %arg10[%c5_148, %c0_149, %c0_150] : memref<9x32x32xbf16, #tpu.memory_space<vmem>>, vector<1x32x32xbf16>
    %179 = vector.shape_cast %178 : vector<1x32x32xbf16> to vector<32x32xbf16>
    %cst_151 = arith.constant dense<0.000000e+00> : vector<24x32xf32>
    %180 = tpu.matmul %177, %179, %cst_151 {dimension_numbers = #tpu.dot_dimension_numbers<[1], [0], [0], [1], [0, 0, 1, 1], [], []>} : vector<24x32xbf16>, vector<32x32xbf16>, vector<24x32xf32> -> vector<24x32xf32>
    %181 = arith.addf %176, %180 : vector<24x32xf32>
    %182 = vector.extract_strided_slice %150 {offsets = [12, 0], sizes = [24, 32], strides = [1, 1]} : vector<42x32xbf16> to vector<24x32xbf16>
    %c6_152 = arith.constant 6 : index
    %c0_153 = arith.constant 0 : index
    %c0_154 = arith.constant 0 : index
    %183 = vector.load %arg10[%c6_152, %c0_153, %c0_154] : memref<9x32x32xbf16, #tpu.memory_space<vmem>>, vector<1x32x32xbf16>
    %184 = vector.shape_cast %183 : vector<1x32x32xbf16> to vector<32x32xbf16>
    %cst_155 = arith.constant dense<0.000000e+00> : vector<24x32xf32>
    %185 = tpu.matmul %182, %184, %cst_155 {dimension_numbers = #tpu.dot_dimension_numbers<[1], [0], [0], [1], [0, 0, 1, 1], [], []>} : vector<24x32xbf16>, vector<32x32xbf16>, vector<24x32xf32> -> vector<24x32xf32>
    %186 = arith.addf %181, %185 : vector<24x32xf32>
    %187 = vector.extract_strided_slice %150 {offsets = [13, 0], sizes = [24, 32], strides = [1, 1]} : vector<42x32xbf16> to vector<24x32xbf16>
    %c7_156 = arith.constant 7 : index
    %c0_157 = arith.constant 0 : index
    %c0_158 = arith.constant 0 : index
    %188 = vector.load %arg10[%c7_156, %c0_157, %c0_158] : memref<9x32x32xbf16, #tpu.memory_space<vmem>>, vector<1x32x32xbf16>
    %189 = vector.shape_cast %188 : vector<1x32x32xbf16> to vector<32x32xbf16>
    %cst_159 = arith.constant dense<0.000000e+00> : vector<24x32xf32>
    %190 = tpu.matmul %187, %189, %cst_159 {dimension_numbers = #tpu.dot_dimension_numbers<[1], [0], [0], [1], [0, 0, 1, 1], [], []>} : vector<24x32xbf16>, vector<32x32xbf16>, vector<24x32xf32> -> vector<24x32xf32>
    %191 = arith.addf %186, %190 : vector<24x32xf32>
    %192 = vector.extract_strided_slice %150 {offsets = [14, 0], sizes = [24, 32], strides = [1, 1]} : vector<42x32xbf16> to vector<24x32xbf16>
    %c8_160 = arith.constant 8 : index
    %c0_161 = arith.constant 0 : index
    %c0_162 = arith.constant 0 : index
    %193 = vector.load %arg10[%c8_160, %c0_161, %c0_162] : memref<9x32x32xbf16, #tpu.memory_space<vmem>>, vector<1x32x32xbf16>
    %194 = vector.shape_cast %193 : vector<1x32x32xbf16> to vector<32x32xbf16>
    %cst_163 = arith.constant dense<0.000000e+00> : vector<24x32xf32>
    %195 = tpu.matmul %192, %194, %cst_163 {dimension_numbers = #tpu.dot_dimension_numbers<[1], [0], [0], [1], [0, 0, 1, 1], [], []>} : vector<24x32xbf16>, vector<32x32xbf16>, vector<24x32xf32> -> vector<24x32xf32>
    %196 = arith.addf %191, %195 : vector<24x32xf32>
    %c0_164 = arith.constant 0 : index
    %c0_165 = arith.constant 0 : index
    %197 = vector.load %arg11[%c0_164, %c0_165] : memref<1x32xf32, #tpu.memory_space<vmem>>, vector<1x32xf32>
    %198 = vector.broadcast %197 : vector<1x32xf32> to vector<24x32xf32>
    %199 = arith.mulf %196, %198 : vector<24x32xf32>
    %c0_166 = arith.constant 0 : index
    %c0_167 = arith.constant 0 : index
    %200 = vector.load %arg12[%c0_166, %c0_167] : memref<1x32xf32, #tpu.memory_space<vmem>>, vector<1x32xf32>
    %201 = vector.broadcast %200 : vector<1x32xf32> to vector<24x32xf32>
    %202 = arith.addf %199, %201 : vector<24x32xf32>
    %cst_168 = arith.constant 0.000000e+00 : f32
    %203 = vector.broadcast %cst_168 : f32 to vector<24x32xf32>
    %204 = arith.maximumf %202, %203 : vector<24x32xf32>
    %205 = arith.truncf %204 : vector<24x32xf32> to vector<24x32xbf16>
    %c0_169 = arith.constant 0 : index
    %c0_170 = arith.constant 0 : index
    %c0_171 = arith.constant 0 : index
    %206 = vector.load %arg13[%c0_169, %c0_170, %c0_171] : memref<4x20x24xbf16, #tpu.memory_space<vmem>>, vector<1x20x24xbf16>
    %207 = vector.shape_cast %206 : vector<1x20x24xbf16> to vector<20x24xbf16>
    %cst_172 = arith.constant dense<0.000000e+00> : vector<20x32xf32>
    %208 = tpu.matmul %207, %205, %cst_172 {dimension_numbers = #tpu.dot_dimension_numbers<[1], [0], [0], [1], [0, 0, 1, 1], [], []>} : vector<20x24xbf16>, vector<24x32xbf16>, vector<20x32xf32> -> vector<20x32xf32>
    %c1_173 = arith.constant 1 : index
    %c0_174 = arith.constant 0 : index
    %c0_175 = arith.constant 0 : index
    %209 = vector.load %arg13[%c1_173, %c0_174, %c0_175] : memref<4x20x24xbf16, #tpu.memory_space<vmem>>, vector<1x20x24xbf16>
    %210 = vector.shape_cast %209 : vector<1x20x24xbf16> to vector<20x24xbf16>
    %cst_176 = arith.constant dense<0.000000e+00> : vector<20x32xf32>
    %211 = tpu.matmul %210, %205, %cst_176 {dimension_numbers = #tpu.dot_dimension_numbers<[1], [0], [0], [1], [0, 0, 1, 1], [], []>} : vector<20x24xbf16>, vector<24x32xbf16>, vector<20x32xf32> -> vector<20x32xf32>
    %212 = arith.maximumf %208, %211 : vector<20x32xf32>
    %c2_177 = arith.constant 2 : index
    %c0_178 = arith.constant 0 : index
    %c0_179 = arith.constant 0 : index
    %213 = vector.load %arg13[%c2_177, %c0_178, %c0_179] : memref<4x20x24xbf16, #tpu.memory_space<vmem>>, vector<1x20x24xbf16>
    %214 = vector.shape_cast %213 : vector<1x20x24xbf16> to vector<20x24xbf16>
    %cst_180 = arith.constant dense<0.000000e+00> : vector<20x32xf32>
    %215 = tpu.matmul %214, %205, %cst_180 {dimension_numbers = #tpu.dot_dimension_numbers<[1], [0], [0], [1], [0, 0, 1, 1], [], []>} : vector<20x24xbf16>, vector<24x32xbf16>, vector<20x32xf32> -> vector<20x32xf32>
    %216 = arith.maximumf %212, %215 : vector<20x32xf32>
    %c3_181 = arith.constant 3 : index
    %c0_182 = arith.constant 0 : index
    %c0_183 = arith.constant 0 : index
    %217 = vector.load %arg13[%c3_181, %c0_182, %c0_183] : memref<4x20x24xbf16, #tpu.memory_space<vmem>>, vector<1x20x24xbf16>
    %218 = vector.shape_cast %217 : vector<1x20x24xbf16> to vector<20x24xbf16>
    %cst_184 = arith.constant dense<0.000000e+00> : vector<20x32xf32>
    %219 = tpu.matmul %218, %205, %cst_184 {dimension_numbers = #tpu.dot_dimension_numbers<[1], [0], [0], [1], [0, 0, 1, 1], [], []>} : vector<20x24xbf16>, vector<24x32xbf16>, vector<20x32xf32> -> vector<20x32xf32>
    %220 = arith.maximumf %216, %219 : vector<20x32xf32>
    %221 = arith.truncf %220 : vector<20x32xf32> to vector<20x32xbf16>
    %cst_185 = arith.constant 0.000000e+00 : f32
    %222 = vector.broadcast %cst_185 : f32 to vector<8x32xf32>
    %223 = vector.extract_strided_slice %221 {offsets = [0, 0], sizes = [8, 32], strides = [1, 1]} : vector<20x32xbf16> to vector<8x32xbf16>
    %c0_186 = arith.constant 0 : index
    %c0_187 = arith.constant 0 : index
    %c0_188 = arith.constant 0 : index
    %224 = vector.load %arg14[%c0_186, %c0_187, %c0_188] : memref<9x32x32xbf16, #tpu.memory_space<vmem>>, vector<1x32x32xbf16>
    %225 = vector.shape_cast %224 : vector<1x32x32xbf16> to vector<32x32xbf16>
    %cst_189 = arith.constant dense<0.000000e+00> : vector<8x32xf32>
    %226 = tpu.matmul %223, %225, %cst_189 {dimension_numbers = #tpu.dot_dimension_numbers<[1], [0], [0], [1], [0, 0, 1, 1], [], []>} : vector<8x32xbf16>, vector<32x32xbf16>, vector<8x32xf32> -> vector<8x32xf32>
    %227 = arith.addf %222, %226 : vector<8x32xf32>
    %228 = vector.extract_strided_slice %221 {offsets = [1, 0], sizes = [8, 32], strides = [1, 1]} : vector<20x32xbf16> to vector<8x32xbf16>
    %c1_190 = arith.constant 1 : index
    %c0_191 = arith.constant 0 : index
    %c0_192 = arith.constant 0 : index
    %229 = vector.load %arg14[%c1_190, %c0_191, %c0_192] : memref<9x32x32xbf16, #tpu.memory_space<vmem>>, vector<1x32x32xbf16>
    %230 = vector.shape_cast %229 : vector<1x32x32xbf16> to vector<32x32xbf16>
    %cst_193 = arith.constant dense<0.000000e+00> : vector<8x32xf32>
    %231 = tpu.matmul %228, %230, %cst_193 {dimension_numbers = #tpu.dot_dimension_numbers<[1], [0], [0], [1], [0, 0, 1, 1], [], []>} : vector<8x32xbf16>, vector<32x32xbf16>, vector<8x32xf32> -> vector<8x32xf32>
    %232 = arith.addf %227, %231 : vector<8x32xf32>
    %233 = vector.extract_strided_slice %221 {offsets = [2, 0], sizes = [8, 32], strides = [1, 1]} : vector<20x32xbf16> to vector<8x32xbf16>
    %c2_194 = arith.constant 2 : index
    %c0_195 = arith.constant 0 : index
    %c0_196 = arith.constant 0 : index
    %234 = vector.load %arg14[%c2_194, %c0_195, %c0_196] : memref<9x32x32xbf16, #tpu.memory_space<vmem>>, vector<1x32x32xbf16>
    %235 = vector.shape_cast %234 : vector<1x32x32xbf16> to vector<32x32xbf16>
    %cst_197 = arith.constant dense<0.000000e+00> : vector<8x32xf32>
    %236 = tpu.matmul %233, %235, %cst_197 {dimension_numbers = #tpu.dot_dimension_numbers<[1], [0], [0], [1], [0, 0, 1, 1], [], []>} : vector<8x32xbf16>, vector<32x32xbf16>, vector<8x32xf32> -> vector<8x32xf32>
    %237 = arith.addf %232, %236 : vector<8x32xf32>
    %238 = vector.extract_strided_slice %221 {offsets = [4, 0], sizes = [8, 32], strides = [1, 1]} : vector<20x32xbf16> to vector<8x32xbf16>
    %c3_198 = arith.constant 3 : index
    %c0_199 = arith.constant 0 : index
    %c0_200 = arith.constant 0 : index
    %239 = vector.load %arg14[%c3_198, %c0_199, %c0_200] : memref<9x32x32xbf16, #tpu.memory_space<vmem>>, vector<1x32x32xbf16>
    %240 = vector.shape_cast %239 : vector<1x32x32xbf16> to vector<32x32xbf16>
    %cst_201 = arith.constant dense<0.000000e+00> : vector<8x32xf32>
    %241 = tpu.matmul %238, %240, %cst_201 {dimension_numbers = #tpu.dot_dimension_numbers<[1], [0], [0], [1], [0, 0, 1, 1], [], []>} : vector<8x32xbf16>, vector<32x32xbf16>, vector<8x32xf32> -> vector<8x32xf32>
    %242 = arith.addf %237, %241 : vector<8x32xf32>
    %243 = vector.extract_strided_slice %221 {offsets = [5, 0], sizes = [8, 32], strides = [1, 1]} : vector<20x32xbf16> to vector<8x32xbf16>
    %c4_202 = arith.constant 4 : index
    %c0_203 = arith.constant 0 : index
    %c0_204 = arith.constant 0 : index
    %244 = vector.load %arg14[%c4_202, %c0_203, %c0_204] : memref<9x32x32xbf16, #tpu.memory_space<vmem>>, vector<1x32x32xbf16>
    %245 = vector.shape_cast %244 : vector<1x32x32xbf16> to vector<32x32xbf16>
    %cst_205 = arith.constant dense<0.000000e+00> : vector<8x32xf32>
    %246 = tpu.matmul %243, %245, %cst_205 {dimension_numbers = #tpu.dot_dimension_numbers<[1], [0], [0], [1], [0, 0, 1, 1], [], []>} : vector<8x32xbf16>, vector<32x32xbf16>, vector<8x32xf32> -> vector<8x32xf32>
    %247 = arith.addf %242, %246 : vector<8x32xf32>
    %248 = vector.extract_strided_slice %221 {offsets = [6, 0], sizes = [8, 32], strides = [1, 1]} : vector<20x32xbf16> to vector<8x32xbf16>
    %c5_206 = arith.constant 5 : index
    %c0_207 = arith.constant 0 : index
    %c0_208 = arith.constant 0 : index
    %249 = vector.load %arg14[%c5_206, %c0_207, %c0_208] : memref<9x32x32xbf16, #tpu.memory_space<vmem>>, vector<1x32x32xbf16>
    %250 = vector.shape_cast %249 : vector<1x32x32xbf16> to vector<32x32xbf16>
    %cst_209 = arith.constant dense<0.000000e+00> : vector<8x32xf32>
    %251 = tpu.matmul %248, %250, %cst_209 {dimension_numbers = #tpu.dot_dimension_numbers<[1], [0], [0], [1], [0, 0, 1, 1], [], []>} : vector<8x32xbf16>, vector<32x32xbf16>, vector<8x32xf32> -> vector<8x32xf32>
    %252 = arith.addf %247, %251 : vector<8x32xf32>
    %253 = vector.extract_strided_slice %221 {offsets = [8, 0], sizes = [8, 32], strides = [1, 1]} : vector<20x32xbf16> to vector<8x32xbf16>
    %c6_210 = arith.constant 6 : index
    %c0_211 = arith.constant 0 : index
    %c0_212 = arith.constant 0 : index
    %254 = vector.load %arg14[%c6_210, %c0_211, %c0_212] : memref<9x32x32xbf16, #tpu.memory_space<vmem>>, vector<1x32x32xbf16>
    %255 = vector.shape_cast %254 : vector<1x32x32xbf16> to vector<32x32xbf16>
    %cst_213 = arith.constant dense<0.000000e+00> : vector<8x32xf32>
    %256 = tpu.matmul %253, %255, %cst_213 {dimension_numbers = #tpu.dot_dimension_numbers<[1], [0], [0], [1], [0, 0, 1, 1], [], []>} : vector<8x32xbf16>, vector<32x32xbf16>, vector<8x32xf32> -> vector<8x32xf32>
    %257 = arith.addf %252, %256 : vector<8x32xf32>
    %258 = vector.extract_strided_slice %221 {offsets = [9, 0], sizes = [8, 32], strides = [1, 1]} : vector<20x32xbf16> to vector<8x32xbf16>
    %c7_214 = arith.constant 7 : index
    %c0_215 = arith.constant 0 : index
    %c0_216 = arith.constant 0 : index
    %259 = vector.load %arg14[%c7_214, %c0_215, %c0_216] : memref<9x32x32xbf16, #tpu.memory_space<vmem>>, vector<1x32x32xbf16>
    %260 = vector.shape_cast %259 : vector<1x32x32xbf16> to vector<32x32xbf16>
    %cst_217 = arith.constant dense<0.000000e+00> : vector<8x32xf32>
    %261 = tpu.matmul %258, %260, %cst_217 {dimension_numbers = #tpu.dot_dimension_numbers<[1], [0], [0], [1], [0, 0, 1, 1], [], []>} : vector<8x32xbf16>, vector<32x32xbf16>, vector<8x32xf32> -> vector<8x32xf32>
    %262 = arith.addf %257, %261 : vector<8x32xf32>
    %263 = vector.extract_strided_slice %221 {offsets = [10, 0], sizes = [8, 32], strides = [1, 1]} : vector<20x32xbf16> to vector<8x32xbf16>
    %c8_218 = arith.constant 8 : index
    %c0_219 = arith.constant 0 : index
    %c0_220 = arith.constant 0 : index
    %264 = vector.load %arg14[%c8_218, %c0_219, %c0_220] : memref<9x32x32xbf16, #tpu.memory_space<vmem>>, vector<1x32x32xbf16>
    %265 = vector.shape_cast %264 : vector<1x32x32xbf16> to vector<32x32xbf16>
    %cst_221 = arith.constant dense<0.000000e+00> : vector<8x32xf32>
    %266 = tpu.matmul %263, %265, %cst_221 {dimension_numbers = #tpu.dot_dimension_numbers<[1], [0], [0], [1], [0, 0, 1, 1], [], []>} : vector<8x32xbf16>, vector<32x32xbf16>, vector<8x32xf32> -> vector<8x32xf32>
    %267 = arith.addf %262, %266 : vector<8x32xf32>
    %c0_222 = arith.constant 0 : index
    %c0_223 = arith.constant 0 : index
    %268 = vector.load %arg15[%c0_222, %c0_223] : memref<1x32xf32, #tpu.memory_space<vmem>>, vector<1x32xf32>
    %269 = vector.broadcast %268 : vector<1x32xf32> to vector<8x32xf32>
    %270 = arith.mulf %267, %269 : vector<8x32xf32>
    %c0_224 = arith.constant 0 : index
    %c0_225 = arith.constant 0 : index
    %271 = vector.load %arg16[%c0_224, %c0_225] : memref<1x32xf32, #tpu.memory_space<vmem>>, vector<1x32xf32>
    %272 = vector.broadcast %271 : vector<1x32xf32> to vector<8x32xf32>
    %273 = arith.addf %270, %272 : vector<8x32xf32>
    %cst_226 = arith.constant 0.000000e+00 : f32
    %274 = vector.broadcast %cst_226 : f32 to vector<8x32xf32>
    %275 = arith.maximumf %273, %274 : vector<8x32xf32>
    %276 = vector.extract_strided_slice %275 {offsets = [0, 0], sizes = [1, 32], strides = [1, 1]} : vector<8x32xf32> to vector<1x32xf32>
    %277 = vector.extract_strided_slice %275 {offsets = [1, 0], sizes = [1, 32], strides = [1, 1]} : vector<8x32xf32> to vector<1x32xf32>
    %278 = arith.maximumf %276, %277 : vector<1x32xf32>
    %279 = vector.extract_strided_slice %275 {offsets = [4, 0], sizes = [1, 32], strides = [1, 1]} : vector<8x32xf32> to vector<1x32xf32>
    %280 = vector.extract_strided_slice %275 {offsets = [5, 0], sizes = [1, 32], strides = [1, 1]} : vector<8x32xf32> to vector<1x32xf32>
    %281 = arith.maximumf %279, %280 : vector<1x32xf32>
    %282 = arith.maximumf %278, %281 : vector<1x32xf32>
    %283 = arith.truncf %282 : vector<1x32xf32> to vector<1x32xbf16>
    %c0_227 = arith.constant 0 : index
    %c0_228 = arith.constant 0 : index
    %284 = vector.load %arg17[%c0_227, %c0_228] : memref<32x5xbf16, #tpu.memory_space<vmem>>, vector<32x5xbf16>
    %cst_229 = arith.constant dense<0.000000e+00> : vector<1x5xf32>
    %285 = tpu.matmul %283, %284, %cst_229 {dimension_numbers = #tpu.dot_dimension_numbers<[1], [0], [0], [1], [0, 0, 1, 1], [], []>} : vector<1x32xbf16>, vector<32x5xbf16>, vector<1x5xf32> -> vector<1x5xf32>
    %c0_230 = arith.constant 0 : index
    %c0_231 = arith.constant 0 : index
    %286 = vector.load %arg18[%c0_230, %c0_231] : memref<1x5xf32, #tpu.memory_space<vmem>>, vector<1x5xf32>
    %287 = arith.addf %285, %286 : vector<1x5xf32>
    %c0_232 = arith.constant 0 : index
    %c0_233 = arith.constant 0 : index
    %c0_234 = arith.constant 0 : index
    %288 = vector.load %arg19[%c0_232, %c0_233, %c0_234] : memref<1x1x5xf32, #tpu.memory_space<vmem>>, vector<1x1x5xf32>
    %289 = vector.shape_cast %288 : vector<1x1x5xf32> to vector<1x5xf32>
    %290 = vector.shape_cast %287 : vector<1x5xf32> to vector<1x1x5xf32>
    tpu.vector_store %arg19[%c0_232, %c0_233, %c0_234], %290 {strides = array<i32>} : memref<1x1x5xf32, #tpu.memory_space<vmem>>, vector<1x1x5xf32>,
    return
  }
  func.func @transform_0(%arg0: i32) -> (i32, i32, i32) {
    %c0_i32 = arith.constant 0 : i32
    %c0_i32_0 = arith.constant 0 : i32
    %c0_i32_1 = arith.constant 0 : i32
    return %arg0, %c0_i32, %c0_i32_0 : i32, i32, i32
  }
  func.func @transform_1(%arg0: i32) -> (i32, i32, i32) {
    %c0_i32 = arith.constant 0 : i32
    %c0_i32_0 = arith.constant 0 : i32
    %c0_i32_1 = arith.constant 0 : i32
    %c0_i32_2 = arith.constant 0 : i32
    return %c0_i32, %c0_i32_0, %c0_i32_1 : i32, i32, i32
  }
  func.func @transform_2(%arg0: i32) -> (i32, i32) {
    %c0_i32 = arith.constant 0 : i32
    %c0_i32_0 = arith.constant 0 : i32
    %c0_i32_1 = arith.constant 0 : i32
    return %c0_i32, %c0_i32_0 : i32, i32
  }
  func.func @transform_3(%arg0: i32) -> (i32, i32) {
    %c0_i32 = arith.constant 0 : i32
    %c0_i32_0 = arith.constant 0 : i32
    %c0_i32_1 = arith.constant 0 : i32
    return %c0_i32, %c0_i32_0 : i32, i32
  }
  func.func @transform_4(%arg0: i32) -> (i32, i32, i32) {
    %c0_i32 = arith.constant 0 : i32
    %c0_i32_0 = arith.constant 0 : i32
    %c0_i32_1 = arith.constant 0 : i32
    %c0_i32_2 = arith.constant 0 : i32
    return %c0_i32, %c0_i32_0, %c0_i32_1 : i32, i32, i32
  }
  func.func @transform_5(%arg0: i32) -> (i32, i32, i32) {
    %c0_i32 = arith.constant 0 : i32
    %c0_i32_0 = arith.constant 0 : i32
    %c0_i32_1 = arith.constant 0 : i32
    %c0_i32_2 = arith.constant 0 : i32
    return %c0_i32, %c0_i32_0, %c0_i32_1 : i32, i32, i32
  }
  func.func @transform_6(%arg0: i32) -> (i32, i32) {
    %c0_i32 = arith.constant 0 : i32
    %c0_i32_0 = arith.constant 0 : i32
    %c0_i32_1 = arith.constant 0 : i32
    return %c0_i32, %c0_i32_0 : i32, i32
  }
  func.func @transform_7(%arg0: i32) -> (i32, i32) {
    %c0_i32 = arith.constant 0 : i32
    %c0_i32_0 = arith.constant 0 : i32
    %c0_i32_1 = arith.constant 0 : i32
    return %c0_i32, %c0_i32_0 : i32, i32
  }
  func.func @transform_8(%arg0: i32) -> (i32, i32, i32) {
    %c0_i32 = arith.constant 0 : i32
    %c0_i32_0 = arith.constant 0 : i32
    %c0_i32_1 = arith.constant 0 : i32
    %c0_i32_2 = arith.constant 0 : i32
    return %c0_i32, %c0_i32_0, %c0_i32_1 : i32, i32, i32
  }
  func.func @transform_9(%arg0: i32) -> (i32, i32, i32) {
    %c0_i32 = arith.constant 0 : i32
    %c0_i32_0 = arith.constant 0 : i32
    %c0_i32_1 = arith.constant 0 : i32
    %c0_i32_2 = arith.constant 0 : i32
    return %c0_i32, %c0_i32_0, %c0_i32_1 : i32, i32, i32
  }
  func.func @transform_10(%arg0: i32) -> (i32, i32) {
    %c0_i32 = arith.constant 0 : i32
    %c0_i32_0 = arith.constant 0 : i32
    %c0_i32_1 = arith.constant 0 : i32
    return %c0_i32, %c0_i32_0 : i32, i32
  }
  func.func @transform_11(%arg0: i32) -> (i32, i32) {
    %c0_i32 = arith.constant 0 : i32
    %c0_i32_0 = arith.constant 0 : i32
    %c0_i32_1 = arith.constant 0 : i32
    return %c0_i32, %c0_i32_0 : i32, i32
  }
  func.func @transform_12(%arg0: i32) -> (i32, i32, i32) {
    %c0_i32 = arith.constant 0 : i32
    %c0_i32_0 = arith.constant 0 : i32
    %c0_i32_1 = arith.constant 0 : i32
    %c0_i32_2 = arith.constant 0 : i32
    return %c0_i32, %c0_i32_0, %c0_i32_1 : i32, i32, i32
  }
  func.func @transform_13(%arg0: i32) -> (i32, i32, i32) {
    %c0_i32 = arith.constant 0 : i32
    %c0_i32_0 = arith.constant 0 : i32
    %c0_i32_1 = arith.constant 0 : i32
    %c0_i32_2 = arith.constant 0 : i32
    return %c0_i32, %c0_i32_0, %c0_i32_1 : i32, i32, i32
  }
  func.func @transform_14(%arg0: i32) -> (i32, i32) {
    %c0_i32 = arith.constant 0 : i32
    %c0_i32_0 = arith.constant 0 : i32
    %c0_i32_1 = arith.constant 0 : i32
    return %c0_i32, %c0_i32_0 : i32, i32
  }
  func.func @transform_15(%arg0: i32) -> (i32, i32) {
    %c0_i32 = arith.constant 0 : i32
    %c0_i32_0 = arith.constant 0 : i32
    %c0_i32_1 = arith.constant 0 : i32
    return %c0_i32, %c0_i32_0 : i32, i32
  }
  func.func @transform_16(%arg0: i32) -> (i32, i32) {
    %c0_i32 = arith.constant 0 : i32
    %c0_i32_0 = arith.constant 0 : i32
    %c0_i32_1 = arith.constant 0 : i32
    return %c0_i32, %c0_i32_0 : i32, i32
  }
  func.func @transform_17(%arg0: i32) -> (i32, i32) {
    %c0_i32 = arith.constant 0 : i32
    %c0_i32_0 = arith.constant 0 : i32
    %c0_i32_1 = arith.constant 0 : i32
    return %c0_i32, %c0_i32_0 : i32, i32
  }
  func.func @transform_18(%arg0: i32) -> (i32, i32, i32) {
    %c0_i32 = arith.constant 0 : i32
    %c0_i32_0 = arith.constant 0 : i32
    %c0_i32_1 = arith.constant 0 : i32
    return %arg0, %c0_i32, %c0_i32_0 : i32, i32, i32
  }
}

</mosaic_0001>

<llo_original>
// kernel: pretrain_forward.1
$region0: #{pretrain_forward.1}
  #allocation0 [shape = 'u32[]', space=smem, size = 0x4, offset = 0x4, fixed_abs, tag = 'smem constant byte address 0x4 - core index']
  #allocation1 [shape = 'u32[144,128]{1,0:T(1,128)}', space=vmem, size = 0x12000, scoped, tag = 'internal scratch']
  %s0 = inlined_call_operand.vmem [shape: bf16[2,342,8], index: 0, kind: input, shape index: {}]
  %s1 = inlined_call_operand.vmem [shape: bf16[9,8,32], index: 1, kind: input, shape index: {}]
  %s2 = inlined_call_operand.vmem [shape: f32[1,32], index: 2, kind: input, shape index: {}]
  %s3 = inlined_call_operand.vmem [shape: f32[1,32], index: 3, kind: input, shape index: {}]
  %s4 = inlined_call_operand.vmem [shape: bf16[4,110,288], index: 4, kind: input, shape index: {}]
  %s5 = inlined_call_operand.vmem [shape: bf16[9,32,32], index: 5, kind: input, shape index: {}]
  %s6 = inlined_call_operand.vmem [shape: f32[1,32], index: 6, kind: input, shape index: {}]
  %s7 = inlined_call_operand.vmem [shape: f32[1,32], index: 7, kind: input, shape index: {}]
  %s8 = inlined_call_operand.vmem [shape: bf16[4,42,80], index: 8, kind: input, shape index: {}]
  %s9 = inlined_call_operand.vmem [shape: bf16[9,32,32], index: 9, kind: input, shape index: {}]
  %s10 = inlined_call_operand.vmem [shape: f32[1,32], index: 10, kind: input, shape index: {}]
  %s11 = inlined_call_operand.vmem [shape: f32[1,32], index: 11, kind: input, shape index: {}]
  %s12 = inlined_call_operand.vmem [shape: bf16[4,20,24], index: 12, kind: input, shape index: {}]
  %s13 = inlined_call_operand.vmem [shape: bf16[9,32,32], index: 13, kind: input, shape index: {}]
  %s14 = inlined_call_operand.vmem [shape: f32[1,32], index: 14, kind: input, shape index: {}]
  %s15 = inlined_call_operand.vmem [shape: f32[1,32], index: 15, kind: input, shape index: {}]
  %s16 = inlined_call_operand.vmem [shape: bf16[32,5], index: 16, kind: input, shape index: {}]
  %s17 = inlined_call_operand.vmem [shape: f32[1,5], index: 17, kind: input, shape index: {}]
  %s18 = inlined_call_operand.hbm [shape: f32[2,1,5], index: 18, kind: output, shape index: {}]
  %s19 = sld [smem:[#allocation0]]
  $region105: #{pretrain_forward.1} parent=0
    _
  %s21 = ssub.s32 1, %s19
  %s22 = scalar_select 0, %s21, %s19
  $region1: #{pretrain_forward.1} parent=0
    #allocation2 [shape = 'u8[1024]{0}', space=vmem, size = 0x400, scoped, tag = 'output window, operand 0']
    #allocation3 [shape = 's32[2]{0}', space=sflag, size = 0x8, scoped, tag = 'scoped memory for pretrain_forward.1']
    %23 = vsyncpa [#allocation3], 0
    %s24 = scalar_lea.sflag [#allocation3], 1
    %25 = vsyncpa %s24, 0
    loop: start=0, step=1, limit=4
    $region2: #{pretrain_forward.1} parent=1 // loop_pre_header
      _
    $region3: #{pretrain_forward.1} parent=1 // loop_header
      %s27 = sphi 0, %s31
      %p28 = scmp.ge.s32.totalorder %s27, 4
      %s37 = sphi 0, %s39
      %s40 = sphi 0, %s37
      %s41 = sphi 0, %s40
      %s57 = sphi 0, %s41
      %s61 = sphi 0, %s61
      %s63 = sphi 0, %s61
      %s64 = sphi 0, %s63
      %s78 = sphi 0, %s64
      %s82 = sphi 0, %s82
      %s84 = sphi 0, %s82
      %s85 = sphi 0, %s84
      %s99 = sphi 0, %s85
      %s103 = sphi 0, %s103
      %s105 = sphi 0, %s103
      %s106 = sphi 0, %s105
      %s120 = sphi 0, %s106
      %s124 = sphi 0, %s124
      %s126 = sphi 0, %s124
      %s127 = sphi 0, %s126
      %s141 = sphi 0, %s127
      %s145 = sphi 0, %s145
      %s147 = sphi 0, %s145
      %s148 = sphi 0, %s147
      %s162 = sphi 0, %s148
      %s166 = sphi 0, %s166
      %s168 = sphi 0, %s166
      %s169 = sphi 0, %s168
      %s183 = sphi 0, %s169
      %s187 = sphi 0, %s187
      %s189 = sphi 0, %s187
      %s190 = sphi 0, %s189
      %s204 = sphi 0, %s190
      %s208 = sphi 0, %s208
      %s210 = sphi 0, %s208
      %s211 = sphi 0, %s210
      %s225 = sphi 0, %s211
      %s229 = sphi 0, %s229
      %s231 = sphi 0, %s229
      %s232 = sphi 0, %s231
      %s246 = sphi 0, %s232
      %s250 = sphi 0, %s250
      %s252 = sphi 0, %s250
      %s253 = sphi 0, %s252
      %s267 = sphi 0, %s253
      %s271 = sphi 0, %s271
      %s273 = sphi 0, %s271
      %s274 = sphi 0, %s273
      %s288 = sphi 0, %s274
      %s292 = sphi 0, %s292
      %s294 = sphi 0, %s292
      %s295 = sphi 0, %s294
      %s309 = sphi 0, %s295
      %s313 = sphi 0, %s313
      %s315 = sphi 0, %s313
      %s316 = sphi 0, %s315
      %s330 = sphi 0, %s316
      %s334 = sphi 0, %s334
      %s336 = sphi 0, %s334
      %s337 = sphi 0, %s336
      %s351 = sphi 0, %s337
      %s355 = sphi 0, %s355
      %s357 = sphi 0, %s355
      %s358 = sphi 0, %s357
      %s372 = sphi 0, %s358
      %s376 = sphi 0, %s376
      %s378 = sphi 0, %s376
      %s379 = sphi 0, %s378
      %s393 = sphi 0, %s379
      %s397 = sphi 0, %s397
      %s399 = sphi 0, %s397
      %s400 = sphi 0, %s399
      %s414 = sphi 0, %s400
      %s420 = sphi 0, %s422
      %s423 = sphi 0, %s420
      %s424 = sphi 0, %s423
      %s440 = sphi 0, %s424
    $region4: #{pretrain_forward.1} parent=1 // loop_header_branch
      %30 = sbr.rel (%p28) target = $region8
    $region5: #{pretrain_forward.1} parent=1 // loop_body
      %s32 = ssub.s32 %s27, 1
      %s33 = ssub.s32 %s27, 2
      %s34 = sadd.s32 %s27, 1
      %s35 = ssub.s32 %s27, %s34
      %p36 = scmp.eq.s32.totalorder %s35, 0
      %s38 = sadd.s32 %s37, 1
      %s39 = scalar_select %p36, %s37, %s38
      %p42 = pneg %p36
      %p43 = scmp.eq.s32.totalorder %s27, 1
      %p44 = por %p42, %p43
      %p45 = scmp.ne.s32.totalorder %s37, %s40
      %p46 = scmp.eq.s32.totalorder %s27, 0
      %p47 = por %p45, %p46
      %p48 = scmp.ne.s32.totalorder %s37, %s40
      %p49 = scmp.eq.s32.totalorder %s32, 1
      %p50 = por %p48, %p49
      %p51 = scmp.ne.s32.totalorder %s40, %s41
      %p52 = scmp.eq.s32.totalorder %s32, 0
      %p53 = por %p51, %p52
      %p54 = scmp.ne.s32.totalorder %s40, %s41
      %p55 = scmp.eq.s32.totalorder %s33, 1
      %p56 = por %p54, %p55
      %p58 = scmp.ne.s32.totalorder %s41, %s57
      %p59 = scmp.eq.s32.totalorder %s33, 0
      %p60 = por %p58, %p59
      %s62 = sadd.s32 %s61, 1
      %p65 = scmp.eq.s32.totalorder %s27, 1
      %p66 = scmp.ne.s32.totalorder %s61, %s63
      %p67 = scmp.eq.s32.totalorder %s27, 0
      %p68 = por %p66, %p67
      %p69 = scmp.ne.s32.totalorder %s61, %s63
      %p70 = scmp.eq.s32.totalorder %s32, 1
      %p71 = por %p69, %p70
      %p72 = scmp.ne.s32.totalorder %s63, %s64
      %p73 = scmp.eq.s32.totalorder %s32, 0
      %p74 = por %p72, %p73
      %p75 = scmp.ne.s32.totalorder %s63, %s64
      %p76 = scmp.eq.s32.totalorder %s33, 1
      %p77 = por %p75, %p76
      %p79 = scmp.ne.s32.totalorder %s64, %s78
      %p80 = scmp.eq.s32.totalorder %s33, 0
      %p81 = por %p79, %p80
      %s83 = sadd.s32 %s82, 1
      %p86 = scmp.eq.s32.totalorder %s27, 1
      %p87 = scmp.ne.s32.totalorder %s82, %s84
      %p88 = scmp.eq.s32.totalorder %s27, 0
      %p89 = por %p87, %p88
      %p90 = scmp.ne.s32.totalorder %s82, %s84
      %p91 = scmp.eq.s32.totalorder %s32, 1
      %p92 = por %p90, %p91
      %p93 = scmp.ne.s32.totalorder %s84, %s85
      %p94 = scmp.eq.s32.totalorder %s32, 0
      %p95 = por %p93, %p94
      %p96 = scmp.ne.s32.totalorder %s84, %s85
      %p97 = scmp.eq.s32.totalorder %s33, 1
      %p98 = por %p96, %p97
      %p100 = scmp.ne.s32.totalorder %s85, %s99
      %p101 = scmp.eq.s32.totalorder %s33, 0
      %p102 = por %p100, %p101
      %s104 = sadd.s32 %s103, 1
      %p107 = scmp.eq.s32.totalorder %s27, 1
      %p108 = scmp.ne.s32.totalorder %s103, %s105
      %p109 = scmp.eq.s32.totalorder %s27, 0
      %p110 = por %p108, %p109
      %p111 = scmp.ne.s32.totalorder %s103, %s105
      %p112 = scmp.eq.s32.totalorder %s32, 1
      %p113 = por %p111, %p112
      %p114 = scmp.ne.s32.totalorder %s105, %s106
      %p115 = scmp.eq.s32.totalorder %s32, 0
      %p116 = por %p114, %p115
      %p117 = scmp.ne.s32.totalorder %s105, %s106
      %p118 = scmp.eq.s32.totalorder %s33, 1
      %p119 = por %p117, %p118
      %p121 = scmp.ne.s32.totalorder %s106, %s120
      %p122 = scmp.eq.s32.totalorder %s33, 0
      %p123 = por %p121, %p122
      %s125 = sadd.s32 %s124, 1
      %p128 = scmp.eq.s32.totalorder %s27, 1
      %p129 = scmp.ne.s32.totalorder %s124, %s126
      %p130 = scmp.eq.s32.totalorder %s27, 0
      %p131 = por %p129, %p130
      %p132 = scmp.ne.s32.totalorder %s124, %s126
      %p133 = scmp.eq.s32.totalorder %s32, 1
      %p134 = por %p132, %p133
      %p135 = scmp.ne.s32.totalorder %s126, %s127
      %p136 = scmp.eq.s32.totalorder %s32, 0
      %p137 = por %p135, %p136
      %p138 = scmp.ne.s32.totalorder %s126, %s127
      %p139 = scmp.eq.s32.totalorder %s33, 1
      %p140 = por %p138, %p139
      %p142 = scmp.ne.s32.totalorder %s127, %s141
      %p143 = scmp.eq.s32.totalorder %s33, 0
      %p144 = por %p142, %p143
      %s146 = sadd.s32 %s145, 1
      %p149 = scmp.eq.s32.totalorder %s27, 1
      %p150 = scmp.ne.s32.totalorder %s145, %s147
      %p151 = scmp.eq.s32.totalorder %s27, 0
      %p152 = por %p150, %p151
      %p153 = scmp.ne.s32.totalorder %s145, %s147
      %p154 = scmp.eq.s32.totalorder %s32, 1
      %p155 = por %p153, %p154
      %p156 = scmp.ne.s32.totalorder %s147, %s148
      %p157 = scmp.eq.s32.totalorder %s32, 0
      %p158 = por %p156, %p157
      %p159 = scmp.ne.s32.totalorder %s147, %s148
      %p160 = scmp.eq.s32.totalorder %s33, 1
      %p161 = por %p159, %p160
      %p163 = scmp.ne.s32.totalorder %s148, %s162
      %p164 = scmp.eq.s32.totalorder %s33, 0
      %p165 = por %p163, %p164
      %s167 = sadd.s32 %s166, 1
      %p170 = scmp.eq.s32.totalorder %s27, 1
      %p171 = scmp.ne.s32.totalorder %s166, %s168
      %p172 = scmp.eq.s32.totalorder %s27, 0
      %p173 = por %p171, %p172
      %p174 = scmp.ne.s32.totalorder %s166, %s168
      %p175 = scmp.eq.s32.totalorder %s32, 1
      %p176 = por %p174, %p175
      %p177 = scmp.ne.s32.totalorder %s168, %s169
      %p178 = scmp.eq.s32.totalorder %s32, 0
      %p179 = por %p177, %p178
      %p180 = scmp.ne.s32.totalorder %s168, %s169
      %p181 = scmp.eq.s32.totalorder %s33, 1
      %p182 = por %p180, %p181
      %p184 = scmp.ne.s32.totalorder %s169, %s183
      %p185 = scmp.eq.s32.totalorder %s33, 0
      %p186 = por %p184, %p185
      %s188 = sadd.s32 %s187, 1
      %p191 = scmp.eq.s32.totalorder %s27, 1
      %p192 = scmp.ne.s32.totalorder %s187, %s189
      %p193 = scmp.eq.s32.totalorder %s27, 0
      %p194 = por %p192, %p193
      %p195 = scmp.ne.s32.totalorder %s187, %s189
      %p196 = scmp.eq.s32.totalorder %s32, 1
      %p197 = por %p195, %p196
      %p198 = scmp.ne.s32.totalorder %s189, %s190
      %p199 = scmp.eq.s32.totalorder %s32, 0
      %p200 = por %p198, %p199
      %p201 = scmp.ne.s32.totalorder %s189, %s190
      %p202 = scmp.eq.s32.totalorder %s33, 1
      %p203 = por %p201, %p202
      %p205 = scmp.ne.s32.totalorder %s190, %s204
      %p206 = scmp.eq.s32.totalorder %s33, 0
      %p207 = por %p205, %p206
      %s209 = sadd.s32 %s208, 1
      %p212 = scmp.eq.s32.totalorder %s27, 1
      %p213 = scmp.ne.s32.totalorder %s208, %s210
      %p214 = scmp.eq.s32.totalorder %s27, 0
      %p215 = por %p213, %p214
      %p216 = scmp.ne.s32.totalorder %s208, %s210
      %p217 = scmp.eq.s32.totalorder %s32, 1
      %p218 = por %p216, %p217
      %p219 = scmp.ne.s32.totalorder %s210, %s211
      %p220 = scmp.eq.s32.totalorder %s32, 0
      %p221 = por %p219, %p220
      %p222 = scmp.ne.s32.totalorder %s210, %s211
      %p223 = scmp.eq.s32.totalorder %s33, 1
      %p224 = por %p222, %p223
      %p226 = scmp.ne.s32.totalorder %s211, %s225
      %p227 = scmp.eq.s32.totalorder %s33, 0
      %p228 = por %p226, %p227
      %s230 = sadd.s32 %s229, 1
      %p233 = scmp.eq.s32.totalorder %s27, 1
      %p234 = scmp.ne.s32.totalorder %s229, %s231
      %p235 = scmp.eq.s32.totalorder %s27, 0
      %p236 = por %p234, %p235
      %p237 = scmp.ne.s32.totalorder %s229, %s231
      %p238 = scmp.eq.s32.totalorder %s32, 1
      %p239 = por %p237, %p238
      %p240 = scmp.ne.s32.totalorder %s231, %s232
      %p241 = scmp.eq.s32.totalorder %s32, 0
      %p242 = por %p240, %p241
      %p243 = scmp.ne.s32.totalorder %s231, %s232
      %p244 = scmp.eq.s32.totalorder %s33, 1
      %p245 = por %p243, %p244
      %p247 = scmp.ne.s32.totalorder %s232, %s246
      %p248 = scmp.eq.s32.totalorder %s33, 0
      %p249 = por %p247, %p248
      %s251 = sadd.s32 %s250, 1
      %p254 = scmp.eq.s32.totalorder %s27, 1
      %p255 = scmp.ne.s32.totalorder %s250, %s252
      %p256 = scmp.eq.s32.totalorder %s27, 0
      %p257 = por %p255, %p256
      %p258 = scmp.ne.s32.totalorder %s250, %s252
      %p259 = scmp.eq.s32.totalorder %s32, 1
      %p260 = por %p258, %p259
      %p261 = scmp.ne.s32.totalorder %s252, %s253
      %p262 = scmp.eq.s32.totalorder %s32, 0
      %p263 = por %p261, %p262
      %p264 = scmp.ne.s32.totalorder %s252, %s253
      %p265 = scmp.eq.s32.totalorder %s33, 1
      %p266 = por %p264, %p265
      %p268 = scmp.ne.s32.totalorder %s253, %s267
      %p269 = scmp.eq.s32.totalorder %s33, 0
      %p270 = por %p268, %p269
      %s272 = sadd.s32 %s271, 1
      %p275 = scmp.eq.s32.totalorder %s27, 1
      %p276 = scmp.ne.s32.totalorder %s271, %s273
      %p277 = scmp.eq.s32.totalorder %s27, 0
      %p278 = por %p276, %p277
      %p279 = scmp.ne.s32.totalorder %s271, %s273
      %p280 = scmp.eq.s32.totalorder %s32, 1
      %p281 = por %p279, %p280
      %p282 = scmp.ne.s32.totalorder %s273, %s274
      %p283 = scmp.eq.s32.totalorder %s32, 0
      %p284 = por %p282, %p283
      %p285 = scmp.ne.s32.totalorder %s273, %s274
      %p286 = scmp.eq.s32.totalorder %s33, 1
      %p287 = por %p285, %p286
      %p289 = scmp.ne.s32.totalorder %s274, %s288
      %p290 = scmp.eq.s32.totalorder %s33, 0
      %p291 = por %p289, %p290
      %s293 = sadd.s32 %s292, 1
      %p296 = scmp.eq.s32.totalorder %s27, 1
      %p297 = scmp.ne.s32.totalorder %s292, %s294
      %p298 = scmp.eq.s32.totalorder %s27, 0
      %p299 = por %p297, %p298
      %p300 = scmp.ne.s32.totalorder %s292, %s294
      %p301 = scmp.eq.s32.totalorder %s32, 1
      %p302 = por %p300, %p301
      %p303 = scmp.ne.s32.totalorder %s294, %s295
      %p304 = scmp.eq.s32.totalorder %s32, 0
      %p305 = por %p303, %p304
      %p306 = scmp.ne.s32.totalorder %s294, %s295
      %p307 = scmp.eq.s32.totalorder %s33, 1
      %p308 = por %p306, %p307
      %p310 = scmp.ne.s32.totalorder %s295, %s309
      %p311 = scmp.eq.s32.totalorder %s33, 0
      %p312 = por %p310, %p311
      %s314 = sadd.s32 %s313, 1
      %p317 = scmp.eq.s32.totalorder %s27, 1
      %p318 = scmp.ne.s32.totalorder %s313, %s315
      %p319 = scmp.eq.s32.totalorder %s27, 0
      %p320 = por %p318, %p319
      %p321 = scmp.ne.s32.totalorder %s313, %s315
      %p322 = scmp.eq.s32.totalorder %s32, 1
      %p323 = por %p321, %p322
      %p324 = scmp.ne.s32.totalorder %s315, %s316
      %p325 = scmp.eq.s32.totalorder %s32, 0
      %p326 = por %p324, %p325
      %p327 = scmp.ne.s32.totalorder %s315, %s316
      %p328 = scmp.eq.s32.totalorder %s33, 1
      %p329 = por %p327, %p328
      %p331 = scmp.ne.s32.totalorder %s316, %s330
      %p332 = scmp.eq.s32.totalorder %s33, 0
      %p333 = por %p331, %p332
      %s335 = sadd.s32 %s334, 1
      %p338 = scmp.eq.s32.totalorder %s27, 1
      %p339 = scmp.ne.s32.totalorder %s334, %s336
      %p340 = scmp.eq.s32.totalorder %s27, 0
      %p341 = por %p339, %p340
      %p342 = scmp.ne.s32.totalorder %s334, %s336
      %p343 = scmp.eq.s32.totalorder %s32, 1
      %p344 = por %p342, %p343
      %p345 = scmp.ne.s32.totalorder %s336, %s337
      %p346 = scmp.eq.s32.totalorder %s32, 0
      %p347 = por %p345, %p346
      %p348 = scmp.ne.s32.totalorder %s336, %s337
      %p349 = scmp.eq.s32.totalorder %s33, 1
      %p350 = por %p348, %p349
      %p352 = scmp.ne.s32.totalorder %s337, %s351
      %p353 = scmp.eq.s32.totalorder %s33, 0
      %p354 = por %p352, %p353
      %s356 = sadd.s32 %s355, 1
      %p359 = scmp.eq.s32.totalorder %s27, 1
      %p360 = scmp.ne.s32.totalorder %s355, %s357
      %p361 = scmp.eq.s32.totalorder %s27, 0
      %p362 = por %p360, %p361
      %p363 = scmp.ne.s32.totalorder %s355, %s357
      %p364 = scmp.eq.s32.totalorder %s32, 1
      %p365 = por %p363, %p364
      %p366 = scmp.ne.s32.totalorder %s357, %s358
      %p367 = scmp.eq.s32.totalorder %s32, 0
      %p368 = por %p366, %p367
      %p369 = scmp.ne.s32.totalorder %s357, %s358
      %p370 = scmp.eq.s32.totalorder %s33, 1
      %p371 = por %p369, %p370
      %p373 = scmp.ne.s32.totalorder %s358, %s372
      %p374 = scmp.eq.s32.totalorder %s33, 0
      %p375 = por %p373, %p374
      %s377 = sadd.s32 %s376, 1
      %p380 = scmp.eq.s32.totalorder %s27, 1
      %p381 = scmp.ne.s32.totalorder %s376, %s378
      %p382 = scmp.eq.s32.totalorder %s27, 0
      %p383 = por %p381, %p382
      %p384 = scmp.ne.s32.totalorder %s376, %s378
      %p385 = scmp.eq.s32.totalorder %s32, 1
      %p386 = por %p384, %p385
      %p387 = scmp.ne.s32.totalorder %s378, %s379
      %p388 = scmp.eq.s32.totalorder %s32, 0
      %p389 = por %p387, %p388
      %p390 = scmp.ne.s32.totalorder %s378, %s379
      %p391 = scmp.eq.s32.totalorder %s33, 1
      %p392 = por %p390, %p391
      %p394 = scmp.ne.s32.totalorder %s379, %s393
      %p395 = scmp.eq.s32.totalorder %s33, 0
      %p396 = por %p394, %p395
      %s398 = sadd.s32 %s397, 1
      %p401 = scmp.eq.s32.totalorder %s27, 1
      %p402 = scmp.ne.s32.totalorder %s397, %s399
      %p403 = scmp.eq.s32.totalorder %s27, 0
      %p404 = por %p402, %p403
      %p405 = scmp.ne.s32.totalorder %s397, %s399
      %p406 = scmp.eq.s32.totalorder %s32, 1
      %p407 = por %p405, %p406
      %p408 = scmp.ne.s32.totalorder %s399, %s400
      %p409 = scmp.eq.s32.totalorder %s32, 0
      %p410 = por %p408, %p409
      %p411 = scmp.ne.s32.totalorder %s399, %s400
      %p412 = scmp.eq.s32.totalorder %s33, 1
      %p413 = por %p411, %p412
      %p415 = scmp.ne.s32.totalorder %s400, %s414
      %p416 = scmp.eq.s32.totalorder %s33, 0
      %p417 = por %p415, %p416
      %s418 = ssub.s32 %s27, %s34
      %p419 = scmp.eq.s32.totalorder %s418, 0
      %s421 = sadd.s32 %s420, 1
      %s422 = scalar_select %p419, %s420, %s421
      %p425 = pneg %p419
      %p426 = scmp.eq.s32.totalorder %s27, 1
      %p427 = por %p425, %p426
      %p428 = scmp.ne.s32.totalorder %s420, %s423
      %p429 = scmp.eq.s32.totalorder %s27, 0
      %p430 = por %p428, %p429
      %p431 = scmp.ne.s32.totalorder %s420, %s423
      %p432 = scmp.eq.s32.totalorder %s32, 1
      %p433 = por %p431, %p432
      %p434 = scmp.ne.s32.totalorder %s423, %s424
      %p435 = scmp.eq.s32.totalorder %s32, 0
      %p436 = por %p434, %p435
      %p437 = scmp.ne.s32.totalorder %s423, %s424
      %p438 = scmp.eq.s32.totalorder %s33, 1
      %p439 = por %p437, %p438
      %p441 = scmp.ne.s32.totalorder %s424, %s440
      %p442 = scmp.eq.s32.totalorder %s33, 0
      %p443 = por %p441, %p442
      %p444 = scmp.le.s32.totalorder 1, %s27
      %p445 = scmp.lt.s32.totalorder %s27, 3
      %p446 = pnand %p444, %p445
      %p447 = pneg %p446
      // Predicated region
      $region9: #{pretrain_forward.1} parent=5 // pred_check
        _
      $region10: #{pretrain_forward.1} parent=5 // pred_check_branch
        %449 = sbr.rel (%p446) target = $region12
      $region11: #{pretrain_forward.1} parent=5 // pred_region
        %s450 = ssub.s32 %s27, 1
        // Predicated region
        $region13: #{pretrain_forward.1} parent=11 // pred_check
          %p451 = pneg %p74
        $region14: #{pretrain_forward.1} parent=11 // pred_check_branch
          %453 = sbr.rel (%p451) target = $region16
        $region15: #{pretrain_forward.1} parent=11 // pred_region
          _
        $region16: #{pretrain_forward.1} parent=11 // pred_fallthru
          _
        // Predicated region
        $region17: #{pretrain_forward.1} parent=11 // pred_check
          %p454 = pneg %p95
        $region18: #{pretrain_forward.1} parent=11 // pred_check_branch
          %456 = sbr.rel (%p454) target = $region20
        $region19: #{pretrain_forward.1} parent=11 // pred_region
          _
        $region20: #{pretrain_forward.1} parent=11 // pred_fallthru
          _
        // Predicated region
        $region21: #{pretrain_forward.1} parent=11 // pred_check
          %p457 = pneg %p116
        $region22: #{pretrain_forward.1} parent=11 // pred_check_branch
          %459 = sbr.rel (%p457) target = $region24
        $region23: #{pretrain_forward.1} parent=11 // pred_region
          _
        $region24: #{pretrain_forward.1} parent=11 // pred_fallthru
          _
        // Predicated region
        $region25: #{pretrain_forward.1} parent=11 // pred_check
          %p460 = pneg %p137
        $region26: #{pretrain_forward.1} parent=11 // pred_check_branch
          %462 = sbr.rel (%p460) target = $region28
        $region27: #{pretrain_forward.1} parent=11 // pred_region
          _
        $region28: #{pretrain_forward.1} parent=11 // pred_fallthru
          _
        // Predicated region
        $region29: #{pretrain_forward.1} parent=11 // pred_check
          %p463 = pneg %p158
        $region30: #{pretrain_forward.1} parent=11 // pred_check_branch
          %465 = sbr.rel (%p463) target = $region32
        $region31: #{pretrain_forward.1} parent=11 // pred_region
          _
        $region32: #{pretrain_forward.1} parent=11 // pred_fallthru
          _
        // Predicated region
        $region33: #{pretrain_forward.1} parent=11 // pred_check
          %p466 = pneg %p179
        $region34: #{pretrain_forward.1} parent=11 // pred_check_branch
          %468 = sbr.rel (%p466) target = $region36
        $region35: #{pretrain_forward.1} parent=11 // pred_region
          _
        $region36: #{pretrain_forward.1} parent=11 // pred_fallthru
          _
        // Predicated region
        $region37: #{pretrain_forward.1} parent=11 // pred_check
          %p469 = pneg %p200
        $region38: #{pretrain_forward.1} parent=11 // pred_check_branch
          %471 = sbr.rel (%p469) target = $region40
        $region39: #{pretrain_forward.1} parent=11 // pred_region
          _
        $region40: #{pretrain_forward.1} parent=11 // pred_fallthru
          _
        // Predicated region
        $region41: #{pretrain_forward.1} parent=11 // pred_check
          %p472 = pneg %p221
        $region42: #{pretrain_forward.1} parent=11 // pred_check_branch
          %474 = sbr.rel (%p472) target = $region44
        $region43: #{pretrain_forward.1} parent=11 // pred_region
          _
        $region44: #{pretrain_forward.1} parent=11 // pred_fallthru
          _
        // Predicated region
        $region45: #{pretrain_forward.1} parent=11 // pred_check
          %p475 = pneg %p242
        $region46: #{pretrain_forward.1} parent=11 // pred_check_branch
          %477 = sbr.rel (%p475) target = $region48
        $region47: #{pretrain_forward.1} parent=11 // pred_region
          _
        $region48: #{pretrain_forward.1} parent=11 // pred_fallthru
          _
        // Predicated region
        $region49: #{pretrain_forward.1} parent=11 // pred_check
          %p478 = pneg %p263
        $region50: #{pretrain_forward.1} parent=11 // pred_check_branch
          %480 = sbr.rel (%p478) target = $region52
        $region51: #{pretrain_forward.1} parent=11 // pred_region
          _
        $region52: #{pretrain_forward.1} parent=11 // pred_fallthru
          _
        // Predicated region
        $region53: #{pretrain_forward.1} parent=11 // pred_check
          %p481 = pneg %p284
        $region54: #{pretrain_forward.1} parent=11 // pred_check_branch
          %483 = sbr.rel (%p481) target = $region56
        $region55: #{pretrain_forward.1} parent=11 // pred_region
          _
        $region56: #{pretrain_forward.1} parent=11 // pred_fallthru
          _
        // Predicated region
        $region57: #{pretrain_forward.1} parent=11 // pred_check
          %p484 = pneg %p305
        $region58: #{pretrain_forward.1} parent=11 // pred_check_branch
          %486 = sbr.rel (%p484) target = $region60
        $region59: #{pretrain_forward.1} parent=11 // pred_region
          _
        $region60: #{pretrain_forward.1} parent=11 // pred_fallthru
          _
        // Predicated region
        $region61: #{pretrain_forward.1} parent=11 // pred_check
          %p487 = pneg %p326
        $region62: #{pretrain_forward.1} parent=11 // pred_check_branch
          %489 = sbr.rel (%p487) target = $region64
        $region63: #{pretrain_forward.1} parent=11 // pred_region
          _
        $region64: #{pretrain_forward.1} parent=11 // pred_fallthru
          _
        // Predicated region
        $region65: #{pretrain_forward.1} parent=11 // pred_check
          %p490 = pneg %p347
        $region66: #{pretrain_forward.1} parent=11 // pred_check_branch
          %492 = sbr.rel (%p490) target = $region68
        $region67: #{pretrain_forward.1} parent=11 // pred_region
          _
        $region68: #{pretrain_forward.1} parent=11 // pred_fallthru
          _
        // Predicated region
        $region69: #{pretrain_forward.1} parent=11 // pred_check
          %p493 = pneg %p368
        $region70: #{pretrain_forward.1} parent=11 // pred_check_branch
          %495 = sbr.rel (%p493) target = $region72
        $region71: #{pretrain_forward.1} parent=11 // pred_region
          _
        $region72: #{pretrain_forward.1} parent=11 // pred_fallthru
          _
        // Predicated region
        $region73: #{pretrain_forward.1} parent=11 // pred_check
          %p496 = pneg %p389
        $region74: #{pretrain_forward.1} parent=11 // pred_check_branch
          %498 = sbr.rel (%p496) target = $region76
        $region75: #{pretrain_forward.1} parent=11 // pred_region
          _
        $region76: #{pretrain_forward.1} parent=11 // pred_fallthru
          _
        // Predicated region
        $region77: #{pretrain_forward.1} parent=11 // pred_check
          %p499 = pneg %p410
        $region78: #{pretrain_forward.1} parent=11 // pred_check_branch
          %501 = sbr.rel (%p499) target = $region80
        $region79: #{pretrain_forward.1} parent=11 // pred_region
          _
        $region80: #{pretrain_forward.1} parent=11 // pred_fallthru
          _
      $region12: #{pretrain_forward.1} parent=5 // pred_fallthru
        _
      %p502 = scmp.lt.s32.totalorder %s27, 2
      // Predicated region
      $region81: #{pretrain_forward.1} parent=5 // pred_check
        %p503 = pneg %p502
      $region82: #{pretrain_forward.1} parent=5 // pred_check_branch
        %505 = sbr.rel (%p503) target = $region84
      $region83: #{pretrain_forward.1} parent=5 // pred_region
        // Predicated region
        $region85: #{pretrain_forward.1} parent=83 // pred_check
          %p506 = pneg %p47
        $region86: #{pretrain_forward.1} parent=83 // pred_check_branch
          %508 = sbr.rel (%p506) target = $region88
        $region87: #{pretrain_forward.1} parent=83 // pred_region
          %p509 = scmp.lt.s32.totalorder %s27, 1
          %s510 = scalar_select %p509, %s27, 1
          %s511 = smul.addr %s510, 43
          %s512 = smul.addr %s511, 4
          %s513 = scalar_lea.vmem %s0, %s512
        $region88: #{pretrain_forward.1} parent=83 // pred_fallthru
          _
      $region84: #{pretrain_forward.1} parent=5 // pred_fallthru
        _
      %p514 = scmp.le.s32.totalorder 1, %s27
      %p515 = scmp.lt.s32.totalorder %s27, 3
      %p516 = pnand %p514, %p515
      %p517 = pneg %p516
      // Predicated region
      $region89: #{pretrain_forward.1} parent=5 // pred_check
        _
      $region90: #{pretrain_forward.1} parent=5 // pred_check_branch
        %519 = sbr.rel (%p516) target = $region92
      $region91: #{pretrain_forward.1} parent=5 // pred_region
        %s520 = ssub.s32 %s27, 1
        %p521 = scmp.lt.s32.totalorder %s32, 1
        %s522 = scalar_select %p521, %s32, 1
        %s523 = smul.addr %s522, 43
        %s524 = smul.addr %s523, 4
        %s525 = scalar_lea.vmem %s0, %s524
        %p526 = pneg %p53
        %p527 = pneg %p50
        %p528 = pneg %p74
        %p529 = pneg %p71
        %p530 = pneg %p95
        %p531 = pneg %p92
        %p532 = pneg %p116
        %p533 = pneg %p113
        %p534 = pneg %p137
        %p535 = pneg %p134
        %p536 = pneg %p158
        %p537 = pneg %p155
        %p538 = pneg %p179
        %p539 = pneg %p176
        %p540 = pneg %p200
        %p541 = pneg %p197
        %p542 = pneg %p221
        %p543 = pneg %p218
        %p544 = pneg %p242
        %p545 = pneg %p239
        %p546 = pneg %p263
        %p547 = pneg %p260
        %p548 = pneg %p284
        %p549 = pneg %p281
        %p550 = pneg %p305
        %p551 = pneg %p302
        %p552 = pneg %p326
        %p553 = pneg %p323
        %p554 = pneg %p347
        %p555 = pneg %p344
        %p556 = pneg %p368
        %p557 = pneg %p365
        %p558 = pneg %p389
        %p559 = pneg %p386
        %p560 = pneg %p410
        %p561 = pneg %p407
        %p562 = pneg %p436
        %p563 = pneg %p433
        %s564 = sand.u32 %s423, 1
        %s565 = scalar_lea.sflag [#allocation3], %s564
        %s566 = sand.u32 %s423, 1
        %s567 = scalar_lea.vmem [#allocation2], %s566
        %p568 = scmp.lt.s32.totalorder %s32, 1
        %s569 = scalar_select %p568, %s32, 1
        %s570 = smul.addr %s569, 43
        %s571 = smul.addr %s570, 4
        %s572 = scalar_lea.vmem %s0, %s571
        %v574 = vld [vmem:[%s572] sm:$0xf]
        %v575 = vld [vmem:[%s572 + $0x4] sm:$0xf]
        %v576 = vld [vmem:[%s572 + $0x8] sm:$0xf]
        %v577 = vld [vmem:[%s572 + $0xc] sm:$0xf]
        %v578 = vld [vmem:[%s572 + $0x10] sm:$0xf]
        %v579 = vld [vmem:[%s572 + $0x14] sm:$0xf]
        %v580 = vld [vmem:[%s572 + $0x18] sm:$0xf]
        %v581 = vld [vmem:[%s572 + $0x1c] sm:$0xf]
        %v582 = vld [vmem:[%s572 + $0x20] sm:$0xf]
        %v583 = vld [vmem:[%s572 + $0x24] sm:$0xf]
        %v584 = vld [vmem:[%s572 + $0x28] sm:$0xf]
        %v585 = vld [vmem:[%s572 + $0x2c] sm:$0xf]
        %v586 = vld [vmem:[%s572 + $0x30] sm:$0xf]
        %v587 = vld [vmem:[%s572 + $0x34] sm:$0xf]
        %v588 = vld [vmem:[%s572 + $0x38] sm:$0xf]
        %v589 = vld [vmem:[%s572 + $0x3c] sm:$0xf]
        %v590 = vld [vmem:[%s572 + $0x40] sm:$0xf]
        %v591 = vld [vmem:[%s572 + $0x44] sm:$0xf]
        %v592 = vld [vmem:[%s572 + $0x48] sm:$0xf]
        %v593 = vld [vmem:[%s572 + $0x4c] sm:$0xf]
        %v594 = vld [vmem:[%s572 + $0x50] sm:$0xf]
        %v595 = vld [vmem:[%s572 + $0x54] sm:$0xf]
        %v596 = vld [vmem:[%s572 + $0x58] sm:$0xf]
        %v597 = vld [vmem:[%s572 + $0x5c] sm:$0xf]
        %v598 = vld [vmem:[%s572 + $0x60] sm:$0xf]
        %v599 = vld [vmem:[%s572 + $0x64] sm:$0xf]
        %v600 = vld [vmem:[%s572 + $0x68] sm:$0xf]
        %v601 = vld [vmem:[%s572 + $0x6c] sm:$0xf]
        %v602 = vld [vmem:[%s572 + $0x70] sm:$0xf]
        %v603 = vld [vmem:[%s572 + $0x74] sm:$0xf]
        %v604 = vld [vmem:[%s572 + $0x78] sm:$0xf]
        %v605 = vld [vmem:[%s572 + $0x7c] sm:$0xf]
        %v606 = vld [vmem:[%s572 + $0x80] sm:$0xf]
        %v607 = vld [vmem:[%s572 + $0x84] sm:$0xf]
        %v608 = vld [vmem:[%s572 + $0x88] sm:$0xf]
        %v609 = vld [vmem:[%s572 + $0x8c] sm:$0xf]
        %v610 = vld [vmem:[%s1] sm:$0xf]
        %v611 = vld [vmem:[%s572 + $0x90] sm:$0x1]
        %s612 = scalar_lea.vmem %s1, 4
        %v613 = vld [vmem:[%s612] sm:$0xf]
        %v651 = vunpack.c.l.b16 %v574
        %v652 = vunpack.c.l.b16 %v575
        %v653 = vunpack.c.l.b16 %v576
        %v654 = vunpack.c.l.b16 %v577
        %v655 = vunpack.c.l.b16 %v578
        %v656 = vunpack.c.l.b16 %v579
        %v657 = vunpack.c.l.b16 %v580
        %v658 = vunpack.c.l.b16 %v581
        %v659 = vunpack.c.l.b16 %v582
        %v660 = vunpack.c.l.b16 %v583
        %v661 = vunpack.c.l.b16 %v584
        %v662 = vunpack.c.l.b16 %v585
        %v663 = vunpack.c.l.b16 %v586
        %v664 = vunpack.c.l.b16 %v587
        %v665 = vunpack.c.l.b16 %v588
        %v666 = vunpack.c.l.b16 %v589
        %v667 = vunpack.c.l.b16 %v590
        %v668 = vunpack.c.l.b16 %v591
        %v669 = vunpack.c.l.b16 %v592
        %v670 = vunpack.c.l.b16 %v593
        %v671 = vunpack.c.l.b16 %v594
        %v672 = vunpack.c.l.b16 %v595
        %v673 = vunpack.c.l.b16 %v596
        %v674 = vunpack.c.l.b16 %v597
        %v675 = vunpack.c.l.b16 %v598
        %v676 = vunpack.c.l.b16 %v599
        %v677 = vunpack.c.l.b16 %v600
        %v678 = vunpack.c.l.b16 %v601
        %v679 = vunpack.c.l.b16 %v602
        %v680 = vunpack.c.l.b16 %v603
        %v681 = vunpack.c.l.b16 %v604
        %v682 = vunpack.c.l.b16 %v605
        %v683 = vunpack.c.l.b16 %v606
        %v684 = vunpack.c.l.b16 %v607
        %v685 = vunpack.c.l.b16 %v608
        %v686 = vunpack.c.l.b16 %v609
        %v687 = vunpack.c.l.b16 %v611
        %v688 = vpack.c.b16 %v652, %v651
        %v689 = vpack.c.b16 %v654, %v653
        %v690 = vpack.c.b16 %v656, %v655
        %v691 = vpack.c.b16 %v658, %v657
        %v692 = vpack.c.b16 %v660, %v659
        %v693 = vpack.c.b16 %v662, %v661
        %v694 = vpack.c.b16 %v664, %v663
        %v695 = vpack.c.b16 %v666, %v665
        %v696 = vpack.c.b16 %v668, %v667
        %v697 = vpack.c.b16 %v670, %v669
        %v698 = vpack.c.b16 %v672, %v671
        %v699 = vpack.c.b16 %v674, %v673
        %v700 = vpack.c.b16 %v676, %v675
        %v701 = vpack.c.b16 %v678, %v677
        %v702 = vpack.c.b16 %v680, %v679
        %v703 = vpack.c.b16 %v682, %v681
        %v704 = vpack.c.b16 %v684, %v683
        %v705 = vpack.c.b16 %v686, %v685
        %v706 = vpack.c.b16 %v687, %v687
        %vm707 = vsmask.f32 7424
        %v709 = vshrl.u32 %v688, 16
        %v711 = vshll.u32 %v688, 16
        %v713 = vrot.slane %v711, 1
        %v714 = vor.u32 %v709, %v713
        %v716 = vshll.u32 %v689, 16
        %v718 = vrot.slane %v716, 1
        %v719 = vsel %vm707, %v714, %v718
        %v720 = vshrl.u32 %v689, 16
        %v722 = vor.u32 %v720, %v718
        %v724 = vshll.u32 %v690, 16
        %v726 = vrot.slane %v724, 1
        %v727 = vsel %vm707, %v722, %v726
        %v728 = vshrl.u32 %v690, 16
        %v730 = vor.u32 %v728, %v726
        %v732 = vshll.u32 %v691, 16
        %v734 = vrot.slane %v732, 1
        %v735 = vsel %vm707, %v730, %v734
        %v736 = vshrl.u32 %v691, 16
        %v738 = vor.u32 %v736, %v734
        %v740 = vshll.u32 %v692, 16
        %v742 = vrot.slane %v740, 1
        %v743 = vsel %vm707, %v738, %v742
        %v744 = vshrl.u32 %v692, 16
        %v746 = vor.u32 %v744, %v742
        %v748 = vshll.u32 %v693, 16
        %v750 = vrot.slane %v748, 1
        %v751 = vsel %vm707, %v746, %v750
        %v752 = vshrl.u32 %v693, 16
        %v754 = vor.u32 %v752, %v750
        %v756 = vshll.u32 %v694, 16
        %v758 = vrot.slane %v756, 1
        %v759 = vsel %vm707, %v754, %v758
        %v760 = vshrl.u32 %v694, 16
        %v762 = vor.u32 %v760, %v758
        %v764 = vshll.u32 %v695, 16
        %v766 = vrot.slane %v764, 1
        %v767 = vsel %vm707, %v762, %v766
        %v768 = vshrl.u32 %v695, 16
        %v770 = vor.u32 %v768, %v766
        %v772 = vshll.u32 %v696, 16
        %v774 = vrot.slane %v772, 1
        %v775 = vsel %vm707, %v770, %v774
        %v776 = vshrl.u32 %v696, 16
        %v778 = vor.u32 %v776, %v774
        %v780 = vshll.u32 %v697, 16
        %v782 = vrot.slane %v780, 1
        %v783 = vsel %vm707, %v778, %v782
        %v784 = vshrl.u32 %v697, 16
        %v786 = vor.u32 %v784, %v782
        %v788 = vshll.u32 %v698, 16
        %v790 = vrot.slane %v788, 1
        %v791 = vsel %vm707, %v786, %v790
        %v792 = vshrl.u32 %v698, 16
        %v794 = vor.u32 %v792, %v790
        %v796 = vshll.u32 %v699, 16
        %v798 = vrot.slane %v796, 1
        %v799 = vsel %vm707, %v794, %v798
        %v800 = vshrl.u32 %v699, 16
        %v802 = vor.u32 %v800, %v798
        %v804 = vshll.u32 %v700, 16
        %v806 = vrot.slane %v804, 1
        %v807 = vsel %vm707, %v802, %v806
        %v808 = vshrl.u32 %v700, 16
        %v810 = vor.u32 %v808, %v806
        %v812 = vshll.u32 %v701, 16
        %v814 = vrot.slane %v812, 1
        %v815 = vsel %vm707, %v810, %v814
        %v816 = vshrl.u32 %v701, 16
        %v818 = vor.u32 %v816, %v814
        %v820 = vshll.u32 %v702, 16
        %v822 = vrot.slane %v820, 1
        %v823 = vsel %vm707, %v818, %v822
        %v824 = vshrl.u32 %v702, 16
        %v826 = vor.u32 %v824, %v822
        %v828 = vshll.u32 %v703, 16
        %v830 = vrot.slane %v828, 1
        %v831 = vsel %vm707, %v826, %v830
        %v832 = vshrl.u32 %v703, 16
        %v834 = vor.u32 %v832, %v830
        %v836 = vshll.u32 %v704, 16
        %v838 = vrot.slane %v836, 1
        %v839 = vsel %vm707, %v834, %v838
        %v840 = vshrl.u32 %v704, 16
        %v842 = vor.u32 %v840, %v838
        %v844 = vshll.u32 %v705, 16
        %v846 = vrot.slane %v844, 1
        %v847 = vsel %vm707, %v842, %v846
        %v848 = vshrl.u32 %v705, 16
        %v850 = vor.u32 %v848, %v846
        %v852 = vshll.u32 %v706, 16
        %v854 = vrot.slane %v852, 1
        %v855 = vsel %vm707, %v850, %v854
        %vm856 = vcmask 64512
        %v858 = vsel %vm856, %v719, 0
        %v861 = vsel %vm856, %v727, 0
        %v864 = vsel %vm856, %v735, 0
        %v867 = vsel %vm856, %v743, 0
        %v870 = vsel %vm856, %v751, 0
        %v873 = vsel %vm856, %v759, 0
        %v876 = vsel %vm856, %v767, 0
        %v879 = vsel %vm856, %v775, 0
        %v882 = vsel %vm856, %v783, 0
        %v885 = vsel %vm856, %v791, 0
        %v888 = vsel %vm856, %v799, 0
        %v891 = vsel %vm856, %v807, 0
        %v894 = vsel %vm856, %v815, 0
        %v897 = vsel %vm856, %v823, 0
        %v900 = vsel %vm856, %v831, 0
        %v903 = vsel %vm856, %v839, 0
        %v906 = vsel %vm856, %v847, 0
        %v909 = vsel %vm856, %v855, 0
        %vm911 = vcmask 1043456
        %v913 = vsel %vm911, %v613, 0
        %915 = vmatprep.subr.bf16.mxu0 0
        %916 = vmatpush1.bf16.msra.mxu0 %v913
        %917 = vmatprep.subr.bf16.mxu0 0
        %918 = vmatpush1.bf16.msra.mxu0 0
        %919 = vmatprep.subr.bf16.mxu0 0
        %920 = vmatpush1.bf16.msra.mxu0 0
        %921 = vmatprep.subr.bf16.mxu0 0
        %922 = vmatpush1.bf16.msra.mxu0 0
        %923 = vmatprep.subr.bf16.mxu0 0
        %924 = vmatpush1.bf16.msra.mxu0 0
        %925 = vmatprep.subr.bf16.mxu0 0
        %926 = vmatpush1.bf16.msra.mxu0 0
        %927 = vmatprep.subr.bf16.mxu0 0
        %928 = vmatpush1.bf16.msra.mxu0 0
        %929 = vmatprep.subr.bf16.mxu0 0
        %930 = vmatpush1.bf16.msra.mxu0 0
        %931 = vmatprep.subr.bf16.mxu0 0
        %932 = vmatpush1.bf16.msra.mxu0 0
        %933 = vmatprep.subr.bf16.mxu0 0
        %934 = vmatpush1.bf16.msra.mxu0 0
        %935 = vmatprep.subr.bf16.mxu0 0
        %936 = vmatpush1.bf16.msra.mxu0 0
        %937 = vmatprep.subr.bf16.mxu0 0
        %938 = vmatpush1.bf16.msra.mxu0 0
        %939 = vmatprep.subr.bf16.mxu0 0
        %940 = vmatpush1.bf16.msra.mxu0 0
        %941 = vmatprep.subr.bf16.mxu0 0
        %942 = vmatpush1.bf16.msra.mxu0 0
        %943 = vmatprep.subr.bf16.mxu0 0
        %944 = vmatpush1.bf16.msra.mxu0 0
        %945 = vmatprep.subr.bf16.mxu0 0
        %946 = vmatpush1.bf16.msra.mxu0 0
        %947 = vmatprep.mubr.bf16.mxu0 0
        %948 = vmatmul.mubr.bf16.gmra.mrb[0].mxu0 %v858
        %v949 = vpop.f32.mrb[0].mxu0
        %v950 = vadd.f32 0.0, %v949
        %v951 = vpop.f32.mrb[0].mxu0
        %v952 = vpop.f32.mrb[0].mxu0
        %v953 = vadd.f32 0.0, %v952
        %v954 = vpop.f32.mrb[0].mxu0
        %955 = vmatprep.mubr.bf16.mxu0 0
        %956 = vmatmul.mubr.bf16.gmra.mrb[0].mxu0 %v861
        %v957 = vpop.f32.mrb[0].mxu0
        %v958 = vadd.f32 0.0, %v957
        %v959 = vpop.f32.mrb[0].mxu0
        %v960 = vpop.f32.mrb[0].mxu0
        %v961 = vadd.f32 0.0, %v960
        %v962 = vpop.f32.mrb[0].mxu0
        %963 = vmatprep.mubr.bf16.mxu0 0
        %964 = vmatmul.mubr.bf16.gmra.mrb[0].mxu0 %v864
        %v965 = vpop.f32.mrb[0].mxu0
        %v966 = vadd.f32 0.0, %v965
        %v967 = vpop.f32.mrb[0].mxu0
        %v968 = vpop.f32.mrb[0].mxu0
        %v969 = vadd.f32 0.0, %v968
        %v970 = vpop.f32.mrb[0].mxu0
        %971 = vmatprep.mubr.bf16.mxu0 0
        %972 = vmatmul.mubr.bf16.gmra.mrb[0].mxu0 %v867
        %v973 = vpop.f32.mrb[0].mxu0
        %v974 = vadd.f32 0.0, %v973
        %v975 = vpop.f32.mrb[0].mxu0
        %v976 = vpop.f32.mrb[0].mxu0
        %v977 = vadd.f32 0.0, %v976
        %v978 = vpop.f32.mrb[0].mxu0
        %979 = vmatprep.mubr.bf16.mxu0 0
        %980 = vmatmul.mubr.bf16.gmra.mrb[0].mxu0 %v870
        %v981 = vpop.f32.mrb[0].mxu0
        %v982 = vadd.f32 0.0, %v981
        %v983 = vpop.f32.mrb[0].mxu0
        %v984 = vpop.f32.mrb[0].mxu0
        %v985 = vadd.f32 0.0, %v984
        %v986 = vpop.f32.mrb[0].mxu0
        %987 = vmatprep.mubr.bf16.mxu0 0
        %988 = vmatmul.mubr.bf16.gmra.mrb[0].mxu0 %v873
        %v989 = vpop.f32.mrb[0].mxu0
        %v990 = vadd.f32 0.0, %v989
        %v991 = vpop.f32.mrb[0].mxu0
        %v992 = vpop.f32.mrb[0].mxu0
        %v993 = vadd.f32 0.0, %v992
        %v994 = vpop.f32.mrb[0].mxu0
        %995 = vmatprep.mubr.bf16.mxu0 0
        %996 = vmatmul.mubr.bf16.gmra.mrb[0].mxu0 %v876
        %v997 = vpop.f32.mrb[0].mxu0
        %v998 = vadd.f32 0.0, %v997
        %v999 = vpop.f32.mrb[0].mxu0
        %v1000 = vpop.f32.mrb[0].mxu0
        %v1001 = vadd.f32 0.0, %v1000
        %v1002 = vpop.f32.mrb[0].mxu0
        %1003 = vmatprep.mubr.bf16.mxu0 0
        %1004 = vmatmul.mubr.bf16.gmra.mrb[0].mxu0 %v879
        %v1005 = vpop.f32.mrb[0].mxu0
        %v1006 = vadd.f32 0.0, %v1005
        %v1007 = vpop.f32.mrb[0].mxu0
        %v1008 = vpop.f32.mrb[0].mxu0
        %v1009 = vadd.f32 0.0, %v1008
        %v1010 = vpop.f32.mrb[0].mxu0
        %1011 = vmatprep.mubr.bf16.mxu0 0
        %1012 = vmatmul.mubr.bf16.gmra.mrb[0].mxu0 %v882
        %v1013 = vpop.f32.mrb[0].mxu0
        %v1014 = vadd.f32 0.0, %v1013
        %v1015 = vpop.f32.mrb[0].mxu0
        %v1016 = vpop.f32.mrb[0].mxu0
        %v1017 = vadd.f32 0.0, %v1016
        %v1018 = vpop.f32.mrb[0].mxu0
        %1019 = vmatprep.mubr.bf16.mxu0 0
        %1020 = vmatmul.mubr.bf16.gmra.mrb[0].mxu0 %v885
        %v1021 = vpop.f32.mrb[0].mxu0
        %v1022 = vadd.f32 0.0, %v1021
        %v1023 = vpop.f32.mrb[0].mxu0
        %v1024 = vpop.f32.mrb[0].mxu0
        %v1025 = vadd.f32 0.0, %v1024
        %v1026 = vpop.f32.mrb[0].mxu0
        %1027 = vmatprep.mubr.bf16.mxu0 0
        %1028 = vmatmul.mubr.bf16.gmra.mrb[0].mxu0 %v888
        %v1029 = vpop.f32.mrb[0].mxu0
        %v1030 = vadd.f32 0.0, %v1029
        %v1031 = vpop.f32.mrb[0].mxu0
        %v1032 = vpop.f32.mrb[0].mxu0
        %v1033 = vadd.f32 0.0, %v1032
        %v1034 = vpop.f32.mrb[0].mxu0
        %1035 = vmatprep.mubr.bf16.mxu0 0
        %1036 = vmatmul.mubr.bf16.gmra.mrb[0].mxu0 %v891
        %v1037 = vpop.f32.mrb[0].mxu0
        %v1038 = vadd.f32 0.0, %v1037
        %v1039 = vpop.f32.mrb[0].mxu0
        %v1040 = vpop.f32.mrb[0].mxu0
        %v1041 = vadd.f32 0.0, %v1040
        %v1042 = vpop.f32.mrb[0].mxu0
        %1043 = vmatprep.mubr.bf16.mxu0 0
        %1044 = vmatmul.mubr.bf16.gmra.mrb[0].mxu0 %v894
        %v1045 = vpop.f32.mrb[0].mxu0
        %v1046 = vadd.f32 0.0, %v1045
        %v1047 = vpop.f32.mrb[0].mxu0
        %v1048 = vpop.f32.mrb[0].mxu0
        %v1049 = vadd.f32 0.0, %v1048
        %v1050 = vpop.f32.mrb[0].mxu0
        %1051 = vmatprep.mubr.bf16.mxu0 0
        %1052 = vmatmul.mubr.bf16.gmra.mrb[0].mxu0 %v897
        %v1053 = vpop.f32.mrb[0].mxu0
        %v1054 = vadd.f32 0.0, %v1053
        %v1055 = vpop.f32.mrb[0].mxu0
        %v1056 = vpop.f32.mrb[0].mxu0
        %v1057 = vadd.f32 0.0, %v1056
        %v1058 = vpop.f32.mrb[0].mxu0
        %1059 = vmatprep.mubr.bf16.mxu0 0
        %1060 = vmatmul.mubr.bf16.gmra.mrb[0].mxu0 %v900
        %v1061 = vpop.f32.mrb[0].mxu0
        %v1062 = vadd.f32 0.0, %v1061
        %v1063 = vpop.f32.mrb[0].mxu0
        %v1064 = vpop.f32.mrb[0].mxu0
        %v1065 = vadd.f32 0.0, %v1064
        %v1066 = vpop.f32.mrb[0].mxu0
        %1067 = vmatprep.mubr.bf16.mxu0 0
        %1068 = vmatmul.mubr.bf16.gmra.mrb[0].mxu0 %v903
        %v1069 = vpop.f32.mrb[0].mxu0
        %v1070 = vadd.f32 0.0, %v1069
        %v1071 = vpop.f32.mrb[0].mxu0
        %v1072 = vpop.f32.mrb[0].mxu0
        %v1073 = vadd.f32 0.0, %v1072
        %v1074 = vpop.f32.mrb[0].mxu0
        %1075 = vmatprep.mubr.bf16.mxu0 0
        %1076 = vmatmul.mubr.bf16.gmra.mrb[0].mxu0 %v906
        %v1077 = vpop.f32.mrb[0].mxu0
        %v1078 = vadd.f32 0.0, %v1077
        %v1079 = vpop.f32.mrb[0].mxu0
        %v1080 = vpop.f32.mrb[0].mxu0
        %v1081 = vadd.f32 0.0, %v1080
        %v1082 = vpop.f32.mrb[0].mxu0
        %1083 = vmatprep.mubr.bf16.mxu0 0
        %1084 = vmatmul.mubr.bf16.gmra.mrb[0].mxu0 %v909
        %v1085 = vpop.f32.mrb[0].mxu0
        %v1086 = vadd.f32 0.0, %v1085
        %v1087 = vpop.f32.mrb[0].mxu0
        %v1088 = vpop.f32.mrb[0].mxu0
        %v1089 = vadd.f32 0.0, %v1088
        %v1090 = vpop.f32.mrb[0].mxu0
        %1091 = vdwg.mxu0
        %v1092 = vsel %vm856, %v688, 0
        %v1094 = vsel %vm856, %v689, 0
        %v1096 = vsel %vm856, %v690, 0
        %v1098 = vsel %vm856, %v691, 0
        %v1100 = vsel %vm856, %v692, 0
        %v1102 = vsel %vm856, %v693, 0
        %v1104 = vsel %vm856, %v694, 0
        %v1106 = vsel %vm856, %v695, 0
        %v1108 = vsel %vm856, %v696, 0
        %v1110 = vsel %vm856, %v697, 0
        %v1112 = vsel %vm856, %v698, 0
        %v1114 = vsel %vm856, %v699, 0
        %v1116 = vsel %vm856, %v700, 0
        %v1118 = vsel %vm856, %v701, 0
        %v1120 = vsel %vm856, %v702, 0
        %v1122 = vsel %vm856, %v703, 0
        %v1124 = vsel %vm856, %v704, 0
        %v1126 = vsel %vm856, %v705, 0
        %v1129 = vsel %vm911, %v610, 0
        %1131 = vmatprep.subr.bf16.mxu0 0
        %1132 = vmatpush1.bf16.msra.mxu0 %v1129
        %1133 = vmatprep.subr.bf16.mxu0 0
        %1134 = vmatpush1.bf16.msra.mxu0 0
        %1135 = vmatprep.subr.bf16.mxu0 0
        %1136 = vmatpush1.bf16.msra.mxu0 0
        %1137 = vmatprep.subr.bf16.mxu0 0
        %1138 = vmatpush1.bf16.msra.mxu0 0
        %1139 = vmatprep.subr.bf16.mxu0 0
        %1140 = vmatpush1.bf16.msra.mxu0 0
        %1141 = vmatprep.subr.bf16.mxu0 0
        %1142 = vmatpush1.bf16.msra.mxu0 0
        %1143 = vmatprep.subr.bf16.mxu0 0
        %1144 = vmatpush1.bf16.msra.mxu0 0
        %1145 = vmatprep.subr.bf16.mxu0 0
        %1146 = vmatpush1.bf16.msra.mxu0 0
        %1147 = vmatprep.subr.bf16.mxu0 0
        %1148 = vmatpush1.bf16.msra.mxu0 0
        %1149 = vmatprep.subr.bf16.mxu0 0
        %1150 = vmatpush1.bf16.msra.mxu0 0
        %1151 = vmatprep.subr.bf16.mxu0 0
        %1152 = vmatpush1.bf16.msra.mxu0 0
        %1153 = vmatprep.subr.bf16.mxu0 0
        %1154 = vmatpush1.bf16.msra.mxu0 0
        %1155 = vmatprep.subr.bf16.mxu0 0
        %1156 = vmatpush1.bf16.msra.mxu0 0
        %1157 = vmatprep.subr.bf16.mxu0 0
        %1158 = vmatpush1.bf16.msra.mxu0 0
        %1159 = vmatprep.subr.bf16.mxu0 0
        %1160 = vmatpush1.bf16.msra.mxu0 0
        %1161 = vmatprep.subr.bf16.mxu0 0
        %1162 = vmatpush1.bf16.msra.mxu0 0
        %1163 = vmatprep.mubr.bf16.mxu0 0
        %1164 = vmatmul.mubr.bf16.gmra.mrb[0].mxu0 %v1092
        %v1165 = vpop.f32.mrb[0].mxu0
        %v1166 = vadd.f32 %v950, %v1165
        %v1167 = vpop.f32.mrb[0].mxu0
        %v1168 = vpop.f32.mrb[0].mxu0
        %v1169 = vadd.f32 %v953, %v1168
        %v1170 = vpop.f32.mrb[0].mxu0
        %1171 = vmatprep.mubr.bf16.mxu0 0
        %1172 = vmatmul.mubr.bf16.gmra.mrb[0].mxu0 %v1094
        %v1173 = vpop.f32.mrb[0].mxu0
        %v1174 = vadd.f32 %v958, %v1173
        %v1175 = vpop.f32.mrb[0].mxu0
        %v1176 = vpop.f32.mrb[0].mxu0
        %v1177 = vadd.f32 %v961, %v1176
        %v1178 = vpop.f32.mrb[0].mxu0
        %1179 = vmatprep.mubr.bf16.mxu0 0
        %1180 = vmatmul.mubr.bf16.gmra.mrb[0].mxu0 %v1096
        %v1181 = vpop.f32.mrb[0].mxu0
        %v1182 = vadd.f32 %v966, %v1181
        %v1183 = vpop.f32.mrb[0].mxu0
        %v1184 = vpop.f32.mrb[0].mxu0
        %v1185 = vadd.f32 %v969, %v1184
        %v1186 = vpop.f32.mrb[0].mxu0
        %1187 = vmatprep.mubr.bf16.mxu0 0
        %1188 = vmatmul.mubr.bf16.gmra.mrb[0].mxu0 %v1098
        %v1189 = vpop.f32.mrb[0].mxu0
        %v1190 = vadd.f32 %v974, %v1189
        %v1191 = vpop.f32.mrb[0].mxu0
        %v1192 = vpop.f32.mrb[0].mxu0
        %v1193 = vadd.f32 %v977, %v1192
        %v1194 = vpop.f32.mrb[0].mxu0
        %1195 = vmatprep.mubr.bf16.mxu0 0
        %1196 = vmatmul.mubr.bf16.gmra.mrb[0].mxu0 %v1100
        %v1197 = vpop.f32.mrb[0].mxu0
        %v1198 = vadd.f32 %v982, %v1197
        %v1199 = vpop.f32.mrb[0].mxu0
        %v1200 = vpop.f32.mrb[0].mxu0
        %v1201 = vadd.f32 %v985, %v1200
        %v1202 = vpop.f32.mrb[0].mxu0
        %1203 = vmatprep.mubr.bf16.mxu0 0
        %1204 = vmatmul.mubr.bf16.gmra.mrb[0].mxu0 %v1102
        %v1205 = vpop.f32.mrb[0].mxu0
        %v1206 = vadd.f32 %v990, %v1205
        %v1207 = vpop.f32.mrb[0].mxu0
        %v1208 = vpop.f32.mrb[0].mxu0
        %v1209 = vadd.f32 %v993, %v1208
        %v1210 = vpop.f32.mrb[0].mxu0
        %1211 = vmatprep.mubr.bf16.mxu0 0
        %1212 = vmatmul.mubr.bf16.gmra.mrb[0].mxu0 %v1104
        %v1213 = vpop.f32.mrb[0].mxu0
        %v1214 = vadd.f32 %v998, %v1213
        %v1215 = vpop.f32.mrb[0].mxu0
        %v1216 = vpop.f32.mrb[0].mxu0
        %v1217 = vadd.f32 %v1001, %v1216
        %v1218 = vpop.f32.mrb[0].mxu0
        %1219 = vmatprep.mubr.bf16.mxu0 0
        %1220 = vmatmul.mubr.bf16.gmra.mrb[0].mxu0 %v1106
        %v1221 = vpop.f32.mrb[0].mxu0
        %v1222 = vadd.f32 %v1006, %v1221
        %v1223 = vpop.f32.mrb[0].mxu0
        %v1224 = vpop.f32.mrb[0].mxu0
        %v1225 = vadd.f32 %v1009, %v1224
        %v1226 = vpop.f32.mrb[0].mxu0
        %1227 = vmatprep.mubr.bf16.mxu0 0
        %1228 = vmatmul.mubr.bf16.gmra.mrb[0].mxu0 %v1108
        %v1229 = vpop.f32.mrb[0].mxu0
        %v1230 = vadd.f32 %v1014, %v1229
        %v1231 = vpop.f32.mrb[0].mxu0
        %v1232 = vpop.f32.mrb[0].mxu0
        %v1233 = vadd.f32 %v1017, %v1232
        %v1234 = vpop.f32.mrb[0].mxu0
        %1235 = vmatprep.mubr.bf16.mxu0 0
        %1236 = vmatmul.mubr.bf16.gmra.mrb[0].mxu0 %v1110
        %v1237 = vpop.f32.mrb[0].mxu0
        %v1238 = vadd.f32 %v1022, %v1237
        %v1239 = vpop.f32.mrb[0].mxu0
        %v1240 = vpop.f32.mrb[0].mxu0
        %v1241 = vadd.f32 %v1025, %v1240
        %v1242 = vpop.f32.mrb[0].mxu0
        %1243 = vmatprep.mubr.bf16.mxu0 0
        %1244 = vmatmul.mubr.bf16.gmra.mrb[0].mxu0 %v1112
        %v1245 = vpop.f32.mrb[0].mxu0
        %v1246 = vadd.f32 %v1030, %v1245
        %v1247 = vpop.f32.mrb[0].mxu0
        %v1248 = vpop.f32.mrb[0].mxu0
        %v1249 = vadd.f32 %v1033, %v1248
        %v1250 = vpop.f32.mrb[0].mxu0
        %1251 = vmatprep.mubr.bf16.mxu0 0
        %1252 = vmatmul.mubr.bf16.gmra.mrb[0].mxu0 %v1114
        %v1253 = vpop.f32.mrb[0].mxu0
        %v1254 = vadd.f32 %v1038, %v1253
        %v1255 = vpop.f32.mrb[0].mxu0
        %v1256 = vpop.f32.mrb[0].mxu0
        %v1257 = vadd.f32 %v1041, %v1256
        %v1258 = vpop.f32.mrb[0].mxu0
        %1259 = vmatprep.mubr.bf16.mxu0 0
        %1260 = vmatmul.mubr.bf16.gmra.mrb[0].mxu0 %v1116
        %v1261 = vpop.f32.mrb[0].mxu0
        %v1262 = vadd.f32 %v1046, %v1261
        %v1263 = vpop.f32.mrb[0].mxu0
        %v1264 = vpop.f32.mrb[0].mxu0
        %v1265 = vadd.f32 %v1049, %v1264
        %v1266 = vpop.f32.mrb[0].mxu0
        %1267 = vmatprep.mubr.bf16.mxu0 0
        %1268 = vmatmul.mubr.bf16.gmra.mrb[0].mxu0 %v1118
        %v1269 = vpop.f32.mrb[0].mxu0
        %v1270 = vadd.f32 %v1054, %v1269
        %v1271 = vpop.f32.mrb[0].mxu0
        %v1272 = vpop.f32.mrb[0].mxu0
        %v1273 = vadd.f32 %v1057, %v1272
        %v1274 = vpop.f32.mrb[0].mxu0
        %1275 = vmatprep.mubr.bf16.mxu0 0
        %1276 = vmatmul.mubr.bf16.gmra.mrb[0].mxu0 %v1120
        %v1277 = vpop.f32.mrb[0].mxu0
        %v1278 = vadd.f32 %v1062, %v1277
        %v1279 = vpop.f32.mrb[0].mxu0
        %v1280 = vpop.f32.mrb[0].mxu0
        %v1281 = vadd.f32 %v1065, %v1280
        %v1282 = vpop.f32.mrb[0].mxu0
        %1283 = vmatprep.mubr.bf16.mxu0 0
        %1284 = vmatmul.mubr.bf16.gmra.mrb[0].mxu0 %v1122
        %v1285 = vpop.f32.mrb[0].mxu0
        %v1286 = vadd.f32 %v1070, %v1285
        %v1287 = vpop.f32.mrb[0].mxu0
        %v1288 = vpop.f32.mrb[0].mxu0
        %v1289 = vadd.f32 %v1073, %v1288
        %v1290 = vpop.f32.mrb[0].mxu0
        %1291 = vmatprep.mubr.bf16.mxu0 0
        %1292 = vmatmul.mubr.bf16.gmra.mrb[0].mxu0 %v1124
        %v1293 = vpop.f32.mrb[0].mxu0
        %v1294 = vadd.f32 %v1078, %v1293
        %v1295 = vpop.f32.mrb[0].mxu0
        %v1296 = vpop.f32.mrb[0].mxu0
        %v1297 = vadd.f32 %v1081, %v1296
        %v1298 = vpop.f32.mrb[0].mxu0
        %1299 = vmatprep.mubr.bf16.mxu0 0
        %1300 = vmatmul.mubr.bf16.gmra.mrb[0].mxu0 %v1126
        %v1301 = vpop.f32.mrb[0].mxu0
        %v1302 = vadd.f32 %v1086, %v1301
        %v1303 = vpop.f32.mrb[0].mxu0
        %v1304 = vpop.f32.mrb[0].mxu0
        %v1305 = vadd.f32 %v1089, %v1304
        %v1306 = vpop.f32.mrb[0].mxu0
        %1307 = vdwg.mxu0
        %v1308 = vld [vmem:[%s572] sm:$0xe]
        %s1309 = scalar_lea.vmem %s1, 8
        %v1310 = vld [vmem:[%s1309] sm:$0xf]
        %v1312 = vunpack.c.l.b16 %v1308
        %v1313 = vpack.c.b16 %v652, %v1312
        %vm1314 = vcmask 1046528
        %v1315 = vrot.slane %v1313, 1
        %v1316 = vrot.slane %v689, 1
        %v1317 = vsel %vm1314, %v1315, %v1316
        %v1318 = vrot.slane %v690, 1
        %v1319 = vsel %vm1314, %v1316, %v1318
        %v1320 = vrot.slane %v691, 1
        %v1321 = vsel %vm1314, %v1318, %v1320
        %v1322 = vrot.slane %v692, 1
        %v1323 = vsel %vm1314, %v1320, %v1322
        %v1324 = vrot.slane %v693, 1
        %v1325 = vsel %vm1314, %v1322, %v1324
        %v1326 = vrot.slane %v694, 1
        %v1327 = vsel %vm1314, %v1324, %v1326
        %v1328 = vrot.slane %v695, 1
        %v1329 = vsel %vm1314, %v1326, %v1328
        %v1330 = vrot.slane %v696, 1
        %v1331 = vsel %vm1314, %v1328, %v1330
        %v1332 = vrot.slane %v697, 1
        %v1333 = vsel %vm1314, %v1330, %v1332
        %v1334 = vrot.slane %v698, 1
        %v1335 = vsel %vm1314, %v1332, %v1334
        %v1336 = vrot.slane %v699, 1
        %v1337 = vsel %vm1314, %v1334, %v1336
        %v1338 = vrot.slane %v700, 1
        %v1339 = vsel %vm1314, %v1336, %v1338
        %v1340 = vrot.slane %v701, 1
        %v1341 = vsel %vm1314, %v1338, %v1340
        %v1342 = vrot.slane %v702, 1
        %v1343 = vsel %vm1314, %v1340, %v1342
        %v1344 = vrot.slane %v703, 1
        %v1345 = vsel %vm1314, %v1342, %v1344
        %v1346 = vrot.slane %v704, 1
        %v1347 = vsel %vm1314, %v1344, %v1346
        %v1348 = vrot.slane %v705, 1
        %v1349 = vsel %vm1314, %v1346, %v1348
        %v1350 = vrot.slane %v706, 1
        %v1351 = vsel %vm1314, %v1348, %v1350
        %v1353 = vsel %vm856, %v1317, 0
        %v1356 = vsel %vm856, %v1319, 0
        %v1359 = vsel %vm856, %v1321, 0
        %v1362 = vsel %vm856, %v1323, 0
        %v1365 = vsel %vm856, %v1325, 0
        %v1368 = vsel %vm856, %v1327, 0
        %v1371 = vsel %vm856, %v1329, 0
        %v1374 = vsel %vm856, %v1331, 0
        %v1377 = vsel %vm856, %v1333, 0
        %v1380 = vsel %vm856, %v1335, 0
        %v1383 = vsel %vm856, %v1337, 0
        %v1386 = vsel %vm856, %v1339, 0
        %v1389 = vsel %vm856, %v1341, 0
        %v1392 = vsel %vm856, %v1343, 0
        %v1395 = vsel %vm856, %v1345, 0
        %v1398 = vsel %vm856, %v1347, 0
        %v1401 = vsel %vm856, %v1349, 0
        %v1404 = vsel %vm856, %v1351, 0
        %v1407 = vsel %vm911, %v1310, 0
        %1409 = vmatprep.subr.bf16.mxu0 0
        %1410 = vmatpush1.bf16.msra.mxu0 %v1407
        %1411 = vmatprep.subr.bf16.mxu0 0
        %1412 = vmatpush1.bf16.msra.mxu0 0
        %1413 = vmatprep.subr.bf16.mxu0 0
        %1414 = vmatpush1.bf16.msra.mxu0 0
        %1415 = vmatprep.subr.bf16.mxu0 0
        %1416 = vmatpush1.bf16.msra.mxu0 0
        %1417 = vmatprep.subr.bf16.mxu0 0
        %1418 = vmatpush1.bf16.msra.mxu0 0
        %1419 = vmatprep.subr.bf16.mxu0 0
        %1420 = vmatpush1.bf16.msra.mxu0 0
        %1421 = vmatprep.subr.bf16.mxu0 0
        %1422 = vmatpush1.bf16.msra.mxu0 0
        %1423 = vmatprep.subr.bf16.mxu0 0
        %1424 = vmatpush1.bf16.msra.mxu0 0
        %1425 = vmatprep.subr.bf16.mxu0 0
        %1426 = vmatpush1.bf16.msra.mxu0 0
        %1427 = vmatprep.subr.bf16.mxu0 0
        %1428 = vmatpush1.bf16.msra.mxu0 0
        %1429 = vmatprep.subr.bf16.mxu0 0
        %1430 = vmatpush1.bf16.msra.mxu0 0
        %1431 = vmatprep.subr.bf16.mxu0 0
        %1432 = vmatpush1.bf16.msra.mxu0 0
        %1433 = vmatprep.subr.bf16.mxu0 0
        %1434 = vmatpush1.bf16.msra.mxu0 0
        %1435 = vmatprep.subr.bf16.mxu0 0
        %1436 = vmatpush1.bf16.msra.mxu0 0
        %1437 = vmatprep.subr.bf16.mxu0 0
        %1438 = vmatpush1.bf16.msra.mxu0 0
        %1439 = vmatprep.subr.bf16.mxu0 0
        %1440 = vmatpush1.bf16.msra.mxu0 0
        %1441 = vmatprep.mubr.bf16.mxu0 0
        %1442 = vmatmul.mubr.bf16.gmra.mrb[0].mxu0 %v1353
        %v1443 = vpop.f32.mrb[0].mxu0
        %v1444 = vadd.f32 0.0, %v1443
        %v1445 = vpop.f32.mrb[0].mxu0
        %v1446 = vpop.f32.mrb[0].mxu0
        %v1447 = vadd.f32 0.0, %v1446
        %v1448 = vpop.f32.mrb[0].mxu0
        %1449 = vmatprep.mubr.bf16.mxu0 0
        %1450 = vmatmul.mubr.bf16.gmra.mrb[0].mxu0 %v1356
        %v1451 = vpop.f32.mrb[0].mxu0
        %v1452 = vadd.f32 0.0, %v1451
        %v1453 = vpop.f32.mrb[0].mxu0
        %v1454 = vpop.f32.mrb[0].mxu0
        %v1455 = vadd.f32 0.0, %v1454
        %v1456 = vpop.f32.mrb[0].mxu0
        %1457 = vmatprep.mubr.bf16.mxu0 0
        %1458 = vmatmul.mubr.bf16.gmra.mrb[0].mxu0 %v1359
        %v1459 = vpop.f32.mrb[0].mxu0
        %v1460 = vadd.f32 0.0, %v1459
        %v1461 = vpop.f32.mrb[0].mxu0
        %v1462 = vpop.f32.mrb[0].mxu0
        %v1463 = vadd.f32 0.0, %v1462
        %v1464 = vpop.f32.mrb[0].mxu0
        %1465 = vmatprep.mubr.bf16.mxu0 0
        %1466 = vmatmul.mubr.bf16.gmra.mrb[0].mxu0 %v1362
        %v1467 = vpop.f32.mrb[0].mxu0
        %v1468 = vadd.f32 0.0, %v1467
        %v1469 = vpop.f32.mrb[0].mxu0
        %v1470 = vpop.f32.mrb[0].mxu0
        %v1471 = vadd.f32 0.0, %v1470
        %v1472 = vpop.f32.mrb[0].mxu0
        %1473 = vmatprep.mubr.bf16.mxu0 0
        %1474 = vmatmul.mubr.bf16.gmra.mrb[0].mxu0 %v1365
        %v1475 = vpop.f32.mrb[0].mxu0
        %v1476 = vadd.f32 0.0, %v1475
        %v1477 = vpop.f32.mrb[0].mxu0
        %v1478 = vpop.f32.mrb[0].mxu0
        %v1479 = vadd.f32 0.0, %v1478
        %v1480 = vpop.f32.mrb[0].mxu0
        %1481 = vmatprep.mubr.bf16.mxu0 0
        %1482 = vmatmul.mubr.bf16.gmra.mrb[0].mxu0 %v1368
        %v1483 = vpop.f32.mrb[0].mxu0
        %v1484 = vadd.f32 0.0, %v1483
        %v1485 = vpop.f32.mrb[0].mxu0
        %v1486 = vpop.f32.mrb[0].mxu0
        %v1487 = vadd.f32 0.0, %v1486
        %v1488 = vpop.f32.mrb[0].mxu0
        %1489 = vmatprep.mubr.bf16.mxu0 0
        %1490 = vmatmul.mubr.bf16.gmra.mrb[0].mxu0 %v1371
        %v1491 = vpop.f32.mrb[0].mxu0
        %v1492 = vadd.f32 0.0, %v1491
        %v1493 = vpop.f32.mrb[0].mxu0
        %v1494 = vpop.f32.mrb[0].mxu0
        %v1495 = vadd.f32 0.0, %v1494
        %v1496 = vpop.f32.mrb[0].mxu0
        %1497 = vmatprep.mubr.bf16.mxu0 0
        %1498 = vmatmul.mubr.bf16.gmra.mrb[0].mxu0 %v1374
        %v1499 = vpop.f32.mrb[0].mxu0
        %v1500 = vadd.f32 0.0, %v1499
        %v1501 = vpop.f32.mrb[0].mxu0
        %v1502 = vpop.f32.mrb[0].mxu0
        %v1503 = vadd.f32 0.0, %v1502
        %v1504 = vpop.f32.mrb[0].mxu0
        %1505 = vmatprep.mubr.bf16.mxu0 0
        %1506 = vmatmul.mubr.bf16.gmra.mrb[0].mxu0 %v1377
        %v1507 = vpop.f32.mrb[0].mxu0
        %v1508 = vadd.f32 0.0, %v1507
        %v1509 = vpop.f32.mrb[0].mxu0
        %v1510 = vpop.f32.mrb[0].mxu0
        %v1511 = vadd.f32 0.0, %v1510
        %v1512 = vpop.f32.mrb[0].mxu0
        %1513 = vmatprep.mubr.bf16.mxu0 0
        %1514 = vmatmul.mubr.bf16.gmra.mrb[0].mxu0 %v1380
        %v1515 = vpop.f32.mrb[0].mxu0
        %v1516 = vadd.f32 0.0, %v1515
        %v1517 = vpop.f32.mrb[0].mxu0
        %v1518 = vpop.f32.mrb[0].mxu0
        %v1519 = vadd.f32 0.0, %v1518
        %v1520 = vpop.f32.mrb[0].mxu0
        %1521 = vmatprep.mubr.bf16.mxu0 0
        %1522 = vmatmul.mubr.bf16.gmra.mrb[0].mxu0 %v1383
        %v1523 = vpop.f32.mrb[0].mxu0
        %v1524 = vadd.f32 0.0, %v1523
        %v1525 = vpop.f32.mrb[0].mxu0
        %v1526 = vpop.f32.mrb[0].mxu0
        %v1527 = vadd.f32 0.0, %v1526
        %v1528 = vpop.f32.mrb[0].mxu0
        %1529 = vmatprep.mubr.bf16.mxu0 0
        %1530 = vmatmul.mubr.bf16.gmra.mrb[0].mxu0 %v1386
        %v1531 = vpop.f32.mrb[0].mxu0
        %v1532 = vadd.f32 0.0, %v1531
        %v1533 = vpop.f32.mrb[0].mxu0
        %v1534 = vpop.f32.mrb[0].mxu0
        %v1535 = vadd.f32 0.0, %v1534
        %v1536 = vpop.f32.mrb[0].mxu0
        %1537 = vmatprep.mubr.bf16.mxu0 0
        %1538 = vmatmul.mubr.bf16.gmra.mrb[0].mxu0 %v1389
        %v1539 = vpop.f32.mrb[0].mxu0
        %v1540 = vadd.f32 0.0, %v1539
        %v1541 = vpop.f32.mrb[0].mxu0
        %v1542 = vpop.f32.mrb[0].mxu0
        %v1543 = vadd.f32 0.0, %v1542
        %v1544 = vpop.f32.mrb[0].mxu0
        %1545 = vmatprep.mubr.bf16.mxu0 0
        %1546 = vmatmul.mubr.bf16.gmra.mrb[0].mxu0 %v1392
        %v1547 = vpop.f32.mrb[0].mxu0
        %v1548 = vadd.f32 0.0, %v1547
        %v1549 = vpop.f32.mrb[0].mxu0
        %v1550 = vpop.f32.mrb[0].mxu0
        %v1551 = vadd.f32 0.0, %v1550
        %v1552 = vpop.f32.mrb[0].mxu0
        %1553 = vmatprep.mubr.bf16.mxu0 0
        %1554 = vmatmul.mubr.bf16.gmra.mrb[0].mxu0 %v1395
        %v1555 = vpop.f32.mrb[0].mxu0
        %v1556 = vadd.f32 0.0, %v1555
        %v1557 = vpop.f32.mrb[0].mxu0
        %v1558 = vpop.f32.mrb[0].mxu0
        %v1559 = vadd.f32 0.0, %v1558
        %v1560 = vpop.f32.mrb[0].mxu0
        %1561 = vmatprep.mubr.bf16.mxu0 0
        %1562 = vmatmul.mubr.bf16.gmra.mrb[0].mxu0 %v1398
        %v1563 = vpop.f32.mrb[0].mxu0
        %v1564 = vadd.f32 0.0, %v1563
        %v1565 = vpop.f32.mrb[0].mxu0
        %v1566 = vpop.f32.mrb[0].mxu0
        %v1567 = vadd.f32 0.0, %v1566
        %v1568 = vpop.f32.mrb[0].mxu0
        %1569 = vmatprep.mubr.bf16.mxu0 0
        %1570 = vmatmul.mubr.bf16.gmra.mrb[0].mxu0 %v1401
        %v1571 = vpop.f32.mrb[0].mxu0
        %v1572 = vadd.f32 0.0, %v1571
        %v1573 = vpop.f32.mrb[0].mxu0
        %v1574 = vpop.f32.mrb[0].mxu0
        %v1575 = vadd.f32 0.0, %v1574
        %v1576 = vpop.f32.mrb[0].mxu0
        %1577 = vmatprep.mubr.bf16.mxu0 0
        %1578 = vmatmul.mubr.bf16.gmra.mrb[0].mxu0 %v1404
        %v1579 = vpop.f32.mrb[0].mxu0
        %v1580 = vadd.f32 0.0, %v1579
        %v1581 = vpop.f32.mrb[0].mxu0
        %v1582 = vpop.f32.mrb[0].mxu0
        %v1583 = vadd.f32 0.0, %v1582
        %v1584 = vpop.f32.mrb[0].mxu0
        %1585 = vdwg.mxu0
        %v1586 = vadd.f32 %v1166, %v1444
        %v1587 = vadd.f32 %v1169, %v1447
        %v1588 = vadd.f32 %v1174, %v1452
        %v1589 = vadd.f32 %v1177, %v1455
        %v1590 = vadd.f32 %v1182, %v1460
        %v1591 = vadd.f32 %v1185, %v1463
        %v1592 = vadd.f32 %v1190, %v1468
        %v1593 = vadd.f32 %v1193, %v1471
        %v1594 = vadd.f32 %v1198, %v1476
        %v1595 = vadd.f32 %v1201, %v1479
        %v1596 = vadd.f32 %v1206, %v1484
        %v1597 = vadd.f32 %v1209, %v1487
        %v1598 = vadd.f32 %v1214, %v1492
        %v1599 = vadd.f32 %v1217, %v1495
        %v1600 = vadd.f32 %v1222, %v1500
        %v1601 = vadd.f32 %v1225, %v1503
        %v1602 = vadd.f32 %v1230, %v1508
        %v1603 = vadd.f32 %v1233, %v1511
        %v1604 = vadd.f32 %v1238, %v1516
        %v1605 = vadd.f32 %v1241, %v1519
        %v1606 = vadd.f32 %v1246, %v1524
        %v1607 = vadd.f32 %v1249, %v1527
        %v1608 = vadd.f32 %v1254, %v1532
        %v1609 = vadd.f32 %v1257, %v1535
        %v1610 = vadd.f32 %v1262, %v1540
        %v1611 = vadd.f32 %v1265, %v1543
        %v1612 = vadd.f32 %v1270, %v1548
        %v1613 = vadd.f32 %v1273, %v1551
        %v1614 = vadd.f32 %v1278, %v1556
        %v1615 = vadd.f32 %v1281, %v1559
        %v1616 = vadd.f32 %v1286, %v1564
        %v1617 = vadd.f32 %v1289, %v1567
        %v1618 = vadd.f32 %v1294, %v1572
        %v1619 = vadd.f32 %v1297, %v1575
        %v1620 = vadd.f32 %v1302, %v1580
        %v1621 = vadd.f32 %v1305, %v1583
        %v1622 = vld [vmem:[%s572 + $0x8] sm:$0xe]
        %v1623 = vld [vmem:[%s572 + $0xc] sm:$0xf]
        %v1624 = vld [vmem:[%s572 + $0x10] sm:$0xf]
        %v1625 = vld [vmem:[%s572 + $0x14] sm:$0xf]
        %v1626 = vld [vmem:[%s572 + $0x18] sm:$0xf]
        %v1627 = vld [vmem:[%s572 + $0x1c] sm:$0xf]
        %v1628 = vld [vmem:[%s572 + $0x20] sm:$0xf]
        %v1629 = vld [vmem:[%s572 + $0x24] sm:$0xf]
        %v1630 = vld [vmem:[%s572 + $0x28] sm:$0xf]
        %v1631 = vld [vmem:[%s572 + $0x2c] sm:$0xf]
        %v1632 = vld [vmem:[%s572 + $0x30] sm:$0xf]
        %v1633 = vld [vmem:[%s572 + $0x34] sm:$0xf]
        %v1634 = vld [vmem:[%s572 + $0x38] sm:$0xf]
        %v1635 = vld [vmem:[%s572 + $0x3c] sm:$0xf]
        %v1636 = vld [vmem:[%s572 + $0x40] sm:$0xf]
        %v1637 = vld [vmem:[%s572 + $0x44] sm:$0xf]
        %v1638 = vld [vmem:[%s572 + $0x48] sm:$0xf]
        %v1639 = vld [vmem:[%s572 + $0x4c] sm:$0xf]
        %v1640 = vld [vmem:[%s572 + $0x50] sm:$0xf]
        %v1641 = vld [vmem:[%s572 + $0x54] sm:$0xf]
        %v1642 = vld [vmem:[%s572 + $0x58] sm:$0xf]
        %v1643 = vld [vmem:[%s572 + $0x5c] sm:$0xf]
        %v1644 = vld [vmem:[%s572 + $0x60] sm:$0xf]
        %v1645 = vld [vmem:[%s572 + $0x64] sm:$0xf]
        %v1646 = vld [vmem:[%s572 + $0x68] sm:$0xf]
        %v1647 = vld [vmem:[%s572 + $0x6c] sm:$0xf]
        %v1648 = vld [vmem:[%s572 + $0x70] sm:$0xf]
        %v1649 = vld [vmem:[%s572 + $0x74] sm:$0xf]
        %v1650 = vld [vmem:[%s572 + $0x78] sm:$0xf]
        %v1651 = vld [vmem:[%s572 + $0x7c] sm:$0xf]
        %v1652 = vld [vmem:[%s572 + $0x80] sm:$0xf]
        %v1653 = vld [vmem:[%s572 + $0x84] sm:$0xf]
        %v1654 = vld [vmem:[%s572 + $0x88] sm:$0xf]
        %v1655 = vld [vmem:[%s572 + $0x8c] sm:$0xf]
        %v1656 = vld [vmem:[%s572 + $0x90] sm:$0xf]
        %v1657 = vld [vmem:[%s572 + $0x94] sm:$0xf]
        %v1658 = vld [vmem:[%s572 + $0x98] sm:$0x1]
        %s1659 = scalar_lea.vmem %s1, 12
        %v1660 = vld [vmem:[%s1659] sm:$0xf]
        %v1698 = vunpack.c.l.b16 %v1622
        %v1699 = vunpack.c.l.b16 %v1623
        %v1700 = vunpack.c.l.b16 %v1624
        %v1701 = vunpack.c.l.b16 %v1625
        %v1702 = vunpack.c.l.b16 %v1626
        %v1703 = vunpack.c.l.b16 %v1627
        %v1704 = vunpack.c.l.b16 %v1628
        %v1705 = vunpack.c.l.b16 %v1629
        %v1706 = vunpack.c.l.b16 %v1630
        %v1707 = vunpack.c.l.b16 %v1631
        %v1708 = vunpack.c.l.b16 %v1632
        %v1709 = vunpack.c.l.b16 %v1633
        %v1710 = vunpack.c.l.b16 %v1634
        %v1711 = vunpack.c.l.b16 %v1635
        %v1712 = vunpack.c.l.b16 %v1636
        %v1713 = vunpack.c.l.b16 %v1637
        %v1714 = vunpack.c.l.b16 %v1638
        %v1715 = vunpack.c.l.b16 %v1639
        %v1716 = vunpack.c.l.b16 %v1640
        %v1717 = vunpack.c.l.b16 %v1641
        %v1718 = vunpack.c.l.b16 %v1642
        %v1719 = vunpack.c.l.b16 %v1643
        %v1720 = vunpack.c.l.b16 %v1644
        %v1721 = vunpack.c.l.b16 %v1645
        %v1722 = vunpack.c.l.b16 %v1646
        %v1723 = vunpack.c.l.b16 %v1647
        %v1724 = vunpack.c.l.b16 %v1648
        %v1725 = vunpack.c.l.b16 %v1649
        %v1726 = vunpack.c.l.b16 %v1650
        %v1727 = vunpack.c.l.b16 %v1651
        %v1728 = vunpack.c.l.b16 %v1652
        %v1729 = vunpack.c.l.b16 %v1653
        %v1730 = vunpack.c.l.b16 %v1654
        %v1731 = vunpack.c.l.b16 %v1655
        %v1732 = vunpack.c.l.b16 %v1656
        %v1733 = vunpack.c.l.b16 %v1657
        %v1734 = vunpack.c.l.b16 %v1658
        %v1735 = vpack.c.b16 %v1699, %v1698
        %v1736 = vpack.c.b16 %v1701, %v1700
        %v1737 = vpack.c.b16 %v1703, %v1702
        %v1738 = vpack.c.b16 %v1705, %v1704
        %v1739 = vpack.c.b16 %v1707, %v1706
        %v1740 = vpack.c.b16 %v1709, %v1708
        %v1741 = vpack.c.b16 %v1711, %v1710
        %v1742 = vpack.c.b16 %v1713, %v1712
        %v1743 = vpack.c.b16 %v1715, %v1714
        %v1744 = vpack.c.b16 %v1717, %v1716
        %v1745 = vpack.c.b16 %v1719, %v1718
        %v1746 = vpack.c.b16 %v1721, %v1720
        %v1747 = vpack.c.b16 %v1723, %v1722
        %v1748 = vpack.c.b16 %v1725, %v1724
        %v1749 = vpack.c.b16 %v1727, %v1726
        %v1750 = vpack.c.b16 %v1729, %v1728
        %v1751 = vpack.c.b16 %v1731, %v1730
        %v1752 = vpack.c.b16 %v1733, %v1732
        %v1753 = vpack.c.b16 %v1734, %v1734
        %v1754 = vrot.slane %v1735, 1
        %v1755 = vrot.slane %v1736, 1
        %v1756 = vsel %vm1314, %v1754, %v1755
        %v1757 = vrot.slane %v1737, 1
        %v1758 = vsel %vm1314, %v1755, %v1757
        %v1759 = vrot.slane %v1738, 1
        %v1760 = vsel %vm1314, %v1757, %v1759
        %v1761 = vrot.slane %v1739, 1
        %v1762 = vsel %vm1314, %v1759, %v1761
        %v1763 = vrot.slane %v1740, 1
        %v1764 = vsel %vm1314, %v1761, %v1763
        %v1765 = vrot.slane %v1741, 1
        %v1766 = vsel %vm1314, %v1763, %v1765
        %v1767 = vrot.slane %v1742, 1
        %v1768 = vsel %vm1314, %v1765, %v1767
        %v1769 = vrot.slane %v1743, 1
        %v1770 = vsel %vm1314, %v1767, %v1769
        %v1771 = vrot.slane %v1744, 1
        %v1772 = vsel %vm1314, %v1769, %v1771
        %v1773 = vrot.slane %v1745, 1
        %v1774 = vsel %vm1314, %v1771, %v1773
        %v1775 = vrot.slane %v1746, 1
        %v1776 = vsel %vm1314, %v1773, %v1775
        %v1777 = vrot.slane %v1747, 1
        %v1778 = vsel %vm1314, %v1775, %v1777
        %v1779 = vrot.slane %v1748, 1
        %v1780 = vsel %vm1314, %v1777, %v1779
        %v1781 = vrot.slane %v1749, 1
        %v1782 = vsel %vm1314, %v1779, %v1781
        %v1783 = vrot.slane %v1750, 1
        %v1784 = vsel %vm1314, %v1781, %v1783
        %v1785 = vrot.slane %v1751, 1
        %v1786 = vsel %vm1314, %v1783, %v1785
        %v1787 = vrot.slane %v1752, 1
        %v1788 = vsel %vm1314, %v1785, %v1787
        %v1789 = vrot.slane %v1753, 1
        %v1790 = vsel %vm1314, %v1787, %v1789
        %v1792 = vsel %vm856, %v1756, 0
        %v1795 = vsel %vm856, %v1758, 0
        %v1798 = vsel %vm856, %v1760, 0
        %v1801 = vsel %vm856, %v1762, 0
        %v1804 = vsel %vm856, %v1764, 0
        %v1807 = vsel %vm856, %v1766, 0
        %v1810 = vsel %vm856, %v1768, 0
        %v1813 = vsel %vm856, %v1770, 0
        %v1816 = vsel %vm856, %v1772, 0
        %v1819 = vsel %vm856, %v1774, 0
        %v1822 = vsel %vm856, %v1776, 0
        %v1825 = vsel %vm856, %v1778, 0
        %v1828 = vsel %vm856, %v1780, 0
        %v1831 = vsel %vm856, %v1782, 0
        %v1834 = vsel %vm856, %v1784, 0
        %v1837 = vsel %vm856, %v1786, 0
        %v1840 = vsel %vm856, %v1788, 0
        %v1843 = vsel %vm856, %v1790, 0
        %v1846 = vsel %vm911, %v1660, 0
        %1848 = vmatprep.subr.bf16.mxu0 0
        %1849 = vmatpush1.bf16.msra.mxu0 %v1846
        %1850 = vmatprep.subr.bf16.mxu0 0
        %1851 = vmatpush1.bf16.msra.mxu0 0
        %1852 = vmatprep.subr.bf16.mxu0 0
        %1853 = vmatpush1.bf16.msra.mxu0 0
        %1854 = vmatprep.subr.bf16.mxu0 0
        %1855 = vmatpush1.bf16.msra.mxu0 0
        %1856 = vmatprep.subr.bf16.mxu0 0
        %1857 = vmatpush1.bf16.msra.mxu0 0
        %1858 = vmatprep.subr.bf16.mxu0 0
        %1859 = vmatpush1.bf16.msra.mxu0 0
        %1860 = vmatprep.subr.bf16.mxu0 0
        %1861 = vmatpush1.bf16.msra.mxu0 0
        %1862 = vmatprep.subr.bf16.mxu0 0
        %1863 = vmatpush1.bf16.msra.mxu0 0
        %1864 = vmatprep.subr.bf16.mxu0 0
        %1865 = vmatpush1.bf16.msra.mxu0 0
        %1866 = vmatprep.subr.bf16.mxu0 0
        %1867 = vmatpush1.bf16.msra.mxu0 0
        %1868 = vmatprep.subr.bf16.mxu0 0
        %1869 = vmatpush1.bf16.msra.mxu0 0
        %1870 = vmatprep.subr.bf16.mxu0 0
        %1871 = vmatpush1.bf16.msra.mxu0 0
        %1872 = vmatprep.subr.bf16.mxu0 0
        %1873 = vmatpush1.bf16.msra.mxu0 0
        %1874 = vmatprep.subr.bf16.mxu0 0
        %1875 = vmatpush1.bf16.msra.mxu0 0
        %1876 = vmatprep.subr.bf16.mxu0 0
        %1877 = vmatpush1.bf16.msra.mxu0 0
        %1878 = vmatprep.subr.bf16.mxu0 0
        %1879 = vmatpush1.bf16.msra.mxu0 0
        %1880 = vmatprep.mubr.bf16.mxu0 0
        %1881 = vmatmul.mubr.bf16.gmra.mrb[0].mxu0 %v1792
        %v1882 = vpop.f32.mrb[0].mxu0
        %v1883 = vadd.f32 0.0, %v1882
        %v1884 = vpop.f32.mrb[0].mxu0
        %v1885 = vpop.f32.mrb[0].mxu0
        %v1886 = vadd.f32 0.0, %v1885
        %v1887 = vpop.f32.mrb[0].mxu0
        %1888 = vmatprep.mubr.bf16.mxu0 0
        %1889 = vmatmul.mubr.bf16.gmra.mrb[0].mxu0 %v1795
        %v1890 = vpop.f32.mrb[0].mxu0
        %v1891 = vadd.f32 0.0, %v1890
        %v1892 = vpop.f32.mrb[0].mxu0
        %v1893 = vpop.f32.mrb[0].mxu0
        %v1894 = vadd.f32 0.0, %v1893
        %v1895 = vpop.f32.mrb[0].mxu0
        %1896 = vmatprep.mubr.bf16.mxu0 0
        %1897 = vmatmul.mubr.bf16.gmra.mrb[0].mxu0 %v1798
        %v1898 = vpop.f32.mrb[0].mxu0
        %v1899 = vadd.f32 0.0, %v1898
        %v1900 = vpop.f32.mrb[0].mxu0
        %v1901 = vpop.f32.mrb[0].mxu0
        %v1902 = vadd.f32 0.0, %v1901
        %v1903 = vpop.f32.mrb[0].mxu0
        %1904 = vmatprep.mubr.bf16.mxu0 0
        %1905 = vmatmul.mubr.bf16.gmra.mrb[0].mxu0 %v1801
        %v1906 = vpop.f32.mrb[0].mxu0
        %v1907 = vadd.f32 0.0, %v1906
        %v1908 = vpop.f32.mrb[0].mxu0
        %v1909 = vpop.f32.mrb[0].mxu0
        %v1910 = vadd.f32 0.0, %v1909
        %v1911 = vpop.f32.mrb[0].mxu0
        %1912 = vmatprep.mubr.bf16.mxu0 0
        %1913 = vmatmul.mubr.bf16.gmra.mrb[0].mxu0 %v1804
        %v1914 = vpop.f32.mrb[0].mxu0
        %v1915 = vadd.f32 0.0, %v1914
        %v1916 = vpop.f32.mrb[0].mxu0
        %v1917 = vpop.f32.mrb[0].mxu0
        %v1918 = vadd.f32 0.0, %v1917
        %v1919 = vpop.f32.mrb[0].mxu0
        %1920 = vmatprep.mubr.bf16.mxu0 0
        %1921 = vmatmul.mubr.bf16.gmra.mrb[0].mxu0 %v1807
        %v1922 = vpop.f32.mrb[0].mxu0
        %v1923 = vadd.f32 0.0, %v1922
        %v1924 = vpop.f32.mrb[0].mxu0
        %v1925 = vpop.f32.mrb[0].mxu0
        %v1926 = vadd.f32 0.0, %v1925
        %v1927 = vpop.f32.mrb[0].mxu0
        %1928 = vmatprep.mubr.bf16.mxu0 0
        %1929 = vmatmul.mubr.bf16.gmra.mrb[0].mxu0 %v1810
        %v1930 = vpop.f32.mrb[0].mxu0
        %v1931 = vadd.f32 0.0, %v1930
        %v1932 = vpop.f32.mrb[0].mxu0
        %v1933 = vpop.f32.mrb[0].mxu0
        %v1934 = vadd.f32 0.0, %v1933
        %v1935 = vpop.f32.mrb[0].mxu0
        %1936 = vmatprep.mubr.bf16.mxu0 0
        %1937 = vmatmul.mubr.bf16.gmra.mrb[0].mxu0 %v1813
        %v1938 = vpop.f32.mrb[0].mxu0
        %v1939 = vadd.f32 0.0, %v1938
        %v1940 = vpop.f32.mrb[0].mxu0
        %v1941 = vpop.f32.mrb[0].mxu0
        %v1942 = vadd.f32 0.0, %v1941
        %v1943 = vpop.f32.mrb[0].mxu0
        %1944 = vmatprep.mubr.bf16.mxu0 0
        %1945 = vmatmul.mubr.bf16.gmra.mrb[0].mxu0 %v1816
        %v1946 = vpop.f32.mrb[0].mxu0
        %v1947 = vadd.f32 0.0, %v1946
        %v1948 = vpop.f32.mrb[0].mxu0
        %v1949 = vpop.f32.mrb[0].mxu0
        %v1950 = vadd.f32 0.0, %v1949
        %v1951 = vpop.f32.mrb[0].mxu0
        %1952 = vmatprep.mubr.bf16.mxu0 0
        %1953 = vmatmul.mubr.bf16.gmra.mrb[0].mxu0 %v1819
        %v1954 = vpop.f32.mrb[0].mxu0
        %v1955 = vadd.f32 0.0, %v1954
        %v1956 = vpop.f32.mrb[0].mxu0
        %v1957 = vpop.f32.mrb[0].mxu0
        %v1958 = vadd.f32 0.0, %v1957
        %v1959 = vpop.f32.mrb[0].mxu0
        %1960 = vmatprep.mubr.bf16.mxu0 0
        %1961 = vmatmul.mubr.bf16.gmra.mrb[0].mxu0 %v1822
        %v1962 = vpop.f32.mrb[0].mxu0
        %v1963 = vadd.f32 0.0, %v1962
        %v1964 = vpop.f32.mrb[0].mxu0
        %v1965 = vpop.f32.mrb[0].mxu0
        %v1966 = vadd.f32 0.0, %v1965
        %v1967 = vpop.f32.mrb[0].mxu0
        %1968 = vmatprep.mubr.bf16.mxu0 0
        %1969 = vmatmul.mubr.bf16.gmra.mrb[0].mxu0 %v1825
        %v1970 = vpop.f32.mrb[0].mxu0
        %v1971 = vadd.f32 0.0, %v1970
        %v1972 = vpop.f32.mrb[0].mxu0
        %v1973 = vpop.f32.mrb[0].mxu0
        %v1974 = vadd.f32 0.0, %v1973
        %v1975 = vpop.f32.mrb[0].mxu0
        %1976 = vmatprep.mubr.bf16.mxu0 0
        %1977 = vmatmul.mubr.bf16.gmra.mrb[0].mxu0 %v1828
        %v1978 = vpop.f32.mrb[0].mxu0
        %v1979 = vadd.f32 0.0, %v1978
        %v1980 = vpop.f32.mrb[0].mxu0
        %v1981 = vpop.f32.mrb[0].mxu0
        %v1982 = vadd.f32 0.0, %v1981
        %v1983 = vpop.f32.mrb[0].mxu0
        %1984 = vmatprep.mubr.bf16.mxu0 0
        %1985 = vmatmul.mubr.bf16.gmra.mrb[0].mxu0 %v1831
        %v1986 = vpop.f32.mrb[0].mxu0
        %v1987 = vadd.f32 0.0, %v1986
        %v1988 = vpop.f32.mrb[0].mxu0
        %v1989 = vpop.f32.mrb[0].mxu0
        %v1990 = vadd.f32 0.0, %v1989
        %v1991 = vpop.f32.mrb[0].mxu0
        %1992 = vmatprep.mubr.bf16.mxu0 0
        %1993 = vmatmul.mubr.bf16.gmra.mrb[0].mxu0 %v1834
        %v1994 = vpop.f32.mrb[0].mxu0
        %v1995 = vadd.f32 0.0, %v1994
        %v1996 = vpop.f32.mrb[0].mxu0
        %v1997 = vpop.f32.mrb[0].mxu0
        %v1998 = vadd.f32 0.0, %v1997
        %v1999 = vpop.f32.mrb[0].mxu0
        %2000 = vmatprep.mubr.bf16.mxu0 0
        %2001 = vmatmul.mubr.bf16.gmra.mrb[0].mxu0 %v1837
        %v2002 = vpop.f32.mrb[0].mxu0
        %v2003 = vadd.f32 0.0, %v2002
        %v2004 = vpop.f32.mrb[0].mxu0
        %v2005 = vpop.f32.mrb[0].mxu0
        %v2006 = vadd.f32 0.0, %v2005
        %v2007 = vpop.f32.mrb[0].mxu0
        %2008 = vmatprep.mubr.bf16.mxu0 0
        %2009 = vmatmul.mubr.bf16.gmra.mrb[0].mxu0 %v1840
        %v2010 = vpop.f32.mrb[0].mxu0
        %v2011 = vadd.f32 0.0, %v2010
        %v2012 = vpop.f32.mrb[0].mxu0
        %v2013 = vpop.f32.mrb[0].mxu0
        %v2014 = vadd.f32 0.0, %v2013
        %v2015 = vpop.f32.mrb[0].mxu0
        %2016 = vmatprep.mubr.bf16.mxu0 0
        %2017 = vmatmul.mubr.bf16.gmra.mrb[0].mxu0 %v1843
        %v2018 = vpop.f32.mrb[0].mxu0
        %v2019 = vadd.f32 0.0, %v2018
        %v2020 = vpop.f32.mrb[0].mxu0
        %v2021 = vpop.f32.mrb[0].mxu0
        %v2022 = vadd.f32 0.0, %v2021
        %v2023 = vpop.f32.mrb[0].mxu0
        %2024 = vdwg.mxu0
        %v2025 = vadd.f32 %v1586, %v1883
        %v2026 = vadd.f32 %v1587, %v1886
        %v2027 = vadd.f32 %v1588, %v1891
        %v2028 = vadd.f32 %v1589, %v1894
        %v2029 = vadd.f32 %v1590, %v1899
        %v2030 = vadd.f32 %v1591, %v1902
        %v2031 = vadd.f32 %v1592, %v1907
        %v2032 = vadd.f32 %v1593, %v1910
        %v2033 = vadd.f32 %v1594, %v1915
        %v2034 = vadd.f32 %v1595, %v1918
        %v2035 = vadd.f32 %v1596, %v1923
        %v2036 = vadd.f32 %v1597, %v1926
        %v2037 = vadd.f32 %v1598, %v1931
        %v2038 = vadd.f32 %v1599, %v1934
        %v2039 = vadd.f32 %v1600, %v1939
        %v2040 = vadd.f32 %v1601, %v1942
        %v2041 = vadd.f32 %v1602, %v1947
        %v2042 = vadd.f32 %v1603, %v1950
        %v2043 = vadd.f32 %v1604, %v1955
        %v2044 = vadd.f32 %v1605, %v1958
        %v2045 = vadd.f32 %v1606, %v1963
        %v2046 = vadd.f32 %v1607, %v1966
        %v2047 = vadd.f32 %v1608, %v1971
        %v2048 = vadd.f32 %v1609, %v1974
        %v2049 = vadd.f32 %v1610, %v1979
        %v2050 = vadd.f32 %v1611, %v1982
        %v2051 = vadd.f32 %v1612, %v1987
        %v2052 = vadd.f32 %v1613, %v1990
        %v2053 = vadd.f32 %v1614, %v1995
        %v2054 = vadd.f32 %v1615, %v1998
        %v2055 = vadd.f32 %v1616, %v2003
        %v2056 = vadd.f32 %v1617, %v2006
        %v2057 = vadd.f32 %v1618, %v2011
        %v2058 = vadd.f32 %v1619, %v2014
        %v2059 = vadd.f32 %v1620, %v2019
        %v2060 = vadd.f32 %v1621, %v2022
        %v2061 = vld [vmem:[%s572 + $0x98] sm:$0x3]
        %s2062 = scalar_lea.vmem %s1, 16
        %v2063 = vld [vmem:[%s2062] sm:$0xf]
        %v2065 = vunpack.c.l.b16 %v2061
        %v2066 = vpack.c.b16 %v2065, %v2065
        %vm2067 = vsmask.f32 6400
        %v2069 = vshrl.u32 %v1735, 16
        %v2071 = vrot.slane %v2069, 1
        %v2072 = vshll.u32 %v1735, 16
        %v2074 = vrot.slane %v2072, 2
        %v2075 = vor.u32 %v2071, %v2074
        %v2077 = vshrl.u32 %v1736, 16
        %v2079 = vrot.slane %v2077, 1
        %v2080 = vshll.u32 %v1736, 16
        %v2082 = vrot.slane %v2080, 2
        %v2083 = vor.u32 %v2079, %v2082
        %v2084 = vsel %vm2067, %v2075, %v2083
        %v2086 = vshrl.u32 %v1737, 16
        %v2088 = vrot.slane %v2086, 1
        %v2089 = vshll.u32 %v1737, 16
        %v2091 = vrot.slane %v2089, 2
        %v2092 = vor.u32 %v2088, %v2091
        %v2093 = vsel %vm2067, %v2083, %v2092
        %v2095 = vshrl.u32 %v1738, 16
        %v2097 = vrot.slane %v2095, 1
        %v2098 = vshll.u32 %v1738, 16
        %v2100 = vrot.slane %v2098, 2
        %v2101 = vor.u32 %v2097, %v2100
        %v2102 = vsel %vm2067, %v2092, %v2101
        %v2104 = vshrl.u32 %v1739, 16
        %v2106 = vrot.slane %v2104, 1
        %v2107 = vshll.u32 %v1739, 16
        %v2109 = vrot.slane %v2107, 2
        %v2110 = vor.u32 %v2106, %v2109
        %v2111 = vsel %vm2067, %v2101, %v2110
        %v2113 = vshrl.u32 %v1740, 16
        %v2115 = vrot.slane %v2113, 1
        %v2116 = vshll.u32 %v1740, 16
        %v2118 = vrot.slane %v2116, 2
        %v2119 = vor.u32 %v2115, %v2118
        %v2120 = vsel %vm2067, %v2110, %v2119
        %v2122 = vshrl.u32 %v1741, 16
        %v2124 = vrot.slane %v2122, 1
        %v2125 = vshll.u32 %v1741, 16
        %v2127 = vrot.slane %v2125, 2
        %v2128 = vor.u32 %v2124, %v2127
        %v2129 = vsel %vm2067, %v2119, %v2128
        %v2131 = vshrl.u32 %v1742, 16
        %v2133 = vrot.slane %v2131, 1
        %v2134 = vshll.u32 %v1742, 16
        %v2136 = vrot.slane %v2134, 2
        %v2137 = vor.u32 %v2133, %v2136
        %v2138 = vsel %vm2067, %v2128, %v2137
        %v2140 = vshrl.u32 %v1743, 16
        %v2142 = vrot.slane %v2140, 1
        %v2143 = vshll.u32 %v1743, 16
        %v2145 = vrot.slane %v2143, 2
        %v2146 = vor.u32 %v2142, %v2145
        %v2147 = vsel %vm2067, %v2137, %v2146
        %v2149 = vshrl.u32 %v1744, 16
        %v2151 = vrot.slane %v2149, 1
        %v2152 = vshll.u32 %v1744, 16
        %v2154 = vrot.slane %v2152, 2
        %v2155 = vor.u32 %v2151, %v2154
        %v2156 = vsel %vm2067, %v2146, %v2155
        %v2158 = vshrl.u32 %v1745, 16
        %v2160 = vrot.slane %v2158, 1
        %v2161 = vshll.u32 %v1745, 16
        %v2163 = vrot.slane %v2161, 2
        %v2164 = vor.u32 %v2160, %v2163
        %v2165 = vsel %vm2067, %v2155, %v2164
        %v2167 = vshrl.u32 %v1746, 16
        %v2169 = vrot.slane %v2167, 1
        %v2170 = vshll.u32 %v1746, 16
        %v2172 = vrot.slane %v2170, 2
        %v2173 = vor.u32 %v2169, %v2172
        %v2174 = vsel %vm2067, %v2164, %v2173
        %v2176 = vshrl.u32 %v1747, 16
        %v2178 = vrot.slane %v2176, 1
        %v2179 = vshll.u32 %v1747, 16
        %v2181 = vrot.slane %v2179, 2
        %v2182 = vor.u32 %v2178, %v2181
        %v2183 = vsel %vm2067, %v2173, %v2182
        %v2185 = vshrl.u32 %v1748, 16
        %v2187 = vrot.slane %v2185, 1
        %v2188 = vshll.u32 %v1748, 16
        %v2190 = vrot.slane %v2188, 2
        %v2191 = vor.u32 %v2187, %v2190
        %v2192 = vsel %vm2067, %v2182, %v2191
        %v2194 = vshrl.u32 %v1749, 16
        %v2196 = vrot.slane %v2194, 1
        %v2197 = vshll.u32 %v1749, 16
        %v2199 = vrot.slane %v2197, 2
        %v2200 = vor.u32 %v2196, %v2199
        %v2201 = vsel %vm2067, %v2191, %v2200
        %v2203 = vshrl.u32 %v1750, 16
        %v2205 = vrot.slane %v2203, 1
        %v2206 = vshll.u32 %v1750, 16
        %v2208 = vrot.slane %v2206, 2
        %v2209 = vor.u32 %v2205, %v2208
        %v2210 = vsel %vm2067, %v2200, %v2209
        %v2212 = vshrl.u32 %v1751, 16
        %v2214 = vrot.slane %v2212, 1
        %v2215 = vshll.u32 %v1751, 16
        %v2217 = vrot.slane %v2215, 2
        %v2218 = vor.u32 %v2214, %v2217
        %v2219 = vsel %vm2067, %v2209, %v2218
        %v2221 = vshrl.u32 %v1752, 16
        %v2223 = vrot.slane %v2221, 1
        %v2224 = vshll.u32 %v1752, 16
        %v2226 = vrot.slane %v2224, 2
        %v2227 = vor.u32 %v2223, %v2226
        %v2228 = vsel %vm2067, %v2218, %v2227
        %v2230 = vshrl.u32 %v2066, 16
        %v2232 = vrot.slane %v2230, 1
        %v2233 = vshll.u32 %v2066, 16
        %v2235 = vrot.slane %v2233, 2
        %v2236 = vor.u32 %v2232, %v2235
        %v2237 = vsel %vm2067, %v2227, %v2236
        %v2239 = vsel %vm856, %v2084, 0
        %v2242 = vsel %vm856, %v2093, 0
        %v2245 = vsel %vm856, %v2102, 0
        %v2248 = vsel %vm856, %v2111, 0
        %v2251 = vsel %vm856, %v2120, 0
        %v2254 = vsel %vm856, %v2129, 0
        %v2257 = vsel %vm856, %v2138, 0
        %v2260 = vsel %vm856, %v2147, 0
        %v2263 = vsel %vm856, %v2156, 0
        %v2266 = vsel %vm856, %v2165, 0
        %v2269 = vsel %vm856, %v2174, 0
        %v2272 = vsel %vm856, %v2183, 0
        %v2275 = vsel %vm856, %v2192, 0
        %v2278 = vsel %vm856, %v2201, 0
        %v2281 = vsel %vm856, %v2210, 0
        %v2284 = vsel %vm856, %v2219, 0
        %v2287 = vsel %vm856, %v2228, 0
        %v2290 = vsel %vm856, %v2237, 0
        %v2293 = vsel %vm911, %v2063, 0
        %2295 = vmatprep.subr.bf16.mxu0 0
        %2296 = vmatpush1.bf16.msra.mxu0 %v2293
        %2297 = vmatprep.subr.bf16.mxu0 0
        %2298 = vmatpush1.bf16.msra.mxu0 0
        %2299 = vmatprep.subr.bf16.mxu0 0
        %2300 = vmatpush1.bf16.msra.mxu0 0
        %2301 = vmatprep.subr.bf16.mxu0 0
        %2302 = vmatpush1.bf16.msra.mxu0 0
        %2303 = vmatprep.subr.bf16.mxu0 0
        %2304 = vmatpush1.bf16.msra.mxu0 0
        %2305 = vmatprep.subr.bf16.mxu0 0
        %2306 = vmatpush1.bf16.msra.mxu0 0
        %2307 = vmatprep.subr.bf16.mxu0 0
        %2308 = vmatpush1.bf16.msra.mxu0 0
        %2309 = vmatprep.subr.bf16.mxu0 0
        %2310 = vmatpush1.bf16.msra.mxu0 0
        %2311 = vmatprep.subr.bf16.mxu0 0
        %2312 = vmatpush1.bf16.msra.mxu0 0
        %2313 = vmatprep.subr.bf16.mxu0 0
        %2314 = vmatpush1.bf16.msra.mxu0 0
        %2315 = vmatprep.subr.bf16.mxu0 0
        %2316 = vmatpush1.bf16.msra.mxu0 0
        %2317 = vmatprep.subr.bf16.mxu0 0
        %2318 = vmatpush1.bf16.msra.mxu0 0
        %2319 = vmatprep.subr.bf16.mxu0 0
        %2320 = vmatpush1.bf16.msra.mxu0 0
        %2321 = vmatprep.subr.bf16.mxu0 0
        %2322 = vmatpush1.bf16.msra.mxu0 0
        %2323 = vmatprep.subr.bf16.mxu0 0
        %2324 = vmatpush1.bf16.msra.mxu0 0
        %2325 = vmatprep.subr.bf16.mxu0 0
        %2326 = vmatpush1.bf16.msra.mxu0 0
        %2327 = vmatprep.mubr.bf16.mxu0 0
        %2328 = vmatmul.mubr.bf16.gmra.mrb[0].mxu0 %v2239
        %v2329 = vpop.f32.mrb[0].mxu0
        %v2330 = vadd.f32 0.0, %v2329
        %v2331 = vpop.f32.mrb[0].mxu0
        %v2332 = vpop.f32.mrb[0].mxu0
        %v2333 = vadd.f32 0.0, %v2332
        %v2334 = vpop.f32.mrb[0].mxu0
        %2335 = vmatprep.mubr.bf16.mxu0 0
        %2336 = vmatmul.mubr.bf16.gmra.mrb[0].mxu0 %v2242
        %v2337 = vpop.f32.mrb[0].mxu0
        %v2338 = vadd.f32 0.0, %v2337
        %v2339 = vpop.f32.mrb[0].mxu0
        %v2340 = vpop.f32.mrb[0].mxu0
        %v2341 = vadd.f32 0.0, %v2340
        %v2342 = vpop.f32.mrb[0].mxu0
        %2343 = vmatprep.mubr.bf16.mxu0 0
        %2344 = vmatmul.mubr.bf16.gmra.mrb[0].mxu0 %v2245
        %v2345 = vpop.f32.mrb[0].mxu0
        %v2346 = vadd.f32 0.0, %v2345
        %v2347 = vpop.f32.mrb[0].mxu0
        %v2348 = vpop.f32.mrb[0].mxu0
        %v2349 = vadd.f32 0.0, %v2348
        %v2350 = vpop.f32.mrb[0].mxu0
        %2351 = vmatprep.mubr.bf16.mxu0 0
        %2352 = vmatmul.mubr.bf16.gmra.mrb[0].mxu0 %v2248
        %v2353 = vpop.f32.mrb[0].mxu0
        %v2354 = vadd.f32 0.0, %v2353
        %v2355 = vpop.f32.mrb[0].mxu0
        %v2356 = vpop.f32.mrb[0].mxu0
        %v2357 = vadd.f32 0.0, %v2356
        %v2358 = vpop.f32.mrb[0].mxu0
        %2359 = vmatprep.mubr.bf16.mxu0 0
        %2360 = vmatmul.mubr.bf16.gmra.mrb[0].mxu0 %v2251
        %v2361 = vpop.f32.mrb[0].mxu0
        %v2362 = vadd.f32 0.0, %v2361
        %v2363 = vpop.f32.mrb[0].mxu0
        %v2364 = vpop.f32.mrb[0].mxu0
        %v2365 = vadd.f32 0.0, %v2364
        %v2366 = vpop.f32.mrb[0].mxu0
        %2367 = vmatprep.mubr.bf16.mxu0 0
        %2368 = vmatmul.mubr.bf16.gmra.mrb[0].mxu0 %v2254
        %v2369 = vpop.f32.mrb[0].mxu0
        %v2370 = vadd.f32 0.0, %v2369
        %v2371 = vpop.f32.mrb[0].mxu0
        %v2372 = vpop.f32.mrb[0].mxu0
        %v2373 = vadd.f32 0.0, %v2372
        %v2374 = vpop.f32.mrb[0].mxu0
        %2375 = vmatprep.mubr.bf16.mxu0 0
        %2376 = vmatmul.mubr.bf16.gmra.mrb[0].mxu0 %v2257
        %v2377 = vpop.f32.mrb[0].mxu0
        %v2378 = vadd.f32 0.0, %v2377
        %v2379 = vpop.f32.mrb[0].mxu0
        %v2380 = vpop.f32.mrb[0].mxu0
        %v2381 = vadd.f32 0.0, %v2380
        %v2382 = vpop.f32.mrb[0].mxu0
        %2383 = vmatprep.mubr.bf16.mxu0 0
        %2384 = vmatmul.mubr.bf16.gmra.mrb[0].mxu0 %v2260
        %v2385 = vpop.f32.mrb[0].mxu0
        %v2386 = vadd.f32 0.0, %v2385
        %v2387 = vpop.f32.mrb[0].mxu0
        %v2388 = vpop.f32.mrb[0].mxu0
        %v2389 = vadd.f32 0.0, %v2388
        %v2390 = vpop.f32.mrb[0].mxu0
        %2391 = vmatprep.mubr.bf16.mxu0 0
        %2392 = vmatmul.mubr.bf16.gmra.mrb[0].mxu0 %v2263
        %v2393 = vpop.f32.mrb[0].mxu0
        %v2394 = vadd.f32 0.0, %v2393
        %v2395 = vpop.f32.mrb[0].mxu0
        %v2396 = vpop.f32.mrb[0].mxu0
        %v2397 = vadd.f32 0.0, %v2396
        %v2398 = vpop.f32.mrb[0].mxu0
        %2399 = vmatprep.mubr.bf16.mxu0 0
        %2400 = vmatmul.mubr.bf16.gmra.mrb[0].mxu0 %v2266
        %v2401 = vpop.f32.mrb[0].mxu0
        %v2402 = vadd.f32 0.0, %v2401
        %v2403 = vpop.f32.mrb[0].mxu0
        %v2404 = vpop.f32.mrb[0].mxu0
        %v2405 = vadd.f32 0.0, %v2404
        %v2406 = vpop.f32.mrb[0].mxu0
        %2407 = vmatprep.mubr.bf16.mxu0 0
        %2408 = vmatmul.mubr.bf16.gmra.mrb[0].mxu0 %v2269
        %v2409 = vpop.f32.mrb[0].mxu0
        %v2410 = vadd.f32 0.0, %v2409
        %v2411 = vpop.f32.mrb[0].mxu0
        %v2412 = vpop.f32.mrb[0].mxu0
        %v2413 = vadd.f32 0.0, %v2412
        %v2414 = vpop.f32.mrb[0].mxu0
        %2415 = vmatprep.mubr.bf16.mxu0 0
        %2416 = vmatmul.mubr.bf16.gmra.mrb[0].mxu0 %v2272
        %v2417 = vpop.f32.mrb[0].mxu0
        %v2418 = vadd.f32 0.0, %v2417
        %v2419 = vpop.f32.mrb[0].mxu0
        %v2420 = vpop.f32.mrb[0].mxu0
        %v2421 = vadd.f32 0.0, %v2420
        %v2422 = vpop.f32.mrb[0].mxu0
        %2423 = vmatprep.mubr.bf16.mxu0 0
        %2424 = vmatmul.mubr.bf16.gmra.mrb[0].mxu0 %v2275
        %v2425 = vpop.f32.mrb[0].mxu0
        %v2426 = vadd.f32 0.0, %v2425
        %v2427 = vpop.f32.mrb[0].mxu0
        %v2428 = vpop.f32.mrb[0].mxu0
        %v2429 = vadd.f32 0.0, %v2428
        %v2430 = vpop.f32.mrb[0].mxu0
        %2431 = vmatprep.mubr.bf16.mxu0 0
        %2432 = vmatmul.mubr.bf16.gmra.mrb[0].mxu0 %v2278
        %v2433 = vpop.f32.mrb[0].mxu0
        %v2434 = vadd.f32 0.0, %v2433
        %v2435 = vpop.f32.mrb[0].mxu0
        %v2436 = vpop.f32.mrb[0].mxu0
        %v2437 = vadd.f32 0.0, %v2436
        %v2438 = vpop.f32.mrb[0].mxu0
        %2439 = vmatprep.mubr.bf16.mxu0 0
        %2440 = vmatmul.mubr.bf16.gmra.mrb[0].mxu0 %v2281
        %v2441 = vpop.f32.mrb[0].mxu0
        %v2442 = vadd.f32 0.0, %v2441
        %v2443 = vpop.f32.mrb[0].mxu0
        %v2444 = vpop.f32.mrb[0].mxu0
        %v2445 = vadd.f32 0.0, %v2444
        %v2446 = vpop.f32.mrb[0].mxu0
        %2447 = vmatprep.mubr.bf16.mxu0 0
        %2448 = vmatmul.mubr.bf16.gmra.mrb[0].mxu0 %v2284
        %v2449 = vpop.f32.mrb[0].mxu0
        %v2450 = vadd.f32 0.0, %v2449
        %v2451 = vpop.f32.mrb[0].mxu0
        %v2452 = vpop.f32.mrb[0].mxu0
        %v2453 = vadd.f32 0.0, %v2452
        %v2454 = vpop.f32.mrb[0].mxu0
        %2455 = vmatprep.mubr.bf16.mxu0 0
        %2456 = vmatmul.mubr.bf16.gmra.mrb[0].mxu0 %v2287
        %v2457 = vpop.f32.mrb[0].mxu0
        %v2458 = vadd.f32 0.0, %v2457
        %v2459 = vpop.f32.mrb[0].mxu0
        %v2460 = vpop.f32.mrb[0].mxu0
        %v2461 = vadd.f32 0.0, %v2460
        %v2462 = vpop.f32.mrb[0].mxu0
        %2463 = vmatprep.mubr.bf16.mxu0 0
        %2464 = vmatmul.mubr.bf16.gmra.mrb[0].mxu0 %v2290
        %v2465 = vpop.f32.mrb[0].mxu0
        %v2466 = vadd.f32 0.0, %v2465
        %v2467 = vpop.f32.mrb[0].mxu0
        %v2468 = vpop.f32.mrb[0].mxu0
        %v2469 = vadd.f32 0.0, %v2468
        %v2470 = vpop.f32.mrb[0].mxu0
        %2471 = vdwg.mxu0
        %v2472 = vadd.f32 %v2025, %v2330
        %v2473 = vadd.f32 %v2026, %v2333
        %v2474 = vadd.f32 %v2027, %v2338
        %v2475 = vadd.f32 %v2028, %v2341
        %v2476 = vadd.f32 %v2029, %v2346
        %v2477 = vadd.f32 %v2030, %v2349
        %v2478 = vadd.f32 %v2031, %v2354
        %v2479 = vadd.f32 %v2032, %v2357
        %v2480 = vadd.f32 %v2033, %v2362
        %v2481 = vadd.f32 %v2034, %v2365
        %v2482 = vadd.f32 %v2035, %v2370
        %v2483 = vadd.f32 %v2036, %v2373
        %v2484 = vadd.f32 %v2037, %v2378
        %v2485 = vadd.f32 %v2038, %v2381
        %v2486 = vadd.f32 %v2039, %v2386
        %v2487 = vadd.f32 %v2040, %v2389
        %v2488 = vadd.f32 %v2041, %v2394
        %v2489 = vadd.f32 %v2042, %v2397
        %v2490 = vadd.f32 %v2043, %v2402
        %v2491 = vadd.f32 %v2044, %v2405
        %v2492 = vadd.f32 %v2045, %v2410
        %v2493 = vadd.f32 %v2046, %v2413
        %v2494 = vadd.f32 %v2047, %v2418
        %v2495 = vadd.f32 %v2048, %v2421
        %v2496 = vadd.f32 %v2049, %v2426
        %v2497 = vadd.f32 %v2050, %v2429
        %v2498 = vadd.f32 %v2051, %v2434
        %v2499 = vadd.f32 %v2052, %v2437
        %v2500 = vadd.f32 %v2053, %v2442
        %v2501 = vadd.f32 %v2054, %v2445
        %v2502 = vadd.f32 %v2055, %v2450
        %v2503 = vadd.f32 %v2056, %v2453
        %v2504 = vadd.f32 %v2057, %v2458
        %v2505 = vadd.f32 %v2058, %v2461
        %v2506 = vadd.f32 %v2059, %v2466
        %v2507 = vadd.f32 %v2060, %v2469
        %v2508 = vld [vmem:[%s572 + $0x8] sm:$0xc]
        %s2509 = scalar_lea.vmem %s1, 20
        %v2510 = vld [vmem:[%s2509] sm:$0xf]
        %v2512 = vunpack.c.l.b16 %v2508
        %v2513 = vpack.c.b16 %v1699, %v2512
        %vm2514 = vcmask 1045504
        %v2515 = vrot.slane %v2513, 2
        %v2516 = vrot.slane %v1736, 2
        %v2517 = vsel %vm2514, %v2515, %v2516
        %v2518 = vrot.slane %v1737, 2
        %v2519 = vsel %vm2514, %v2516, %v2518
        %v2520 = vrot.slane %v1738, 2
        %v2521 = vsel %vm2514, %v2518, %v2520
        %v2522 = vrot.slane %v1739, 2
        %v2523 = vsel %vm2514, %v2520, %v2522
        %v2524 = vrot.slane %v1740, 2
        %v2525 = vsel %vm2514, %v2522, %v2524
        %v2526 = vrot.slane %v1741, 2
        %v2527 = vsel %vm2514, %v2524, %v2526
        %v2528 = vrot.slane %v1742, 2
        %v2529 = vsel %vm2514, %v2526, %v2528
        %v2530 = vrot.slane %v1743, 2
        %v2531 = vsel %vm2514, %v2528, %v2530
        %v2532 = vrot.slane %v1744, 2
        %v2533 = vsel %vm2514, %v2530, %v2532
        %v2534 = vrot.slane %v1745, 2
        %v2535 = vsel %vm2514, %v2532, %v2534
        %v2536 = vrot.slane %v1746, 2
        %v2537 = vsel %vm2514, %v2534, %v2536
        %v2538 = vrot.slane %v1747, 2
        %v2539 = vsel %vm2514, %v2536, %v2538
        %v2540 = vrot.slane %v1748, 2
        %v2541 = vsel %vm2514, %v2538, %v2540
        %v2542 = vrot.slane %v1749, 2
        %v2543 = vsel %vm2514, %v2540, %v2542
        %v2544 = vrot.slane %v1750, 2
        %v2545 = vsel %vm2514, %v2542, %v2544
        %v2546 = vrot.slane %v1751, 2
        %v2547 = vsel %vm2514, %v2544, %v2546
        %v2548 = vrot.slane %v1752, 2
        %v2549 = vsel %vm2514, %v2546, %v2548
        %v2550 = vrot.slane %v2066, 2
        %v2551 = vsel %vm2514, %v2548, %v2550
        %v2553 = vsel %vm856, %v2517, 0
        %v2556 = vsel %vm856, %v2519, 0
        %v2559 = vsel %vm856, %v2521, 0
        %v2562 = vsel %vm856, %v2523, 0
        %v2565 = vsel %vm856, %v2525, 0
        %v2568 = vsel %vm856, %v2527, 0
        %v2571 = vsel %vm856, %v2529, 0
        %v2574 = vsel %vm856, %v2531, 0
        %v2577 = vsel %vm856, %v2533, 0
        %v2580 = vsel %vm856, %v2535, 0
        %v2583 = vsel %vm856, %v2537, 0
        %v2586 = vsel %vm856, %v2539, 0
        %v2589 = vsel %vm856, %v2541, 0
        %v2592 = vsel %vm856, %v2543, 0
        %v2595 = vsel %vm856, %v2545, 0
        %v2598 = vsel %vm856, %v2547, 0
        %v2601 = vsel %vm856, %v2549, 0
        %v2604 = vsel %vm856, %v2551, 0
        %v2607 = vsel %vm911, %v2510, 0
        %2609 = vmatprep.subr.bf16.mxu0 0
        %2610 = vmatpush1.bf16.msra.mxu0 %v2607
        %2611 = vmatprep.subr.bf16.mxu0 0
        %2612 = vmatpush1.bf16.msra.mxu0 0
        %2613 = vmatprep.subr.bf16.mxu0 0
        %2614 = vmatpush1.bf16.msra.mxu0 0
        %2615 = vmatprep.subr.bf16.mxu0 0
        %2616 = vmatpush1.bf16.msra.mxu0 0
        %2617 = vmatprep.subr.bf16.mxu0 0
        %2618 = vmatpush1.bf16.msra.mxu0 0
        %2619 = vmatprep.subr.bf16.mxu0 0
        %2620 = vmatpush1.bf16.msra.mxu0 0
        %2621 = vmatprep.subr.bf16.mxu0 0
        %2622 = vmatpush1.bf16.msra.mxu0 0
        %2623 = vmatprep.subr.bf16.mxu0 0
        %2624 = vmatpush1.bf16.msra.mxu0 0
        %2625 = vmatprep.subr.bf16.mxu0 0
        %2626 = vmatpush1.bf16.msra.mxu0 0
        %2627 = vmatprep.subr.bf16.mxu0 0
        %2628 = vmatpush1.bf16.msra.mxu0 0
        %2629 = vmatprep.subr.bf16.mxu0 0
        %2630 = vmatpush1.bf16.msra.mxu0 0
        %2631 = vmatprep.subr.bf16.mxu0 0
        %2632 = vmatpush1.bf16.msra.mxu0 0
        %2633 = vmatprep.subr.bf16.mxu0 0
        %2634 = vmatpush1.bf16.msra.mxu0 0
        %2635 = vmatprep.subr.bf16.mxu0 0
        %2636 = vmatpush1.bf16.msra.mxu0 0
        %2637 = vmatprep.subr.bf16.mxu0 0
        %2638 = vmatpush1.bf16.msra.mxu0 0
        %2639 = vmatprep.subr.bf16.mxu0 0
        %2640 = vmatpush1.bf16.msra.mxu0 0
        %2641 = vmatprep.mubr.bf16.mxu0 0
        %2642 = vmatmul.mubr.bf16.gmra.mrb[0].mxu0 %v2553
        %v2643 = vpop.f32.mrb[0].mxu0
        %v2644 = vadd.f32 0.0, %v2643
        %v2645 = vpop.f32.mrb[0].mxu0
        %v2646 = vpop.f32.mrb[0].mxu0
        %v2647 = vadd.f32 0.0, %v2646
        %v2648 = vpop.f32.mrb[0].mxu0
        %2649 = vmatprep.mubr.bf16.mxu0 0
        %2650 = vmatmul.mubr.bf16.gmra.mrb[0].mxu0 %v2556
        %v2651 = vpop.f32.mrb[0].mxu0
        %v2652 = vadd.f32 0.0, %v2651
        %v2653 = vpop.f32.mrb[0].mxu0
        %v2654 = vpop.f32.mrb[0].mxu0
        %v2655 = vadd.f32 0.0, %v2654
        %v2656 = vpop.f32.mrb[0].mxu0
        %2657 = vmatprep.mubr.bf16.mxu0 0
        %2658 = vmatmul.mubr.bf16.gmra.mrb[0].mxu0 %v2559
        %v2659 = vpop.f32.mrb[0].mxu0
        %v2660 = vadd.f32 0.0, %v2659
        %v2661 = vpop.f32.mrb[0].mxu0
        %v2662 = vpop.f32.mrb[0].mxu0
        %v2663 = vadd.f32 0.0, %v2662
        %v2664 = vpop.f32.mrb[0].mxu0
        %2665 = vmatprep.mubr.bf16.mxu0 0
        %2666 = vmatmul.mubr.bf16.gmra.mrb[0].mxu0 %v2562
        %v2667 = vpop.f32.mrb[0].mxu0
        %v2668 = vadd.f32 0.0, %v2667
        %v2669 = vpop.f32.mrb[0].mxu0
        %v2670 = vpop.f32.mrb[0].mxu0
        %v2671 = vadd.f32 0.0, %v2670
        %v2672 = vpop.f32.mrb[0].mxu0
        %2673 = vmatprep.mubr.bf16.mxu0 0
        %2674 = vmatmul.mubr.bf16.gmra.mrb[0].mxu0 %v2565
        %v2675 = vpop.f32.mrb[0].mxu0
        %v2676 = vadd.f32 0.0, %v2675
        %v2677 = vpop.f32.mrb[0].mxu0
        %v2678 = vpop.f32.mrb[0].mxu0
        %v2679 = vadd.f32 0.0, %v2678
        %v2680 = vpop.f32.mrb[0].mxu0
        %2681 = vmatprep.mubr.bf16.mxu0 0
        %2682 = vmatmul.mubr.bf16.gmra.mrb[0].mxu0 %v2568
        %v2683 = vpop.f32.mrb[0].mxu0
        %v2684 = vadd.f32 0.0, %v2683
        %v2685 = vpop.f32.mrb[0].mxu0
        %v2686 = vpop.f32.mrb[0].mxu0
        %v2687 = vadd.f32 0.0, %v2686
        %v2688 = vpop.f32.mrb[0].mxu0
        %2689 = vmatprep.mubr.bf16.mxu0 0
        %2690 = vmatmul.mubr.bf16.gmra.mrb[0].mxu0 %v2571
        %v2691 = vpop.f32.mrb[0].mxu0
        %v2692 = vadd.f32 0.0, %v2691
        %v2693 = vpop.f32.mrb[0].mxu0
        %v2694 = vpop.f32.mrb[0].mxu0
        %v2695 = vadd.f32 0.0, %v2694
        %v2696 = vpop.f32.mrb[0].mxu0
        %2697 = vmatprep.mubr.bf16.mxu0 0
        %2698 = vmatmul.mubr.bf16.gmra.mrb[0].mxu0 %v2574
        %v2699 = vpop.f32.mrb[0].mxu0
        %v2700 = vadd.f32 0.0, %v2699
        %v2701 = vpop.f32.mrb[0].mxu0
        %v2702 = vpop.f32.mrb[0].mxu0
        %v2703 = vadd.f32 0.0, %v2702
        %v2704 = vpop.f32.mrb[0].mxu0
        %2705 = vmatprep.mubr.bf16.mxu0 0
        %2706 = vmatmul.mubr.bf16.gmra.mrb[0].mxu0 %v2577
        %v2707 = vpop.f32.mrb[0].mxu0
        %v2708 = vadd.f32 0.0, %v2707
        %v2709 = vpop.f32.mrb[0].mxu0
        %v2710 = vpop.f32.mrb[0].mxu0
        %v2711 = vadd.f32 0.0, %v2710
        %v2712 = vpop.f32.mrb[0].mxu0
        %2713 = vmatprep.mubr.bf16.mxu0 0
        %2714 = vmatmul.mubr.bf16.gmra.mrb[0].mxu0 %v2580
        %v2715 = vpop.f32.mrb[0].mxu0
        %v2716 = vadd.f32 0.0, %v2715
        %v2717 = vpop.f32.mrb[0].mxu0
        %v2718 = vpop.f32.mrb[0].mxu0
        %v2719 = vadd.f32 0.0, %v2718
        %v2720 = vpop.f32.mrb[0].mxu0
        %2721 = vmatprep.mubr.bf16.mxu0 0
        %2722 = vmatmul.mubr.bf16.gmra.mrb[0].mxu0 %v2583
        %v2723 = vpop.f32.mrb[0].mxu0
        %v2724 = vadd.f32 0.0, %v2723
        %v2725 = vpop.f32.mrb[0].mxu0
        %v2726 = vpop.f32.mrb[0].mxu0
        %v2727 = vadd.f32 0.0, %v2726
        %v2728 = vpop.f32.mrb[0].mxu0
        %2729 = vmatprep.mubr.bf16.mxu0 0
        %2730 = vmatmul.mubr.bf16.gmra.mrb[0].mxu0 %v2586
        %v2731 = vpop.f32.mrb[0].mxu0
        %v2732 = vadd.f32 0.0, %v2731
        %v2733 = vpop.f32.mrb[0].mxu0
        %v2734 = vpop.f32.mrb[0].mxu0
        %v2735 = vadd.f32 0.0, %v2734
        %v2736 = vpop.f32.mrb[0].mxu0
        %2737 = vmatprep.mubr.bf16.mxu0 0
        %2738 = vmatmul.mubr.bf16.gmra.mrb[0].mxu0 %v2589
        %v2739 = vpop.f32.mrb[0].mxu0
        %v2740 = vadd.f32 0.0, %v2739
        %v2741 = vpop.f32.mrb[0].mxu0
        %v2742 = vpop.f32.mrb[0].mxu0
        %v2743 = vadd.f32 0.0, %v2742
        %v2744 = vpop.f32.mrb[0].mxu0
        %2745 = vmatprep.mubr.bf16.mxu0 0
        %2746 = vmatmul.mubr.bf16.gmra.mrb[0].mxu0 %v2592
        %v2747 = vpop.f32.mrb[0].mxu0
        %v2748 = vadd.f32 0.0, %v2747
        %v2749 = vpop.f32.mrb[0].mxu0
        %v2750 = vpop.f32.mrb[0].mxu0
        %v2751 = vadd.f32 0.0, %v2750
        %v2752 = vpop.f32.mrb[0].mxu0
        %2753 = vmatprep.mubr.bf16.mxu0 0
        %2754 = vmatmul.mubr.bf16.gmra.mrb[0].mxu0 %v2595
        %v2755 = vpop.f32.mrb[0].mxu0
        %v2756 = vadd.f32 0.0, %v2755
        %v2757 = vpop.f32.mrb[0].mxu0
        %v2758 = vpop.f32.mrb[0].mxu0
        %v2759 = vadd.f32 0.0, %v2758
        %v2760 = vpop.f32.mrb[0].mxu0
        %2761 = vmatprep.mubr.bf16.mxu0 0
        %2762 = vmatmul.mubr.bf16.gmra.mrb[0].mxu0 %v2598
        %v2763 = vpop.f32.mrb[0].mxu0
        %v2764 = vadd.f32 0.0, %v2763
        %v2765 = vpop.f32.mrb[0].mxu0
        %v2766 = vpop.f32.mrb[0].mxu0
        %v2767 = vadd.f32 0.0, %v2766
        %v2768 = vpop.f32.mrb[0].mxu0
        %2769 = vmatprep.mubr.bf16.mxu0 0
        %2770 = vmatmul.mubr.bf16.gmra.mrb[0].mxu0 %v2601
        %v2771 = vpop.f32.mrb[0].mxu0
        %v2772 = vadd.f32 0.0, %v2771
        %v2773 = vpop.f32.mrb[0].mxu0
        %v2774 = vpop.f32.mrb[0].mxu0
        %v2775 = vadd.f32 0.0, %v2774
        %v2776 = vpop.f32.mrb[0].mxu0
        %2777 = vmatprep.mubr.bf16.mxu0 0
        %2778 = vmatmul.mubr.bf16.gmra.mrb[0].mxu0 %v2604
        %v2779 = vpop.f32.mrb[0].mxu0
        %v2780 = vadd.f32 0.0, %v2779
        %v2781 = vpop.f32.mrb[0].mxu0
        %v2782 = vpop.f32.mrb[0].mxu0
        %v2783 = vadd.f32 0.0, %v2782
        %v2784 = vpop.f32.mrb[0].mxu0
        %2785 = vdwg.mxu0
        %v2786 = vadd.f32 %v2472, %v2644
        %v2787 = vadd.f32 %v2473, %v2647
        %v2788 = vadd.f32 %v2474, %v2652
        %v2789 = vadd.f32 %v2475, %v2655
        %v2790 = vadd.f32 %v2476, %v2660
        %v2791 = vadd.f32 %v2477, %v2663
        %v2792 = vadd.f32 %v2478, %v2668
        %v2793 = vadd.f32 %v2479, %v2671
        %v2794 = vadd.f32 %v2480, %v2676
        %v2795 = vadd.f32 %v2481, %v2679
        %v2796 = vadd.f32 %v2482, %v2684
        %v2797 = vadd.f32 %v2483, %v2687
        %v2798 = vadd.f32 %v2484, %v2692
        %v2799 = vadd.f32 %v2485, %v2695
        %v2800 = vadd.f32 %v2486, %v2700
        %v2801 = vadd.f32 %v2487, %v2703
        %v2802 = vadd.f32 %v2488, %v2708
        %v2803 = vadd.f32 %v2489, %v2711
        %v2804 = vadd.f32 %v2490, %v2716
        %v2805 = vadd.f32 %v2491, %v2719
        %v2806 = vadd.f32 %v2492, %v2724
        %v2807 = vadd.f32 %v2493, %v2727
        %v2808 = vadd.f32 %v2494, %v2732
        %v2809 = vadd.f32 %v2495, %v2735
        %v2810 = vadd.f32 %v2496, %v2740
        %v2811 = vadd.f32 %v2497, %v2743
        %v2812 = vadd.f32 %v2498, %v2748
        %v2813 = vadd.f32 %v2499, %v2751
        %v2814 = vadd.f32 %v2500, %v2756
        %v2815 = vadd.f32 %v2501, %v2759
        %v2816 = vadd.f32 %v2502, %v2764
        %v2817 = vadd.f32 %v2503, %v2767
        %v2818 = vadd.f32 %v2504, %v2772
        %v2819 = vadd.f32 %v2505, %v2775
        %v2820 = vadd.f32 %v2506, %v2780
        %v2821 = vadd.f32 %v2507, %v2783
        %v2822 = vld [vmem:[%s572 + $0x10] sm:$0xc]
        %v2823 = vld [vmem:[%s572 + $0x14] sm:$0xf]
        %v2824 = vld [vmem:[%s572 + $0x18] sm:$0xf]
        %v2825 = vld [vmem:[%s572 + $0x1c] sm:$0xf]
        %v2826 = vld [vmem:[%s572 + $0x20] sm:$0xf]
        %v2827 = vld [vmem:[%s572 + $0x24] sm:$0xf]
        %v2828 = vld [vmem:[%s572 + $0x28] sm:$0xf]
        %v2829 = vld [vmem:[%s572 + $0x2c] sm:$0xf]
        %v2830 = vld [vmem:[%s572 + $0x30] sm:$0xf]
        %v2831 = vld [vmem:[%s572 + $0x34] sm:$0xf]
        %v2832 = vld [vmem:[%s572 + $0x38] sm:$0xf]
        %v2833 = vld [vmem:[%s572 + $0x3c] sm:$0xf]
        %v2834 = vld [vmem:[%s572 + $0x40] sm:$0xf]
        %v2835 = vld [vmem:[%s572 + $0x44] sm:$0xf]
        %v2836 = vld [vmem:[%s572 + $0x48] sm:$0xf]
        %v2837 = vld [vmem:[%s572 + $0x4c] sm:$0xf]
        %v2838 = vld [vmem:[%s572 + $0x50] sm:$0xf]
        %v2839 = vld [vmem:[%s572 + $0x54] sm:$0xf]
        %v2840 = vld [vmem:[%s572 + $0x58] sm:$0xf]
        %v2841 = vld [vmem:[%s572 + $0x5c] sm:$0xf]
        %v2842 = vld [vmem:[%s572 + $0x60] sm:$0xf]
        %v2843 = vld [vmem:[%s572 + $0x64] sm:$0xf]
        %v2844 = vld [vmem:[%s572 + $0x68] sm:$0xf]
        %v2845 = vld [vmem:[%s572 + $0x6c] sm:$0xf]
        %v2846 = vld [vmem:[%s572 + $0x70] sm:$0xf]
        %v2847 = vld [vmem:[%s572 + $0x74] sm:$0xf]
        %v2848 = vld [vmem:[%s572 + $0x78] sm:$0xf]
        %v2849 = vld [vmem:[%s572 + $0x7c] sm:$0xf]
        %v2850 = vld [vmem:[%s572 + $0x80] sm:$0xf]
        %v2851 = vld [vmem:[%s572 + $0x84] sm:$0xf]
        %v2852 = vld [vmem:[%s572 + $0x88] sm:$0xf]
        %v2853 = vld [vmem:[%s572 + $0x8c] sm:$0xf]
        %v2854 = vld [vmem:[%s572 + $0x90] sm:$0xf]
        %v2855 = vld [vmem:[%s572 + $0x94] sm:$0xf]
        %v2856 = vld [vmem:[%s572 + $0x98] sm:$0xf]
        %v2857 = vld [vmem:[%s572 + $0x9c] sm:$0xf]
        %v2858 = vld [vmem:[%s572 + $0xa0] sm:$0x3]
        %s2859 = scalar_lea.vmem %s1, 24
        %v2860 = vld [vmem:[%s2859] sm:$0xf]
        %v2898 = vunpack.c.l.b16 %v2822
        %v2899 = vunpack.c.l.b16 %v2823
        %v2900 = vunpack.c.l.b16 %v2824
        %v2901 = vunpack.c.l.b16 %v2825
        %v2902 = vunpack.c.l.b16 %v2826
        %v2903 = vunpack.c.l.b16 %v2827
        %v2904 = vunpack.c.l.b16 %v2828
        %v2905 = vunpack.c.l.b16 %v2829
        %v2906 = vunpack.c.l.b16 %v2830
        %v2907 = vunpack.c.l.b16 %v2831
        %v2908 = vunpack.c.l.b16 %v2832
        %v2909 = vunpack.c.l.b16 %v2833
        %v2910 = vunpack.c.l.b16 %v2834
        %v2911 = vunpack.c.l.b16 %v2835
        %v2912 = vunpack.c.l.b16 %v2836
        %v2913 = vunpack.c.l.b16 %v2837
        %v2914 = vunpack.c.l.b16 %v2838
        %v2915 = vunpack.c.l.b16 %v2839
        %v2916 = vunpack.c.l.b16 %v2840
        %v2917 = vunpack.c.l.b16 %v2841
        %v2918 = vunpack.c.l.b16 %v2842
        %v2919 = vunpack.c.l.b16 %v2843
        %v2920 = vunpack.c.l.b16 %v2844
        %v2921 = vunpack.c.l.b16 %v2845
        %v2922 = vunpack.c.l.b16 %v2846
        %v2923 = vunpack.c.l.b16 %v2847
        %v2924 = vunpack.c.l.b16 %v2848
        %v2925 = vunpack.c.l.b16 %v2849
        %v2926 = vunpack.c.l.b16 %v2850
        %v2927 = vunpack.c.l.b16 %v2851
        %v2928 = vunpack.c.l.b16 %v2852
        %v2929 = vunpack.c.l.b16 %v2853
        %v2930 = vunpack.c.l.b16 %v2854
        %v2931 = vunpack.c.l.b16 %v2855
        %v2932 = vunpack.c.l.b16 %v2856
        %v2933 = vunpack.c.l.b16 %v2857
        %v2934 = vunpack.c.l.b16 %v2858
        %v2935 = vpack.c.b16 %v2899, %v2898
        %v2936 = vpack.c.b16 %v2901, %v2900
        %v2937 = vpack.c.b16 %v2903, %v2902
        %v2938 = vpack.c.b16 %v2905, %v2904
        %v2939 = vpack.c.b16 %v2907, %v2906
        %v2940 = vpack.c.b16 %v2909, %v2908
        %v2941 = vpack.c.b16 %v2911, %v2910
        %v2942 = vpack.c.b16 %v2913, %v2912
        %v2943 = vpack.c.b16 %v2915, %v2914
        %v2944 = vpack.c.b16 %v2917, %v2916
        %v2945 = vpack.c.b16 %v2919, %v2918
        %v2946 = vpack.c.b16 %v2921, %v2920
        %v2947 = vpack.c.b16 %v2923, %v2922
        %v2948 = vpack.c.b16 %v2925, %v2924
        %v2949 = vpack.c.b16 %v2927, %v2926
        %v2950 = vpack.c.b16 %v2929, %v2928
        %v2951 = vpack.c.b16 %v2931, %v2930
        %v2952 = vpack.c.b16 %v2933, %v2932
        %v2953 = vpack.c.b16 %v2934, %v2934
        %v2954 = vrot.slane %v2935, 2
        %v2955 = vrot.slane %v2936, 2
        %v2956 = vsel %vm2514, %v2954, %v2955
        %v2957 = vrot.slane %v2937, 2
        %v2958 = vsel %vm2514, %v2955, %v2957
        %v2959 = vrot.slane %v2938, 2
        %v2960 = vsel %vm2514, %v2957, %v2959
        %v2961 = vrot.slane %v2939, 2
        %v2962 = vsel %vm2514, %v2959, %v2961
        %v2963 = vrot.slane %v2940, 2
        %v2964 = vsel %vm2514, %v2961, %v2963
        %v2965 = vrot.slane %v2941, 2
        %v2966 = vsel %vm2514, %v2963, %v2965
        %v2967 = vrot.slane %v2942, 2
        %v2968 = vsel %vm2514, %v2965, %v2967
        %v2969 = vrot.slane %v2943, 2
        %v2970 = vsel %vm2514, %v2967, %v2969
        %v2971 = vrot.slane %v2944, 2
        %v2972 = vsel %vm2514, %v2969, %v2971
        %v2973 = vrot.slane %v2945, 2
        %v2974 = vsel %vm2514, %v2971, %v2973
        %v2975 = vrot.slane %v2946, 2
        %v2976 = vsel %vm2514, %v2973, %v2975
        %v2977 = vrot.slane %v2947, 2
        %v2978 = vsel %vm2514, %v2975, %v2977
        %v2979 = vrot.slane %v2948, 2
        %v2980 = vsel %vm2514, %v2977, %v2979
        %v2981 = vrot.slane %v2949, 2
        %v2982 = vsel %vm2514, %v2979, %v2981
        %v2983 = vrot.slane %v2950, 2
        %v2984 = vsel %vm2514, %v2981, %v2983
        %v2985 = vrot.slane %v2951, 2
        %v2986 = vsel %vm2514, %v2983, %v2985
        %v2987 = vrot.slane %v2952, 2
        %v2988 = vsel %vm2514, %v2985, %v2987
        %v2989 = vrot.slane %v2953, 2
        %v2990 = vsel %vm2514, %v2987, %v2989
        %v2992 = vsel %vm856, %v2956, 0
        %v2995 = vsel %vm856, %v2958, 0
        %v2998 = vsel %vm856, %v2960, 0
        %v3001 = vsel %vm856, %v2962, 0
        %v3004 = vsel %vm856, %v2964, 0
        %v3007 = vsel %vm856, %v2966, 0
        %v3010 = vsel %vm856, %v2968, 0
        %v3013 = vsel %vm856, %v2970, 0
        %v3016 = vsel %vm856, %v2972, 0
        %v3019 = vsel %vm856, %v2974, 0
        %v3022 = vsel %vm856, %v2976, 0
        %v3025 = vsel %vm856, %v2978, 0
        %v3028 = vsel %vm856, %v2980, 0
        %v3031 = vsel %vm856, %v2982, 0
        %v3034 = vsel %vm856, %v2984, 0
        %v3037 = vsel %vm856, %v2986, 0
        %v3040 = vsel %vm856, %v2988, 0
        %v3043 = vsel %vm856, %v2990, 0
        %v3046 = vsel %vm911, %v2860, 0
        %3048 = vmatprep.subr.bf16.mxu0 0
        %3049 = vmatpush1.bf16.msra.mxu0 %v3046
        %3050 = vmatprep.subr.bf16.mxu0 0
        %3051 = vmatpush1.bf16.msra.mxu0 0
        %3052 = vmatprep.subr.bf16.mxu0 0
        %3053 = vmatpush1.bf16.msra.mxu0 0
        %3054 = vmatprep.subr.bf16.mxu0 0
        %3055 = vmatpush1.bf16.msra.mxu0 0
        %3056 = vmatprep.subr.bf16.mxu0 0
        %3057 = vmatpush1.bf16.msra.mxu0 0
        %3058 = vmatprep.subr.bf16.mxu0 0
        %3059 = vmatpush1.bf16.msra.mxu0 0
        %3060 = vmatprep.subr.bf16.mxu0 0
        %3061 = vmatpush1.bf16.msra.mxu0 0
        %3062 = vmatprep.subr.bf16.mxu0 0
        %3063 = vmatpush1.bf16.msra.mxu0 0
        %3064 = vmatprep.subr.bf16.mxu0 0
        %3065 = vmatpush1.bf16.msra.mxu0 0
        %3066 = vmatprep.subr.bf16.mxu0 0
        %3067 = vmatpush1.bf16.msra.mxu0 0
        %3068 = vmatprep.subr.bf16.mxu0 0
        %3069 = vmatpush1.bf16.msra.mxu0 0
        %3070 = vmatprep.subr.bf16.mxu0 0
        %3071 = vmatpush1.bf16.msra.mxu0 0
        %3072 = vmatprep.subr.bf16.mxu0 0
        %3073 = vmatpush1.bf16.msra.mxu0 0
        %3074 = vmatprep.subr.bf16.mxu0 0
        %3075 = vmatpush1.bf16.msra.mxu0 0
        %3076 = vmatprep.subr.bf16.mxu0 0
        %3077 = vmatpush1.bf16.msra.mxu0 0
        %3078 = vmatprep.subr.bf16.mxu0 0
        %3079 = vmatpush1.bf16.msra.mxu0 0
        %3080 = vmatprep.mubr.bf16.mxu0 0
        %3081 = vmatmul.mubr.bf16.gmra.mrb[0].mxu0 %v2992
        %v3082 = vpop.f32.mrb[0].mxu0
        %v3083 = vadd.f32 0.0, %v3082
        %v3084 = vpop.f32.mrb[0].mxu0
        %v3085 = vpop.f32.mrb[0].mxu0
        %v3086 = vadd.f32 0.0, %v3085
        %v3087 = vpop.f32.mrb[0].mxu0
        %3088 = vmatprep.mubr.bf16.mxu0 0
        %3089 = vmatmul.mubr.bf16.gmra.mrb[0].mxu0 %v2995
        %v3090 = vpop.f32.mrb[0].mxu0
        %v3091 = vadd.f32 0.0, %v3090
        %v3092 = vpop.f32.mrb[0].mxu0
        %v3093 = vpop.f32.mrb[0].mxu0
        %v3094 = vadd.f32 0.0, %v3093
        %v3095 = vpop.f32.mrb[0].mxu0
        %3096 = vmatprep.mubr.bf16.mxu0 0
        %3097 = vmatmul.mubr.bf16.gmra.mrb[0].mxu0 %v2998
        %v3098 = vpop.f32.mrb[0].mxu0
        %v3099 = vadd.f32 0.0, %v3098
        %v3100 = vpop.f32.mrb[0].mxu0
        %v3101 = vpop.f32.mrb[0].mxu0
        %v3102 = vadd.f32 0.0, %v3101
        %v3103 = vpop.f32.mrb[0].mxu0
        %3104 = vmatprep.mubr.bf16.mxu0 0
        %3105 = vmatmul.mubr.bf16.gmra.mrb[0].mxu0 %v3001
        %v3106 = vpop.f32.mrb[0].mxu0
        %v3107 = vadd.f32 0.0, %v3106
        %v3108 = vpop.f32.mrb[0].mxu0
        %v3109 = vpop.f32.mrb[0].mxu0
        %v3110 = vadd.f32 0.0, %v3109
        %v3111 = vpop.f32.mrb[0].mxu0
        %3112 = vmatprep.mubr.bf16.mxu0 0
        %3113 = vmatmul.mubr.bf16.gmra.mrb[0].mxu0 %v3004
        %v3114 = vpop.f32.mrb[0].mxu0
        %v3115 = vadd.f32 0.0, %v3114
        %v3116 = vpop.f32.mrb[0].mxu0
        %v3117 = vpop.f32.mrb[0].mxu0
        %v3118 = vadd.f32 0.0, %v3117
        %v3119 = vpop.f32.mrb[0].mxu0
        %3120 = vmatprep.mubr.bf16.mxu0 0
        %3121 = vmatmul.mubr.bf16.gmra.mrb[0].mxu0 %v3007
        %v3122 = vpop.f32.mrb[0].mxu0
        %v3123 = vadd.f32 0.0, %v3122
        %v3124 = vpop.f32.mrb[0].mxu0
        %v3125 = vpop.f32.mrb[0].mxu0
        %v3126 = vadd.f32 0.0, %v3125
        %v3127 = vpop.f32.mrb[0].mxu0
        %3128 = vmatprep.mubr.bf16.mxu0 0
        %3129 = vmatmul.mubr.bf16.gmra.mrb[0].mxu0 %v3010
        %v3130 = vpop.f32.mrb[0].mxu0
        %v3131 = vadd.f32 0.0, %v3130
        %v3132 = vpop.f32.mrb[0].mxu0
        %v3133 = vpop.f32.mrb[0].mxu0
        %v3134 = vadd.f32 0.0, %v3133
        %v3135 = vpop.f32.mrb[0].mxu0
        %3136 = vmatprep.mubr.bf16.mxu0 0
        %3137 = vmatmul.mubr.bf16.gmra.mrb[0].mxu0 %v3013
        %v3138 = vpop.f32.mrb[0].mxu0
        %v3139 = vadd.f32 0.0, %v3138
        %v3140 = vpop.f32.mrb[0].mxu0
        %v3141 = vpop.f32.mrb[0].mxu0
        %v3142 = vadd.f32 0.0, %v3141
        %v3143 = vpop.f32.mrb[0].mxu0
        %3144 = vmatprep.mubr.bf16.mxu0 0
        %3145 = vmatmul.mubr.bf16.gmra.mrb[0].mxu0 %v3016
        %v3146 = vpop.f32.mrb[0].mxu0
        %v3147 = vadd.f32 0.0, %v3146
        %v3148 = vpop.f32.mrb[0].mxu0
        %v3149 = vpop.f32.mrb[0].mxu0
        %v3150 = vadd.f32 0.0, %v3149
        %v3151 = vpop.f32.mrb[0].mxu0
        %3152 = vmatprep.mubr.bf16.mxu0 0
        %3153 = vmatmul.mubr.bf16.gmra.mrb[0].mxu0 %v3019
        %v3154 = vpop.f32.mrb[0].mxu0
        %v3155 = vadd.f32 0.0, %v3154
        %v3156 = vpop.f32.mrb[0].mxu0
        %v3157 = vpop.f32.mrb[0].mxu0
        %v3158 = vadd.f32 0.0, %v3157
        %v3159 = vpop.f32.mrb[0].mxu0
        %3160 = vmatprep.mubr.bf16.mxu0 0
        %3161 = vmatmul.mubr.bf16.gmra.mrb[0].mxu0 %v3022
        %v3162 = vpop.f32.mrb[0].mxu0
        %v3163 = vadd.f32 0.0, %v3162
        %v3164 = vpop.f32.mrb[0].mxu0
        %v3165 = vpop.f32.mrb[0].mxu0
        %v3166 = vadd.f32 0.0, %v3165
        %v3167 = vpop.f32.mrb[0].mxu0
        %3168 = vmatprep.mubr.bf16.mxu0 0
        %3169 = vmatmul.mubr.bf16.gmra.mrb[0].mxu0 %v3025
        %v3170 = vpop.f32.mrb[0].mxu0
        %v3171 = vadd.f32 0.0, %v3170
        %v3172 = vpop.f32.mrb[0].mxu0
        %v3173 = vpop.f32.mrb[0].mxu0
        %v3174 = vadd.f32 0.0, %v3173
        %v3175 = vpop.f32.mrb[0].mxu0
        %3176 = vmatprep.mubr.bf16.mxu0 0
        %3177 = vmatmul.mubr.bf16.gmra.mrb[0].mxu0 %v3028
        %v3178 = vpop.f32.mrb[0].mxu0
        %v3179 = vadd.f32 0.0, %v3178
        %v3180 = vpop.f32.mrb[0].mxu0
        %v3181 = vpop.f32.mrb[0].mxu0
        %v3182 = vadd.f32 0.0, %v3181
        %v3183 = vpop.f32.mrb[0].mxu0
        %3184 = vmatprep.mubr.bf16.mxu0 0
        %3185 = vmatmul.mubr.bf16.gmra.mrb[0].mxu0 %v3031
        %v3186 = vpop.f32.mrb[0].mxu0
        %v3187 = vadd.f32 0.0, %v3186
        %v3188 = vpop.f32.mrb[0].mxu0
        %v3189 = vpop.f32.mrb[0].mxu0
        %v3190 = vadd.f32 0.0, %v3189
        %v3191 = vpop.f32.mrb[0].mxu0
        %3192 = vmatprep.mubr.bf16.mxu0 0
        %3193 = vmatmul.mubr.bf16.gmra.mrb[0].mxu0 %v3034
        %v3194 = vpop.f32.mrb[0].mxu0
        %v3195 = vadd.f32 0.0, %v3194
        %v3196 = vpop.f32.mrb[0].mxu0
        %v3197 = vpop.f32.mrb[0].mxu0
        %v3198 = vadd.f32 0.0, %v3197
        %v3199 = vpop.f32.mrb[0].mxu0
        %3200 = vmatprep.mubr.bf16.mxu0 0
        %3201 = vmatmul.mubr.bf16.gmra.mrb[0].mxu0 %v3037
        %v3202 = vpop.f32.mrb[0].mxu0
        %v3203 = vadd.f32 0.0, %v3202
        %v3204 = vpop.f32.mrb[0].mxu0
        %v3205 = vpop.f32.mrb[0].mxu0
        %v3206 = vadd.f32 0.0, %v3205
        %v3207 = vpop.f32.mrb[0].mxu0
        %3208 = vmatprep.mubr.bf16.mxu0 0
        %3209 = vmatmul.mubr.bf16.gmra.mrb[0].mxu0 %v3040
        %v3210 = vpop.f32.mrb[0].mxu0
        %v3211 = vadd.f32 0.0, %v3210
        %v3212 = vpop.f32.mrb[0].mxu0
        %v3213 = vpop.f32.mrb[0].mxu0
        %v3214 = vadd.f32 0.0, %v3213
        %v3215 = vpop.f32.mrb[0].mxu0
        %3216 = vmatprep.mubr.bf16.mxu0 0
        %3217 = vmatmul.mubr.bf16.gmra.mrb[0].mxu0 %v3043
        %v3218 = vpop.f32.mrb[0].mxu0
        %v3219 = vadd.f32 0.0, %v3218
        %v3220 = vpop.f32.mrb[0].mxu0
        %v3221 = vpop.f32.mrb[0].mxu0
        %v3222 = vadd.f32 0.0, %v3221
        %v3223 = vpop.f32.mrb[0].mxu0
        %3224 = vdwg.mxu0
        %v3225 = vadd.f32 %v2786, %v3083
        %v3226 = vadd.f32 %v2787, %v3086
        %v3227 = vadd.f32 %v2788, %v3091
        %v3228 = vadd.f32 %v2789, %v3094
        %v3229 = vadd.f32 %v2790, %v3099
        %v3230 = vadd.f32 %v2791, %v3102
        %v3231 = vadd.f32 %v2792, %v3107
        %v3232 = vadd.f32 %v2793, %v3110
        %v3233 = vadd.f32 %v2794, %v3115
        %v3234 = vadd.f32 %v2795, %v3118
        %v3235 = vadd.f32 %v2796, %v3123
        %v3236 = vadd.f32 %v2797, %v3126
        %v3237 = vadd.f32 %v2798, %v3131
        %v3238 = vadd.f32 %v2799, %v3134
        %v3239 = vadd.f32 %v2800, %v3139
        %v3240 = vadd.f32 %v2801, %v3142
        %v3241 = vadd.f32 %v2802, %v3147
        %v3242 = vadd.f32 %v2803, %v3150
        %v3243 = vadd.f32 %v2804, %v3155
        %v3244 = vadd.f32 %v2805, %v3158
        %v3245 = vadd.f32 %v2806, %v3163
        %v3246 = vadd.f32 %v2807, %v3166
        %v3247 = vadd.f32 %v2808, %v3171
        %v3248 = vadd.f32 %v2809, %v3174
        %v3249 = vadd.f32 %v2810, %v3179
        %v3250 = vadd.f32 %v2811, %v3182
        %v3251 = vadd.f32 %v2812, %v3187
        %v3252 = vadd.f32 %v2813, %v3190
        %v3253 = vadd.f32 %v2814, %v3195
        %v3254 = vadd.f32 %v2815, %v3198
        %v3255 = vadd.f32 %v2816, %v3203
        %v3256 = vadd.f32 %v2817, %v3206
        %v3257 = vadd.f32 %v2818, %v3211
        %v3258 = vadd.f32 %v2819, %v3214
        %v3259 = vadd.f32 %v2820, %v3219
        %v3260 = vadd.f32 %v2821, %v3222
        %v3261 = vld [vmem:[%s572 + $0xa0] sm:$0x7]
        %s3262 = scalar_lea.vmem %s1, 28
        %v3263 = vld [vmem:[%s3262] sm:$0xf]
        %v3265 = vunpack.c.l.b16 %v3261
        %v3266 = vpack.c.b16 %v3265, %v3265
        %vm3267 = vsmask.f32 5376
        %v3269 = vshrl.u32 %v2935, 16
        %v3271 = vrot.slane %v3269, 2
        %v3272 = vshll.u32 %v2935, 16
        %v3274 = vrot.slane %v3272, 3
        %v3275 = vor.u32 %v3271, %v3274
        %v3277 = vshrl.u32 %v2936, 16
        %v3279 = vrot.slane %v3277, 2
        %v3280 = vshll.u32 %v2936, 16
        %v3282 = vrot.slane %v3280, 3
        %v3283 = vor.u32 %v3279, %v3282
        %v3284 = vsel %vm3267, %v3275, %v3283
        %v3286 = vshrl.u32 %v2937, 16
        %v3288 = vrot.slane %v3286, 2
        %v3289 = vshll.u32 %v2937, 16
        %v3291 = vrot.slane %v3289, 3
        %v3292 = vor.u32 %v3288, %v3291
        %v3293 = vsel %vm3267, %v3283, %v3292
        %v3295 = vshrl.u32 %v2938, 16
        %v3297 = vrot.slane %v3295, 2
        %v3298 = vshll.u32 %v2938, 16
        %v3300 = vrot.slane %v3298, 3
        %v3301 = vor.u32 %v3297, %v3300
        %v3302 = vsel %vm3267, %v3292, %v3301
        %v3304 = vshrl.u32 %v2939, 16
        %v3306 = vrot.slane %v3304, 2
        %v3307 = vshll.u32 %v2939, 16
        %v3309 = vrot.slane %v3307, 3
        %v3310 = vor.u32 %v3306, %v3309
        %v3311 = vsel %vm3267, %v3301, %v3310
        %v3313 = vshrl.u32 %v2940, 16
        %v3315 = vrot.slane %v3313, 2
        %v3316 = vshll.u32 %v2940, 16
        %v3318 = vrot.slane %v3316, 3
        %v3319 = vor.u32 %v3315, %v3318
        %v3320 = vsel %vm3267, %v3310, %v3319
        %v3322 = vshrl.u32 %v2941, 16
        %v3324 = vrot.slane %v3322, 2
        %v3325 = vshll.u32 %v2941, 16
        %v3327 = vrot.slane %v3325, 3
        %v3328 = vor.u32 %v3324, %v3327
        %v3329 = vsel %vm3267, %v3319, %v3328
        %v3331 = vshrl.u32 %v2942, 16
        %v3333 = vrot.slane %v3331, 2
        %v3334 = vshll.u32 %v2942, 16
        %v3336 = vrot.slane %v3334, 3
        %v3337 = vor.u32 %v3333, %v3336
        %v3338 = vsel %vm3267, %v3328, %v3337
        %v3340 = vshrl.u32 %v2943, 16
        %v3342 = vrot.slane %v3340, 2
        %v3343 = vshll.u32 %v2943, 16
        %v3345 = vrot.slane %v3343, 3
        %v3346 = vor.u32 %v3342, %v3345
        %v3347 = vsel %vm3267, %v3337, %v3346
        %v3349 = vshrl.u32 %v2944, 16
        %v3351 = vrot.slane %v3349, 2
        %v3352 = vshll.u32 %v2944, 16
        %v3354 = vrot.slane %v3352, 3
        %v3355 = vor.u32 %v3351, %v3354
        %v3356 = vsel %vm3267, %v3346, %v3355
        %v3358 = vshrl.u32 %v2945, 16
        %v3360 = vrot.slane %v3358, 2
        %v3361 = vshll.u32 %v2945, 16
        %v3363 = vrot.slane %v3361, 3
        %v3364 = vor.u32 %v3360, %v3363
        %v3365 = vsel %vm3267, %v3355, %v3364
        %v3367 = vshrl.u32 %v2946, 16
        %v3369 = vrot.slane %v3367, 2
        %v3370 = vshll.u32 %v2946, 16
        %v3372 = vrot.slane %v3370, 3
        %v3373 = vor.u32 %v3369, %v3372
        %v3374 = vsel %vm3267, %v3364, %v3373
        %v3376 = vshrl.u32 %v2947, 16
        %v3378 = vrot.slane %v3376, 2
        %v3379 = vshll.u32 %v2947, 16
        %v3381 = vrot.slane %v3379, 3
        %v3382 = vor.u32 %v3378, %v3381
        %v3383 = vsel %vm3267, %v3373, %v3382
        %v3385 = vshrl.u32 %v2948, 16
        %v3387 = vrot.slane %v3385, 2
        %v3388 = vshll.u32 %v2948, 16
        %v3390 = vrot.slane %v3388, 3
        %v3391 = vor.u32 %v3387, %v3390
        %v3392 = vsel %vm3267, %v3382, %v3391
        %v3394 = vshrl.u32 %v2949, 16
        %v3396 = vrot.slane %v3394, 2
        %v3397 = vshll.u32 %v2949, 16
        %v3399 = vrot.slane %v3397, 3
        %v3400 = vor.u32 %v3396, %v3399
        %v3401 = vsel %vm3267, %v3391, %v3400
        %v3403 = vshrl.u32 %v2950, 16
        %v3405 = vrot.slane %v3403, 2
        %v3406 = vshll.u32 %v2950, 16
        %v3408 = vrot.slane %v3406, 3
        %v3409 = vor.u32 %v3405, %v3408
        %v3410 = vsel %vm3267, %v3400, %v3409
        %v3412 = vshrl.u32 %v2951, 16
        %v3414 = vrot.slane %v3412, 2
        %v3415 = vshll.u32 %v2951, 16
        %v3417 = vrot.slane %v3415, 3
        %v3418 = vor.u32 %v3414, %v3417
        %v3419 = vsel %vm3267, %v3409, %v3418
        %v3421 = vshrl.u32 %v2952, 16
        %v3423 = vrot.slane %v3421, 2
        %v3424 = vshll.u32 %v2952, 16
        %v3426 = vrot.slane %v3424, 3
        %v3427 = vor.u32 %v3423, %v3426
        %v3428 = vsel %vm3267, %v3418, %v3427
        %v3430 = vshrl.u32 %v3266, 16
        %v3432 = vrot.slane %v3430, 2
        %v3433 = vshll.u32 %v3266, 16
        %v3435 = vrot.slane %v3433, 3
        %v3436 = vor.u32 %v3432, %v3435
        %v3437 = vsel %vm3267, %v3427, %v3436
        %v3439 = vsel %vm856, %v3284, 0
        %v3442 = vsel %vm856, %v3293, 0
        %v3445 = vsel %vm856, %v3302, 0
        %v3448 = vsel %vm856, %v3311, 0
        %v3451 = vsel %vm856, %v3320, 0
        %v3454 = vsel %vm856, %v3329, 0
        %v3457 = vsel %vm856, %v3338, 0
        %v3460 = vsel %vm856, %v3347, 0
        %v3463 = vsel %vm856, %v3356, 0
        %v3466 = vsel %vm856, %v3365, 0
        %v3469 = vsel %vm856, %v3374, 0
        %v3472 = vsel %vm856, %v3383, 0
        %v3475 = vsel %vm856, %v3392, 0
        %v3478 = vsel %vm856, %v3401, 0
        %v3481 = vsel %vm856, %v3410, 0
        %v3484 = vsel %vm856, %v3419, 0
        %v3487 = vsel %vm856, %v3428, 0
        %v3490 = vsel %vm856, %v3437, 0
        %v3493 = vsel %vm911, %v3263, 0
        %3495 = vmatprep.subr.bf16.mxu0 0
        %3496 = vmatpush1.bf16.msra.mxu0 %v3493
        %3497 = vmatprep.subr.bf16.mxu0 0
        %3498 = vmatpush1.bf16.msra.mxu0 0
        %3499 = vmatprep.subr.bf16.mxu0 0
        %3500 = vmatpush1.bf16.msra.mxu0 0
        %3501 = vmatprep.subr.bf16.mxu0 0
        %3502 = vmatpush1.bf16.msra.mxu0 0
        %3503 = vmatprep.subr.bf16.mxu0 0
        %3504 = vmatpush1.bf16.msra.mxu0 0
        %3505 = vmatprep.subr.bf16.mxu0 0
        %3506 = vmatpush1.bf16.msra.mxu0 0
        %3507 = vmatprep.subr.bf16.mxu0 0
        %3508 = vmatpush1.bf16.msra.mxu0 0
        %3509 = vmatprep.subr.bf16.mxu0 0
        %3510 = vmatpush1.bf16.msra.mxu0 0
        %3511 = vmatprep.subr.bf16.mxu0 0
        %3512 = vmatpush1.bf16.msra.mxu0 0
        %3513 = vmatprep.subr.bf16.mxu0 0
        %3514 = vmatpush1.bf16.msra.mxu0 0
        %3515 = vmatprep.subr.bf16.mxu0 0
        %3516 = vmatpush1.bf16.msra.mxu0 0
        %3517 = vmatprep.subr.bf16.mxu0 0
        %3518 = vmatpush1.bf16.msra.mxu0 0
        %3519 = vmatprep.subr.bf16.mxu0 0
        %3520 = vmatpush1.bf16.msra.mxu0 0
        %3521 = vmatprep.subr.bf16.mxu0 0
        %3522 = vmatpush1.bf16.msra.mxu0 0
        %3523 = vmatprep.subr.bf16.mxu0 0
        %3524 = vmatpush1.bf16.msra.mxu0 0
        %3525 = vmatprep.subr.bf16.mxu0 0
        %3526 = vmatpush1.bf16.msra.mxu0 0
        %3527 = vmatprep.mubr.bf16.mxu0 0
        %3528 = vmatmul.mubr.bf16.gmra.mrb[0].mxu0 %v3439
        %v3529 = vpop.f32.mrb[0].mxu0
        %v3530 = vadd.f32 0.0, %v3529
        %v3531 = vpop.f32.mrb[0].mxu0
        %v3532 = vpop.f32.mrb[0].mxu0
        %v3533 = vadd.f32 0.0, %v3532
        %v3534 = vpop.f32.mrb[0].mxu0
        %3535 = vmatprep.mubr.bf16.mxu0 0
        %3536 = vmatmul.mubr.bf16.gmra.mrb[0].mxu0 %v3442
        %v3537 = vpop.f32.mrb[0].mxu0
        %v3538 = vadd.f32 0.0, %v3537
        %v3539 = vpop.f32.mrb[0].mxu0
        %v3540 = vpop.f32.mrb[0].mxu0
        %v3541 = vadd.f32 0.0, %v3540
        %v3542 = vpop.f32.mrb[0].mxu0
        %3543 = vmatprep.mubr.bf16.mxu0 0
        %3544 = vmatmul.mubr.bf16.gmra.mrb[0].mxu0 %v3445
        %v3545 = vpop.f32.mrb[0].mxu0
        %v3546 = vadd.f32 0.0, %v3545
        %v3547 = vpop.f32.mrb[0].mxu0
        %v3548 = vpop.f32.mrb[0].mxu0
        %v3549 = vadd.f32 0.0, %v3548
        %v3550 = vpop.f32.mrb[0].mxu0
        %3551 = vmatprep.mubr.bf16.mxu0 0
        %3552 = vmatmul.mubr.bf16.gmra.mrb[0].mxu0 %v3448
        %v3553 = vpop.f32.mrb[0].mxu0
        %v3554 = vadd.f32 0.0, %v3553
        %v3555 = vpop.f32.mrb[0].mxu0
        %v3556 = vpop.f32.mrb[0].mxu0
        %v3557 = vadd.f32 0.0, %v3556
        %v3558 = vpop.f32.mrb[0].mxu0
        %3559 = vmatprep.mubr.bf16.mxu0 0
        %3560 = vmatmul.mubr.bf16.gmra.mrb[0].mxu0 %v3451
        %v3561 = vpop.f32.mrb[0].mxu0
        %v3562 = vadd.f32 0.0, %v3561
        %v3563 = vpop.f32.mrb[0].mxu0
        %v3564 = vpop.f32.mrb[0].mxu0
        %v3565 = vadd.f32 0.0, %v3564
        %v3566 = vpop.f32.mrb[0].mxu0
        %3567 = vmatprep.mubr.bf16.mxu0 0
        %3568 = vmatmul.mubr.bf16.gmra.mrb[0].mxu0 %v3454
        %v3569 = vpop.f32.mrb[0].mxu0
        %v3570 = vadd.f32 0.0, %v3569
        %v3571 = vpop.f32.mrb[0].mxu0
        %v3572 = vpop.f32.mrb[0].mxu0
        %v3573 = vadd.f32 0.0, %v3572
        %v3574 = vpop.f32.mrb[0].mxu0
        %3575 = vmatprep.mubr.bf16.mxu0 0
        %3576 = vmatmul.mubr.bf16.gmra.mrb[0].mxu0 %v3457
        %v3577 = vpop.f32.mrb[0].mxu0
        %v3578 = vadd.f32 0.0, %v3577
        %v3579 = vpop.f32.mrb[0].mxu0
        %v3580 = vpop.f32.mrb[0].mxu0
        %v3581 = vadd.f32 0.0, %v3580
        %v3582 = vpop.f32.mrb[0].mxu0
        %3583 = vmatprep.mubr.bf16.mxu0 0
        %3584 = vmatmul.mubr.bf16.gmra.mrb[0].mxu0 %v3460
        %v3585 = vpop.f32.mrb[0].mxu0
        %v3586 = vadd.f32 0.0, %v3585
        %v3587 = vpop.f32.mrb[0].mxu0
        %v3588 = vpop.f32.mrb[0].mxu0
        %v3589 = vadd.f32 0.0, %v3588
        %v3590 = vpop.f32.mrb[0].mxu0
        %3591 = vmatprep.mubr.bf16.mxu0 0
        %3592 = vmatmul.mubr.bf16.gmra.mrb[0].mxu0 %v3463
        %v3593 = vpop.f32.mrb[0].mxu0
        %v3594 = vadd.f32 0.0, %v3593
        %v3595 = vpop.f32.mrb[0].mxu0
        %v3596 = vpop.f32.mrb[0].mxu0
        %v3597 = vadd.f32 0.0, %v3596
        %v3598 = vpop.f32.mrb[0].mxu0
        %3599 = vmatprep.mubr.bf16.mxu0 0
        %3600 = vmatmul.mubr.bf16.gmra.mrb[0].mxu0 %v3466
        %v3601 = vpop.f32.mrb[0].mxu0
        %v3602 = vadd.f32 0.0, %v3601
        %v3603 = vpop.f32.mrb[0].mxu0
        %v3604 = vpop.f32.mrb[0].mxu0
        %v3605 = vadd.f32 0.0, %v3604
        %v3606 = vpop.f32.mrb[0].mxu0
        %3607 = vmatprep.mubr.bf16.mxu0 0
        %3608 = vmatmul.mubr.bf16.gmra.mrb[0].mxu0 %v3469
        %v3609 = vpop.f32.mrb[0].mxu0
        %v3610 = vadd.f32 0.0, %v3609
        %v3611 = vpop.f32.mrb[0].mxu0
        %v3612 = vpop.f32.mrb[0].mxu0
        %v3613 = vadd.f32 0.0, %v3612
        %v3614 = vpop.f32.mrb[0].mxu0
        %3615 = vmatprep.mubr.bf16.mxu0 0
        %3616 = vmatmul.mubr.bf16.gmra.mrb[0].mxu0 %v3472
        %v3617 = vpop.f32.mrb[0].mxu0
        %v3618 = vadd.f32 0.0, %v3617
        %v3619 = vpop.f32.mrb[0].mxu0
        %v3620 = vpop.f32.mrb[0].mxu0
        %v3621 = vadd.f32 0.0, %v3620
        %v3622 = vpop.f32.mrb[0].mxu0
        %3623 = vmatprep.mubr.bf16.mxu0 0
        %3624 = vmatmul.mubr.bf16.gmra.mrb[0].mxu0 %v3475
        %v3625 = vpop.f32.mrb[0].mxu0
        %v3626 = vadd.f32 0.0, %v3625
        %v3627 = vpop.f32.mrb[0].mxu0
        %v3628 = vpop.f32.mrb[0].mxu0
        %v3629 = vadd.f32 0.0, %v3628
        %v3630 = vpop.f32.mrb[0].mxu0
        %3631 = vmatprep.mubr.bf16.mxu0 0
        %3632 = vmatmul.mubr.bf16.gmra.mrb[0].mxu0 %v3478
        %v3633 = vpop.f32.mrb[0].mxu0
        %v3634 = vadd.f32 0.0, %v3633
        %v3635 = vpop.f32.mrb[0].mxu0
        %v3636 = vpop.f32.mrb[0].mxu0
        %v3637 = vadd.f32 0.0, %v3636
        %v3638 = vpop.f32.mrb[0].mxu0
        %3639 = vmatprep.mubr.bf16.mxu0 0
        %3640 = vmatmul.mubr.bf16.gmra.mrb[0].mxu0 %v3481
        %v3641 = vpop.f32.mrb[0].mxu0
        %v3642 = vadd.f32 0.0, %v3641
        %v3643 = vpop.f32.mrb[0].mxu0
        %v3644 = vpop.f32.mrb[0].mxu0
        %v3645 = vadd.f32 0.0, %v3644
        %v3646 = vpop.f32.mrb[0].mxu0
        %3647 = vmatprep.mubr.bf16.mxu0 0
        %3648 = vmatmul.mubr.bf16.gmra.mrb[0].mxu0 %v3484
        %v3649 = vpop.f32.mrb[0].mxu0
        %v3650 = vadd.f32 0.0, %v3649
        %v3651 = vpop.f32.mrb[0].mxu0
        %v3652 = vpop.f32.mrb[0].mxu0
        %v3653 = vadd.f32 0.0, %v3652
        %v3654 = vpop.f32.mrb[0].mxu0
        %3655 = vmatprep.mubr.bf16.mxu0 0
        %3656 = vmatmul.mubr.bf16.gmra.mrb[0].mxu0 %v3487
        %v3657 = vpop.f32.mrb[0].mxu0
        %v3658 = vadd.f32 0.0, %v3657
        %v3659 = vpop.f32.mrb[0].mxu0
        %v3660 = vpop.f32.mrb[0].mxu0
        %v3661 = vadd.f32 0.0, %v3660
        %v3662 = vpop.f32.mrb[0].mxu0
        %3663 = vmatprep.mubr.bf16.mxu0 0
        %3664 = vmatmul.mubr.bf16.gmra.mrb[0].mxu0 %v3490
        %v3665 = vpop.f32.mrb[0].mxu0
        %v3666 = vadd.f32 0.0, %v3665
        %v3667 = vpop.f32.mrb[0].mxu0
        %v3668 = vpop.f32.mrb[0].mxu0
        %v3669 = vadd.f32 0.0, %v3668
        %v3670 = vpop.f32.mrb[0].mxu0
        %3671 = vdwg.mxu0
        %v3672 = vadd.f32 %v3225, %v3530
        %v3673 = vadd.f32 %v3226, %v3533
        %v3674 = vadd.f32 %v3227, %v3538
        %v3675 = vadd.f32 %v3228, %v3541
        %v3676 = vadd.f32 %v3229, %v3546
        %v3677 = vadd.f32 %v3230, %v3549
        %v3678 = vadd.f32 %v3231, %v3554
        %v3679 = vadd.f32 %v3232, %v3557
        %v3680 = vadd.f32 %v3233, %v3562
        %v3681 = vadd.f32 %v3234, %v3565
        %v3682 = vadd.f32 %v3235, %v3570
        %v3683 = vadd.f32 %v3236, %v3573
        %v3684 = vadd.f32 %v3237, %v3578
        %v3685 = vadd.f32 %v3238, %v3581
        %v3686 = vadd.f32 %v3239, %v3586
        %v3687 = vadd.f32 %v3240, %v3589
        %v3688 = vadd.f32 %v3241, %v3594
        %v3689 = vadd.f32 %v3242, %v3597
        %v3690 = vadd.f32 %v3243, %v3602
        %v3691 = vadd.f32 %v3244, %v3605
        %v3692 = vadd.f32 %v3245, %v3610
        %v3693 = vadd.f32 %v3246, %v3613
        %v3694 = vadd.f32 %v3247, %v3618
        %v3695 = vadd.f32 %v3248, %v3621
        %v3696 = vadd.f32 %v3249, %v3626
        %v3697 = vadd.f32 %v3250, %v3629
        %v3698 = vadd.f32 %v3251, %v3634
        %v3699 = vadd.f32 %v3252, %v3637
        %v3700 = vadd.f32 %v3253, %v3642
        %v3701 = vadd.f32 %v3254, %v3645
        %v3702 = vadd.f32 %v3255, %v3650
        %v3703 = vadd.f32 %v3256, %v3653
        %v3704 = vadd.f32 %v3257, %v3658
        %v3705 = vadd.f32 %v3258, %v3661
        %v3706 = vadd.f32 %v3259, %v3666
        %v3707 = vadd.f32 %v3260, %v3669
        %v3708 = vld [vmem:[%s572 + $0x10] sm:$0x8]
        %s3709 = scalar_lea.vmem %s1, 32
        %v3710 = vld [vmem:[%s3709] sm:$0xf]
        %v3712 = vunpack.c.l.b16 %v3708
        %v3713 = vpack.c.b16 %v2899, %v3712
        %vm3714 = vcmask 1044480
        %v3715 = vrot.slane %v3713, 3
        %v3716 = vrot.slane %v2936, 3
        %v3717 = vsel %vm3714, %v3715, %v3716
        %v3718 = vrot.slane %v2937, 3
        %v3719 = vsel %vm3714, %v3716, %v3718
        %v3720 = vrot.slane %v2938, 3
        %v3721 = vsel %vm3714, %v3718, %v3720
        %v3722 = vrot.slane %v2939, 3
        %v3723 = vsel %vm3714, %v3720, %v3722
        %v3724 = vrot.slane %v2940, 3
        %v3725 = vsel %vm3714, %v3722, %v3724
        %v3726 = vrot.slane %v2941, 3
        %v3727 = vsel %vm3714, %v3724, %v3726
        %v3728 = vrot.slane %v2942, 3
        %v3729 = vsel %vm3714, %v3726, %v3728
        %v3730 = vrot.slane %v2943, 3
        %v3731 = vsel %vm3714, %v3728, %v3730
        %v3732 = vrot.slane %v2944, 3
        %v3733 = vsel %vm3714, %v3730, %v3732
        %v3734 = vrot.slane %v2945, 3
        %v3735 = vsel %vm3714, %v3732, %v3734
        %v3736 = vrot.slane %v2946, 3
        %v3737 = vsel %vm3714, %v3734, %v3736
        %v3738 = vrot.slane %v2947, 3
        %v3739 = vsel %vm3714, %v3736, %v3738
        %v3740 = vrot.slane %v2948, 3
        %v3741 = vsel %vm3714, %v3738, %v3740
        %v3742 = vrot.slane %v2949, 3
        %v3743 = vsel %vm3714, %v3740, %v3742
        %v3744 = vrot.slane %v2950, 3
        %v3745 = vsel %vm3714, %v3742, %v3744
        %v3746 = vrot.slane %v2951, 3
        %v3747 = vsel %vm3714, %v3744, %v3746
        %v3748 = vrot.slane %v2952, 3
        %v3749 = vsel %vm3714, %v3746, %v3748
        %v3750 = vrot.slane %v3266, 3
        %v3751 = vsel %vm3714, %v3748, %v3750
        %v3753 = vsel %vm856, %v3717, 0
        %v3756 = vsel %vm856, %v3719, 0
        %v3759 = vsel %vm856, %v3721, 0
        %v3762 = vsel %vm856, %v3723, 0
        %v3765 = vsel %vm856, %v3725, 0
        %v3768 = vsel %vm856, %v3727, 0
        %v3771 = vsel %vm856, %v3729, 0
        %v3774 = vsel %vm856, %v3731, 0
        %v3777 = vsel %vm856, %v3733, 0
        %v3780 = vsel %vm856, %v3735, 0
        %v3783 = vsel %vm856, %v3737, 0
        %v3786 = vsel %vm856, %v3739, 0
        %v3789 = vsel %vm856, %v3741, 0
        %v3792 = vsel %vm856, %v3743, 0
        %v3795 = vsel %vm856, %v3745, 0
        %v3798 = vsel %vm856, %v3747, 0
        %v3801 = vsel %vm856, %v3749, 0
        %v3804 = vsel %vm856, %v3751, 0
        %v3807 = vsel %vm911, %v3710, 0
        %3809 = vmatprep.subr.bf16.mxu0 0
        %3810 = vmatpush1.bf16.msra.mxu0 %v3807
        %3811 = vmatprep.subr.bf16.mxu0 0
        %3812 = vmatpush1.bf16.msra.mxu0 0
        %3813 = vmatprep.subr.bf16.mxu0 0
        %3814 = vmatpush1.bf16.msra.mxu0 0
        %3815 = vmatprep.subr.bf16.mxu0 0
        %3816 = vmatpush1.bf16.msra.mxu0 0
        %3817 = vmatprep.subr.bf16.mxu0 0
        %3818 = vmatpush1.bf16.msra.mxu0 0
        %3819 = vmatprep.subr.bf16.mxu0 0
        %3820 = vmatpush1.bf16.msra.mxu0 0
        %3821 = vmatprep.subr.bf16.mxu0 0
        %3822 = vmatpush1.bf16.msra.mxu0 0
        %3823 = vmatprep.subr.bf16.mxu0 0
        %3824 = vmatpush1.bf16.msra.mxu0 0
        %3825 = vmatprep.subr.bf16.mxu0 0
        %3826 = vmatpush1.bf16.msra.mxu0 0
        %3827 = vmatprep.subr.bf16.mxu0 0
        %3828 = vmatpush1.bf16.msra.mxu0 0
        %3829 = vmatprep.subr.bf16.mxu0 0
        %3830 = vmatpush1.bf16.msra.mxu0 0
        %3831 = vmatprep.subr.bf16.mxu0 0
        %3832 = vmatpush1.bf16.msra.mxu0 0
        %3833 = vmatprep.subr.bf16.mxu0 0
        %3834 = vmatpush1.bf16.msra.mxu0 0
        %3835 = vmatprep.subr.bf16.mxu0 0
        %3836 = vmatpush1.bf16.msra.mxu0 0
        %3837 = vmatprep.subr.bf16.mxu0 0
        %3838 = vmatpush1.bf16.msra.mxu0 0
        %3839 = vmatprep.subr.bf16.mxu0 0
        %3840 = vmatpush1.bf16.msra.mxu0 0
        %3841 = vmatprep.mubr.bf16.mxu0 0
        %3842 = vmatmul.mubr.bf16.gmra.mrb[0].mxu0 %v3753
        %v3843 = vpop.f32.mrb[0].mxu0
        %v3844 = vadd.f32 0.0, %v3843
        %v3845 = vpop.f32.mrb[0].mxu0
        %v3846 = vpop.f32.mrb[0].mxu0
        %v3847 = vadd.f32 0.0, %v3846
        %v3848 = vpop.f32.mrb[0].mxu0
        %3849 = vmatprep.mubr.bf16.mxu0 0
        %3850 = vmatmul.mubr.bf16.gmra.mrb[0].mxu0 %v3756
        %v3851 = vpop.f32.mrb[0].mxu0
        %v3852 = vadd.f32 0.0, %v3851
        %v3853 = vpop.f32.mrb[0].mxu0
        %v3854 = vpop.f32.mrb[0].mxu0
        %v3855 = vadd.f32 0.0, %v3854
        %v3856 = vpop.f32.mrb[0].mxu0
        %3857 = vmatprep.mubr.bf16.mxu0 0
        %3858 = vmatmul.mubr.bf16.gmra.mrb[0].mxu0 %v3759
        %v3859 = vpop.f32.mrb[0].mxu0
        %v3860 = vadd.f32 0.0, %v3859
        %v3861 = vpop.f32.mrb[0].mxu0
        %v3862 = vpop.f32.mrb[0].mxu0
        %v3863 = vadd.f32 0.0, %v3862
        %v3864 = vpop.f32.mrb[0].mxu0
        %3865 = vmatprep.mubr.bf16.mxu0 0
        %3866 = vmatmul.mubr.bf16.gmra.mrb[0].mxu0 %v3762
        %v3867 = vpop.f32.mrb[0].mxu0
        %v3868 = vadd.f32 0.0, %v3867
        %v3869 = vpop.f32.mrb[0].mxu0
        %v3870 = vpop.f32.mrb[0].mxu0
        %v3871 = vadd.f32 0.0, %v3870
        %v3872 = vpop.f32.mrb[0].mxu0
        %3873 = vmatprep.mubr.bf16.mxu0 0
        %3874 = vmatmul.mubr.bf16.gmra.mrb[0].mxu0 %v3765
        %v3875 = vpop.f32.mrb[0].mxu0
        %v3876 = vadd.f32 0.0, %v3875
        %v3877 = vpop.f32.mrb[0].mxu0
        %v3878 = vpop.f32.mrb[0].mxu0
        %v3879 = vadd.f32 0.0, %v3878
        %v3880 = vpop.f32.mrb[0].mxu0
        %3881 = vmatprep.mubr.bf16.mxu0 0
        %3882 = vmatmul.mubr.bf16.gmra.mrb[0].mxu0 %v3768
        %v3883 = vpop.f32.mrb[0].mxu0
        %v3884 = vadd.f32 0.0, %v3883
        %v3885 = vpop.f32.mrb[0].mxu0
        %v3886 = vpop.f32.mrb[0].mxu0
        %v3887 = vadd.f32 0.0, %v3886
        %v3888 = vpop.f32.mrb[0].mxu0
        %3889 = vmatprep.mubr.bf16.mxu0 0
        %3890 = vmatmul.mubr.bf16.gmra.mrb[0].mxu0 %v3771
        %v3891 = vpop.f32.mrb[0].mxu0
        %v3892 = vadd.f32 0.0, %v3891
        %v3893 = vpop.f32.mrb[0].mxu0
        %v3894 = vpop.f32.mrb[0].mxu0
        %v3895 = vadd.f32 0.0, %v3894
        %v3896 = vpop.f32.mrb[0].mxu0
        %3897 = vmatprep.mubr.bf16.mxu0 0
        %3898 = vmatmul.mubr.bf16.gmra.mrb[0].mxu0 %v3774
        %v3899 = vpop.f32.mrb[0].mxu0
        %v3900 = vadd.f32 0.0, %v3899
        %v3901 = vpop.f32.mrb[0].mxu0
        %v3902 = vpop.f32.mrb[0].mxu0
        %v3903 = vadd.f32 0.0, %v3902
        %v3904 = vpop.f32.mrb[0].mxu0
        %3905 = vmatprep.mubr.bf16.mxu0 0
        %3906 = vmatmul.mubr.bf16.gmra.mrb[0].mxu0 %v3777
        %v3907 = vpop.f32.mrb[0].mxu0
        %v3908 = vadd.f32 0.0, %v3907
        %v3909 = vpop.f32.mrb[0].mxu0
        %v3910 = vpop.f32.mrb[0].mxu0
        %v3911 = vadd.f32 0.0, %v3910
        %v3912 = vpop.f32.mrb[0].mxu0
        %3913 = vmatprep.mubr.bf16.mxu0 0
        %3914 = vmatmul.mubr.bf16.gmra.mrb[0].mxu0 %v3780
        %v3915 = vpop.f32.mrb[0].mxu0
        %v3916 = vadd.f32 0.0, %v3915
        %v3917 = vpop.f32.mrb[0].mxu0
        %v3918 = vpop.f32.mrb[0].mxu0
        %v3919 = vadd.f32 0.0, %v3918
        %v3920 = vpop.f32.mrb[0].mxu0
        %3921 = vmatprep.mubr.bf16.mxu0 0
        %3922 = vmatmul.mubr.bf16.gmra.mrb[0].mxu0 %v3783
        %v3923 = vpop.f32.mrb[0].mxu0
        %v3924 = vadd.f32 0.0, %v3923
        %v3925 = vpop.f32.mrb[0].mxu0
        %v3926 = vpop.f32.mrb[0].mxu0
        %v3927 = vadd.f32 0.0, %v3926
        %v3928 = vpop.f32.mrb[0].mxu0
        %3929 = vmatprep.mubr.bf16.mxu0 0
        %3930 = vmatmul.mubr.bf16.gmra.mrb[0].mxu0 %v3786
        %v3931 = vpop.f32.mrb[0].mxu0
        %v3932 = vadd.f32 0.0, %v3931
        %v3933 = vpop.f32.mrb[0].mxu0
        %v3934 = vpop.f32.mrb[0].mxu0
        %v3935 = vadd.f32 0.0, %v3934
        %v3936 = vpop.f32.mrb[0].mxu0
        %3937 = vmatprep.mubr.bf16.mxu0 0
        %3938 = vmatmul.mubr.bf16.gmra.mrb[0].mxu0 %v3789
        %v3939 = vpop.f32.mrb[0].mxu0
        %v3940 = vadd.f32 0.0, %v3939
        %v3941 = vpop.f32.mrb[0].mxu0
        %v3942 = vpop.f32.mrb[0].mxu0
        %v3943 = vadd.f32 0.0, %v3942
        %v3944 = vpop.f32.mrb[0].mxu0
        %3945 = vmatprep.mubr.bf16.mxu0 0
        %3946 = vmatmul.mubr.bf16.gmra.mrb[0].mxu0 %v3792
        %v3947 = vpop.f32.mrb[0].mxu0
        %v3948 = vadd.f32 0.0, %v3947
        %v3949 = vpop.f32.mrb[0].mxu0
        %v3950 = vpop.f32.mrb[0].mxu0
        %v3951 = vadd.f32 0.0, %v3950
        %v3952 = vpop.f32.mrb[0].mxu0
        %3953 = vmatprep.mubr.bf16.mxu0 0
        %3954 = vmatmul.mubr.bf16.gmra.mrb[0].mxu0 %v3795
        %v3955 = vpop.f32.mrb[0].mxu0
        %v3956 = vadd.f32 0.0, %v3955
        %v3957 = vpop.f32.mrb[0].mxu0
        %v3958 = vpop.f32.mrb[0].mxu0
        %v3959 = vadd.f32 0.0, %v3958
        %v3960 = vpop.f32.mrb[0].mxu0
        %3961 = vmatprep.mubr.bf16.mxu0 0
        %3962 = vmatmul.mubr.bf16.gmra.mrb[0].mxu0 %v3798
        %v3963 = vpop.f32.mrb[0].mxu0
        %v3964 = vadd.f32 0.0, %v3963
        %v3965 = vpop.f32.mrb[0].mxu0
        %v3966 = vpop.f32.mrb[0].mxu0
        %v3967 = vadd.f32 0.0, %v3966
        %v3968 = vpop.f32.mrb[0].mxu0
        %3969 = vmatprep.mubr.bf16.mxu0 0
        %3970 = vmatmul.mubr.bf16.gmra.mrb[0].mxu0 %v3801
        %v3971 = vpop.f32.mrb[0].mxu0
        %v3972 = vadd.f32 0.0, %v3971
        %v3973 = vpop.f32.mrb[0].mxu0
        %v3974 = vpop.f32.mrb[0].mxu0
        %v3975 = vadd.f32 0.0, %v3974
        %v3976 = vpop.f32.mrb[0].mxu0
        %3977 = vmatprep.mubr.bf16.mxu0 0
        %3978 = vmatmul.mubr.bf16.gmra.mrb[0].mxu0 %v3804
        %v3979 = vpop.f32.mrb[0].mxu0
        %v3980 = vadd.f32 0.0, %v3979
        %v3981 = vpop.f32.mrb[0].mxu0
        %v3982 = vpop.f32.mrb[0].mxu0
        %v3983 = vadd.f32 0.0, %v3982
        %v3984 = vpop.f32.mrb[0].mxu0
        %3985 = vdwg.mxu0
        %v3986 = vadd.f32 %v3672, %v3844
        %v3987 = vadd.f32 %v3673, %v3847
        %v3988 = vadd.f32 %v3674, %v3852
        %v3989 = vadd.f32 %v3675, %v3855
        %v3990 = vadd.f32 %v3676, %v3860
        %v3991 = vadd.f32 %v3677, %v3863
        %v3992 = vadd.f32 %v3678, %v3868
        %v3993 = vadd.f32 %v3679, %v3871
        %v3994 = vadd.f32 %v3680, %v3876
        %v3995 = vadd.f32 %v3681, %v3879
        %v3996 = vadd.f32 %v3682, %v3884
        %v3997 = vadd.f32 %v3683, %v3887
        %v3998 = vadd.f32 %v3684, %v3892
        %v3999 = vadd.f32 %v3685, %v3895
        %v4000 = vadd.f32 %v3686, %v3900
        %v4001 = vadd.f32 %v3687, %v3903
        %v4002 = vadd.f32 %v3688, %v3908
        %v4003 = vadd.f32 %v3689, %v3911
        %v4004 = vadd.f32 %v3690, %v3916
        %v4005 = vadd.f32 %v3691, %v3919
        %v4006 = vadd.f32 %v3692, %v3924
        %v4007 = vadd.f32 %v3693, %v3927
        %v4008 = vadd.f32 %v3694, %v3932
        %v4009 = vadd.f32 %v3695, %v3935
        %v4010 = vadd.f32 %v3696, %v3940
        %v4011 = vadd.f32 %v3697, %v3943
        %v4012 = vadd.f32 %v3698, %v3948
        %v4013 = vadd.f32 %v3699, %v3951
        %v4014 = vadd.f32 %v3700, %v3956
        %v4015 = vadd.f32 %v3701, %v3959
        %v4016 = vadd.f32 %v3702, %v3964
        %v4017 = vadd.f32 %v3703, %v3967
        %v4018 = vadd.f32 %v3704, %v3972
        %v4019 = vadd.f32 %v3705, %v3975
        %v4020 = vadd.f32 %v3706, %v3980
        %v4021 = vadd.f32 %v3707, %v3983
        %v4022 = vld [vmem:[%s2] sm:$0x1]
        %v4024 = vlaneseq
        %v4025 = vshrl.u32 %v4024, 7
        %v4026 = vsub.s32 0, %v4025
        %v4027 = vrot.slane %v4022, %v4026
        %v4029 = vmul.f32 %v3986, %v4027
        %v4030 = vmul.f32 %v3987, %v4027
        %v4031 = vmul.f32 %v3988, %v4027
        %v4032 = vmul.f32 %v3989, %v4027
        %v4033 = vmul.f32 %v3990, %v4027
        %v4034 = vmul.f32 %v3991, %v4027
        %v4035 = vmul.f32 %v3992, %v4027
        %v4036 = vmul.f32 %v3993, %v4027
        %v4037 = vmul.f32 %v3994, %v4027
        %v4038 = vmul.f32 %v3995, %v4027
        %v4039 = vmul.f32 %v3996, %v4027
        %v4040 = vmul.f32 %v3997, %v4027
        %v4041 = vmul.f32 %v3998, %v4027
        %v4042 = vmul.f32 %v3999, %v4027
        %v4043 = vmul.f32 %v4000, %v4027
        %v4044 = vmul.f32 %v4001, %v4027
        %v4045 = vmul.f32 %v4002, %v4027
        %v4046 = vmul.f32 %v4003, %v4027
        %v4047 = vmul.f32 %v4004, %v4027
        %v4048 = vmul.f32 %v4005, %v4027
        %v4049 = vmul.f32 %v4006, %v4027
        %v4050 = vmul.f32 %v4007, %v4027
        %v4051 = vmul.f32 %v4008, %v4027
        %v4052 = vmul.f32 %v4009, %v4027
        %v4053 = vmul.f32 %v4010, %v4027
        %v4054 = vmul.f32 %v4011, %v4027
        %v4055 = vmul.f32 %v4012, %v4027
        %v4056 = vmul.f32 %v4013, %v4027
        %v4057 = vmul.f32 %v4014, %v4027
        %v4058 = vmul.f32 %v4015, %v4027
        %v4059 = vmul.f32 %v4016, %v4027
        %v4060 = vmul.f32 %v4017, %v4027
        %v4061 = vmul.f32 %v4018, %v4027
        %v4062 = vmul.f32 %v4019, %v4027
        %v4063 = vmul.f32 %v4020, %v4027
        %v4064 = vmul.f32 %v4021, %v4027
        %v4065 = vld [vmem:[%s3] sm:$0x1]
        %v4067 = vlaneseq
        %v4068 = vshrl.u32 %v4067, 7
        %v4069 = vsub.s32 0, %v4068
        %v4070 = vrot.slane %v4065, %v4069
        %v4072 = vadd.f32 %v4029, %v4070
        %v4073 = vadd.f32 %v4030, %v4070
        %v4074 = vadd.f32 %v4031, %v4070
        %v4075 = vadd.f32 %v4032, %v4070
        %v4076 = vadd.f32 %v4033, %v4070
        %v4077 = vadd.f32 %v4034, %v4070
        %v4078 = vadd.f32 %v4035, %v4070
        %v4079 = vadd.f32 %v4036, %v4070
        %v4080 = vadd.f32 %v4037, %v4070
        %v4081 = vadd.f32 %v4038, %v4070
        %v4082 = vadd.f32 %v4039, %v4070
        %v4083 = vadd.f32 %v4040, %v4070
        %v4084 = vadd.f32 %v4041, %v4070
        %v4085 = vadd.f32 %v4042, %v4070
        %v4086 = vadd.f32 %v4043, %v4070
        %v4087 = vadd.f32 %v4044, %v4070
        %v4088 = vadd.f32 %v4045, %v4070
        %v4089 = vadd.f32 %v4046, %v4070
        %v4090 = vadd.f32 %v4047, %v4070
        %v4091 = vadd.f32 %v4048, %v4070
        %v4092 = vadd.f32 %v4049, %v4070
        %v4093 = vadd.f32 %v4050, %v4070
        %v4094 = vadd.f32 %v4051, %v4070
        %v4095 = vadd.f32 %v4052, %v4070
        %v4096 = vadd.f32 %v4053, %v4070
        %v4097 = vadd.f32 %v4054, %v4070
        %v4098 = vadd.f32 %v4055, %v4070
        %v4099 = vadd.f32 %v4056, %v4070
        %v4100 = vadd.f32 %v4057, %v4070
        %v4101 = vadd.f32 %v4058, %v4070
        %v4102 = vadd.f32 %v4059, %v4070
        %v4103 = vadd.f32 %v4060, %v4070
        %v4104 = vadd.f32 %v4061, %v4070
        %v4105 = vadd.f32 %v4062, %v4070
        %v4106 = vadd.f32 %v4063, %v4070
        %v4107 = vadd.f32 %v4064, %v4070
        %v4108 = vmax.f32 %v4072, 0.0
        %v4109 = vmax.f32 %v4073, 0.0
        %v4110 = vmax.f32 %v4074, 0.0
        %v4111 = vmax.f32 %v4075, 0.0
        %v4112 = vmax.f32 %v4076, 0.0
        %v4113 = vmax.f32 %v4077, 0.0
        %v4114 = vmax.f32 %v4078, 0.0
        %v4115 = vmax.f32 %v4079, 0.0
        %v4116 = vmax.f32 %v4080, 0.0
        %v4117 = vmax.f32 %v4081, 0.0
        %v4118 = vmax.f32 %v4082, 0.0
        %v4119 = vmax.f32 %v4083, 0.0
        %v4120 = vmax.f32 %v4084, 0.0
        %v4121 = vmax.f32 %v4085, 0.0
        %v4122 = vmax.f32 %v4086, 0.0
        %v4123 = vmax.f32 %v4087, 0.0
        %v4124 = vmax.f32 %v4088, 0.0
        %v4125 = vmax.f32 %v4089, 0.0
        %v4126 = vmax.f32 %v4090, 0.0
        %v4127 = vmax.f32 %v4091, 0.0
        %v4128 = vmax.f32 %v4092, 0.0
        %v4129 = vmax.f32 %v4093, 0.0
        %v4130 = vmax.f32 %v4094, 0.0
        %v4131 = vmax.f32 %v4095, 0.0
        %v4132 = vmax.f32 %v4096, 0.0
        %v4133 = vmax.f32 %v4097, 0.0
        %v4134 = vmax.f32 %v4098, 0.0
        %v4135 = vmax.f32 %v4099, 0.0
        %v4136 = vmax.f32 %v4100, 0.0
        %v4137 = vmax.f32 %v4101, 0.0
        %v4138 = vmax.f32 %v4102, 0.0
        %v4139 = vmax.f32 %v4103, 0.0
        %v4140 = vmax.f32 %v4104, 0.0
        %v4141 = vmax.f32 %v4105, 0.0
        %v4142 = vmax.f32 %v4106, 0.0
        %v4143 = vmax.f32 %v4107, 0.0
        %v4144 = vpack.c.bf16 %v4109, %v4108
        %v4145 = vpack.c.bf16 %v4111, %v4110
        %v4146 = vpack.c.bf16 %v4113, %v4112
        %v4147 = vpack.c.bf16 %v4115, %v4114
        %v4148 = vpack.c.bf16 %v4117, %v4116
        %v4149 = vpack.c.bf16 %v4119, %v4118
        %v4150 = vpack.c.bf16 %v4121, %v4120
        %v4151 = vpack.c.bf16 %v4123, %v4122
        %v4152 = vpack.c.bf16 %v4125, %v4124
        %v4153 = vpack.c.bf16 %v4127, %v4126
        %v4154 = vpack.c.bf16 %v4129, %v4128
        %v4155 = vpack.c.bf16 %v4131, %v4130
        %v4156 = vpack.c.bf16 %v4133, %v4132
        %v4157 = vpack.c.bf16 %v4135, %v4134
        %v4158 = vpack.c.bf16 %v4137, %v4136
        %v4159 = vpack.c.bf16 %v4139, %v4138
        %v4160 = vpack.c.bf16 %v4141, %v4140
        %v4161 = vpack.c.bf16 %v4143, %v4142
        %v4162 = vld [vmem:[%s4] sm:$0xff]
        %v4163 = vld [vmem:[%s4 + $0x8] sm:$0xf]
        %v4164 = vld [vmem:[%s4 + $0xc] sm:$0xff]
        %v4165 = vld [vmem:[%s4 + $0x14] sm:$0xf]
        %v4166 = vld [vmem:[%s4 + $0x18] sm:$0xff]
        %v4167 = vld [vmem:[%s4 + $0x20] sm:$0xf]
        %v4168 = vld [vmem:[%s4 + $0x24] sm:$0xff]
        %v4169 = vld [vmem:[%s4 + $0x2c] sm:$0xf]
        %v4170 = vld [vmem:[%s4 + $0x30] sm:$0xff]
        %v4171 = vld [vmem:[%s4 + $0x38] sm:$0xf]
        %v4172 = vld [vmem:[%s4 + $0x3c] sm:$0xff]
        %v4173 = vld [vmem:[%s4 + $0x44] sm:$0xf]
        %v4174 = vld [vmem:[%s4 + $0x48] sm:$0xff]
        %v4175 = vld [vmem:[%s4 + $0x50] sm:$0xf]
        %v4176 = vld [vmem:[%s4 + $0x54] sm:$0xff]
        %v4177 = vld [vmem:[%s4 + $0x5c] sm:$0xf]
        %v4178 = vld [vmem:[%s4 + $0x60] sm:$0xff]
        %v4179 = vld [vmem:[%s4 + $0x68] sm:$0xf]
        %v4180 = vld [vmem:[%s4 + $0x6c] sm:$0xff]
        %v4181 = vld [vmem:[%s4 + $0x74] sm:$0xf]
        %v4182 = vld [vmem:[%s4 + $0x78] sm:$0xff]
        %v4183 = vld [vmem:[%s4 + $0x80] sm:$0xf]
        %v4184 = vld [vmem:[%s4 + $0x84] sm:$0xff]
        %v4185 = vld [vmem:[%s4 + $0x8c] sm:$0xf]
        %v4186 = vld [vmem:[%s4 + $0x90] sm:$0xff]
        %v4187 = vld [vmem:[%s4 + $0x98] sm:$0xf]
        %v4188 = vld [vmem:[%s4 + $0x9c] sm:$0x77]
        %v4189 = vld [vmem:[%s4 + $0xa4] sm:$0x7]
        %v4218 = vunpack.c.l.b16 %v4162
        %v4219 = vunpack.c.h.b16 %v4162
        %v4220 = vunpack.c.l.b16 %v4163
        %v4221 = vunpack.c.l.b16 %v4164
        %v4222 = vunpack.c.h.b16 %v4164
        %v4223 = vunpack.c.l.b16 %v4165
        %v4224 = vunpack.c.l.b16 %v4166
        %v4225 = vunpack.c.h.b16 %v4166
        %v4226 = vunpack.c.l.b16 %v4167
        %v4227 = vunpack.c.l.b16 %v4168
        %v4228 = vunpack.c.h.b16 %v4168
        %v4229 = vunpack.c.l.b16 %v4169
        %v4230 = vunpack.c.l.b16 %v4170
        %v4231 = vunpack.c.h.b16 %v4170
        %v4232 = vunpack.c.l.b16 %v4171
        %v4233 = vunpack.c.l.b16 %v4172
        %v4234 = vunpack.c.h.b16 %v4172
        %v4235 = vunpack.c.l.b16 %v4173
        %v4236 = vunpack.c.l.b16 %v4174
        %v4237 = vunpack.c.h.b16 %v4174
        %v4238 = vunpack.c.l.b16 %v4175
        %v4239 = vunpack.c.l.b16 %v4176
        %v4240 = vunpack.c.h.b16 %v4176
        %v4241 = vunpack.c.l.b16 %v4177
        %v4242 = vunpack.c.l.b16 %v4178
        %v4243 = vunpack.c.h.b16 %v4178
        %v4244 = vunpack.c.l.b16 %v4179
        %v4245 = vunpack.c.l.b16 %v4180
        %v4246 = vunpack.c.h.b16 %v4180
        %v4247 = vunpack.c.l.b16 %v4181
        %v4248 = vunpack.c.l.b16 %v4182
        %v4249 = vunpack.c.h.b16 %v4182
        %v4250 = vunpack.c.l.b16 %v4183
        %v4251 = vunpack.c.l.b16 %v4184
        %v4252 = vunpack.c.h.b16 %v4184
        %v4253 = vunpack.c.l.b16 %v4185
        %v4254 = vunpack.c.l.b16 %v4186
        %v4255 = vunpack.c.h.b16 %v4186
        %v4256 = vunpack.c.l.b16 %v4187
        %v4257 = vunpack.c.l.b16 %v4188
        %v4258 = vunpack.c.h.b16 %v4188
        %v4259 = vunpack.c.l.b16 %v4189
        %v4260 = vpack.c.b16 %v4221, %v4218
        %v4261 = vpack.c.b16 %v4222, %v4219
        %v4262 = vpack.c.b16 %v4223, %v4220
        %v4263 = vpack.c.b16 %v4227, %v4224
        %v4264 = vpack.c.b16 %v4228, %v4225
        %v4265 = vpack.c.b16 %v4229, %v4226
        %v4266 = vpack.c.b16 %v4233, %v4230
        %v4267 = vpack.c.b16 %v4234, %v4231
        %v4268 = vpack.c.b16 %v4235, %v4232
        %v4269 = vpack.c.b16 %v4239, %v4236
        %v4270 = vpack.c.b16 %v4240, %v4237
        %v4271 = vpack.c.b16 %v4241, %v4238
        %v4272 = vpack.c.b16 %v4245, %v4242
        %v4273 = vpack.c.b16 %v4246, %v4243
        %v4274 = vpack.c.b16 %v4247, %v4244
        %v4275 = vpack.c.b16 %v4251, %v4248
        %v4276 = vpack.c.b16 %v4252, %v4249
        %v4277 = vpack.c.b16 %v4253, %v4250
        %v4278 = vpack.c.b16 %v4257, %v4254
        %v4279 = vpack.c.b16 %v4258, %v4255
        %v4280 = vpack.c.b16 %v4259, %v4256
        %vm4295 = vcmask 261120
        %v4297 = vsel %vm4295, %v4262, 0
        %v4300 = vsel %vm4295, %v4265, 0
        %v4303 = vsel %vm4295, %v4268, 0
        %v4306 = vsel %vm4295, %v4271, 0
        %v4309 = vsel %vm4295, %v4274, 0
        %v4312 = vsel %vm4295, %v4277, 0
        %v4315 = vsel %vm4295, %v4280, 0
        %4317 = vmatprep.subr.bf16.mxu0 0
        %4318 = vmatpush1.bf16.msra.mxu0 %v4144
        %4319 = vmatprep.subr.bf16.mxu0 0
        %4320 = vmatpush1.bf16.msra.mxu0 %v4145
        %4321 = vmatprep.subr.bf16.mxu0 0
        %4322 = vmatpush1.bf16.msra.mxu0 %v4146
        %4323 = vmatprep.subr.bf16.mxu0 0
        %4324 = vmatpush1.bf16.msra.mxu0 %v4147
        %4325 = vmatprep.subr.bf16.mxu0 0
        %4326 = vmatpush1.bf16.msra.mxu0 %v4148
        %4327 = vmatprep.subr.bf16.mxu0 0
        %4328 = vmatpush1.bf16.msra.mxu0 %v4149
        %4329 = vmatprep.subr.bf16.mxu0 0
        %4330 = vmatpush1.bf16.msra.mxu0 %v4150
        %4331 = vmatprep.subr.bf16.mxu0 0
        %4332 = vmatpush1.bf16.msra.mxu0 %v4151
        %4333 = vmatprep.subr.bf16.mxu0 0
        %4334 = vmatpush1.bf16.msra.mxu0 %v4152
        %4335 = vmatprep.subr.bf16.mxu0 0
        %4336 = vmatpush1.bf16.msra.mxu0 %v4153
        %4337 = vmatprep.subr.bf16.mxu0 0
        %4338 = vmatpush1.bf16.msra.mxu0 %v4154
        %4339 = vmatprep.subr.bf16.mxu0 0
        %4340 = vmatpush1.bf16.msra.mxu0 %v4155
        %4341 = vmatprep.subr.bf16.mxu0 0
        %4342 = vmatpush1.bf16.msra.mxu0 %v4156
        %4343 = vmatprep.subr.bf16.mxu0 0
        %4344 = vmatpush1.bf16.msra.mxu0 %v4157
        %4345 = vmatprep.subr.bf16.mxu0 0
        %4346 = vmatpush1.bf16.msra.mxu0 %v4158
        %4347 = vmatprep.subr.bf16.mxu0 0
        %4348 = vmatpush1.bf16.msra.mxu0 %v4159
        %4349 = vmatprep.mubr.bf16.mxu0 %v4261
        %4350 = vmatmul.mubr.bf16.gmra.mrb[0].mxu0 %v4260
        %v4351 = vpop.f32.mrb[0].mxu0
        %v4352 = vadd.f32 0.0, %v4351
        %v4353 = vpop.f32.mrb[0].mxu0
        %v4354 = vpop.f32.mrb[0].mxu0
        %v4355 = vadd.f32 0.0, %v4354
        %v4356 = vpop.f32.mrb[0].mxu0
        %4357 = vmatprep.mubr.bf16.mxu0 %v4264
        %4358 = vmatmul.mubr.bf16.gmra.mrb[0].mxu0 %v4263
        %v4359 = vpop.f32.mrb[0].mxu0
        %v4360 = vadd.f32 0.0, %v4359
        %v4361 = vpop.f32.mrb[0].mxu0
        %v4362 = vpop.f32.mrb[0].mxu0
        %v4363 = vadd.f32 0.0, %v4362
        %v4364 = vpop.f32.mrb[0].mxu0
        %4365 = vmatprep.mubr.bf16.mxu0 %v4267
        %4366 = vmatmul.mubr.bf16.gmra.mrb[0].mxu0 %v4266
        %v4367 = vpop.f32.mrb[0].mxu0
        %v4368 = vadd.f32 0.0, %v4367
        %v4369 = vpop.f32.mrb[0].mxu0
        %v4370 = vpop.f32.mrb[0].mxu0
        %v4371 = vadd.f32 0.0, %v4370
        %v4372 = vpop.f32.mrb[0].mxu0
        %4373 = vmatprep.mubr.bf16.mxu0 %v4270
        %4374 = vmatmul.mubr.bf16.gmra.mrb[0].mxu0 %v4269
        %v4375 = vpop.f32.mrb[0].mxu0
        %v4376 = vadd.f32 0.0, %v4375
        %v4377 = vpop.f32.mrb[0].mxu0
        %v4378 = vpop.f32.mrb[0].mxu0
        %v4379 = vadd.f32 0.0, %v4378
        %v4380 = vpop.f32.mrb[0].mxu0
        %4381 = vmatprep.mubr.bf16.mxu0 %v4273
        %4382 = vmatmul.mubr.bf16.gmra.mrb[0].mxu0 %v4272
        %v4383 = vpop.f32.mrb[0].mxu0
        %v4384 = vadd.f32 0.0, %v4383
        %v4385 = vpop.f32.mrb[0].mxu0
        %v4386 = vpop.f32.mrb[0].mxu0
        %v4387 = vadd.f32 0.0, %v4386
        %v4388 = vpop.f32.mrb[0].mxu0
        %4389 = vmatprep.mubr.bf16.mxu0 %v4276
        %4390 = vmatmul.mubr.bf16.gmra.mrb[0].mxu0 %v4275
        %v4391 = vpop.f32.mrb[0].mxu0
        %v4392 = vadd.f32 0.0, %v4391
        %v4393 = vpop.f32.mrb[0].mxu0
        %v4394 = vpop.f32.mrb[0].mxu0
        %v4395 = vadd.f32 0.0, %v4394
        %v4396 = vpop.f32.mrb[0].mxu0
        %4397 = vmatprep.mubr.bf16.mxu0 %v4279
        %4398 = vmatmul.mubr.bf16.gmra.mrb[0].mxu0 %v4278
        %v4399 = vpop.f32.mrb[0].mxu0
        %v4400 = vadd.f32 0.0, %v4399
        %v4401 = vpop.f32.mrb[0].mxu0
        %v4402 = vpop.f32.mrb[0].mxu0
        %v4403 = vadd.f32 0.0, %v4402
        %v4404 = vpop.f32.mrb[0].mxu0
        %4405 = vdwg.mxu0
        %4406 = vmatprep.subr.bf16.mxu0 0
        %4407 = vmatpush1.bf16.msra.mxu0 %v4160
        %4408 = vmatprep.subr.bf16.mxu0 0
        %4409 = vmatpush1.bf16.msra.mxu0 %v4161
        %4410 = vmatprep.subr.bf16.mxu0 0
        %4411 = vmatpush1.bf16.msra.mxu0 0
        %4412 = vmatprep.subr.bf16.mxu0 0
        %4413 = vmatpush1.bf16.msra.mxu0 0
        %4414 = vmatprep.subr.bf16.mxu0 0
        %4415 = vmatpush1.bf16.msra.mxu0 0
        %4416 = vmatprep.subr.bf16.mxu0 0
        %4417 = vmatpush1.bf16.msra.mxu0 0
        %4418 = vmatprep.subr.bf16.mxu0 0
        %4419 = vmatpush1.bf16.msra.mxu0 0
        %4420 = vmatprep.subr.bf16.mxu0 0
        %4421 = vmatpush1.bf16.msra.mxu0 0
        %4422 = vmatprep.subr.bf16.mxu0 0
        %4423 = vmatpush1.bf16.msra.mxu0 0
        %4424 = vmatprep.subr.bf16.mxu0 0
        %4425 = vmatpush1.bf16.msra.mxu0 0
        %4426 = vmatprep.subr.bf16.mxu0 0
        %4427 = vmatpush1.bf16.msra.mxu0 0
        %4428 = vmatprep.subr.bf16.mxu0 0
        %4429 = vmatpush1.bf16.msra.mxu0 0
        %4430 = vmatprep.subr.bf16.mxu0 0
        %4431 = vmatpush1.bf16.msra.mxu0 0
        %4432 = vmatprep.subr.bf16.mxu0 0
        %4433 = vmatpush1.bf16.msra.mxu0 0
        %4434 = vmatprep.subr.bf16.mxu0 0
        %4435 = vmatpush1.bf16.msra.mxu0 0
        %4436 = vmatprep.subr.bf16.mxu0 0
        %4437 = vmatpush1.bf16.msra.mxu0 0
        %4438 = vmatprep.mubr.bf16.mxu0 0
        %4439 = vmatmul.mubr.bf16.gmra.mrb[0].mxu0 %v4297
        %v4440 = vpop.f32.mrb[0].mxu0
        %v4441 = vadd.f32 %v4352, %v4440
        %v4442 = vpop.f32.mrb[0].mxu0
        %v4443 = vpop.f32.mrb[0].mxu0
        %v4444 = vadd.f32 %v4355, %v4443
        %v4445 = vpop.f32.mrb[0].mxu0
        %4446 = vmatprep.mubr.bf16.mxu0 0
        %4447 = vmatmul.mubr.bf16.gmra.mrb[0].mxu0 %v4300
        %v4448 = vpop.f32.mrb[0].mxu0
        %v4449 = vadd.f32 %v4360, %v4448
        %v4450 = vpop.f32.mrb[0].mxu0
        %v4451 = vpop.f32.mrb[0].mxu0
        %v4452 = vadd.f32 %v4363, %v4451
        %v4453 = vpop.f32.mrb[0].mxu0
        %4454 = vmatprep.mubr.bf16.mxu0 0
        %4455 = vmatmul.mubr.bf16.gmra.mrb[0].mxu0 %v4303
        %v4456 = vpop.f32.mrb[0].mxu0
        %v4457 = vadd.f32 %v4368, %v4456
        %v4458 = vpop.f32.mrb[0].mxu0
        %v4459 = vpop.f32.mrb[0].mxu0
        %v4460 = vadd.f32 %v4371, %v4459
        %v4461 = vpop.f32.mrb[0].mxu0
        %4462 = vmatprep.mubr.bf16.mxu0 0
        %4463 = vmatmul.mubr.bf16.gmra.mrb[0].mxu0 %v4306
        %v4464 = vpop.f32.mrb[0].mxu0
        %v4465 = vadd.f32 %v4376, %v4464
        %v4466 = vpop.f32.mrb[0].mxu0
        %v4467 = vpop.f32.mrb[0].mxu0
        %v4468 = vadd.f32 %v4379, %v4467
        %v4469 = vpop.f32.mrb[0].mxu0
        %4470 = vmatprep.mubr.bf16.mxu0 0
        %4471 = vmatmul.mubr.bf16.gmra.mrb[0].mxu0 %v4309
        %v4472 = vpop.f32.mrb[0].mxu0
        %v4473 = vadd.f32 %v4384, %v4472
        %v4474 = vpop.f32.mrb[0].mxu0
        %v4475 = vpop.f32.mrb[0].mxu0
        %v4476 = vadd.f32 %v4387, %v4475
        %v4477 = vpop.f32.mrb[0].mxu0
        %4478 = vmatprep.mubr.bf16.mxu0 0
        %4479 = vmatmul.mubr.bf16.gmra.mrb[0].mxu0 %v4312
        %v4480 = vpop.f32.mrb[0].mxu0
        %v4481 = vadd.f32 %v4392, %v4480
        %v4482 = vpop.f32.mrb[0].mxu0
        %v4483 = vpop.f32.mrb[0].mxu0
        %v4484 = vadd.f32 %v4395, %v4483
        %v4485 = vpop.f32.mrb[0].mxu0
        %4486 = vmatprep.mubr.bf16.mxu0 0
        %4487 = vmatmul.mubr.bf16.gmra.mrb[0].mxu0 %v4315
        %v4488 = vpop.f32.mrb[0].mxu0
        %v4489 = vadd.f32 %v4400, %v4488
        %v4490 = vpop.f32.mrb[0].mxu0
        %v4491 = vpop.f32.mrb[0].mxu0
        %v4492 = vadd.f32 %v4403, %v4491
        %v4493 = vpop.f32.mrb[0].mxu0
        %4494 = vdwg.mxu0
        %s4495 = scalar_lea.vmem %s4, 168
        %v4496 = vld [vmem:[%s4495] sm:$0xff]
        %v4497 = vld [vmem:[%s4495 + $0x8] sm:$0xf]
        %v4498 = vld [vmem:[%s4495 + $0xc] sm:$0xff]
        %v4499 = vld [vmem:[%s4495 + $0x14] sm:$0xf]
        %v4500 = vld [vmem:[%s4495 + $0x18] sm:$0xff]
        %v4501 = vld [vmem:[%s4495 + $0x20] sm:$0xf]
        %v4502 = vld [vmem:[%s4495 + $0x24] sm:$0xff]
        %v4503 = vld [vmem:[%s4495 + $0x2c] sm:$0xf]
        %v4504 = vld [vmem:[%s4495 + $0x30] sm:$0xff]
        %v4505 = vld [vmem:[%s4495 + $0x38] sm:$0xf]
        %v4506 = vld [vmem:[%s4495 + $0x3c] sm:$0xff]
        %v4507 = vld [vmem:[%s4495 + $0x44] sm:$0xf]
        %v4508 = vld [vmem:[%s4495 + $0x48] sm:$0xff]
        %v4509 = vld [vmem:[%s4495 + $0x50] sm:$0xf]
        %v4510 = vld [vmem:[%s4495 + $0x54] sm:$0xff]
        %v4511 = vld [vmem:[%s4495 + $0x5c] sm:$0xf]
        %v4512 = vld [vmem:[%s4495 + $0x60] sm:$0xff]
        %v4513 = vld [vmem:[%s4495 + $0x68] sm:$0xf]
        %v4514 = vld [vmem:[%s4495 + $0x6c] sm:$0xff]
        %v4515 = vld [vmem:[%s4495 + $0x74] sm:$0xf]
        %v4516 = vld [vmem:[%s4495 + $0x78] sm:$0xff]
        %v4517 = vld [vmem:[%s4495 + $0x80] sm:$0xf]
        %v4518 = vld [vmem:[%s4495 + $0x84] sm:$0xff]
        %v4519 = vld [vmem:[%s4495 + $0x8c] sm:$0xf]
        %v4520 = vld [vmem:[%s4495 + $0x90] sm:$0xff]
        %v4521 = vld [vmem:[%s4495 + $0x98] sm:$0xf]
        %v4522 = vld [vmem:[%s4495 + $0x9c] sm:$0x77]
        %v4523 = vld [vmem:[%s4495 + $0xa4] sm:$0x7]
        %v4552 = vunpack.c.l.b16 %v4496
        %v4553 = vunpack.c.h.b16 %v4496
        %v4554 = vunpack.c.l.b16 %v4497
        %v4555 = vunpack.c.l.b16 %v4498
        %v4556 = vunpack.c.h.b16 %v4498
        %v4557 = vunpack.c.l.b16 %v4499
        %v4558 = vunpack.c.l.b16 %v4500
        %v4559 = vunpack.c.h.b16 %v4500
        %v4560 = vunpack.c.l.b16 %v4501
        %v4561 = vunpack.c.l.b16 %v4502
        %v4562 = vunpack.c.h.b16 %v4502
        %v4563 = vunpack.c.l.b16 %v4503
        %v4564 = vunpack.c.l.b16 %v4504
        %v4565 = vunpack.c.h.b16 %v4504
        %v4566 = vunpack.c.l.b16 %v4505
        %v4567 = vunpack.c.l.b16 %v4506
        %v4568 = vunpack.c.h.b16 %v4506
        %v4569 = vunpack.c.l.b16 %v4507
        %v4570 = vunpack.c.l.b16 %v4508
        %v4571 = vunpack.c.h.b16 %v4508
        %v4572 = vunpack.c.l.b16 %v4509
        %v4573 = vunpack.c.l.b16 %v4510
        %v4574 = vunpack.c.h.b16 %v4510
        %v4575 = vunpack.c.l.b16 %v4511
        %v4576 = vunpack.c.l.b16 %v4512
        %v4577 = vunpack.c.h.b16 %v4512
        %v4578 = vunpack.c.l.b16 %v4513
        %v4579 = vunpack.c.l.b16 %v4514
        %v4580 = vunpack.c.h.b16 %v4514
        %v4581 = vunpack.c.l.b16 %v4515
        %v4582 = vunpack.c.l.b16 %v4516
        %v4583 = vunpack.c.h.b16 %v4516
        %v4584 = vunpack.c.l.b16 %v4517
        %v4585 = vunpack.c.l.b16 %v4518
        %v4586 = vunpack.c.h.b16 %v4518
        %v4587 = vunpack.c.l.b16 %v4519
        %v4588 = vunpack.c.l.b16 %v4520
        %v4589 = vunpack.c.h.b16 %v4520
        %v4590 = vunpack.c.l.b16 %v4521
        %v4591 = vunpack.c.l.b16 %v4522
        %v4592 = vunpack.c.h.b16 %v4522
        %v4593 = vunpack.c.l.b16 %v4523
        %v4594 = vpack.c.b16 %v4555, %v4552
        %v4595 = vpack.c.b16 %v4556, %v4553
        %v4596 = vpack.c.b16 %v4557, %v4554
        %v4597 = vpack.c.b16 %v4561, %v4558
        %v4598 = vpack.c.b16 %v4562, %v4559
        %v4599 = vpack.c.b16 %v4563, %v4560
        %v4600 = vpack.c.b16 %v4567, %v4564
        %v4601 = vpack.c.b16 %v4568, %v4565
        %v4602 = vpack.c.b16 %v4569, %v4566
        %v4603 = vpack.c.b16 %v4573, %v4570
        %v4604 = vpack.c.b16 %v4574, %v4571
        %v4605 = vpack.c.b16 %v4575, %v4572
        %v4606 = vpack.c.b16 %v4579, %v4576
        %v4607 = vpack.c.b16 %v4580, %v4577
        %v4608 = vpack.c.b16 %v4581, %v4578
        %v4609 = vpack.c.b16 %v4585, %v4582
        %v4610 = vpack.c.b16 %v4586, %v4583
        %v4611 = vpack.c.b16 %v4587, %v4584
        %v4612 = vpack.c.b16 %v4591, %v4588
        %v4613 = vpack.c.b16 %v4592, %v4589
        %v4614 = vpack.c.b16 %v4593, %v4590
        %v4630 = vsel %vm4295, %v4596, 0
        %v4633 = vsel %vm4295, %v4599, 0
        %v4636 = vsel %vm4295, %v4602, 0
        %v4639 = vsel %vm4295, %v4605, 0
        %v4642 = vsel %vm4295, %v4608, 0
        %v4645 = vsel %vm4295, %v4611, 0
        %v4648 = vsel %vm4295, %v4614, 0
        %4650 = vmatprep.subr.bf16.mxu0 0
        %4651 = vmatpush1.bf16.msra.mxu0 %v4144
        %4652 = vmatprep.subr.bf16.mxu0 0
        %4653 = vmatpush1.bf16.msra.mxu0 %v4145
        %4654 = vmatprep.subr.bf16.mxu0 0
        %4655 = vmatpush1.bf16.msra.mxu0 %v4146
        %4656 = vmatprep.subr.bf16.mxu0 0
        %4657 = vmatpush1.bf16.msra.mxu0 %v4147
        %4658 = vmatprep.subr.bf16.mxu0 0
        %4659 = vmatpush1.bf16.msra.mxu0 %v4148
        %4660 = vmatprep.subr.bf16.mxu0 0
        %4661 = vmatpush1.bf16.msra.mxu0 %v4149
        %4662 = vmatprep.subr.bf16.mxu0 0
        %4663 = vmatpush1.bf16.msra.mxu0 %v4150
        %4664 = vmatprep.subr.bf16.mxu0 0
        %4665 = vmatpush1.bf16.msra.mxu0 %v4151
        %4666 = vmatprep.subr.bf16.mxu0 0
        %4667 = vmatpush1.bf16.msra.mxu0 %v4152
        %4668 = vmatprep.subr.bf16.mxu0 0
        %4669 = vmatpush1.bf16.msra.mxu0 %v4153
        %4670 = vmatprep.subr.bf16.mxu0 0
        %4671 = vmatpush1.bf16.msra.mxu0 %v4154
        %4672 = vmatprep.subr.bf16.mxu0 0
        %4673 = vmatpush1.bf16.msra.mxu0 %v4155
        %4674 = vmatprep.subr.bf16.mxu0 0
        %4675 = vmatpush1.bf16.msra.mxu0 %v4156
        %4676 = vmatprep.subr.bf16.mxu0 0
        %4677 = vmatpush1.bf16.msra.mxu0 %v4157
        %4678 = vmatprep.subr.bf16.mxu0 0
        %4679 = vmatpush1.bf16.msra.mxu0 %v4158
        %4680 = vmatprep.subr.bf16.mxu0 0
        %4681 = vmatpush1.bf16.msra.mxu0 %v4159
        %4682 = vmatprep.mubr.bf16.mxu0 %v4595
        %4683 = vmatmul.mubr.bf16.gmra.mrb[0].mxu0 %v4594
        %v4684 = vpop.f32.mrb[0].mxu0
        %v4685 = vadd.f32 0.0, %v4684
        %v4686 = vpop.f32.mrb[0].mxu0
        %v4687 = vpop.f32.mrb[0].mxu0
        %v4688 = vadd.f32 0.0, %v4687
        %v4689 = vpop.f32.mrb[0].mxu0
        %4690 = vmatprep.mubr.bf16.mxu0 %v4598
        %4691 = vmatmul.mubr.bf16.gmra.mrb[0].mxu0 %v4597
        %v4692 = vpop.f32.mrb[0].mxu0
        %v4693 = vadd.f32 0.0, %v4692
        %v4694 = vpop.f32.mrb[0].mxu0
        %v4695 = vpop.f32.mrb[0].mxu0
        %v4696 = vadd.f32 0.0, %v4695
        %v4697 = vpop.f32.mrb[0].mxu0
        %4698 = vmatprep.mubr.bf16.mxu0 %v4601
        %4699 = vmatmul.mubr.bf16.gmra.mrb[0].mxu0 %v4600
        %v4700 = vpop.f32.mrb[0].mxu0
        %v4701 = vadd.f32 0.0, %v4700
        %v4702 = vpop.f32.mrb[0].mxu0
        %v4703 = vpop.f32.mrb[0].mxu0
        %v4704 = vadd.f32 0.0, %v4703
        %v4705 = vpop.f32.mrb[0].mxu0
        %4706 = vmatprep.mubr.bf16.mxu0 %v4604
        %4707 = vmatmul.mubr.bf16.gmra.mrb[0].mxu0 %v4603
        %v4708 = vpop.f32.mrb[0].mxu0
        %v4709 = vadd.f32 0.0, %v4708
        %v4710 = vpop.f32.mrb[0].mxu0
        %v4711 = vpop.f32.mrb[0].mxu0
        %v4712 = vadd.f32 0.0, %v4711
        %v4713 = vpop.f32.mrb[0].mxu0
        %4714 = vmatprep.mubr.bf16.mxu0 %v4607
        %4715 = vmatmul.mubr.bf16.gmra.mrb[0].mxu0 %v4606
        %v4716 = vpop.f32.mrb[0].mxu0
        %v4717 = vadd.f32 0.0, %v4716
        %v4718 = vpop.f32.mrb[0].mxu0
        %v4719 = vpop.f32.mrb[0].mxu0
        %v4720 = vadd.f32 0.0, %v4719
        %v4721 = vpop.f32.mrb[0].mxu0
        %4722 = vmatprep.mubr.bf16.mxu0 %v4610
        %4723 = vmatmul.mubr.bf16.gmra.mrb[0].mxu0 %v4609
        %v4724 = vpop.f32.mrb[0].mxu0
        %v4725 = vadd.f32 0.0, %v4724
        %v4726 = vpop.f32.mrb[0].mxu0
        %v4727 = vpop.f32.mrb[0].mxu0
        %v4728 = vadd.f32 0.0, %v4727
        %v4729 = vpop.f32.mrb[0].mxu0
        %4730 = vmatprep.mubr.bf16.mxu0 %v4613
        %4731 = vmatmul.mubr.bf16.gmra.mrb[0].mxu0 %v4612
        %v4732 = vpop.f32.mrb[0].mxu0
        %v4733 = vadd.f32 0.0, %v4732
        %v4734 = vpop.f32.mrb[0].mxu0
        %v4735 = vpop.f32.mrb[0].mxu0
        %v4736 = vadd.f32 0.0, %v4735
        %v4737 = vpop.f32.mrb[0].mxu0
        %4738 = vdwg.mxu0
        %4739 = vmatprep.subr.bf16.mxu0 0
        %4740 = vmatpush1.bf16.msra.mxu0 %v4160
        %4741 = vmatprep.subr.bf16.mxu0 0
        %4742 = vmatpush1.bf16.msra.mxu0 %v4161
        %4743 = vmatprep.subr.bf16.mxu0 0
        %4744 = vmatpush1.bf16.msra.mxu0 0
        %4745 = vmatprep.subr.bf16.mxu0 0
        %4746 = vmatpush1.bf16.msra.mxu0 0
        %4747 = vmatprep.subr.bf16.mxu0 0
        %4748 = vmatpush1.bf16.msra.mxu0 0
        %4749 = vmatprep.subr.bf16.mxu0 0
        %4750 = vmatpush1.bf16.msra.mxu0 0
        %4751 = vmatprep.subr.bf16.mxu0 0
        %4752 = vmatpush1.bf16.msra.mxu0 0
        %4753 = vmatprep.subr.bf16.mxu0 0
        %4754 = vmatpush1.bf16.msra.mxu0 0
        %4755 = vmatprep.subr.bf16.mxu0 0
        %4756 = vmatpush1.bf16.msra.mxu0 0
        %4757 = vmatprep.subr.bf16.mxu0 0
        %4758 = vmatpush1.bf16.msra.mxu0 0
        %4759 = vmatprep.subr.bf16.mxu0 0
        %4760 = vmatpush1.bf16.msra.mxu0 0
        %4761 = vmatprep.subr.bf16.mxu0 0
        %4762 = vmatpush1.bf16.msra.mxu0 0
        %4763 = vmatprep.subr.bf16.mxu0 0
        %4764 = vmatpush1.bf16.msra.mxu0 0
        %4765 = vmatprep.subr.bf16.mxu0 0
        %4766 = vmatpush1.bf16.msra.mxu0 0
        %4767 = vmatprep.subr.bf16.mxu0 0
        %4768 = vmatpush1.bf16.msra.mxu0 0
        %4769 = vmatprep.subr.bf16.mxu0 0
        %4770 = vmatpush1.bf16.msra.mxu0 0
        %4771 = vmatprep.mubr.bf16.mxu0 0
        %4772 = vmatmul.mubr.bf16.gmra.mrb[0].mxu0 %v4630
        %v4773 = vpop.f32.mrb[0].mxu0
        %v4774 = vadd.f32 %v4685, %v4773
        %v4775 = vpop.f32.mrb[0].mxu0
        %v4776 = vpop.f32.mrb[0].mxu0
        %v4777 = vadd.f32 %v4688, %v4776
        %v4778 = vpop.f32.mrb[0].mxu0
        %4779 = vmatprep.mubr.bf16.mxu0 0
        %4780 = vmatmul.mubr.bf16.gmra.mrb[0].mxu0 %v4633
        %v4781 = vpop.f32.mrb[0].mxu0
        %v4782 = vadd.f32 %v4693, %v4781
        %v4783 = vpop.f32.mrb[0].mxu0
        %v4784 = vpop.f32.mrb[0].mxu0
        %v4785 = vadd.f32 %v4696, %v4784
        %v4786 = vpop.f32.mrb[0].mxu0
        %4787 = vmatprep.mubr.bf16.mxu0 0
        %4788 = vmatmul.mubr.bf16.gmra.mrb[0].mxu0 %v4636
        %v4789 = vpop.f32.mrb[0].mxu0
        %v4790 = vadd.f32 %v4701, %v4789
        %v4791 = vpop.f32.mrb[0].mxu0
        %v4792 = vpop.f32.mrb[0].mxu0
        %v4793 = vadd.f32 %v4704, %v4792
        %v4794 = vpop.f32.mrb[0].mxu0
        %4795 = vmatprep.mubr.bf16.mxu0 0
        %4796 = vmatmul.mubr.bf16.gmra.mrb[0].mxu0 %v4639
        %v4797 = vpop.f32.mrb[0].mxu0
        %v4798 = vadd.f32 %v4709, %v4797
        %v4799 = vpop.f32.mrb[0].mxu0
        %v4800 = vpop.f32.mrb[0].mxu0
        %v4801 = vadd.f32 %v4712, %v4800
        %v4802 = vpop.f32.mrb[0].mxu0
        %4803 = vmatprep.mubr.bf16.mxu0 0
        %4804 = vmatmul.mubr.bf16.gmra.mrb[0].mxu0 %v4642
        %v4805 = vpop.f32.mrb[0].mxu0
        %v4806 = vadd.f32 %v4717, %v4805
        %v4807 = vpop.f32.mrb[0].mxu0
        %v4808 = vpop.f32.mrb[0].mxu0
        %v4809 = vadd.f32 %v4720, %v4808
        %v4810 = vpop.f32.mrb[0].mxu0
        %4811 = vmatprep.mubr.bf16.mxu0 0
        %4812 = vmatmul.mubr.bf16.gmra.mrb[0].mxu0 %v4645
        %v4813 = vpop.f32.mrb[0].mxu0
        %v4814 = vadd.f32 %v4725, %v4813
        %v4815 = vpop.f32.mrb[0].mxu0
        %v4816 = vpop.f32.mrb[0].mxu0
        %v4817 = vadd.f32 %v4728, %v4816
        %v4818 = vpop.f32.mrb[0].mxu0
        %4819 = vmatprep.mubr.bf16.mxu0 0
        %4820 = vmatmul.mubr.bf16.gmra.mrb[0].mxu0 %v4648
        %v4821 = vpop.f32.mrb[0].mxu0
        %v4822 = vadd.f32 %v4733, %v4821
        %v4823 = vpop.f32.mrb[0].mxu0
        %v4824 = vpop.f32.mrb[0].mxu0
        %v4825 = vadd.f32 %v4736, %v4824
        %v4826 = vpop.f32.mrb[0].mxu0
        %4827 = vdwg.mxu0
        %v4828 = vmax.f32 %v4441, %v4774
        %v4829 = vmax.f32 %v4444, %v4777
        %v4830 = vmax.f32 %v4449, %v4782
        %v4831 = vmax.f32 %v4452, %v4785
        %v4832 = vmax.f32 %v4457, %v4790
        %v4833 = vmax.f32 %v4460, %v4793
        %v4834 = vmax.f32 %v4465, %v4798
        %v4835 = vmax.f32 %v4468, %v4801
        %v4836 = vmax.f32 %v4473, %v4806
        %v4837 = vmax.f32 %v4476, %v4809
        %v4838 = vmax.f32 %v4481, %v4814
        %v4839 = vmax.f32 %v4484, %v4817
        %v4840 = vmax.f32 %v4489, %v4822
        %v4841 = vmax.f32 %v4492, %v4825
        %s4842 = scalar_lea.vmem %s4, 336
        %v4843 = vld [vmem:[%s4842] sm:$0xff]
        %v4844 = vld [vmem:[%s4842 + $0x8] sm:$0xf]
        %v4845 = vld [vmem:[%s4842 + $0xc] sm:$0xff]
        %v4846 = vld [vmem:[%s4842 + $0x14] sm:$0xf]
        %v4847 = vld [vmem:[%s4842 + $0x18] sm:$0xff]
        %v4848 = vld [vmem:[%s4842 + $0x20] sm:$0xf]
        %v4849 = vld [vmem:[%s4842 + $0x24] sm:$0xff]
        %v4850 = vld [vmem:[%s4842 + $0x2c] sm:$0xf]
        %v4851 = vld [vmem:[%s4842 + $0x30] sm:$0xff]
        %v4852 = vld [vmem:[%s4842 + $0x38] sm:$0xf]
        %v4853 = vld [vmem:[%s4842 + $0x3c] sm:$0xff]
        %v4854 = vld [vmem:[%s4842 + $0x44] sm:$0xf]
        %v4855 = vld [vmem:[%s4842 + $0x48] sm:$0xff]
        %v4856 = vld [vmem:[%s4842 + $0x50] sm:$0xf]
        %v4857 = vld [vmem:[%s4842 + $0x54] sm:$0xff]
        %v4858 = vld [vmem:[%s4842 + $0x5c] sm:$0xf]
        %v4859 = vld [vmem:[%s4842 + $0x60] sm:$0xff]
        %v4860 = vld [vmem:[%s4842 + $0x68] sm:$0xf]
        %v4861 = vld [vmem:[%s4842 + $0x6c] sm:$0xff]
        %v4862 = vld [vmem:[%s4842 + $0x74] sm:$0xf]
        %v4863 = vld [vmem:[%s4842 + $0x78] sm:$0xff]
        %v4864 = vld [vmem:[%s4842 + $0x80] sm:$0xf]
        %v4865 = vld [vmem:[%s4842 + $0x84] sm:$0xff]
        %v4866 = vld [vmem:[%s4842 + $0x8c] sm:$0xf]
        %v4867 = vld [vmem:[%s4842 + $0x90] sm:$0xff]
        %v4868 = vld [vmem:[%s4842 + $0x98] sm:$0xf]
        %v4869 = vld [vmem:[%s4842 + $0x9c] sm:$0x77]
        %v4870 = vld [vmem:[%s4842 + $0xa4] sm:$0x7]
        %v4899 = vunpack.c.l.b16 %v4843
        %v4900 = vunpack.c.h.b16 %v4843
        %v4901 = vunpack.c.l.b16 %v4844
        %v4902 = vunpack.c.l.b16 %v4845
        %v4903 = vunpack.c.h.b16 %v4845
        %v4904 = vunpack.c.l.b16 %v4846
        %v4905 = vunpack.c.l.b16 %v4847
        %v4906 = vunpack.c.h.b16 %v4847
        %v4907 = vunpack.c.l.b16 %v4848
        %v4908 = vunpack.c.l.b16 %v4849
        %v4909 = vunpack.c.h.b16 %v4849
        %v4910 = vunpack.c.l.b16 %v4850
        %v4911 = vunpack.c.l.b16 %v4851
        %v4912 = vunpack.c.h.b16 %v4851
        %v4913 = vunpack.c.l.b16 %v4852
        %v4914 = vunpack.c.l.b16 %v4853
        %v4915 = vunpack.c.h.b16 %v4853
        %v4916 = vunpack.c.l.b16 %v4854
        %v4917 = vunpack.c.l.b16 %v4855
        %v4918 = vunpack.c.h.b16 %v4855
        %v4919 = vunpack.c.l.b16 %v4856
        %v4920 = vunpack.c.l.b16 %v4857
        %v4921 = vunpack.c.h.b16 %v4857
        %v4922 = vunpack.c.l.b16 %v4858
        %v4923 = vunpack.c.l.b16 %v4859
        %v4924 = vunpack.c.h.b16 %v4859
        %v4925 = vunpack.c.l.b16 %v4860
        %v4926 = vunpack.c.l.b16 %v4861
        %v4927 = vunpack.c.h.b16 %v4861
        %v4928 = vunpack.c.l.b16 %v4862
        %v4929 = vunpack.c.l.b16 %v4863
        %v4930 = vunpack.c.h.b16 %v4863
        %v4931 = vunpack.c.l.b16 %v4864
        %v4932 = vunpack.c.l.b16 %v4865
        %v4933 = vunpack.c.h.b16 %v4865
        %v4934 = vunpack.c.l.b16 %v4866
        %v4935 = vunpack.c.l.b16 %v4867
        %v4936 = vunpack.c.h.b16 %v4867
        %v4937 = vunpack.c.l.b16 %v4868
        %v4938 = vunpack.c.l.b16 %v4869
        %v4939 = vunpack.c.h.b16 %v4869
        %v4940 = vunpack.c.l.b16 %v4870
        %v4941 = vpack.c.b16 %v4902, %v4899
        %v4942 = vpack.c.b16 %v4903, %v4900
        %v4943 = vpack.c.b16 %v4904, %v4901
        %v4944 = vpack.c.b16 %v4908, %v4905
        %v4945 = vpack.c.b16 %v4909, %v4906
        %v4946 = vpack.c.b16 %v4910, %v4907
        %v4947 = vpack.c.b16 %v4914, %v4911
        %v4948 = vpack.c.b16 %v4915, %v4912
        %v4949 = vpack.c.b16 %v4916, %v4913
        %v4950 = vpack.c.b16 %v4920, %v4917
        %v4951 = vpack.c.b16 %v4921, %v4918
        %v4952 = vpack.c.b16 %v4922, %v4919
        %v4953 = vpack.c.b16 %v4926, %v4923
        %v4954 = vpack.c.b16 %v4927, %v4924
        %v4955 = vpack.c.b16 %v4928, %v4925
        %v4956 = vpack.c.b16 %v4932, %v4929
        %v4957 = vpack.c.b16 %v4933, %v4930
        %v4958 = vpack.c.b16 %v4934, %v4931
        %v4959 = vpack.c.b16 %v4938, %v4935
        %v4960 = vpack.c.b16 %v4939, %v4936
        %v4961 = vpack.c.b16 %v4940, %v4937
        %v4977 = vsel %vm4295, %v4943, 0
        %v4980 = vsel %vm4295, %v4946, 0
        %v4983 = vsel %vm4295, %v4949, 0
        %v4986 = vsel %vm4295, %v4952, 0
        %v4989 = vsel %vm4295, %v4955, 0
        %v4992 = vsel %vm4295, %v4958, 0
        %v4995 = vsel %vm4295, %v4961, 0
        %4997 = vmatprep.subr.bf16.mxu0 0
        %4998 = vmatpush1.bf16.msra.mxu0 %v4144
        %4999 = vmatprep.subr.bf16.mxu0 0
        %5000 = vmatpush1.bf16.msra.mxu0 %v4145
        %5001 = vmatprep.subr.bf16.mxu0 0
        %5002 = vmatpush1.bf16.msra.mxu0 %v4146
        %5003 = vmatprep.subr.bf16.mxu0 0
        %5004 = vmatpush1.bf16.msra.mxu0 %v4147
        %5005 = vmatprep.subr.bf16.mxu0 0
        %5006 = vmatpush1.bf16.msra.mxu0 %v4148
        %5007 = vmatprep.subr.bf16.mxu0 0
        %5008 = vmatpush1.bf16.msra.mxu0 %v4149
        %5009 = vmatprep.subr.bf16.mxu0 0
        %5010 = vmatpush1.bf16.msra.mxu0 %v4150
        %5011 = vmatprep.subr.bf16.mxu0 0
        %5012 = vmatpush1.bf16.msra.mxu0 %v4151
        %5013 = vmatprep.subr.bf16.mxu0 0
        %5014 = vmatpush1.bf16.msra.mxu0 %v4152
        %5015 = vmatprep.subr.bf16.mxu0 0
        %5016 = vmatpush1.bf16.msra.mxu0 %v4153
        %5017 = vmatprep.subr.bf16.mxu0 0
        %5018 = vmatpush1.bf16.msra.mxu0 %v4154
        %5019 = vmatprep.subr.bf16.mxu0 0
        %5020 = vmatpush1.bf16.msra.mxu0 %v4155
        %5021 = vmatprep.subr.bf16.mxu0 0
        %5022 = vmatpush1.bf16.msra.mxu0 %v4156
        %5023 = vmatprep.subr.bf16.mxu0 0
        %5024 = vmatpush1.bf16.msra.mxu0 %v4157
        %5025 = vmatprep.subr.bf16.mxu0 0
        %5026 = vmatpush1.bf16.msra.mxu0 %v4158
        %5027 = vmatprep.subr.bf16.mxu0 0
        %5028 = vmatpush1.bf16.msra.mxu0 %v4159
        %5029 = vmatprep.mubr.bf16.mxu0 %v4942
        %5030 = vmatmul.mubr.bf16.gmra.mrb[0].mxu0 %v4941
        %v5031 = vpop.f32.mrb[0].mxu0
        %v5032 = vadd.f32 0.0, %v5031
        %v5033 = vpop.f32.mrb[0].mxu0
        %v5034 = vpop.f32.mrb[0].mxu0
        %v5035 = vadd.f32 0.0, %v5034
        %v5036 = vpop.f32.mrb[0].mxu0
        %5037 = vmatprep.mubr.bf16.mxu0 %v4945
        %5038 = vmatmul.mubr.bf16.gmra.mrb[0].mxu0 %v4944
        %v5039 = vpop.f32.mrb[0].mxu0
        %v5040 = vadd.f32 0.0, %v5039
        %v5041 = vpop.f32.mrb[0].mxu0
        %v5042 = vpop.f32.mrb[0].mxu0
        %v5043 = vadd.f32 0.0, %v5042
        %v5044 = vpop.f32.mrb[0].mxu0
        %5045 = vmatprep.mubr.bf16.mxu0 %v4948
        %5046 = vmatmul.mubr.bf16.gmra.mrb[0].mxu0 %v4947
        %v5047 = vpop.f32.mrb[0].mxu0
        %v5048 = vadd.f32 0.0, %v5047
        %v5049 = vpop.f32.mrb[0].mxu0
        %v5050 = vpop.f32.mrb[0].mxu0
        %v5051 = vadd.f32 0.0, %v5050
        %v5052 = vpop.f32.mrb[0].mxu0
        %5053 = vmatprep.mubr.bf16.mxu0 %v4951
        %5054 = vmatmul.mubr.bf16.gmra.mrb[0].mxu0 %v4950
        %v5055 = vpop.f32.mrb[0].mxu0
        %v5056 = vadd.f32 0.0, %v5055
        %v5057 = vpop.f32.mrb[0].mxu0
        %v5058 = vpop.f32.mrb[0].mxu0
        %v5059 = vadd.f32 0.0, %v5058
        %v5060 = vpop.f32.mrb[0].mxu0
        %5061 = vmatprep.mubr.bf16.mxu0 %v4954
        %5062 = vmatmul.mubr.bf16.gmra.mrb[0].mxu0 %v4953
        %v5063 = vpop.f32.mrb[0].mxu0
        %v5064 = vadd.f32 0.0, %v5063
        %v5065 = vpop.f32.mrb[0].mxu0
        %v5066 = vpop.f32.mrb[0].mxu0
        %v5067 = vadd.f32 0.0, %v5066
        %v5068 = vpop.f32.mrb[0].mxu0
        %5069 = vmatprep.mubr.bf16.mxu0 %v4957
        %5070 = vmatmul.mubr.bf16.gmra.mrb[0].mxu0 %v4956
        %v5071 = vpop.f32.mrb[0].mxu0
        %v5072 = vadd.f32 0.0, %v5071
        %v5073 = vpop.f32.mrb[0].mxu0
        %v5074 = vpop.f32.mrb[0].mxu0
        %v5075 = vadd.f32 0.0, %v5074
        %v5076 = vpop.f32.mrb[0].mxu0
        %5077 = vmatprep.mubr.bf16.mxu0 %v4960
        %5078 = vmatmul.mubr.bf16.gmra.mrb[0].mxu0 %v4959
        %v5079 = vpop.f32.mrb[0].mxu0
        %v5080 = vadd.f32 0.0, %v5079
        %v5081 = vpop.f32.mrb[0].mxu0
        %v5082 = vpop.f32.mrb[0].mxu0
        %v5083 = vadd.f32 0.0, %v5082
        %v5084 = vpop.f32.mrb[0].mxu0
        %5085 = vdwg.mxu0
        %5086 = vmatprep.subr.bf16.mxu0 0
        %5087 = vmatpush1.bf16.msra.mxu0 %v4160
        %5088 = vmatprep.subr.bf16.mxu0 0
        %5089 = vmatpush1.bf16.msra.mxu0 %v4161
        %5090 = vmatprep.subr.bf16.mxu0 0
        %5091 = vmatpush1.bf16.msra.mxu0 0
        %5092 = vmatprep.subr.bf16.mxu0 0
        %5093 = vmatpush1.bf16.msra.mxu0 0
        %5094 = vmatprep.subr.bf16.mxu0 0
        %5095 = vmatpush1.bf16.msra.mxu0 0
        %5096 = vmatprep.subr.bf16.mxu0 0
        %5097 = vmatpush1.bf16.msra.mxu0 0
        %5098 = vmatprep.subr.bf16.mxu0 0
        %5099 = vmatpush1.bf16.msra.mxu0 0
        %5100 = vmatprep.subr.bf16.mxu0 0
        %5101 = vmatpush1.bf16.msra.mxu0 0
        %5102 = vmatprep.subr.bf16.mxu0 0
        %5103 = vmatpush1.bf16.msra.mxu0 0
        %5104 = vmatprep.subr.bf16.mxu0 0
        %5105 = vmatpush1.bf16.msra.mxu0 0
        %5106 = vmatprep.subr.bf16.mxu0 0
        %5107 = vmatpush1.bf16.msra.mxu0 0
        %5108 = vmatprep.subr.bf16.mxu0 0
        %5109 = vmatpush1.bf16.msra.mxu0 0
        %5110 = vmatprep.subr.bf16.mxu0 0
        %5111 = vmatpush1.bf16.msra.mxu0 0
        %5112 = vmatprep.subr.bf16.mxu0 0
        %5113 = vmatpush1.bf16.msra.mxu0 0
        %5114 = vmatprep.subr.bf16.mxu0 0
        %5115 = vmatpush1.bf16.msra.mxu0 0
        %5116 = vmatprep.subr.bf16.mxu0 0
        %5117 = vmatpush1.bf16.msra.mxu0 0
        %5118 = vmatprep.mubr.bf16.mxu0 0
        %5119 = vmatmul.mubr.bf16.gmra.mrb[0].mxu0 %v4977
        %v5120 = vpop.f32.mrb[0].mxu0
        %v5121 = vadd.f32 %v5032, %v5120
        %v5122 = vpop.f32.mrb[0].mxu0
        %v5123 = vpop.f32.mrb[0].mxu0
        %v5124 = vadd.f32 %v5035, %v5123
        %v5125 = vpop.f32.mrb[0].mxu0
        %5126 = vmatprep.mubr.bf16.mxu0 0
        %5127 = vmatmul.mubr.bf16.gmra.mrb[0].mxu0 %v4980
        %v5128 = vpop.f32.mrb[0].mxu0
        %v5129 = vadd.f32 %v5040, %v5128
        %v5130 = vpop.f32.mrb[0].mxu0
        %v5131 = vpop.f32.mrb[0].mxu0
        %v5132 = vadd.f32 %v5043, %v5131
        %v5133 = vpop.f32.mrb[0].mxu0
        %5134 = vmatprep.mubr.bf16.mxu0 0
        %5135 = vmatmul.mubr.bf16.gmra.mrb[0].mxu0 %v4983
        %v5136 = vpop.f32.mrb[0].mxu0
        %v5137 = vadd.f32 %v5048, %v5136
        %v5138 = vpop.f32.mrb[0].mxu0
        %v5139 = vpop.f32.mrb[0].mxu0
        %v5140 = vadd.f32 %v5051, %v5139
        %v5141 = vpop.f32.mrb[0].mxu0
        %5142 = vmatprep.mubr.bf16.mxu0 0
        %5143 = vmatmul.mubr.bf16.gmra.mrb[0].mxu0 %v4986
        %v5144 = vpop.f32.mrb[0].mxu0
        %v5145 = vadd.f32 %v5056, %v5144
        %v5146 = vpop.f32.mrb[0].mxu0
        %v5147 = vpop.f32.mrb[0].mxu0
        %v5148 = vadd.f32 %v5059, %v5147
        %v5149 = vpop.f32.mrb[0].mxu0
        %5150 = vmatprep.mubr.bf16.mxu0 0
        %5151 = vmatmul.mubr.bf16.gmra.mrb[0].mxu0 %v4989
        %v5152 = vpop.f32.mrb[0].mxu0
        %v5153 = vadd.f32 %v5064, %v5152
        %v5154 = vpop.f32.mrb[0].mxu0
        %v5155 = vpop.f32.mrb[0].mxu0
        %v5156 = vadd.f32 %v5067, %v5155
        %v5157 = vpop.f32.mrb[0].mxu0
        %5158 = vmatprep.mubr.bf16.mxu0 0
        %5159 = vmatmul.mubr.bf16.gmra.mrb[0].mxu0 %v4992
        %v5160 = vpop.f32.mrb[0].mxu0
        %v5161 = vadd.f32 %v5072, %v5160
        %v5162 = vpop.f32.mrb[0].mxu0
        %v5163 = vpop.f32.mrb[0].mxu0
        %v5164 = vadd.f32 %v5075, %v5163
        %v5165 = vpop.f32.mrb[0].mxu0
        %5166 = vmatprep.mubr.bf16.mxu0 0
        %5167 = vmatmul.mubr.bf16.gmra.mrb[0].mxu0 %v4995
        %v5168 = vpop.f32.mrb[0].mxu0
        %v5169 = vadd.f32 %v5080, %v5168
        %v5170 = vpop.f32.mrb[0].mxu0
        %v5171 = vpop.f32.mrb[0].mxu0
        %v5172 = vadd.f32 %v5083, %v5171
        %v5173 = vpop.f32.mrb[0].mxu0
        %5174 = vdwg.mxu0
        %v5175 = vmax.f32 %v4828, %v5121
        %v5176 = vmax.f32 %v4829, %v5124
        %v5177 = vmax.f32 %v4830, %v5129
        %v5178 = vmax.f32 %v4831, %v5132
        %v5179 = vmax.f32 %v4832, %v5137
        %v5180 = vmax.f32 %v4833, %v5140
        %v5181 = vmax.f32 %v4834, %v5145
        %v5182 = vmax.f32 %v4835, %v5148
        %v5183 = vmax.f32 %v4836, %v5153
        %v5184 = vmax.f32 %v4837, %v5156
        %v5185 = vmax.f32 %v4838, %v5161
        %v5186 = vmax.f32 %v4839, %v5164
        %v5187 = vmax.f32 %v4840, %v5169
        %v5188 = vmax.f32 %v4841, %v5172
        %s5189 = scalar_lea.vmem %s4, 504
        %v5190 = vld [vmem:[%s5189] sm:$0xff]
        %v5191 = vld [vmem:[%s5189 + $0x8] sm:$0xf]
        %v5192 = vld [vmem:[%s5189 + $0xc] sm:$0xff]
        %v5193 = vld [vmem:[%s5189 + $0x14] sm:$0xf]
        %v5194 = vld [vmem:[%s5189 + $0x18] sm:$0xff]
        %v5195 = vld [vmem:[%s5189 + $0x20] sm:$0xf]
        %v5196 = vld [vmem:[%s5189 + $0x24] sm:$0xff]
        %v5197 = vld [vmem:[%s5189 + $0x2c] sm:$0xf]
        %v5198 = vld [vmem:[%s5189 + $0x30] sm:$0xff]
        %v5199 = vld [vmem:[%s5189 + $0x38] sm:$0xf]
        %v5200 = vld [vmem:[%s5189 + $0x3c] sm:$0xff]
        %v5201 = vld [vmem:[%s5189 + $0x44] sm:$0xf]
        %v5202 = vld [vmem:[%s5189 + $0x48] sm:$0xff]
        %v5203 = vld [vmem:[%s5189 + $0x50] sm:$0xf]
        %v5204 = vld [vmem:[%s5189 + $0x54] sm:$0xff]
        %v5205 = vld [vmem:[%s5189 + $0x5c] sm:$0xf]
        %v5206 = vld [vmem:[%s5189 + $0x60] sm:$0xff]
        %v5207 = vld [vmem:[%s5189 + $0x68] sm:$0xf]
        %v5208 = vld [vmem:[%s5189 + $0x6c] sm:$0xff]
        %v5209 = vld [vmem:[%s5189 + $0x74] sm:$0xf]
        %v5210 = vld [vmem:[%s5189 + $0x78] sm:$0xff]
        %v5211 = vld [vmem:[%s5189 + $0x80] sm:$0xf]
        %v5212 = vld [vmem:[%s5189 + $0x84] sm:$0xff]
        %v5213 = vld [vmem:[%s5189 + $0x8c] sm:$0xf]
        %v5214 = vld [vmem:[%s5189 + $0x90] sm:$0xff]
        %v5215 = vld [vmem:[%s5189 + $0x98] sm:$0xf]
        %v5216 = vld [vmem:[%s5189 + $0x9c] sm:$0x77]
        %v5217 = vld [vmem:[%s5189 + $0xa4] sm:$0x7]
        %v5246 = vunpack.c.l.b16 %v5190
        %v5247 = vunpack.c.h.b16 %v5190
        %v5248 = vunpack.c.l.b16 %v5191
        %v5249 = vunpack.c.l.b16 %v5192
        %v5250 = vunpack.c.h.b16 %v5192
        %v5251 = vunpack.c.l.b16 %v5193
        %v5252 = vunpack.c.l.b16 %v5194
        %v5253 = vunpack.c.h.b16 %v5194
        %v5254 = vunpack.c.l.b16 %v5195
        %v5255 = vunpack.c.l.b16 %v5196
        %v5256 = vunpack.c.h.b16 %v5196
        %v5257 = vunpack.c.l.b16 %v5197
        %v5258 = vunpack.c.l.b16 %v5198
        %v5259 = vunpack.c.h.b16 %v5198
        %v5260 = vunpack.c.l.b16 %v5199
        %v5261 = vunpack.c.l.b16 %v5200
        %v5262 = vunpack.c.h.b16 %v5200
        %v5263 = vunpack.c.l.b16 %v5201
        %v5264 = vunpack.c.l.b16 %v5202
        %v5265 = vunpack.c.h.b16 %v5202
        %v5266 = vunpack.c.l.b16 %v5203
        %v5267 = vunpack.c.l.b16 %v5204
        %v5268 = vunpack.c.h.b16 %v5204
        %v5269 = vunpack.c.l.b16 %v5205
        %v5270 = vunpack.c.l.b16 %v5206
        %v5271 = vunpack.c.h.b16 %v5206
        %v5272 = vunpack.c.l.b16 %v5207
        %v5273 = vunpack.c.l.b16 %v5208
        %v5274 = vunpack.c.h.b16 %v5208
        %v5275 = vunpack.c.l.b16 %v5209
        %v5276 = vunpack.c.l.b16 %v5210
        %v5277 = vunpack.c.h.b16 %v5210
        %v5278 = vunpack.c.l.b16 %v5211
        %v5279 = vunpack.c.l.b16 %v5212
        %v5280 = vunpack.c.h.b16 %v5212
        %v5281 = vunpack.c.l.b16 %v5213
        %v5282 = vunpack.c.l.b16 %v5214
        %v5283 = vunpack.c.h.b16 %v5214
        %v5284 = vunpack.c.l.b16 %v5215
        %v5285 = vunpack.c.l.b16 %v5216
        %v5286 = vunpack.c.h.b16 %v5216
        %v5287 = vunpack.c.l.b16 %v5217
        %v5288 = vpack.c.b16 %v5249, %v5246
        %v5289 = vpack.c.b16 %v5250, %v5247
        %v5290 = vpack.c.b16 %v5251, %v5248
        %v5291 = vpack.c.b16 %v5255, %v5252
        %v5292 = vpack.c.b16 %v5256, %v5253
        %v5293 = vpack.c.b16 %v5257, %v5254
        %v5294 = vpack.c.b16 %v5261, %v5258
        %v5295 = vpack.c.b16 %v5262, %v5259
        %v5296 = vpack.c.b16 %v5263, %v5260
        %v5297 = vpack.c.b16 %v5267, %v5264
        %v5298 = vpack.c.b16 %v5268, %v5265
        %v5299 = vpack.c.b16 %v5269, %v5266
        %v5300 = vpack.c.b16 %v5273, %v5270
        %v5301 = vpack.c.b16 %v5274, %v5271
        %v5302 = vpack.c.b16 %v5275, %v5272
        %v5303 = vpack.c.b16 %v5279, %v5276
        %v5304 = vpack.c.b16 %v5280, %v5277
        %v5305 = vpack.c.b16 %v5281, %v5278
        %v5306 = vpack.c.b16 %v5285, %v5282
        %v5307 = vpack.c.b16 %v5286, %v5283
        %v5308 = vpack.c.b16 %v5287, %v5284
        %v5324 = vsel %vm4295, %v5290, 0
        %v5327 = vsel %vm4295, %v5293, 0
        %v5330 = vsel %vm4295, %v5296, 0
        %v5333 = vsel %vm4295, %v5299, 0
        %v5336 = vsel %vm4295, %v5302, 0
        %v5339 = vsel %vm4295, %v5305, 0
        %v5342 = vsel %vm4295, %v5308, 0
        %5344 = vmatprep.subr.bf16.mxu0 0
        %5345 = vmatpush1.bf16.msra.mxu0 %v4144
        %5346 = vmatprep.subr.bf16.mxu0 0
        %5347 = vmatpush1.bf16.msra.mxu0 %v4145
        %5348 = vmatprep.subr.bf16.mxu0 0
        %5349 = vmatpush1.bf16.msra.mxu0 %v4146
        %5350 = vmatprep.subr.bf16.mxu0 0
        %5351 = vmatpush1.bf16.msra.mxu0 %v4147
        %5352 = vmatprep.subr.bf16.mxu0 0
        %5353 = vmatpush1.bf16.msra.mxu0 %v4148
        %5354 = vmatprep.subr.bf16.mxu0 0
        %5355 = vmatpush1.bf16.msra.mxu0 %v4149
        %5356 = vmatprep.subr.bf16.mxu0 0
        %5357 = vmatpush1.bf16.msra.mxu0 %v4150
        %5358 = vmatprep.subr.bf16.mxu0 0
        %5359 = vmatpush1.bf16.msra.mxu0 %v4151
        %5360 = vmatprep.subr.bf16.mxu0 0
        %5361 = vmatpush1.bf16.msra.mxu0 %v4152
        %5362 = vmatprep.subr.bf16.mxu0 0
        %5363 = vmatpush1.bf16.msra.mxu0 %v4153
        %5364 = vmatprep.subr.bf16.mxu0 0
        %5365 = vmatpush1.bf16.msra.mxu0 %v4154
        %5366 = vmatprep.subr.bf16.mxu0 0
        %5367 = vmatpush1.bf16.msra.mxu0 %v4155
        %5368 = vmatprep.subr.bf16.mxu0 0
        %5369 = vmatpush1.bf16.msra.mxu0 %v4156
        %5370 = vmatprep.subr.bf16.mxu0 0
        %5371 = vmatpush1.bf16.msra.mxu0 %v4157
        %5372 = vmatprep.subr.bf16.mxu0 0
        %5373 = vmatpush1.bf16.msra.mxu0 %v4158
        %5374 = vmatprep.subr.bf16.mxu0 0
        %5375 = vmatpush1.bf16.msra.mxu0 %v4159
        %5376 = vmatprep.mubr.bf16.mxu0 %v5289
        %5377 = vmatmul.mubr.bf16.gmra.mrb[0].mxu0 %v5288
        %v5378 = vpop.f32.mrb[0].mxu0
        %v5379 = vadd.f32 0.0, %v5378
        %v5380 = vpop.f32.mrb[0].mxu0
        %v5381 = vpop.f32.mrb[0].mxu0
        %v5382 = vadd.f32 0.0, %v5381
        %v5383 = vpop.f32.mrb[0].mxu0
        %5384 = vmatprep.mubr.bf16.mxu0 %v5292
        %5385 = vmatmul.mubr.bf16.gmra.mrb[0].mxu0 %v5291
        %v5386 = vpop.f32.mrb[0].mxu0
        %v5387 = vadd.f32 0.0, %v5386
        %v5388 = vpop.f32.mrb[0].mxu0
        %v5389 = vpop.f32.mrb[0].mxu0
        %v5390 = vadd.f32 0.0, %v5389
        %v5391 = vpop.f32.mrb[0].mxu0
        %5392 = vmatprep.mubr.bf16.mxu0 %v5295
        %5393 = vmatmul.mubr.bf16.gmra.mrb[0].mxu0 %v5294
        %v5394 = vpop.f32.mrb[0].mxu0
        %v5395 = vadd.f32 0.0, %v5394
        %v5396 = vpop.f32.mrb[0].mxu0
        %v5397 = vpop.f32.mrb[0].mxu0
        %v5398 = vadd.f32 0.0, %v5397
        %v5399 = vpop.f32.mrb[0].mxu0
        %5400 = vmatprep.mubr.bf16.mxu0 %v5298
        %5401 = vmatmul.mubr.bf16.gmra.mrb[0].mxu0 %v5297
        %v5402 = vpop.f32.mrb[0].mxu0
        %v5403 = vadd.f32 0.0, %v5402
        %v5404 = vpop.f32.mrb[0].mxu0
        %v5405 = vpop.f32.mrb[0].mxu0
        %v5406 = vadd.f32 0.0, %v5405
        %v5407 = vpop.f32.mrb[0].mxu0
        %5408 = vmatprep.mubr.bf16.mxu0 %v5301
        %5409 = vmatmul.mubr.bf16.gmra.mrb[0].mxu0 %v5300
        %v5410 = vpop.f32.mrb[0].mxu0
        %v5411 = vadd.f32 0.0, %v5410
        %v5412 = vpop.f32.mrb[0].mxu0
        %v5413 = vpop.f32.mrb[0].mxu0
        %v5414 = vadd.f32 0.0, %v5413
        %v5415 = vpop.f32.mrb[0].mxu0
        %5416 = vmatprep.mubr.bf16.mxu0 %v5304
        %5417 = vmatmul.mubr.bf16.gmra.mrb[0].mxu0 %v5303
        %v5418 = vpop.f32.mrb[0].mxu0
        %v5419 = vadd.f32 0.0, %v5418
        %v5420 = vpop.f32.mrb[0].mxu0
        %v5421 = vpop.f32.mrb[0].mxu0
        %v5422 = vadd.f32 0.0, %v5421
        %v5423 = vpop.f32.mrb[0].mxu0
        %5424 = vmatprep.mubr.bf16.mxu0 %v5307
        %5425 = vmatmul.mubr.bf16.gmra.mrb[0].mxu0 %v5306
        %v5426 = vpop.f32.mrb[0].mxu0
        %v5427 = vadd.f32 0.0, %v5426
        %v5428 = vpop.f32.mrb[0].mxu0
        %v5429 = vpop.f32.mrb[0].mxu0
        %v5430 = vadd.f32 0.0, %v5429
        %v5431 = vpop.f32.mrb[0].mxu0
        %5432 = vdwg.mxu0
        %5433 = vmatprep.subr.bf16.mxu0 0
        %5434 = vmatpush1.bf16.msra.mxu0 %v4160
        %5435 = vmatprep.subr.bf16.mxu0 0
        %5436 = vmatpush1.bf16.msra.mxu0 %v4161
        %5437 = vmatprep.subr.bf16.mxu0 0
        %5438 = vmatpush1.bf16.msra.mxu0 0
        %5439 = vmatprep.subr.bf16.mxu0 0
        %5440 = vmatpush1.bf16.msra.mxu0 0
        %5441 = vmatprep.subr.bf16.mxu0 0
        %5442 = vmatpush1.bf16.msra.mxu0 0
        %5443 = vmatprep.subr.bf16.mxu0 0
        %5444 = vmatpush1.bf16.msra.mxu0 0
        %5445 = vmatprep.subr.bf16.mxu0 0
        %5446 = vmatpush1.bf16.msra.mxu0 0
        %5447 = vmatprep.subr.bf16.mxu0 0
        %5448 = vmatpush1.bf16.msra.mxu0 0
        %5449 = vmatprep.subr.bf16.mxu0 0
        %5450 = vmatpush1.bf16.msra.mxu0 0
        %5451 = vmatprep.subr.bf16.mxu0 0
        %5452 = vmatpush1.bf16.msra.mxu0 0
        %5453 = vmatprep.subr.bf16.mxu0 0
        %5454 = vmatpush1.bf16.msra.mxu0 0
        %5455 = vmatprep.subr.bf16.mxu0 0
        %5456 = vmatpush1.bf16.msra.mxu0 0
        %5457 = vmatprep.subr.bf16.mxu0 0
        %5458 = vmatpush1.bf16.msra.mxu0 0
        %5459 = vmatprep.subr.bf16.mxu0 0
        %5460 = vmatpush1.bf16.msra.mxu0 0
        %5461 = vmatprep.subr.bf16.mxu0 0
        %5462 = vmatpush1.bf16.msra.mxu0 0
        %5463 = vmatprep.subr.bf16.mxu0 0
        %5464 = vmatpush1.bf16.msra.mxu0 0
        %5465 = vmatprep.mubr.bf16.mxu0 0
        %5466 = vmatmul.mubr.bf16.gmra.mrb[0].mxu0 %v5324
        %v5467 = vpop.f32.mrb[0].mxu0
        %v5468 = vadd.f32 %v5379, %v5467
        %v5469 = vpop.f32.mrb[0].mxu0
        %v5470 = vpop.f32.mrb[0].mxu0
        %v5471 = vadd.f32 %v5382, %v5470
        %v5472 = vpop.f32.mrb[0].mxu0
        %5473 = vmatprep.mubr.bf16.mxu0 0
        %5474 = vmatmul.mubr.bf16.gmra.mrb[0].mxu0 %v5327
        %v5475 = vpop.f32.mrb[0].mxu0
        %v5476 = vadd.f32 %v5387, %v5475
        %v5477 = vpop.f32.mrb[0].mxu0
        %v5478 = vpop.f32.mrb[0].mxu0
        %v5479 = vadd.f32 %v5390, %v5478
        %v5480 = vpop.f32.mrb[0].mxu0
        %5481 = vmatprep.mubr.bf16.mxu0 0
        %5482 = vmatmul.mubr.bf16.gmra.mrb[0].mxu0 %v5330
        %v5483 = vpop.f32.mrb[0].mxu0
        %v5484 = vadd.f32 %v5395, %v5483
        %v5485 = vpop.f32.mrb[0].mxu0
        %v5486 = vpop.f32.mrb[0].mxu0
        %v5487 = vadd.f32 %v5398, %v5486
        %v5488 = vpop.f32.mrb[0].mxu0
        %5489 = vmatprep.mubr.bf16.mxu0 0
        %5490 = vmatmul.mubr.bf16.gmra.mrb[0].mxu0 %v5333
        %v5491 = vpop.f32.mrb[0].mxu0
        %v5492 = vadd.f32 %v5403, %v5491
        %v5493 = vpop.f32.mrb[0].mxu0
        %v5494 = vpop.f32.mrb[0].mxu0
        %v5495 = vadd.f32 %v5406, %v5494
        %v5496 = vpop.f32.mrb[0].mxu0
        %5497 = vmatprep.mubr.bf16.mxu0 0
        %5498 = vmatmul.mubr.bf16.gmra.mrb[0].mxu0 %v5336
        %v5499 = vpop.f32.mrb[0].mxu0
        %v5500 = vadd.f32 %v5411, %v5499
        %v5501 = vpop.f32.mrb[0].mxu0
        %v5502 = vpop.f32.mrb[0].mxu0
        %v5503 = vadd.f32 %v5414, %v5502
        %v5504 = vpop.f32.mrb[0].mxu0
        %5505 = vmatprep.mubr.bf16.mxu0 0
        %5506 = vmatmul.mubr.bf16.gmra.mrb[0].mxu0 %v5339
        %v5507 = vpop.f32.mrb[0].mxu0
        %v5508 = vadd.f32 %v5419, %v5507
        %v5509 = vpop.f32.mrb[0].mxu0
        %v5510 = vpop.f32.mrb[0].mxu0
        %v5511 = vadd.f32 %v5422, %v5510
        %v5512 = vpop.f32.mrb[0].mxu0
        %5513 = vmatprep.mubr.bf16.mxu0 0
        %5514 = vmatmul.mubr.bf16.gmra.mrb[0].mxu0 %v5342
        %v5515 = vpop.f32.mrb[0].mxu0
        %v5516 = vadd.f32 %v5427, %v5515
        %v5517 = vpop.f32.mrb[0].mxu0
        %v5518 = vpop.f32.mrb[0].mxu0
        %v5519 = vadd.f32 %v5430, %v5518
        %v5520 = vpop.f32.mrb[0].mxu0
        %5521 = vdwg.mxu0
        %v5522 = vmax.f32 %v5175, %v5468
        %v5523 = vmax.f32 %v5176, %v5471
        %v5524 = vmax.f32 %v5177, %v5476
        %v5525 = vmax.f32 %v5178, %v5479
        %v5526 = vmax.f32 %v5179, %v5484
        %v5527 = vmax.f32 %v5180, %v5487
        %v5528 = vmax.f32 %v5181, %v5492
        %v5529 = vmax.f32 %v5182, %v5495
        %v5530 = vmax.f32 %v5183, %v5500
        %v5531 = vmax.f32 %v5184, %v5503
        %v5532 = vmax.f32 %v5185, %v5508
        %v5533 = vmax.f32 %v5186, %v5511
        %v5534 = vmax.f32 %v5187, %v5516
        %v5535 = vmax.f32 %v5188, %v5519
        %v5536 = vpack.c.bf16 %v5523, %v5522
        %v5537 = vpack.c.bf16 %v5525, %v5524
        %v5538 = vpack.c.bf16 %v5527, %v5526
        %v5539 = vpack.c.bf16 %v5529, %v5528
        %v5540 = vpack.c.bf16 %v5531, %v5530
        %v5541 = vpack.c.bf16 %v5533, %v5532
        %v5542 = vpack.c.bf16 %v5535, %v5534
        %v5543 = vld [vmem:[%s5] sm:$0xf]
        %v5544 = vld [vmem:[%s5 + $0x4] sm:$0xf]
        %v5545 = vld [vmem:[%s5 + $0x8] sm:$0xf]
        %v5546 = vld [vmem:[%s5 + $0xc] sm:$0xf]
        %s5547 = scalar_lea.vmem %s5, 16
        %v5548 = vld [vmem:[%s5547] sm:$0xf]
        %v5549 = vld [vmem:[%s5547 + $0x4] sm:$0xf]
        %v5550 = vld [vmem:[%s5547 + $0x8] sm:$0xf]
        %v5551 = vld [vmem:[%s5547 + $0xc] sm:$0xf]
        %v5553 = vshrl.u32 %v5536, 16
        %v5555 = vshll.u32 %v5536, 16
        %v5557 = vrot.slane %v5555, 1
        %v5558 = vor.u32 %v5553, %v5557
        %v5560 = vshll.u32 %v5537, 16
        %v5562 = vrot.slane %v5560, 1
        %v5563 = vsel %vm707, %v5558, %v5562
        %v5564 = vshrl.u32 %v5537, 16
        %v5566 = vor.u32 %v5564, %v5562
        %v5568 = vshll.u32 %v5538, 16
        %v5570 = vrot.slane %v5568, 1
        %v5571 = vsel %vm707, %v5566, %v5570
        %v5572 = vshrl.u32 %v5538, 16
        %v5574 = vor.u32 %v5572, %v5570
        %v5576 = vshll.u32 %v5539, 16
        %v5578 = vrot.slane %v5576, 1
        %v5579 = vsel %vm707, %v5574, %v5578
        %v5580 = vshrl.u32 %v5539, 16
        %v5582 = vor.u32 %v5580, %v5578
        %v5584 = vshll.u32 %v5540, 16
        %v5586 = vrot.slane %v5584, 1
        %v5587 = vsel %vm707, %v5582, %v5586
        %v5588 = vshrl.u32 %v5540, 16
        %v5590 = vor.u32 %v5588, %v5586
        %v5592 = vshll.u32 %v5541, 16
        %v5594 = vrot.slane %v5592, 1
        %v5595 = vsel %vm707, %v5590, %v5594
        %v5600 = vunpack.c.l.b16 %v5548
        %v5601 = vunpack.c.l.b16 %v5549
        %v5602 = vunpack.c.l.b16 %v5550
        %v5603 = vunpack.c.l.b16 %v5551
        %v5604 = vpack.c.b16 %v5601, %v5600
        %v5605 = vpack.c.b16 %v5603, %v5602
        %v5609 = vsel %vm4295, %v5563, 0
        %v5612 = vsel %vm4295, %v5571, 0
        %v5615 = vsel %vm4295, %v5579, 0
        %v5618 = vsel %vm4295, %v5587, 0
        %v5621 = vsel %vm4295, %v5595, 0
        %5623 = vmatprep.subr.bf16.mxu0 0
        %5624 = vmatpush1.bf16.msra.mxu0 %v5604
        %5625 = vmatprep.subr.bf16.mxu0 0
        %5626 = vmatpush1.bf16.msra.mxu0 %v5605
        %5627 = vmatprep.subr.bf16.mxu0 0
        %5628 = vmatpush1.bf16.msra.mxu0 0
        %5629 = vmatprep.subr.bf16.mxu0 0
        %5630 = vmatpush1.bf16.msra.mxu0 0
        %5631 = vmatprep.subr.bf16.mxu0 0
        %5632 = vmatpush1.bf16.msra.mxu0 0
        %5633 = vmatprep.subr.bf16.mxu0 0
        %5634 = vmatpush1.bf16.msra.mxu0 0
        %5635 = vmatprep.subr.bf16.mxu0 0
        %5636 = vmatpush1.bf16.msra.mxu0 0
        %5637 = vmatprep.subr.bf16.mxu0 0
        %5638 = vmatpush1.bf16.msra.mxu0 0
        %5639 = vmatprep.subr.bf16.mxu0 0
        %5640 = vmatpush1.bf16.msra.mxu0 0
        %5641 = vmatprep.subr.bf16.mxu0 0
        %5642 = vmatpush1.bf16.msra.mxu0 0
        %5643 = vmatprep.subr.bf16.mxu0 0
        %5644 = vmatpush1.bf16.msra.mxu0 0
        %5645 = vmatprep.subr.bf16.mxu0 0
        %5646 = vmatpush1.bf16.msra.mxu0 0
        %5647 = vmatprep.subr.bf16.mxu0 0
        %5648 = vmatpush1.bf16.msra.mxu0 0
        %5649 = vmatprep.subr.bf16.mxu0 0
        %5650 = vmatpush1.bf16.msra.mxu0 0
        %5651 = vmatprep.subr.bf16.mxu0 0
        %5652 = vmatpush1.bf16.msra.mxu0 0
        %5653 = vmatprep.subr.bf16.mxu0 0
        %5654 = vmatpush1.bf16.msra.mxu0 0
        %5655 = vmatprep.mubr.bf16.mxu0 0
        %5656 = vmatmul.mubr.bf16.gmra.mrb[0].mxu0 %v5609
        %v5657 = vpop.f32.mrb[0].mxu0
        %v5658 = vadd.f32 0.0, %v5657
        %v5659 = vpop.f32.mrb[0].mxu0
        %v5660 = vpop.f32.mrb[0].mxu0
        %v5661 = vadd.f32 0.0, %v5660
        %v5662 = vpop.f32.mrb[0].mxu0
        %5663 = vmatprep.mubr.bf16.mxu0 0
        %5664 = vmatmul.mubr.bf16.gmra.mrb[0].mxu0 %v5612
        %v5665 = vpop.f32.mrb[0].mxu0
        %v5666 = vadd.f32 0.0, %v5665
        %v5667 = vpop.f32.mrb[0].mxu0
        %v5668 = vpop.f32.mrb[0].mxu0
        %v5669 = vadd.f32 0.0, %v5668
        %v5670 = vpop.f32.mrb[0].mxu0
        %5671 = vmatprep.mubr.bf16.mxu0 0
        %5672 = vmatmul.mubr.bf16.gmra.mrb[0].mxu0 %v5615
        %v5673 = vpop.f32.mrb[0].mxu0
        %v5674 = vadd.f32 0.0, %v5673
        %v5675 = vpop.f32.mrb[0].mxu0
        %v5676 = vpop.f32.mrb[0].mxu0
        %v5677 = vadd.f32 0.0, %v5676
        %v5678 = vpop.f32.mrb[0].mxu0
        %5679 = vmatprep.mubr.bf16.mxu0 0
        %5680 = vmatmul.mubr.bf16.gmra.mrb[0].mxu0 %v5618
        %v5681 = vpop.f32.mrb[0].mxu0
        %v5682 = vadd.f32 0.0, %v5681
        %v5683 = vpop.f32.mrb[0].mxu0
        %v5684 = vpop.f32.mrb[0].mxu0
        %v5685 = vadd.f32 0.0, %v5684
        %v5686 = vpop.f32.mrb[0].mxu0
        %5687 = vmatprep.mubr.bf16.mxu0 0
        %5688 = vmatmul.mubr.bf16.gmra.mrb[0].mxu0 %v5621
        %v5689 = vpop.f32.mrb[0].mxu0
        %v5690 = vadd.f32 0.0, %v5689
        %v5691 = vpop.f32.mrb[0].mxu0
        %v5692 = vpop.f32.mrb[0].mxu0
        %v5693 = vadd.f32 0.0, %v5692
        %v5694 = vpop.f32.mrb[0].mxu0
        %5695 = vdwg.mxu0
        %v5700 = vunpack.c.l.b16 %v5543
        %v5701 = vunpack.c.l.b16 %v5544
        %v5702 = vunpack.c.l.b16 %v5545
        %v5703 = vunpack.c.l.b16 %v5546
        %v5704 = vpack.c.b16 %v5701, %v5700
        %v5705 = vpack.c.b16 %v5703, %v5702
        %v5708 = vsel %vm4295, %v5536, 0
        %v5710 = vsel %vm4295, %v5537, 0
        %v5712 = vsel %vm4295, %v5538, 0
        %v5714 = vsel %vm4295, %v5539, 0
        %v5716 = vsel %vm4295, %v5540, 0
        %5718 = vmatprep.subr.bf16.mxu0 0
        %5719 = vmatpush1.bf16.msra.mxu0 %v5704
        %5720 = vmatprep.subr.bf16.mxu0 0
        %5721 = vmatpush1.bf16.msra.mxu0 %v5705
        %5722 = vmatprep.subr.bf16.mxu0 0
        %5723 = vmatpush1.bf16.msra.mxu0 0
        %5724 = vmatprep.subr.bf16.mxu0 0
        %5725 = vmatpush1.bf16.msra.mxu0 0
        %5726 = vmatprep.subr.bf16.mxu0 0
        %5727 = vmatpush1.bf16.msra.mxu0 0
        %5728 = vmatprep.subr.bf16.mxu0 0
        %5729 = vmatpush1.bf16.msra.mxu0 0
        %5730 = vmatprep.subr.bf16.mxu0 0
        %5731 = vmatpush1.bf16.msra.mxu0 0
        %5732 = vmatprep.subr.bf16.mxu0 0
        %5733 = vmatpush1.bf16.msra.mxu0 0
        %5734 = vmatprep.subr.bf16.mxu0 0
        %5735 = vmatpush1.bf16.msra.mxu0 0
        %5736 = vmatprep.subr.bf16.mxu0 0
        %5737 = vmatpush1.bf16.msra.mxu0 0
        %5738 = vmatprep.subr.bf16.mxu0 0
        %5739 = vmatpush1.bf16.msra.mxu0 0
        %5740 = vmatprep.subr.bf16.mxu0 0
        %5741 = vmatpush1.bf16.msra.mxu0 0
        %5742 = vmatprep.subr.bf16.mxu0 0
        %5743 = vmatpush1.bf16.msra.mxu0 0
        %5744 = vmatprep.subr.bf16.mxu0 0
        %5745 = vmatpush1.bf16.msra.mxu0 0
        %5746 = vmatprep.subr.bf16.mxu0 0
        %5747 = vmatpush1.bf16.msra.mxu0 0
        %5748 = vmatprep.subr.bf16.mxu0 0
        %5749 = vmatpush1.bf16.msra.mxu0 0
        %5750 = vmatprep.mubr.bf16.mxu0 0
        %5751 = vmatmul.mubr.bf16.gmra.mrb[0].mxu0 %v5708
        %v5752 = vpop.f32.mrb[0].mxu0
        %v5753 = vadd.f32 %v5658, %v5752
        %v5754 = vpop.f32.mrb[0].mxu0
        %v5755 = vpop.f32.mrb[0].mxu0
        %v5756 = vadd.f32 %v5661, %v5755
        %v5757 = vpop.f32.mrb[0].mxu0
        %5758 = vmatprep.mubr.bf16.mxu0 0
        %5759 = vmatmul.mubr.bf16.gmra.mrb[0].mxu0 %v5710
        %v5760 = vpop.f32.mrb[0].mxu0
        %v5761 = vadd.f32 %v5666, %v5760
        %v5762 = vpop.f32.mrb[0].mxu0
        %v5763 = vpop.f32.mrb[0].mxu0
        %v5764 = vadd.f32 %v5669, %v5763
        %v5765 = vpop.f32.mrb[0].mxu0
        %5766 = vmatprep.mubr.bf16.mxu0 0
        %5767 = vmatmul.mubr.bf16.gmra.mrb[0].mxu0 %v5712
        %v5768 = vpop.f32.mrb[0].mxu0
        %v5769 = vadd.f32 %v5674, %v5768
        %v5770 = vpop.f32.mrb[0].mxu0
        %v5771 = vpop.f32.mrb[0].mxu0
        %v5772 = vadd.f32 %v5677, %v5771
        %v5773 = vpop.f32.mrb[0].mxu0
        %5774 = vmatprep.mubr.bf16.mxu0 0
        %5775 = vmatmul.mubr.bf16.gmra.mrb[0].mxu0 %v5714
        %v5776 = vpop.f32.mrb[0].mxu0
        %v5777 = vadd.f32 %v5682, %v5776
        %v5778 = vpop.f32.mrb[0].mxu0
        %v5779 = vpop.f32.mrb[0].mxu0
        %v5780 = vadd.f32 %v5685, %v5779
        %v5781 = vpop.f32.mrb[0].mxu0
        %5782 = vmatprep.mubr.bf16.mxu0 0
        %5783 = vmatmul.mubr.bf16.gmra.mrb[0].mxu0 %v5716
        %v5784 = vpop.f32.mrb[0].mxu0
        %v5785 = vadd.f32 %v5690, %v5784
        %v5786 = vpop.f32.mrb[0].mxu0
        %v5787 = vpop.f32.mrb[0].mxu0
        %v5788 = vadd.f32 %v5693, %v5787
        %v5789 = vpop.f32.mrb[0].mxu0
        %5790 = vdwg.mxu0
        %s5791 = scalar_lea.vmem %s5, 32
        %v5792 = vld [vmem:[%s5791] sm:$0xf]
        %v5793 = vld [vmem:[%s5791 + $0x4] sm:$0xf]
        %v5794 = vld [vmem:[%s5791 + $0x8] sm:$0xf]
        %v5795 = vld [vmem:[%s5791 + $0xc] sm:$0xf]
        %v5802 = vrot.slane %v5536, 1
        %v5803 = vrot.slane %v5537, 1
        %v5804 = vsel %vm1314, %v5802, %v5803
        %v5805 = vrot.slane %v5538, 1
        %v5806 = vsel %vm1314, %v5803, %v5805
        %v5807 = vrot.slane %v5539, 1
        %v5808 = vsel %vm1314, %v5805, %v5807
        %v5809 = vrot.slane %v5540, 1
        %v5810 = vsel %vm1314, %v5807, %v5809
        %v5811 = vrot.slane %v5541, 1
        %v5812 = vsel %vm1314, %v5809, %v5811
        %v5817 = vunpack.c.l.b16 %v5792
        %v5818 = vunpack.c.l.b16 %v5793
        %v5819 = vunpack.c.l.b16 %v5794
        %v5820 = vunpack.c.l.b16 %v5795
        %v5821 = vpack.c.b16 %v5818, %v5817
        %v5822 = vpack.c.b16 %v5820, %v5819
        %v5826 = vsel %vm4295, %v5804, 0
        %v5829 = vsel %vm4295, %v5806, 0
        %v5832 = vsel %vm4295, %v5808, 0
        %v5835 = vsel %vm4295, %v5810, 0
        %v5838 = vsel %vm4295, %v5812, 0
        %5840 = vmatprep.subr.bf16.mxu0 0
        %5841 = vmatpush1.bf16.msra.mxu0 %v5821
        %5842 = vmatprep.subr.bf16.mxu0 0
        %5843 = vmatpush1.bf16.msra.mxu0 %v5822
        %5844 = vmatprep.subr.bf16.mxu0 0
        %5845 = vmatpush1.bf16.msra.mxu0 0
        %5846 = vmatprep.subr.bf16.mxu0 0
        %5847 = vmatpush1.bf16.msra.mxu0 0
        %5848 = vmatprep.subr.bf16.mxu0 0
        %5849 = vmatpush1.bf16.msra.mxu0 0
        %5850 = vmatprep.subr.bf16.mxu0 0
        %5851 = vmatpush1.bf16.msra.mxu0 0
        %5852 = vmatprep.subr.bf16.mxu0 0
        %5853 = vmatpush1.bf16.msra.mxu0 0
        %5854 = vmatprep.subr.bf16.mxu0 0
        %5855 = vmatpush1.bf16.msra.mxu0 0
        %5856 = vmatprep.subr.bf16.mxu0 0
        %5857 = vmatpush1.bf16.msra.mxu0 0
        %5858 = vmatprep.subr.bf16.mxu0 0
        %5859 = vmatpush1.bf16.msra.mxu0 0
        %5860 = vmatprep.subr.bf16.mxu0 0
        %5861 = vmatpush1.bf16.msra.mxu0 0
        %5862 = vmatprep.subr.bf16.mxu0 0
        %5863 = vmatpush1.bf16.msra.mxu0 0
        %5864 = vmatprep.subr.bf16.mxu0 0
        %5865 = vmatpush1.bf16.msra.mxu0 0
        %5866 = vmatprep.subr.bf16.mxu0 0
        %5867 = vmatpush1.bf16.msra.mxu0 0
        %5868 = vmatprep.subr.bf16.mxu0 0
        %5869 = vmatpush1.bf16.msra.mxu0 0
        %5870 = vmatprep.subr.bf16.mxu0 0
        %5871 = vmatpush1.bf16.msra.mxu0 0
        %5872 = vmatprep.mubr.bf16.mxu0 0
        %5873 = vmatmul.mubr.bf16.gmra.mrb[0].mxu0 %v5826
        %v5874 = vpop.f32.mrb[0].mxu0
        %v5875 = vadd.f32 0.0, %v5874
        %v5876 = vpop.f32.mrb[0].mxu0
        %v5877 = vpop.f32.mrb[0].mxu0
        %v5878 = vadd.f32 0.0, %v5877
        %v5879 = vpop.f32.mrb[0].mxu0
        %5880 = vmatprep.mubr.bf16.mxu0 0
        %5881 = vmatmul.mubr.bf16.gmra.mrb[0].mxu0 %v5829
        %v5882 = vpop.f32.mrb[0].mxu0
        %v5883 = vadd.f32 0.0, %v5882
        %v5884 = vpop.f32.mrb[0].mxu0
        %v5885 = vpop.f32.mrb[0].mxu0
        %v5886 = vadd.f32 0.0, %v5885
        %v5887 = vpop.f32.mrb[0].mxu0
        %5888 = vmatprep.mubr.bf16.mxu0 0
        %5889 = vmatmul.mubr.bf16.gmra.mrb[0].mxu0 %v5832
        %v5890 = vpop.f32.mrb[0].mxu0
        %v5891 = vadd.f32 0.0, %v5890
        %v5892 = vpop.f32.mrb[0].mxu0
        %v5893 = vpop.f32.mrb[0].mxu0
        %v5894 = vadd.f32 0.0, %v5893
        %v5895 = vpop.f32.mrb[0].mxu0
        %5896 = vmatprep.mubr.bf16.mxu0 0
        %5897 = vmatmul.mubr.bf16.gmra.mrb[0].mxu0 %v5835
        %v5898 = vpop.f32.mrb[0].mxu0
        %v5899 = vadd.f32 0.0, %v5898
        %v5900 = vpop.f32.mrb[0].mxu0
        %v5901 = vpop.f32.mrb[0].mxu0
        %v5902 = vadd.f32 0.0, %v5901
        %v5903 = vpop.f32.mrb[0].mxu0
        %5904 = vmatprep.mubr.bf16.mxu0 0
        %5905 = vmatmul.mubr.bf16.gmra.mrb[0].mxu0 %v5838
        %v5906 = vpop.f32.mrb[0].mxu0
        %v5907 = vadd.f32 0.0, %v5906
        %v5908 = vpop.f32.mrb[0].mxu0
        %v5909 = vpop.f32.mrb[0].mxu0
        %v5910 = vadd.f32 0.0, %v5909
        %v5911 = vpop.f32.mrb[0].mxu0
        %5912 = vdwg.mxu0
        %v5913 = vadd.f32 %v5753, %v5875
        %v5914 = vadd.f32 %v5756, %v5878
        %v5915 = vadd.f32 %v5761, %v5883
        %v5916 = vadd.f32 %v5764, %v5886
        %v5917 = vadd.f32 %v5769, %v5891
        %v5918 = vadd.f32 %v5772, %v5894
        %v5919 = vadd.f32 %v5777, %v5899
        %v5920 = vadd.f32 %v5780, %v5902
        %v5921 = vadd.f32 %v5785, %v5907
        %v5922 = vadd.f32 %v5788, %v5910
        %s5923 = scalar_lea.vmem %s5, 48
        %v5924 = vld [vmem:[%s5923] sm:$0xf]
        %v5925 = vld [vmem:[%s5923 + $0x4] sm:$0xf]
        %v5926 = vld [vmem:[%s5923 + $0x8] sm:$0xf]
        %v5927 = vld [vmem:[%s5923 + $0xc] sm:$0xf]
        %vm5928 = vcmask 1042432
        %v5929 = vrot.slane %v5536, 5
        %v5930 = vrot.slane %v5537, 5
        %v5931 = vsel %vm5928, %v5929, %v5930
        %v5932 = vrot.slane %v5538, 5
        %v5933 = vsel %vm5928, %v5930, %v5932
        %v5934 = vrot.slane %v5539, 5
        %v5935 = vsel %vm5928, %v5932, %v5934
        %v5936 = vrot.slane %v5540, 5
        %v5937 = vsel %vm5928, %v5934, %v5936
        %v5938 = vrot.slane %v5541, 5
        %v5939 = vsel %vm5928, %v5936, %v5938
        %v5944 = vunpack.c.l.b16 %v5924
        %v5945 = vunpack.c.l.b16 %v5925
        %v5946 = vunpack.c.l.b16 %v5926
        %v5947 = vunpack.c.l.b16 %v5927
        %v5948 = vpack.c.b16 %v5945, %v5944
        %v5949 = vpack.c.b16 %v5947, %v5946
        %v5953 = vsel %vm4295, %v5931, 0
        %v5956 = vsel %vm4295, %v5933, 0
        %v5959 = vsel %vm4295, %v5935, 0
        %v5962 = vsel %vm4295, %v5937, 0
        %v5965 = vsel %vm4295, %v5939, 0
        %5967 = vmatprep.subr.bf16.mxu0 0
        %5968 = vmatpush1.bf16.msra.mxu0 %v5948
        %5969 = vmatprep.subr.bf16.mxu0 0
        %5970 = vmatpush1.bf16.msra.mxu0 %v5949
        %5971 = vmatprep.subr.bf16.mxu0 0
        %5972 = vmatpush1.bf16.msra.mxu0 0
        %5973 = vmatprep.subr.bf16.mxu0 0
        %5974 = vmatpush1.bf16.msra.mxu0 0
        %5975 = vmatprep.subr.bf16.mxu0 0
        %5976 = vmatpush1.bf16.msra.mxu0 0
        %5977 = vmatprep.subr.bf16.mxu0 0
        %5978 = vmatpush1.bf16.msra.mxu0 0
        %5979 = vmatprep.subr.bf16.mxu0 0
        %5980 = vmatpush1.bf16.msra.mxu0 0
        %5981 = vmatprep.subr.bf16.mxu0 0
        %5982 = vmatpush1.bf16.msra.mxu0 0
        %5983 = vmatprep.subr.bf16.mxu0 0
        %5984 = vmatpush1.bf16.msra.mxu0 0
        %5985 = vmatprep.subr.bf16.mxu0 0
        %5986 = vmatpush1.bf16.msra.mxu0 0
        %5987 = vmatprep.subr.bf16.mxu0 0
        %5988 = vmatpush1.bf16.msra.mxu0 0
        %5989 = vmatprep.subr.bf16.mxu0 0
        %5990 = vmatpush1.bf16.msra.mxu0 0
        %5991 = vmatprep.subr.bf16.mxu0 0
        %5992 = vmatpush1.bf16.msra.mxu0 0
        %5993 = vmatprep.subr.bf16.mxu0 0
        %5994 = vmatpush1.bf16.msra.mxu0 0
        %5995 = vmatprep.subr.bf16.mxu0 0
        %5996 = vmatpush1.bf16.msra.mxu0 0
        %5997 = vmatprep.subr.bf16.mxu0 0
        %5998 = vmatpush1.bf16.msra.mxu0 0
        %5999 = vmatprep.mubr.bf16.mxu0 0
        %6000 = vmatmul.mubr.bf16.gmra.mrb[0].mxu0 %v5953
        %v6001 = vpop.f32.mrb[0].mxu0
        %v6002 = vadd.f32 0.0, %v6001
        %v6003 = vpop.f32.mrb[0].mxu0
        %v6004 = vpop.f32.mrb[0].mxu0
        %v6005 = vadd.f32 0.0, %v6004
        %v6006 = vpop.f32.mrb[0].mxu0
        %6007 = vmatprep.mubr.bf16.mxu0 0
        %6008 = vmatmul.mubr.bf16.gmra.mrb[0].mxu0 %v5956
        %v6009 = vpop.f32.mrb[0].mxu0
        %v6010 = vadd.f32 0.0, %v6009
        %v6011 = vpop.f32.mrb[0].mxu0
        %v6012 = vpop.f32.mrb[0].mxu0
        %v6013 = vadd.f32 0.0, %v6012
        %v6014 = vpop.f32.mrb[0].mxu0
        %6015 = vmatprep.mubr.bf16.mxu0 0
        %6016 = vmatmul.mubr.bf16.gmra.mrb[0].mxu0 %v5959
        %v6017 = vpop.f32.mrb[0].mxu0
        %v6018 = vadd.f32 0.0, %v6017
        %v6019 = vpop.f32.mrb[0].mxu0
        %v6020 = vpop.f32.mrb[0].mxu0
        %v6021 = vadd.f32 0.0, %v6020
        %v6022 = vpop.f32.mrb[0].mxu0
        %6023 = vmatprep.mubr.bf16.mxu0 0
        %6024 = vmatmul.mubr.bf16.gmra.mrb[0].mxu0 %v5962
        %v6025 = vpop.f32.mrb[0].mxu0
        %v6026 = vadd.f32 0.0, %v6025
        %v6027 = vpop.f32.mrb[0].mxu0
        %v6028 = vpop.f32.mrb[0].mxu0
        %v6029 = vadd.f32 0.0, %v6028
        %v6030 = vpop.f32.mrb[0].mxu0
        %6031 = vmatprep.mubr.bf16.mxu0 0
        %6032 = vmatmul.mubr.bf16.gmra.mrb[0].mxu0 %v5965
        %v6033 = vpop.f32.mrb[0].mxu0
        %v6034 = vadd.f32 0.0, %v6033
        %v6035 = vpop.f32.mrb[0].mxu0
        %v6036 = vpop.f32.mrb[0].mxu0
        %v6037 = vadd.f32 0.0, %v6036
        %v6038 = vpop.f32.mrb[0].mxu0
        %6039 = vdwg.mxu0
        %v6040 = vadd.f32 %v5913, %v6002
        %v6041 = vadd.f32 %v5914, %v6005
        %v6042 = vadd.f32 %v5915, %v6010
        %v6043 = vadd.f32 %v5916, %v6013
        %v6044 = vadd.f32 %v5917, %v6018
        %v6045 = vadd.f32 %v5918, %v6021
        %v6046 = vadd.f32 %v5919, %v6026
        %v6047 = vadd.f32 %v5920, %v6029
        %v6048 = vadd.f32 %v5921, %v6034
        %v6049 = vadd.f32 %v5922, %v6037
        %s6050 = scalar_lea.vmem %s5, 64
        %v6051 = vld [vmem:[%s6050] sm:$0xf]
        %v6052 = vld [vmem:[%s6050 + $0x4] sm:$0xf]
        %v6053 = vld [vmem:[%s6050 + $0x8] sm:$0xf]
        %v6054 = vld [vmem:[%s6050 + $0xc] sm:$0xf]
        %vm6055 = vsmask.f32 2304
        %v6056 = vrot.slane %v5553, 5
        %v6057 = vrot.slane %v5555, 6
        %v6058 = vor.u32 %v6056, %v6057
        %v6059 = vrot.slane %v5564, 5
        %v6060 = vrot.slane %v5560, 6
        %v6061 = vor.u32 %v6059, %v6060
        %v6062 = vsel %vm6055, %v6058, %v6061
        %v6063 = vrot.slane %v5572, 5
        %v6064 = vrot.slane %v5568, 6
        %v6065 = vor.u32 %v6063, %v6064
        %v6066 = vsel %vm6055, %v6061, %v6065
        %v6067 = vrot.slane %v5580, 5
        %v6068 = vrot.slane %v5576, 6
        %v6069 = vor.u32 %v6067, %v6068
        %v6070 = vsel %vm6055, %v6065, %v6069
        %v6071 = vrot.slane %v5588, 5
        %v6072 = vrot.slane %v5584, 6
        %v6073 = vor.u32 %v6071, %v6072
        %v6074 = vsel %vm6055, %v6069, %v6073
        %v6075 = vshrl.u32 %v5541, 16
        %v6077 = vrot.slane %v6075, 5
        %v6078 = vrot.slane %v5592, 6
        %v6079 = vor.u32 %v6077, %v6078
        %v6080 = vsel %vm6055, %v6073, %v6079
        %v6085 = vunpack.c.l.b16 %v6051
        %v6086 = vunpack.c.l.b16 %v6052
        %v6087 = vunpack.c.l.b16 %v6053
        %v6088 = vunpack.c.l.b16 %v6054
        %v6089 = vpack.c.b16 %v6086, %v6085
        %v6090 = vpack.c.b16 %v6088, %v6087
        %v6094 = vsel %vm4295, %v6062, 0
        %v6097 = vsel %vm4295, %v6066, 0
        %v6100 = vsel %vm4295, %v6070, 0
        %v6103 = vsel %vm4295, %v6074, 0
        %v6106 = vsel %vm4295, %v6080, 0
        %6108 = vmatprep.subr.bf16.mxu0 0
        %6109 = vmatpush1.bf16.msra.mxu0 %v6089
        %6110 = vmatprep.subr.bf16.mxu0 0
        %6111 = vmatpush1.bf16.msra.mxu0 %v6090
        %6112 = vmatprep.subr.bf16.mxu0 0
        %6113 = vmatpush1.bf16.msra.mxu0 0
        %6114 = vmatprep.subr.bf16.mxu0 0
        %6115 = vmatpush1.bf16.msra.mxu0 0
        %6116 = vmatprep.subr.bf16.mxu0 0
        %6117 = vmatpush1.bf16.msra.mxu0 0
        %6118 = vmatprep.subr.bf16.mxu0 0
        %6119 = vmatpush1.bf16.msra.mxu0 0
        %6120 = vmatprep.subr.bf16.mxu0 0
        %6121 = vmatpush1.bf16.msra.mxu0 0
        %6122 = vmatprep.subr.bf16.mxu0 0
        %6123 = vmatpush1.bf16.msra.mxu0 0
        %6124 = vmatprep.subr.bf16.mxu0 0
        %6125 = vmatpush1.bf16.msra.mxu0 0
        %6126 = vmatprep.subr.bf16.mxu0 0
        %6127 = vmatpush1.bf16.msra.mxu0 0
        %6128 = vmatprep.subr.bf16.mxu0 0
        %6129 = vmatpush1.bf16.msra.mxu0 0
        %6130 = vmatprep.subr.bf16.mxu0 0
        %6131 = vmatpush1.bf16.msra.mxu0 0
        %6132 = vmatprep.subr.bf16.mxu0 0
        %6133 = vmatpush1.bf16.msra.mxu0 0
        %6134 = vmatprep.subr.bf16.mxu0 0
        %6135 = vmatpush1.bf16.msra.mxu0 0
        %6136 = vmatprep.subr.bf16.mxu0 0
        %6137 = vmatpush1.bf16.msra.mxu0 0
        %6138 = vmatprep.subr.bf16.mxu0 0
        %6139 = vmatpush1.bf16.msra.mxu0 0
        %6140 = vmatprep.mubr.bf16.mxu0 0
        %6141 = vmatmul.mubr.bf16.gmra.mrb[0].mxu0 %v6094
        %v6142 = vpop.f32.mrb[0].mxu0
        %v6143 = vadd.f32 0.0, %v6142
        %v6144 = vpop.f32.mrb[0].mxu0
        %v6145 = vpop.f32.mrb[0].mxu0
        %v6146 = vadd.f32 0.0, %v6145
        %v6147 = vpop.f32.mrb[0].mxu0
        %6148 = vmatprep.mubr.bf16.mxu0 0
        %6149 = vmatmul.mubr.bf16.gmra.mrb[0].mxu0 %v6097
        %v6150 = vpop.f32.mrb[0].mxu0
        %v6151 = vadd.f32 0.0, %v6150
        %v6152 = vpop.f32.mrb[0].mxu0
        %v6153 = vpop.f32.mrb[0].mxu0
        %v6154 = vadd.f32 0.0, %v6153
        %v6155 = vpop.f32.mrb[0].mxu0
        %6156 = vmatprep.mubr.bf16.mxu0 0
        %6157 = vmatmul.mubr.bf16.gmra.mrb[0].mxu0 %v6100
        %v6158 = vpop.f32.mrb[0].mxu0
        %v6159 = vadd.f32 0.0, %v6158
        %v6160 = vpop.f32.mrb[0].mxu0
        %v6161 = vpop.f32.mrb[0].mxu0
        %v6162 = vadd.f32 0.0, %v6161
        %v6163 = vpop.f32.mrb[0].mxu0
        %6164 = vmatprep.mubr.bf16.mxu0 0
        %6165 = vmatmul.mubr.bf16.gmra.mrb[0].mxu0 %v6103
        %v6166 = vpop.f32.mrb[0].mxu0
        %v6167 = vadd.f32 0.0, %v6166
        %v6168 = vpop.f32.mrb[0].mxu0
        %v6169 = vpop.f32.mrb[0].mxu0
        %v6170 = vadd.f32 0.0, %v6169
        %v6171 = vpop.f32.mrb[0].mxu0
        %6172 = vmatprep.mubr.bf16.mxu0 0
        %6173 = vmatmul.mubr.bf16.gmra.mrb[0].mxu0 %v6106
        %v6174 = vpop.f32.mrb[0].mxu0
        %v6175 = vadd.f32 0.0, %v6174
        %v6176 = vpop.f32.mrb[0].mxu0
        %v6177 = vpop.f32.mrb[0].mxu0
        %v6178 = vadd.f32 0.0, %v6177
        %v6179 = vpop.f32.mrb[0].mxu0
        %6180 = vdwg.mxu0
        %v6181 = vadd.f32 %v6040, %v6143
        %v6182 = vadd.f32 %v6041, %v6146
        %v6183 = vadd.f32 %v6042, %v6151
        %v6184 = vadd.f32 %v6043, %v6154
        %v6185 = vadd.f32 %v6044, %v6159
        %v6186 = vadd.f32 %v6045, %v6162
        %v6187 = vadd.f32 %v6046, %v6167
        %v6188 = vadd.f32 %v6047, %v6170
        %v6189 = vadd.f32 %v6048, %v6175
        %v6190 = vadd.f32 %v6049, %v6178
        %s6191 = scalar_lea.vmem %s5, 80
        %v6192 = vld [vmem:[%s6191] sm:$0xf]
        %v6193 = vld [vmem:[%s6191 + $0x4] sm:$0xf]
        %v6194 = vld [vmem:[%s6191 + $0x8] sm:$0xf]
        %v6195 = vld [vmem:[%s6191 + $0xc] sm:$0xf]
        %vm6196 = vcmask 1041408
        %v6197 = vrot.slane %v5536, 6
        %v6198 = vrot.slane %v5537, 6
        %v6199 = vsel %vm6196, %v6197, %v6198
        %v6200 = vrot.slane %v5538, 6
        %v6201 = vsel %vm6196, %v6198, %v6200
        %v6202 = vrot.slane %v5539, 6
        %v6203 = vsel %vm6196, %v6200, %v6202
        %v6204 = vrot.slane %v5540, 6
        %v6205 = vsel %vm6196, %v6202, %v6204
        %v6206 = vrot.slane %v5541, 6
        %v6207 = vsel %vm6196, %v6204, %v6206
        %v6212 = vunpack.c.l.b16 %v6192
        %v6213 = vunpack.c.l.b16 %v6193
        %v6214 = vunpack.c.l.b16 %v6194
        %v6215 = vunpack.c.l.b16 %v6195
        %v6216 = vpack.c.b16 %v6213, %v6212
        %v6217 = vpack.c.b16 %v6215, %v6214
        %v6221 = vsel %vm4295, %v6199, 0
        %v6224 = vsel %vm4295, %v6201, 0
        %v6227 = vsel %vm4295, %v6203, 0
        %v6230 = vsel %vm4295, %v6205, 0
        %v6233 = vsel %vm4295, %v6207, 0
        %6235 = vmatprep.subr.bf16.mxu0 0
        %6236 = vmatpush1.bf16.msra.mxu0 %v6216
        %6237 = vmatprep.subr.bf16.mxu0 0
        %6238 = vmatpush1.bf16.msra.mxu0 %v6217
        %6239 = vmatprep.subr.bf16.mxu0 0
        %6240 = vmatpush1.bf16.msra.mxu0 0
        %6241 = vmatprep.subr.bf16.mxu0 0
        %6242 = vmatpush1.bf16.msra.mxu0 0
        %6243 = vmatprep.subr.bf16.mxu0 0
        %6244 = vmatpush1.bf16.msra.mxu0 0
        %6245 = vmatprep.subr.bf16.mxu0 0
        %6246 = vmatpush1.bf16.msra.mxu0 0
        %6247 = vmatprep.subr.bf16.mxu0 0
        %6248 = vmatpush1.bf16.msra.mxu0 0
        %6249 = vmatprep.subr.bf16.mxu0 0
        %6250 = vmatpush1.bf16.msra.mxu0 0
        %6251 = vmatprep.subr.bf16.mxu0 0
        %6252 = vmatpush1.bf16.msra.mxu0 0
        %6253 = vmatprep.subr.bf16.mxu0 0
        %6254 = vmatpush1.bf16.msra.mxu0 0
        %6255 = vmatprep.subr.bf16.mxu0 0
        %6256 = vmatpush1.bf16.msra.mxu0 0
        %6257 = vmatprep.subr.bf16.mxu0 0
        %6258 = vmatpush1.bf16.msra.mxu0 0
        %6259 = vmatprep.subr.bf16.mxu0 0
        %6260 = vmatpush1.bf16.msra.mxu0 0
        %6261 = vmatprep.subr.bf16.mxu0 0
        %6262 = vmatpush1.bf16.msra.mxu0 0
        %6263 = vmatprep.subr.bf16.mxu0 0
        %6264 = vmatpush1.bf16.msra.mxu0 0
        %6265 = vmatprep.subr.bf16.mxu0 0
        %6266 = vmatpush1.bf16.msra.mxu0 0
        %6267 = vmatprep.mubr.bf16.mxu0 0
        %6268 = vmatmul.mubr.bf16.gmra.mrb[0].mxu0 %v6221
        %v6269 = vpop.f32.mrb[0].mxu0
        %v6270 = vadd.f32 0.0, %v6269
        %v6271 = vpop.f32.mrb[0].mxu0
        %v6272 = vpop.f32.mrb[0].mxu0
        %v6273 = vadd.f32 0.0, %v6272
        %v6274 = vpop.f32.mrb[0].mxu0
        %6275 = vmatprep.mubr.bf16.mxu0 0
        %6276 = vmatmul.mubr.bf16.gmra.mrb[0].mxu0 %v6224
        %v6277 = vpop.f32.mrb[0].mxu0
        %v6278 = vadd.f32 0.0, %v6277
        %v6279 = vpop.f32.mrb[0].mxu0
        %v6280 = vpop.f32.mrb[0].mxu0
        %v6281 = vadd.f32 0.0, %v6280
        %v6282 = vpop.f32.mrb[0].mxu0
        %6283 = vmatprep.mubr.bf16.mxu0 0
        %6284 = vmatmul.mubr.bf16.gmra.mrb[0].mxu0 %v6227
        %v6285 = vpop.f32.mrb[0].mxu0
        %v6286 = vadd.f32 0.0, %v6285
        %v6287 = vpop.f32.mrb[0].mxu0
        %v6288 = vpop.f32.mrb[0].mxu0
        %v6289 = vadd.f32 0.0, %v6288
        %v6290 = vpop.f32.mrb[0].mxu0
        %6291 = vmatprep.mubr.bf16.mxu0 0
        %6292 = vmatmul.mubr.bf16.gmra.mrb[0].mxu0 %v6230
        %v6293 = vpop.f32.mrb[0].mxu0
        %v6294 = vadd.f32 0.0, %v6293
        %v6295 = vpop.f32.mrb[0].mxu0
        %v6296 = vpop.f32.mrb[0].mxu0
        %v6297 = vadd.f32 0.0, %v6296
        %v6298 = vpop.f32.mrb[0].mxu0
        %6299 = vmatprep.mubr.bf16.mxu0 0
        %6300 = vmatmul.mubr.bf16.gmra.mrb[0].mxu0 %v6233
        %v6301 = vpop.f32.mrb[0].mxu0
        %v6302 = vadd.f32 0.0, %v6301
        %v6303 = vpop.f32.mrb[0].mxu0
        %v6304 = vpop.f32.mrb[0].mxu0
        %v6305 = vadd.f32 0.0, %v6304
        %v6306 = vpop.f32.mrb[0].mxu0
        %6307 = vdwg.mxu0
        %v6308 = vadd.f32 %v6181, %v6270
        %v6309 = vadd.f32 %v6182, %v6273
        %v6310 = vadd.f32 %v6183, %v6278
        %v6311 = vadd.f32 %v6184, %v6281
        %v6312 = vadd.f32 %v6185, %v6286
        %v6313 = vadd.f32 %v6186, %v6289
        %v6314 = vadd.f32 %v6187, %v6294
        %v6315 = vadd.f32 %v6188, %v6297
        %v6316 = vadd.f32 %v6189, %v6302
        %v6317 = vadd.f32 %v6190, %v6305
        %s6318 = scalar_lea.vmem %s5, 96
        %v6319 = vld [vmem:[%s6318] sm:$0xf]
        %v6320 = vld [vmem:[%s6318 + $0x4] sm:$0xf]
        %v6321 = vld [vmem:[%s6318 + $0x8] sm:$0xf]
        %v6322 = vld [vmem:[%s6318 + $0xc] sm:$0xf]
        %v6324 = vrot.slane %v5537, 2
        %v6325 = vrot.slane %v5538, 2
        %v6326 = vsel %vm2514, %v6324, %v6325
        %v6327 = vrot.slane %v5539, 2
        %v6328 = vsel %vm2514, %v6325, %v6327
        %v6329 = vrot.slane %v5540, 2
        %v6330 = vsel %vm2514, %v6327, %v6329
        %v6331 = vrot.slane %v5541, 2
        %v6332 = vsel %vm2514, %v6329, %v6331
        %v6333 = vrot.slane %v5542, 2
        %v6334 = vsel %vm2514, %v6331, %v6333
        %v6339 = vunpack.c.l.b16 %v6319
        %v6340 = vunpack.c.l.b16 %v6320
        %v6341 = vunpack.c.l.b16 %v6321
        %v6342 = vunpack.c.l.b16 %v6322
        %v6343 = vpack.c.b16 %v6340, %v6339
        %v6344 = vpack.c.b16 %v6342, %v6341
        %v6348 = vsel %vm4295, %v6326, 0
        %v6351 = vsel %vm4295, %v6328, 0
        %v6354 = vsel %vm4295, %v6330, 0
        %v6357 = vsel %vm4295, %v6332, 0
        %v6360 = vsel %vm4295, %v6334, 0
        %6362 = vmatprep.subr.bf16.mxu0 0
        %6363 = vmatpush1.bf16.msra.mxu0 %v6343
        %6364 = vmatprep.subr.bf16.mxu0 0
        %6365 = vmatpush1.bf16.msra.mxu0 %v6344
        %6366 = vmatprep.subr.bf16.mxu0 0
        %6367 = vmatpush1.bf16.msra.mxu0 0
        %6368 = vmatprep.subr.bf16.mxu0 0
        %6369 = vmatpush1.bf16.msra.mxu0 0
        %6370 = vmatprep.subr.bf16.mxu0 0
        %6371 = vmatpush1.bf16.msra.mxu0 0
        %6372 = vmatprep.subr.bf16.mxu0 0
        %6373 = vmatpush1.bf16.msra.mxu0 0
        %6374 = vmatprep.subr.bf16.mxu0 0
        %6375 = vmatpush1.bf16.msra.mxu0 0
        %6376 = vmatprep.subr.bf16.mxu0 0
        %6377 = vmatpush1.bf16.msra.mxu0 0
        %6378 = vmatprep.subr.bf16.mxu0 0
        %6379 = vmatpush1.bf16.msra.mxu0 0
        %6380 = vmatprep.subr.bf16.mxu0 0
        %6381 = vmatpush1.bf16.msra.mxu0 0
        %6382 = vmatprep.subr.bf16.mxu0 0
        %6383 = vmatpush1.bf16.msra.mxu0 0
        %6384 = vmatprep.subr.bf16.mxu0 0
        %6385 = vmatpush1.bf16.msra.mxu0 0
        %6386 = vmatprep.subr.bf16.mxu0 0
        %6387 = vmatpush1.bf16.msra.mxu0 0
        %6388 = vmatprep.subr.bf16.mxu0 0
        %6389 = vmatpush1.bf16.msra.mxu0 0
        %6390 = vmatprep.subr.bf16.mxu0 0
        %6391 = vmatpush1.bf16.msra.mxu0 0
        %6392 = vmatprep.subr.bf16.mxu0 0
        %6393 = vmatpush1.bf16.msra.mxu0 0
        %6394 = vmatprep.mubr.bf16.mxu0 0
        %6395 = vmatmul.mubr.bf16.gmra.mrb[0].mxu0 %v6348
        %v6396 = vpop.f32.mrb[0].mxu0
        %v6397 = vadd.f32 0.0, %v6396
        %v6398 = vpop.f32.mrb[0].mxu0
        %v6399 = vpop.f32.mrb[0].mxu0
        %v6400 = vadd.f32 0.0, %v6399
        %v6401 = vpop.f32.mrb[0].mxu0
        %6402 = vmatprep.mubr.bf16.mxu0 0
        %6403 = vmatmul.mubr.bf16.gmra.mrb[0].mxu0 %v6351
        %v6404 = vpop.f32.mrb[0].mxu0
        %v6405 = vadd.f32 0.0, %v6404
        %v6406 = vpop.f32.mrb[0].mxu0
        %v6407 = vpop.f32.mrb[0].mxu0
        %v6408 = vadd.f32 0.0, %v6407
        %v6409 = vpop.f32.mrb[0].mxu0
        %6410 = vmatprep.mubr.bf16.mxu0 0
        %6411 = vmatmul.mubr.bf16.gmra.mrb[0].mxu0 %v6354
        %v6412 = vpop.f32.mrb[0].mxu0
        %v6413 = vadd.f32 0.0, %v6412
        %v6414 = vpop.f32.mrb[0].mxu0
        %v6415 = vpop.f32.mrb[0].mxu0
        %v6416 = vadd.f32 0.0, %v6415
        %v6417 = vpop.f32.mrb[0].mxu0
        %6418 = vmatprep.mubr.bf16.mxu0 0
        %6419 = vmatmul.mubr.bf16.gmra.mrb[0].mxu0 %v6357
        %v6420 = vpop.f32.mrb[0].mxu0
        %v6421 = vadd.f32 0.0, %v6420
        %v6422 = vpop.f32.mrb[0].mxu0
        %v6423 = vpop.f32.mrb[0].mxu0
        %v6424 = vadd.f32 0.0, %v6423
        %v6425 = vpop.f32.mrb[0].mxu0
        %6426 = vmatprep.mubr.bf16.mxu0 0
        %6427 = vmatmul.mubr.bf16.gmra.mrb[0].mxu0 %v6360
        %v6428 = vpop.f32.mrb[0].mxu0
        %v6429 = vadd.f32 0.0, %v6428
        %v6430 = vpop.f32.mrb[0].mxu0
        %v6431 = vpop.f32.mrb[0].mxu0
        %v6432 = vadd.f32 0.0, %v6431
        %v6433 = vpop.f32.mrb[0].mxu0
        %6434 = vdwg.mxu0
        %v6435 = vadd.f32 %v6308, %v6397
        %v6436 = vadd.f32 %v6309, %v6400
        %v6437 = vadd.f32 %v6310, %v6405
        %v6438 = vadd.f32 %v6311, %v6408
        %v6439 = vadd.f32 %v6312, %v6413
        %v6440 = vadd.f32 %v6313, %v6416
        %v6441 = vadd.f32 %v6314, %v6421
        %v6442 = vadd.f32 %v6315, %v6424
        %v6443 = vadd.f32 %v6316, %v6429
        %v6444 = vadd.f32 %v6317, %v6432
        %s6445 = scalar_lea.vmem %s5, 112
        %v6446 = vld [vmem:[%s6445] sm:$0xf]
        %v6447 = vld [vmem:[%s6445 + $0x4] sm:$0xf]
        %v6448 = vld [vmem:[%s6445 + $0x8] sm:$0xf]
        %v6449 = vld [vmem:[%s6445 + $0xc] sm:$0xf]
        %v6450 = vrot.slane %v5564, 2
        %v6451 = vrot.slane %v5560, 3
        %v6452 = vor.u32 %v6450, %v6451
        %v6453 = vrot.slane %v5572, 2
        %v6454 = vrot.slane %v5568, 3
        %v6455 = vor.u32 %v6453, %v6454
        %v6456 = vsel %vm3267, %v6452, %v6455
        %v6457 = vrot.slane %v5580, 2
        %v6458 = vrot.slane %v5576, 3
        %v6459 = vor.u32 %v6457, %v6458
        %v6460 = vsel %vm3267, %v6455, %v6459
        %v6461 = vrot.slane %v5588, 2
        %v6462 = vrot.slane %v5584, 3
        %v6463 = vor.u32 %v6461, %v6462
        %v6464 = vsel %vm3267, %v6459, %v6463
        %v6465 = vrot.slane %v6075, 2
        %v6466 = vrot.slane %v5592, 3
        %v6467 = vor.u32 %v6465, %v6466
        %v6468 = vsel %vm3267, %v6463, %v6467
        %v6470 = vshrl.u32 %v5542, 16
        %v6472 = vrot.slane %v6470, 2
        %v6473 = vshll.u32 %v5542, 16
        %v6475 = vrot.slane %v6473, 3
        %v6476 = vor.u32 %v6472, %v6475
        %v6477 = vsel %vm3267, %v6467, %v6476
        %v6482 = vunpack.c.l.b16 %v6446
        %v6483 = vunpack.c.l.b16 %v6447
        %v6484 = vunpack.c.l.b16 %v6448
        %v6485 = vunpack.c.l.b16 %v6449
        %v6486 = vpack.c.b16 %v6483, %v6482
        %v6487 = vpack.c.b16 %v6485, %v6484
        %v6491 = vsel %vm4295, %v6456, 0
        %v6494 = vsel %vm4295, %v6460, 0
        %v6497 = vsel %vm4295, %v6464, 0
        %v6500 = vsel %vm4295, %v6468, 0
        %v6503 = vsel %vm4295, %v6477, 0
        %6505 = vmatprep.subr.bf16.mxu0 0
        %6506 = vmatpush1.bf16.msra.mxu0 %v6486
        %6507 = vmatprep.subr.bf16.mxu0 0
        %6508 = vmatpush1.bf16.msra.mxu0 %v6487
        %6509 = vmatprep.subr.bf16.mxu0 0
        %6510 = vmatpush1.bf16.msra.mxu0 0
        %6511 = vmatprep.subr.bf16.mxu0 0
        %6512 = vmatpush1.bf16.msra.mxu0 0
        %6513 = vmatprep.subr.bf16.mxu0 0
        %6514 = vmatpush1.bf16.msra.mxu0 0
        %6515 = vmatprep.subr.bf16.mxu0 0
        %6516 = vmatpush1.bf16.msra.mxu0 0
        %6517 = vmatprep.subr.bf16.mxu0 0
        %6518 = vmatpush1.bf16.msra.mxu0 0
        %6519 = vmatprep.subr.bf16.mxu0 0
        %6520 = vmatpush1.bf16.msra.mxu0 0
        %6521 = vmatprep.subr.bf16.mxu0 0
        %6522 = vmatpush1.bf16.msra.mxu0 0
        %6523 = vmatprep.subr.bf16.mxu0 0
        %6524 = vmatpush1.bf16.msra.mxu0 0
        %6525 = vmatprep.subr.bf16.mxu0 0
        %6526 = vmatpush1.bf16.msra.mxu0 0
        %6527 = vmatprep.subr.bf16.mxu0 0
        %6528 = vmatpush1.bf16.msra.mxu0 0
        %6529 = vmatprep.subr.bf16.mxu0 0
        %6530 = vmatpush1.bf16.msra.mxu0 0
        %6531 = vmatprep.subr.bf16.mxu0 0
        %6532 = vmatpush1.bf16.msra.mxu0 0
        %6533 = vmatprep.subr.bf16.mxu0 0
        %6534 = vmatpush1.bf16.msra.mxu0 0
        %6535 = vmatprep.subr.bf16.mxu0 0
        %6536 = vmatpush1.bf16.msra.mxu0 0
        %6537 = vmatprep.mubr.bf16.mxu0 0
        %6538 = vmatmul.mubr.bf16.gmra.mrb[0].mxu0 %v6491
        %v6539 = vpop.f32.mrb[0].mxu0
        %v6540 = vadd.f32 0.0, %v6539
        %v6541 = vpop.f32.mrb[0].mxu0
        %v6542 = vpop.f32.mrb[0].mxu0
        %v6543 = vadd.f32 0.0, %v6542
        %v6544 = vpop.f32.mrb[0].mxu0
        %6545 = vmatprep.mubr.bf16.mxu0 0
        %6546 = vmatmul.mubr.bf16.gmra.mrb[0].mxu0 %v6494
        %v6547 = vpop.f32.mrb[0].mxu0
        %v6548 = vadd.f32 0.0, %v6547
        %v6549 = vpop.f32.mrb[0].mxu0
        %v6550 = vpop.f32.mrb[0].mxu0
        %v6551 = vadd.f32 0.0, %v6550
        %v6552 = vpop.f32.mrb[0].mxu0
        %6553 = vmatprep.mubr.bf16.mxu0 0
        %6554 = vmatmul.mubr.bf16.gmra.mrb[0].mxu0 %v6497
        %v6555 = vpop.f32.mrb[0].mxu0
        %v6556 = vadd.f32 0.0, %v6555
        %v6557 = vpop.f32.mrb[0].mxu0
        %v6558 = vpop.f32.mrb[0].mxu0
        %v6559 = vadd.f32 0.0, %v6558
        %v6560 = vpop.f32.mrb[0].mxu0
        %6561 = vmatprep.mubr.bf16.mxu0 0
        %6562 = vmatmul.mubr.bf16.gmra.mrb[0].mxu0 %v6500
        %v6563 = vpop.f32.mrb[0].mxu0
        %v6564 = vadd.f32 0.0, %v6563
        %v6565 = vpop.f32.mrb[0].mxu0
        %v6566 = vpop.f32.mrb[0].mxu0
        %v6567 = vadd.f32 0.0, %v6566
        %v6568 = vpop.f32.mrb[0].mxu0
        %6569 = vmatprep.mubr.bf16.mxu0 0
        %6570 = vmatmul.mubr.bf16.gmra.mrb[0].mxu0 %v6503
        %v6571 = vpop.f32.mrb[0].mxu0
        %v6572 = vadd.f32 0.0, %v6571
        %v6573 = vpop.f32.mrb[0].mxu0
        %v6574 = vpop.f32.mrb[0].mxu0
        %v6575 = vadd.f32 0.0, %v6574
        %v6576 = vpop.f32.mrb[0].mxu0
        %6577 = vdwg.mxu0
        %v6578 = vadd.f32 %v6435, %v6540
        %v6579 = vadd.f32 %v6436, %v6543
        %v6580 = vadd.f32 %v6437, %v6548
        %v6581 = vadd.f32 %v6438, %v6551
        %v6582 = vadd.f32 %v6439, %v6556
        %v6583 = vadd.f32 %v6440, %v6559
        %v6584 = vadd.f32 %v6441, %v6564
        %v6585 = vadd.f32 %v6442, %v6567
        %v6586 = vadd.f32 %v6443, %v6572
        %v6587 = vadd.f32 %v6444, %v6575
        %s6588 = scalar_lea.vmem %s5, 128
        %v6589 = vld [vmem:[%s6588] sm:$0xf]
        %v6590 = vld [vmem:[%s6588 + $0x4] sm:$0xf]
        %v6591 = vld [vmem:[%s6588 + $0x8] sm:$0xf]
        %v6592 = vld [vmem:[%s6588 + $0xc] sm:$0xf]
        %v6593 = vrot.slane %v5537, 3
        %v6594 = vrot.slane %v5538, 3
        %v6595 = vsel %vm3714, %v6593, %v6594
        %v6596 = vrot.slane %v5539, 3
        %v6597 = vsel %vm3714, %v6594, %v6596
        %v6598 = vrot.slane %v5540, 3
        %v6599 = vsel %vm3714, %v6596, %v6598
        %v6600 = vrot.slane %v5541, 3
        %v6601 = vsel %vm3714, %v6598, %v6600
        %v6602 = vrot.slane %v5542, 3
        %v6603 = vsel %vm3714, %v6600, %v6602
        %v6608 = vunpack.c.l.b16 %v6589
        %v6609 = vunpack.c.l.b16 %v6590
        %v6610 = vunpack.c.l.b16 %v6591
        %v6611 = vunpack.c.l.b16 %v6592
        %v6612 = vpack.c.b16 %v6609, %v6608
        %v6613 = vpack.c.b16 %v6611, %v6610
        %v6617 = vsel %vm4295, %v6595, 0
        %v6620 = vsel %vm4295, %v6597, 0
        %v6623 = vsel %vm4295, %v6599, 0
        %v6626 = vsel %vm4295, %v6601, 0
        %v6629 = vsel %vm4295, %v6603, 0
        %6631 = vmatprep.subr.bf16.mxu0 0
        %6632 = vmatpush1.bf16.msra.mxu0 %v6612
        %6633 = vmatprep.subr.bf16.mxu0 0
        %6634 = vmatpush1.bf16.msra.mxu0 %v6613
        %6635 = vmatprep.subr.bf16.mxu0 0
        %6636 = vmatpush1.bf16.msra.mxu0 0
        %6637 = vmatprep.subr.bf16.mxu0 0
        %6638 = vmatpush1.bf16.msra.mxu0 0
        %6639 = vmatprep.subr.bf16.mxu0 0
        %6640 = vmatpush1.bf16.msra.mxu0 0
        %6641 = vmatprep.subr.bf16.mxu0 0
        %6642 = vmatpush1.bf16.msra.mxu0 0
        %6643 = vmatprep.subr.bf16.mxu0 0
        %6644 = vmatpush1.bf16.msra.mxu0 0
        %6645 = vmatprep.subr.bf16.mxu0 0
        %6646 = vmatpush1.bf16.msra.mxu0 0
        %6647 = vmatprep.subr.bf16.mxu0 0
        %6648 = vmatpush1.bf16.msra.mxu0 0
        %6649 = vmatprep.subr.bf16.mxu0 0
        %6650 = vmatpush1.bf16.msra.mxu0 0
        %6651 = vmatprep.subr.bf16.mxu0 0
        %6652 = vmatpush1.bf16.msra.mxu0 0
        %6653 = vmatprep.subr.bf16.mxu0 0
        %6654 = vmatpush1.bf16.msra.mxu0 0
        %6655 = vmatprep.subr.bf16.mxu0 0
        %6656 = vmatpush1.bf16.msra.mxu0 0
        %6657 = vmatprep.subr.bf16.mxu0 0
        %6658 = vmatpush1.bf16.msra.mxu0 0
        %6659 = vmatprep.subr.bf16.mxu0 0
        %6660 = vmatpush1.bf16.msra.mxu0 0
        %6661 = vmatprep.subr.bf16.mxu0 0
        %6662 = vmatpush1.bf16.msra.mxu0 0
        %6663 = vmatprep.mubr.bf16.mxu0 0
        %6664 = vmatmul.mubr.bf16.gmra.mrb[0].mxu0 %v6617
        %v6665 = vpop.f32.mrb[0].mxu0
        %v6666 = vadd.f32 0.0, %v6665
        %v6667 = vpop.f32.mrb[0].mxu0
        %v6668 = vpop.f32.mrb[0].mxu0
        %v6669 = vadd.f32 0.0, %v6668
        %v6670 = vpop.f32.mrb[0].mxu0
        %6671 = vmatprep.mubr.bf16.mxu0 0
        %6672 = vmatmul.mubr.bf16.gmra.mrb[0].mxu0 %v6620
        %v6673 = vpop.f32.mrb[0].mxu0
        %v6674 = vadd.f32 0.0, %v6673
        %v6675 = vpop.f32.mrb[0].mxu0
        %v6676 = vpop.f32.mrb[0].mxu0
        %v6677 = vadd.f32 0.0, %v6676
        %v6678 = vpop.f32.mrb[0].mxu0
        %6679 = vmatprep.mubr.bf16.mxu0 0
        %6680 = vmatmul.mubr.bf16.gmra.mrb[0].mxu0 %v6623
        %v6681 = vpop.f32.mrb[0].mxu0
        %v6682 = vadd.f32 0.0, %v6681
        %v6683 = vpop.f32.mrb[0].mxu0
        %v6684 = vpop.f32.mrb[0].mxu0
        %v6685 = vadd.f32 0.0, %v6684
        %v6686 = vpop.f32.mrb[0].mxu0
        %6687 = vmatprep.mubr.bf16.mxu0 0
        %6688 = vmatmul.mubr.bf16.gmra.mrb[0].mxu0 %v6626
        %v6689 = vpop.f32.mrb[0].mxu0
        %v6690 = vadd.f32 0.0, %v6689
        %v6691 = vpop.f32.mrb[0].mxu0
        %v6692 = vpop.f32.mrb[0].mxu0
        %v6693 = vadd.f32 0.0, %v6692
        %v6694 = vpop.f32.mrb[0].mxu0
        %6695 = vmatprep.mubr.bf16.mxu0 0
        %6696 = vmatmul.mubr.bf16.gmra.mrb[0].mxu0 %v6629
        %v6697 = vpop.f32.mrb[0].mxu0
        %v6698 = vadd.f32 0.0, %v6697
        %v6699 = vpop.f32.mrb[0].mxu0
        %v6700 = vpop.f32.mrb[0].mxu0
        %v6701 = vadd.f32 0.0, %v6700
        %v6702 = vpop.f32.mrb[0].mxu0
        %6703 = vdwg.mxu0
        %v6704 = vadd.f32 %v6578, %v6666
        %v6705 = vadd.f32 %v6579, %v6669
        %v6706 = vadd.f32 %v6580, %v6674
        %v6707 = vadd.f32 %v6581, %v6677
        %v6708 = vadd.f32 %v6582, %v6682
        %v6709 = vadd.f32 %v6583, %v6685
        %v6710 = vadd.f32 %v6584, %v6690
        %v6711 = vadd.f32 %v6585, %v6693
        %v6712 = vadd.f32 %v6586, %v6698
        %v6713 = vadd.f32 %v6587, %v6701
        %v6714 = vld [vmem:[%s6] sm:$0x1]
        %v6716 = vlaneseq
        %v6717 = vshrl.u32 %v6716, 7
        %v6718 = vsub.s32 0, %v6717
        %v6719 = vrot.slane %v6714, %v6718
        %v6721 = vmul.f32 %v6704, %v6719
        %v6722 = vmul.f32 %v6705, %v6719
        %v6723 = vmul.f32 %v6706, %v6719
        %v6724 = vmul.f32 %v6707, %v6719
        %v6725 = vmul.f32 %v6708, %v6719
        %v6726 = vmul.f32 %v6709, %v6719
        %v6727 = vmul.f32 %v6710, %v6719
        %v6728 = vmul.f32 %v6711, %v6719
        %v6729 = vmul.f32 %v6712, %v6719
        %v6730 = vmul.f32 %v6713, %v6719
        %v6731 = vld [vmem:[%s7] sm:$0x1]
        %v6733 = vlaneseq
        %v6734 = vshrl.u32 %v6733, 7
        %v6735 = vsub.s32 0, %v6734
        %v6736 = vrot.slane %v6731, %v6735
        %v6738 = vadd.f32 %v6721, %v6736
        %v6739 = vadd.f32 %v6722, %v6736
        %v6740 = vadd.f32 %v6723, %v6736
        %v6741 = vadd.f32 %v6724, %v6736
        %v6742 = vadd.f32 %v6725, %v6736
        %v6743 = vadd.f32 %v6726, %v6736
        %v6744 = vadd.f32 %v6727, %v6736
        %v6745 = vadd.f32 %v6728, %v6736
        %v6746 = vadd.f32 %v6729, %v6736
        %v6747 = vadd.f32 %v6730, %v6736
        %v6748 = vmax.f32 %v6738, 0.0
        %v6749 = vmax.f32 %v6739, 0.0
        %v6750 = vmax.f32 %v6740, 0.0
        %v6751 = vmax.f32 %v6741, 0.0
        %v6752 = vmax.f32 %v6742, 0.0
        %v6753 = vmax.f32 %v6743, 0.0
        %v6754 = vmax.f32 %v6744, 0.0
        %v6755 = vmax.f32 %v6745, 0.0
        %v6756 = vmax.f32 %v6746, 0.0
        %v6757 = vmax.f32 %v6747, 0.0
        %v6758 = vpack.c.bf16 %v6749, %v6748
        %v6759 = vpack.c.bf16 %v6751, %v6750
        %v6760 = vpack.c.bf16 %v6753, %v6752
        %v6761 = vpack.c.bf16 %v6755, %v6754
        %v6762 = vpack.c.bf16 %v6757, %v6756
        %v6763 = vld [vmem:[%s8] sm:$0xf]
        %v6764 = vld [vmem:[%s8 + $0x4] sm:$0xf]
        %v6765 = vld [vmem:[%s8 + $0x8] sm:$0xf]
        %v6766 = vld [vmem:[%s8 + $0xc] sm:$0xf]
        %v6767 = vld [vmem:[%s8 + $0x10] sm:$0xf]
        %v6768 = vld [vmem:[%s8 + $0x14] sm:$0x1]
        %v6775 = vunpack.c.l.b16 %v6763
        %v6776 = vunpack.c.l.b16 %v6764
        %v6777 = vunpack.c.l.b16 %v6765
        %v6778 = vunpack.c.l.b16 %v6766
        %v6779 = vunpack.c.l.b16 %v6767
        %v6780 = vunpack.c.l.b16 %v6768
        %v6781 = vpack.c.b16 %v6776, %v6775
        %v6782 = vpack.c.b16 %v6778, %v6777
        %v6783 = vpack.c.b16 %v6780, %v6779
        %vm6784 = vcmask 654336
        %v6786 = vsel %vm6784, %v6781, 0
        %v6789 = vsel %vm6784, %v6782, 0
        %v6792 = vsel %vm6784, %v6783, 0
        %6794 = vmatprep.subr.bf16.mxu0 0
        %6795 = vmatpush1.bf16.msra.mxu0 %v6758
        %6796 = vmatprep.subr.bf16.mxu0 0
        %6797 = vmatpush1.bf16.msra.mxu0 %v6759
        %6798 = vmatprep.subr.bf16.mxu0 0
        %6799 = vmatpush1.bf16.msra.mxu0 %v6760
        %6800 = vmatprep.subr.bf16.mxu0 0
        %6801 = vmatpush1.bf16.msra.mxu0 %v6761
        %6802 = vmatprep.subr.bf16.mxu0 0
        %6803 = vmatpush1.bf16.msra.mxu0 %v6762
        %6804 = vmatprep.subr.bf16.mxu0 0
        %6805 = vmatpush1.bf16.msra.mxu0 0
        %6806 = vmatprep.subr.bf16.mxu0 0
        %6807 = vmatpush1.bf16.msra.mxu0 0
        %6808 = vmatprep.subr.bf16.mxu0 0
        %6809 = vmatpush1.bf16.msra.mxu0 0
        %6810 = vmatprep.subr.bf16.mxu0 0
        %6811 = vmatpush1.bf16.msra.mxu0 0
        %6812 = vmatprep.subr.bf16.mxu0 0
        %6813 = vmatpush1.bf16.msra.mxu0 0
        %6814 = vmatprep.subr.bf16.mxu0 0
        %6815 = vmatpush1.bf16.msra.mxu0 0
        %6816 = vmatprep.subr.bf16.mxu0 0
        %6817 = vmatpush1.bf16.msra.mxu0 0
        %6818 = vmatprep.subr.bf16.mxu0 0
        %6819 = vmatpush1.bf16.msra.mxu0 0
        %6820 = vmatprep.subr.bf16.mxu0 0
        %6821 = vmatpush1.bf16.msra.mxu0 0
        %6822 = vmatprep.subr.bf16.mxu0 0
        %6823 = vmatpush1.bf16.msra.mxu0 0
        %6824 = vmatprep.subr.bf16.mxu0 0
        %6825 = vmatpush1.bf16.msra.mxu0 0
        %6826 = vmatprep.mubr.bf16.mxu0 0
        %6827 = vmatmul.mubr.bf16.gmra.mrb[0].mxu0 %v6786
        %v6828 = vpop.f32.mrb[0].mxu0
        %v6829 = vadd.f32 0.0, %v6828
        %v6830 = vpop.f32.mrb[0].mxu0
        %v6831 = vpop.f32.mrb[0].mxu0
        %v6832 = vadd.f32 0.0, %v6831
        %v6833 = vpop.f32.mrb[0].mxu0
        %6834 = vmatprep.mubr.bf16.mxu0 0
        %6835 = vmatmul.mubr.bf16.gmra.mrb[0].mxu0 %v6789
        %v6836 = vpop.f32.mrb[0].mxu0
        %v6837 = vadd.f32 0.0, %v6836
        %v6838 = vpop.f32.mrb[0].mxu0
        %v6839 = vpop.f32.mrb[0].mxu0
        %v6840 = vadd.f32 0.0, %v6839
        %v6841 = vpop.f32.mrb[0].mxu0
        %6842 = vmatprep.mubr.bf16.mxu0 0
        %6843 = vmatmul.mubr.bf16.gmra.mrb[0].mxu0 %v6792
        %v6844 = vpop.f32.mrb[0].mxu0
        %v6845 = vadd.f32 0.0, %v6844
        %v6846 = vpop.f32.mrb[0].mxu0
        %v6847 = vpop.f32.mrb[0].mxu0
        %v6848 = vadd.f32 0.0, %v6847
        %v6849 = vpop.f32.mrb[0].mxu0
        %6850 = vdwg.mxu0
        %s6851 = scalar_lea.vmem %s8, 24
        %v6852 = vld [vmem:[%s6851] sm:$0xf]
        %v6853 = vld [vmem:[%s6851 + $0x4] sm:$0xf]
        %v6854 = vld [vmem:[%s6851 + $0x8] sm:$0xf]
        %v6855 = vld [vmem:[%s6851 + $0xc] sm:$0xf]
        %v6856 = vld [vmem:[%s6851 + $0x10] sm:$0xf]
        %v6857 = vld [vmem:[%s6851 + $0x14] sm:$0x1]
        %v6864 = vunpack.c.l.b16 %v6852
        %v6865 = vunpack.c.l.b16 %v6853
        %v6866 = vunpack.c.l.b16 %v6854
        %v6867 = vunpack.c.l.b16 %v6855
        %v6868 = vunpack.c.l.b16 %v6856
        %v6869 = vunpack.c.l.b16 %v6857
        %v6870 = vpack.c.b16 %v6865, %v6864
        %v6871 = vpack.c.b16 %v6867, %v6866
        %v6872 = vpack.c.b16 %v6869, %v6868
        %v6874 = vsel %vm6784, %v6870, 0
        %v6877 = vsel %vm6784, %v6871, 0
        %v6880 = vsel %vm6784, %v6872, 0
        %6882 = vmatprep.subr.bf16.mxu0 0
        %6883 = vmatpush1.bf16.msra.mxu0 %v6758
        %6884 = vmatprep.subr.bf16.mxu0 0
        %6885 = vmatpush1.bf16.msra.mxu0 %v6759
        %6886 = vmatprep.subr.bf16.mxu0 0
        %6887 = vmatpush1.bf16.msra.mxu0 %v6760
        %6888 = vmatprep.subr.bf16.mxu0 0
        %6889 = vmatpush1.bf16.msra.mxu0 %v6761
        %6890 = vmatprep.subr.bf16.mxu0 0
        %6891 = vmatpush1.bf16.msra.mxu0 %v6762
        %6892 = vmatprep.subr.bf16.mxu0 0
        %6893 = vmatpush1.bf16.msra.mxu0 0
        %6894 = vmatprep.subr.bf16.mxu0 0
        %6895 = vmatpush1.bf16.msra.mxu0 0
        %6896 = vmatprep.subr.bf16.mxu0 0
        %6897 = vmatpush1.bf16.msra.mxu0 0
        %6898 = vmatprep.subr.bf16.mxu0 0
        %6899 = vmatpush1.bf16.msra.mxu0 0
        %6900 = vmatprep.subr.bf16.mxu0 0
        %6901 = vmatpush1.bf16.msra.mxu0 0
        %6902 = vmatprep.subr.bf16.mxu0 0
        %6903 = vmatpush1.bf16.msra.mxu0 0
        %6904 = vmatprep.subr.bf16.mxu0 0
        %6905 = vmatpush1.bf16.msra.mxu0 0
        %6906 = vmatprep.subr.bf16.mxu0 0
        %6907 = vmatpush1.bf16.msra.mxu0 0
        %6908 = vmatprep.subr.bf16.mxu0 0
        %6909 = vmatpush1.bf16.msra.mxu0 0
        %6910 = vmatprep.subr.bf16.mxu0 0
        %6911 = vmatpush1.bf16.msra.mxu0 0
        %6912 = vmatprep.subr.bf16.mxu0 0
        %6913 = vmatpush1.bf16.msra.mxu0 0
        %6914 = vmatprep.mubr.bf16.mxu0 0
        %6915 = vmatmul.mubr.bf16.gmra.mrb[0].mxu0 %v6874
        %v6916 = vpop.f32.mrb[0].mxu0
        %v6917 = vadd.f32 0.0, %v6916
        %v6918 = vpop.f32.mrb[0].mxu0
        %v6919 = vpop.f32.mrb[0].mxu0
        %v6920 = vadd.f32 0.0, %v6919
        %v6921 = vpop.f32.mrb[0].mxu0
        %6922 = vmatprep.mubr.bf16.mxu0 0
        %6923 = vmatmul.mubr.bf16.gmra.mrb[0].mxu0 %v6877
        %v6924 = vpop.f32.mrb[0].mxu0
        %v6925 = vadd.f32 0.0, %v6924
        %v6926 = vpop.f32.mrb[0].mxu0
        %v6927 = vpop.f32.mrb[0].mxu0
        %v6928 = vadd.f32 0.0, %v6927
        %v6929 = vpop.f32.mrb[0].mxu0
        %6930 = vmatprep.mubr.bf16.mxu0 0
        %6931 = vmatmul.mubr.bf16.gmra.mrb[0].mxu0 %v6880
        %v6932 = vpop.f32.mrb[0].mxu0
        %v6933 = vadd.f32 0.0, %v6932
        %v6934 = vpop.f32.mrb[0].mxu0
        %v6935 = vpop.f32.mrb[0].mxu0
        %v6936 = vadd.f32 0.0, %v6935
        %v6937 = vpop.f32.mrb[0].mxu0
        %6938 = vdwg.mxu0
        %v6939 = vmax.f32 %v6829, %v6917
        %v6940 = vmax.f32 %v6832, %v6920
        %v6941 = vmax.f32 %v6837, %v6925
        %v6942 = vmax.f32 %v6840, %v6928
        %v6943 = vmax.f32 %v6845, %v6933
        %v6944 = vmax.f32 %v6848, %v6936
        %s6945 = scalar_lea.vmem %s8, 48
        %v6946 = vld [vmem:[%s6945] sm:$0xf]
        %v6947 = vld [vmem:[%s6945 + $0x4] sm:$0xf]
        %v6948 = vld [vmem:[%s6945 + $0x8] sm:$0xf]
        %v6949 = vld [vmem:[%s6945 + $0xc] sm:$0xf]
        %v6950 = vld [vmem:[%s6945 + $0x10] sm:$0xf]
        %v6951 = vld [vmem:[%s6945 + $0x14] sm:$0x1]
        %v6958 = vunpack.c.l.b16 %v6946
        %v6959 = vunpack.c.l.b16 %v6947
        %v6960 = vunpack.c.l.b16 %v6948
        %v6961 = vunpack.c.l.b16 %v6949
        %v6962 = vunpack.c.l.b16 %v6950
        %v6963 = vunpack.c.l.b16 %v6951
        %v6964 = vpack.c.b16 %v6959, %v6958
        %v6965 = vpack.c.b16 %v6961, %v6960
        %v6966 = vpack.c.b16 %v6963, %v6962
        %v6968 = vsel %vm6784, %v6964, 0
        %v6971 = vsel %vm6784, %v6965, 0
        %v6974 = vsel %vm6784, %v6966, 0
        %6976 = vmatprep.subr.bf16.mxu0 0
        %6977 = vmatpush1.bf16.msra.mxu0 %v6758
        %6978 = vmatprep.subr.bf16.mxu0 0
        %6979 = vmatpush1.bf16.msra.mxu0 %v6759
        %6980 = vmatprep.subr.bf16.mxu0 0
        %6981 = vmatpush1.bf16.msra.mxu0 %v6760
        %6982 = vmatprep.subr.bf16.mxu0 0
        %6983 = vmatpush1.bf16.msra.mxu0 %v6761
        %6984 = vmatprep.subr.bf16.mxu0 0
        %6985 = vmatpush1.bf16.msra.mxu0 %v6762
        %6986 = vmatprep.subr.bf16.mxu0 0
        %6987 = vmatpush1.bf16.msra.mxu0 0
        %6988 = vmatprep.subr.bf16.mxu0 0
        %6989 = vmatpush1.bf16.msra.mxu0 0
        %6990 = vmatprep.subr.bf16.mxu0 0
        %6991 = vmatpush1.bf16.msra.mxu0 0
        %6992 = vmatprep.subr.bf16.mxu0 0
        %6993 = vmatpush1.bf16.msra.mxu0 0
        %6994 = vmatprep.subr.bf16.mxu0 0
        %6995 = vmatpush1.bf16.msra.mxu0 0
        %6996 = vmatprep.subr.bf16.mxu0 0
        %6997 = vmatpush1.bf16.msra.mxu0 0
        %6998 = vmatprep.subr.bf16.mxu0 0
        %6999 = vmatpush1.bf16.msra.mxu0 0
        %7000 = vmatprep.subr.bf16.mxu0 0
        %7001 = vmatpush1.bf16.msra.mxu0 0
        %7002 = vmatprep.subr.bf16.mxu0 0
        %7003 = vmatpush1.bf16.msra.mxu0 0
        %7004 = vmatprep.subr.bf16.mxu0 0
        %7005 = vmatpush1.bf16.msra.mxu0 0
        %7006 = vmatprep.subr.bf16.mxu0 0
        %7007 = vmatpush1.bf16.msra.mxu0 0
        %7008 = vmatprep.mubr.bf16.mxu0 0
        %7009 = vmatmul.mubr.bf16.gmra.mrb[0].mxu0 %v6968
        %v7010 = vpop.f32.mrb[0].mxu0
        %v7011 = vadd.f32 0.0, %v7010
        %v7012 = vpop.f32.mrb[0].mxu0
        %v7013 = vpop.f32.mrb[0].mxu0
        %v7014 = vadd.f32 0.0, %v7013
        %v7015 = vpop.f32.mrb[0].mxu0
        %7016 = vmatprep.mubr.bf16.mxu0 0
        %7017 = vmatmul.mubr.bf16.gmra.mrb[0].mxu0 %v6971
        %v7018 = vpop.f32.mrb[0].mxu0
        %v7019 = vadd.f32 0.0, %v7018
        %v7020 = vpop.f32.mrb[0].mxu0
        %v7021 = vpop.f32.mrb[0].mxu0
        %v7022 = vadd.f32 0.0, %v7021
        %v7023 = vpop.f32.mrb[0].mxu0
        %7024 = vmatprep.mubr.bf16.mxu0 0
        %7025 = vmatmul.mubr.bf16.gmra.mrb[0].mxu0 %v6974
        %v7026 = vpop.f32.mrb[0].mxu0
        %v7027 = vadd.f32 0.0, %v7026
        %v7028 = vpop.f32.mrb[0].mxu0
        %v7029 = vpop.f32.mrb[0].mxu0
        %v7030 = vadd.f32 0.0, %v7029
        %v7031 = vpop.f32.mrb[0].mxu0
        %7032 = vdwg.mxu0
        %v7033 = vmax.f32 %v6939, %v7011
        %v7034 = vmax.f32 %v6940, %v7014
        %v7035 = vmax.f32 %v6941, %v7019
        %v7036 = vmax.f32 %v6942, %v7022
        %v7037 = vmax.f32 %v6943, %v7027
        %v7038 = vmax.f32 %v6944, %v7030
        %s7039 = scalar_lea.vmem %s8, 72
        %v7040 = vld [vmem:[%s7039] sm:$0xf]
        %v7041 = vld [vmem:[%s7039 + $0x4] sm:$0xf]
        %v7042 = vld [vmem:[%s7039 + $0x8] sm:$0xf]
        %v7043 = vld [vmem:[%s7039 + $0xc] sm:$0xf]
        %v7044 = vld [vmem:[%s7039 + $0x10] sm:$0xf]
        %v7045 = vld [vmem:[%s7039 + $0x14] sm:$0x1]
        %v7052 = vunpack.c.l.b16 %v7040
        %v7053 = vunpack.c.l.b16 %v7041
        %v7054 = vunpack.c.l.b16 %v7042
        %v7055 = vunpack.c.l.b16 %v7043
        %v7056 = vunpack.c.l.b16 %v7044
        %v7057 = vunpack.c.l.b16 %v7045
        %v7058 = vpack.c.b16 %v7053, %v7052
        %v7059 = vpack.c.b16 %v7055, %v7054
        %v7060 = vpack.c.b16 %v7057, %v7056
        %v7062 = vsel %vm6784, %v7058, 0
        %v7065 = vsel %vm6784, %v7059, 0
        %v7068 = vsel %vm6784, %v7060, 0
        %7070 = vmatprep.subr.bf16.mxu0 0
        %7071 = vmatpush1.bf16.msra.mxu0 %v6758
        %7072 = vmatprep.subr.bf16.mxu0 0
        %7073 = vmatpush1.bf16.msra.mxu0 %v6759
        %7074 = vmatprep.subr.bf16.mxu0 0
        %7075 = vmatpush1.bf16.msra.mxu0 %v6760
        %7076 = vmatprep.subr.bf16.mxu0 0
        %7077 = vmatpush1.bf16.msra.mxu0 %v6761
        %7078 = vmatprep.subr.bf16.mxu0 0
        %7079 = vmatpush1.bf16.msra.mxu0 %v6762
        %7080 = vmatprep.subr.bf16.mxu0 0
        %7081 = vmatpush1.bf16.msra.mxu0 0
        %7082 = vmatprep.subr.bf16.mxu0 0
        %7083 = vmatpush1.bf16.msra.mxu0 0
        %7084 = vmatprep.subr.bf16.mxu0 0
        %7085 = vmatpush1.bf16.msra.mxu0 0
        %7086 = vmatprep.subr.bf16.mxu0 0
        %7087 = vmatpush1.bf16.msra.mxu0 0
        %7088 = vmatprep.subr.bf16.mxu0 0
        %7089 = vmatpush1.bf16.msra.mxu0 0
        %7090 = vmatprep.subr.bf16.mxu0 0
        %7091 = vmatpush1.bf16.msra.mxu0 0
        %7092 = vmatprep.subr.bf16.mxu0 0
        %7093 = vmatpush1.bf16.msra.mxu0 0
        %7094 = vmatprep.subr.bf16.mxu0 0
        %7095 = vmatpush1.bf16.msra.mxu0 0
        %7096 = vmatprep.subr.bf16.mxu0 0
        %7097 = vmatpush1.bf16.msra.mxu0 0
        %7098 = vmatprep.subr.bf16.mxu0 0
        %7099 = vmatpush1.bf16.msra.mxu0 0
        %7100 = vmatprep.subr.bf16.mxu0 0
        %7101 = vmatpush1.bf16.msra.mxu0 0
        %7102 = vmatprep.mubr.bf16.mxu0 0
        %7103 = vmatmul.mubr.bf16.gmra.mrb[0].mxu0 %v7062
        %v7104 = vpop.f32.mrb[0].mxu0
        %v7105 = vadd.f32 0.0, %v7104
        %v7106 = vpop.f32.mrb[0].mxu0
        %v7107 = vpop.f32.mrb[0].mxu0
        %v7108 = vadd.f32 0.0, %v7107
        %v7109 = vpop.f32.mrb[0].mxu0
        %7110 = vmatprep.mubr.bf16.mxu0 0
        %7111 = vmatmul.mubr.bf16.gmra.mrb[0].mxu0 %v7065
        %v7112 = vpop.f32.mrb[0].mxu0
        %v7113 = vadd.f32 0.0, %v7112
        %v7114 = vpop.f32.mrb[0].mxu0
        %v7115 = vpop.f32.mrb[0].mxu0
        %v7116 = vadd.f32 0.0, %v7115
        %v7117 = vpop.f32.mrb[0].mxu0
        %7118 = vmatprep.mubr.bf16.mxu0 0
        %7119 = vmatmul.mubr.bf16.gmra.mrb[0].mxu0 %v7068
        %v7120 = vpop.f32.mrb[0].mxu0
        %v7121 = vadd.f32 0.0, %v7120
        %v7122 = vpop.f32.mrb[0].mxu0
        %v7123 = vpop.f32.mrb[0].mxu0
        %v7124 = vadd.f32 0.0, %v7123
        %v7125 = vpop.f32.mrb[0].mxu0
        %7126 = vdwg.mxu0
        %v7127 = vmax.f32 %v7033, %v7105
        %v7128 = vmax.f32 %v7034, %v7108
        %v7129 = vmax.f32 %v7035, %v7113
        %v7130 = vmax.f32 %v7036, %v7116
        %v7131 = vmax.f32 %v7037, %v7121
        %v7132 = vmax.f32 %v7038, %v7124
        %v7133 = vpack.c.bf16 %v7128, %v7127
        %v7134 = vpack.c.bf16 %v7130, %v7129
        %v7135 = vpack.c.bf16 %v7132, %v7131
        %v7136 = vld [vmem:[%s9] sm:$0xf]
        %v7137 = vld [vmem:[%s9 + $0x4] sm:$0xf]
        %v7138 = vld [vmem:[%s9 + $0x8] sm:$0xf]
        %v7139 = vld [vmem:[%s9 + $0xc] sm:$0xf]
        %s7140 = scalar_lea.vmem %s9, 16
        %v7141 = vld [vmem:[%s7140] sm:$0xf]
        %v7142 = vld [vmem:[%s7140 + $0x4] sm:$0xf]
        %v7143 = vld [vmem:[%s7140 + $0x8] sm:$0xf]
        %v7144 = vld [vmem:[%s7140 + $0xc] sm:$0xf]
        %v7146 = vshrl.u32 %v7133, 16
        %v7148 = vshll.u32 %v7133, 16
        %v7150 = vrot.slane %v7148, 1
        %v7151 = vor.u32 %v7146, %v7150
        %v7153 = vshll.u32 %v7134, 16
        %v7155 = vrot.slane %v7153, 1
        %v7156 = vsel %vm707, %v7151, %v7155
        %v7157 = vshrl.u32 %v7134, 16
        %v7159 = vor.u32 %v7157, %v7155
        %v7164 = vunpack.c.l.b16 %v7141
        %v7165 = vunpack.c.l.b16 %v7142
        %v7166 = vunpack.c.l.b16 %v7143
        %v7167 = vunpack.c.l.b16 %v7144
        %v7168 = vpack.c.b16 %v7165, %v7164
        %v7169 = vpack.c.b16 %v7167, %v7166
        %v7173 = vsel %vm4295, %v7156, 0
        %v7176 = vsel %vm4295, %v7159, 0
        %7178 = vmatprep.subr.bf16.mxu0 0
        %7179 = vmatpush1.bf16.msra.mxu0 %v7168
        %7180 = vmatprep.subr.bf16.mxu0 0
        %7181 = vmatpush1.bf16.msra.mxu0 %v7169
        %7182 = vmatprep.subr.bf16.mxu0 0
        %7183 = vmatpush1.bf16.msra.mxu0 0
        %7184 = vmatprep.subr.bf16.mxu0 0
        %7185 = vmatpush1.bf16.msra.mxu0 0
        %7186 = vmatprep.subr.bf16.mxu0 0
        %7187 = vmatpush1.bf16.msra.mxu0 0
        %7188 = vmatprep.subr.bf16.mxu0 0
        %7189 = vmatpush1.bf16.msra.mxu0 0
        %7190 = vmatprep.subr.bf16.mxu0 0
        %7191 = vmatpush1.bf16.msra.mxu0 0
        %7192 = vmatprep.subr.bf16.mxu0 0
        %7193 = vmatpush1.bf16.msra.mxu0 0
        %7194 = vmatprep.subr.bf16.mxu0 0
        %7195 = vmatpush1.bf16.msra.mxu0 0
        %7196 = vmatprep.subr.bf16.mxu0 0
        %7197 = vmatpush1.bf16.msra.mxu0 0
        %7198 = vmatprep.subr.bf16.mxu0 0
        %7199 = vmatpush1.bf16.msra.mxu0 0
        %7200 = vmatprep.subr.bf16.mxu0 0
        %7201 = vmatpush1.bf16.msra.mxu0 0
        %7202 = vmatprep.subr.bf16.mxu0 0
        %7203 = vmatpush1.bf16.msra.mxu0 0
        %7204 = vmatprep.subr.bf16.mxu0 0
        %7205 = vmatpush1.bf16.msra.mxu0 0
        %7206 = vmatprep.subr.bf16.mxu0 0
        %7207 = vmatpush1.bf16.msra.mxu0 0
        %7208 = vmatprep.subr.bf16.mxu0 0
        %7209 = vmatpush1.bf16.msra.mxu0 0
        %7210 = vmatprep.mubr.bf16.mxu0 0
        %7211 = vmatmul.mubr.bf16.gmra.mrb[0].mxu0 %v7173
        %v7212 = vpop.f32.mrb[0].mxu0
        %v7213 = vadd.f32 0.0, %v7212
        %v7214 = vpop.f32.mrb[0].mxu0
        %v7215 = vpop.f32.mrb[0].mxu0
        %v7216 = vadd.f32 0.0, %v7215
        %v7217 = vpop.f32.mrb[0].mxu0
        %7218 = vmatprep.mubr.bf16.mxu0 0
        %7219 = vmatmul.mubr.bf16.gmra.mrb[0].mxu0 %v7176
        %v7220 = vpop.f32.mrb[0].mxu0
        %v7221 = vadd.f32 0.0, %v7220
        %v7222 = vpop.f32.mrb[0].mxu0
        %v7223 = vpop.f32.mrb[0].mxu0
        %v7224 = vpop.f32.mrb[0].mxu0
        %7225 = vdwg.mxu0
        %v7230 = vunpack.c.l.b16 %v7136
        %v7231 = vunpack.c.l.b16 %v7137
        %v7232 = vunpack.c.l.b16 %v7138
        %v7233 = vunpack.c.l.b16 %v7139
        %v7234 = vpack.c.b16 %v7231, %v7230
        %v7235 = vpack.c.b16 %v7233, %v7232
        %v7238 = vsel %vm4295, %v7133, 0
        %v7240 = vsel %vm4295, %v7134, 0
        %7242 = vmatprep.subr.bf16.mxu0 0
        %7243 = vmatpush1.bf16.msra.mxu0 %v7234
        %7244 = vmatprep.subr.bf16.mxu0 0
        %7245 = vmatpush1.bf16.msra.mxu0 %v7235
        %7246 = vmatprep.subr.bf16.mxu0 0
        %7247 = vmatpush1.bf16.msra.mxu0 0
        %7248 = vmatprep.subr.bf16.mxu0 0
        %7249 = vmatpush1.bf16.msra.mxu0 0
        %7250 = vmatprep.subr.bf16.mxu0 0
        %7251 = vmatpush1.bf16.msra.mxu0 0
        %7252 = vmatprep.subr.bf16.mxu0 0
        %7253 = vmatpush1.bf16.msra.mxu0 0
        %7254 = vmatprep.subr.bf16.mxu0 0
        %7255 = vmatpush1.bf16.msra.mxu0 0
        %7256 = vmatprep.subr.bf16.mxu0 0
        %7257 = vmatpush1.bf16.msra.mxu0 0
        %7258 = vmatprep.subr.bf16.mxu0 0
        %7259 = vmatpush1.bf16.msra.mxu0 0
        %7260 = vmatprep.subr.bf16.mxu0 0
        %7261 = vmatpush1.bf16.msra.mxu0 0
        %7262 = vmatprep.subr.bf16.mxu0 0
        %7263 = vmatpush1.bf16.msra.mxu0 0
        %7264 = vmatprep.subr.bf16.mxu0 0
        %7265 = vmatpush1.bf16.msra.mxu0 0
        %7266 = vmatprep.subr.bf16.mxu0 0
        %7267 = vmatpush1.bf16.msra.mxu0 0
        %7268 = vmatprep.subr.bf16.mxu0 0
        %7269 = vmatpush1.bf16.msra.mxu0 0
        %7270 = vmatprep.subr.bf16.mxu0 0
        %7271 = vmatpush1.bf16.msra.mxu0 0
        %7272 = vmatprep.subr.bf16.mxu0 0
        %7273 = vmatpush1.bf16.msra.mxu0 0
        %7274 = vmatprep.mubr.bf16.mxu0 0
        %7275 = vmatmul.mubr.bf16.gmra.mrb[0].mxu0 %v7238
        %v7276 = vpop.f32.mrb[0].mxu0
        %v7277 = vadd.f32 %v7213, %v7276
        %v7278 = vpop.f32.mrb[0].mxu0
        %v7279 = vpop.f32.mrb[0].mxu0
        %v7280 = vadd.f32 %v7216, %v7279
        %v7281 = vpop.f32.mrb[0].mxu0
        %7282 = vmatprep.mubr.bf16.mxu0 0
        %7283 = vmatmul.mubr.bf16.gmra.mrb[0].mxu0 %v7240
        %v7284 = vpop.f32.mrb[0].mxu0
        %v7285 = vadd.f32 %v7221, %v7284
        %v7286 = vpop.f32.mrb[0].mxu0
        %v7287 = vpop.f32.mrb[0].mxu0
        %v7288 = vpop.f32.mrb[0].mxu0
        %7289 = vdwg.mxu0
        %s7290 = scalar_lea.vmem %s9, 32
        %v7291 = vld [vmem:[%s7290] sm:$0xf]
        %v7292 = vld [vmem:[%s7290 + $0x4] sm:$0xf]
        %v7293 = vld [vmem:[%s7290 + $0x8] sm:$0xf]
        %v7294 = vld [vmem:[%s7290 + $0xc] sm:$0xf]
        %v7297 = vrot.slane %v7133, 1
        %v7298 = vrot.slane %v7134, 1
        %v7299 = vsel %vm1314, %v7297, %v7298
        %v7304 = vunpack.c.l.b16 %v7291
        %v7305 = vunpack.c.l.b16 %v7292
        %v7306 = vunpack.c.l.b16 %v7293
        %v7307 = vunpack.c.l.b16 %v7294
        %v7308 = vpack.c.b16 %v7305, %v7304
        %v7309 = vpack.c.b16 %v7307, %v7306
        %v7313 = vsel %vm4295, %v7299, 0
        %v7316 = vsel %vm4295, %v7298, 0
        %7318 = vmatprep.subr.bf16.mxu0 0
        %7319 = vmatpush1.bf16.msra.mxu0 %v7308
        %7320 = vmatprep.subr.bf16.mxu0 0
        %7321 = vmatpush1.bf16.msra.mxu0 %v7309
        %7322 = vmatprep.subr.bf16.mxu0 0
        %7323 = vmatpush1.bf16.msra.mxu0 0
        %7324 = vmatprep.subr.bf16.mxu0 0
        %7325 = vmatpush1.bf16.msra.mxu0 0
        %7326 = vmatprep.subr.bf16.mxu0 0
        %7327 = vmatpush1.bf16.msra.mxu0 0
        %7328 = vmatprep.subr.bf16.mxu0 0
        %7329 = vmatpush1.bf16.msra.mxu0 0
        %7330 = vmatprep.subr.bf16.mxu0 0
        %7331 = vmatpush1.bf16.msra.mxu0 0
        %7332 = vmatprep.subr.bf16.mxu0 0
        %7333 = vmatpush1.bf16.msra.mxu0 0
        %7334 = vmatprep.subr.bf16.mxu0 0
        %7335 = vmatpush1.bf16.msra.mxu0 0
        %7336 = vmatprep.subr.bf16.mxu0 0
        %7337 = vmatpush1.bf16.msra.mxu0 0
        %7338 = vmatprep.subr.bf16.mxu0 0
        %7339 = vmatpush1.bf16.msra.mxu0 0
        %7340 = vmatprep.subr.bf16.mxu0 0
        %7341 = vmatpush1.bf16.msra.mxu0 0
        %7342 = vmatprep.subr.bf16.mxu0 0
        %7343 = vmatpush1.bf16.msra.mxu0 0
        %7344 = vmatprep.subr.bf16.mxu0 0
        %7345 = vmatpush1.bf16.msra.mxu0 0
        %7346 = vmatprep.subr.bf16.mxu0 0
        %7347 = vmatpush1.bf16.msra.mxu0 0
        %7348 = vmatprep.subr.bf16.mxu0 0
        %7349 = vmatpush1.bf16.msra.mxu0 0
        %7350 = vmatprep.mubr.bf16.mxu0 0
        %7351 = vmatmul.mubr.bf16.gmra.mrb[0].mxu0 %v7313
        %v7352 = vpop.f32.mrb[0].mxu0
        %v7353 = vadd.f32 0.0, %v7352
        %v7354 = vpop.f32.mrb[0].mxu0
        %v7355 = vpop.f32.mrb[0].mxu0
        %v7356 = vadd.f32 0.0, %v7355
        %v7357 = vpop.f32.mrb[0].mxu0
        %7358 = vmatprep.mubr.bf16.mxu0 0
        %7359 = vmatmul.mubr.bf16.gmra.mrb[0].mxu0 %v7316
        %v7360 = vpop.f32.mrb[0].mxu0
        %v7361 = vadd.f32 0.0, %v7360
        %v7362 = vpop.f32.mrb[0].mxu0
        %v7363 = vpop.f32.mrb[0].mxu0
        %v7364 = vpop.f32.mrb[0].mxu0
        %7365 = vdwg.mxu0
        %v7366 = vadd.f32 %v7277, %v7353
        %v7367 = vadd.f32 %v7280, %v7356
        %v7368 = vadd.f32 %v7285, %v7361
        %s7369 = scalar_lea.vmem %s9, 48
        %v7370 = vld [vmem:[%s7369] sm:$0xf]
        %v7371 = vld [vmem:[%s7369 + $0x4] sm:$0xf]
        %v7372 = vld [vmem:[%s7369 + $0x8] sm:$0xf]
        %v7373 = vld [vmem:[%s7369 + $0xc] sm:$0xf]
        %v7374 = vrot.slane %v7133, 3
        %v7375 = vrot.slane %v7134, 3
        %v7376 = vsel %vm3714, %v7374, %v7375
        %v7381 = vunpack.c.l.b16 %v7370
        %v7382 = vunpack.c.l.b16 %v7371
        %v7383 = vunpack.c.l.b16 %v7372
        %v7384 = vunpack.c.l.b16 %v7373
        %v7385 = vpack.c.b16 %v7382, %v7381
        %v7386 = vpack.c.b16 %v7384, %v7383
        %v7390 = vsel %vm4295, %v7376, 0
        %v7393 = vsel %vm4295, %v7375, 0
        %7395 = vmatprep.subr.bf16.mxu0 0
        %7396 = vmatpush1.bf16.msra.mxu0 %v7385
        %7397 = vmatprep.subr.bf16.mxu0 0
        %7398 = vmatpush1.bf16.msra.mxu0 %v7386
        %7399 = vmatprep.subr.bf16.mxu0 0
        %7400 = vmatpush1.bf16.msra.mxu0 0
        %7401 = vmatprep.subr.bf16.mxu0 0
        %7402 = vmatpush1.bf16.msra.mxu0 0
        %7403 = vmatprep.subr.bf16.mxu0 0
        %7404 = vmatpush1.bf16.msra.mxu0 0
        %7405 = vmatprep.subr.bf16.mxu0 0
        %7406 = vmatpush1.bf16.msra.mxu0 0
        %7407 = vmatprep.subr.bf16.mxu0 0
        %7408 = vmatpush1.bf16.msra.mxu0 0
        %7409 = vmatprep.subr.bf16.mxu0 0
        %7410 = vmatpush1.bf16.msra.mxu0 0
        %7411 = vmatprep.subr.bf16.mxu0 0
        %7412 = vmatpush1.bf16.msra.mxu0 0
        %7413 = vmatprep.subr.bf16.mxu0 0
        %7414 = vmatpush1.bf16.msra.mxu0 0
        %7415 = vmatprep.subr.bf16.mxu0 0
        %7416 = vmatpush1.bf16.msra.mxu0 0
        %7417 = vmatprep.subr.bf16.mxu0 0
        %7418 = vmatpush1.bf16.msra.mxu0 0
        %7419 = vmatprep.subr.bf16.mxu0 0
        %7420 = vmatpush1.bf16.msra.mxu0 0
        %7421 = vmatprep.subr.bf16.mxu0 0
        %7422 = vmatpush1.bf16.msra.mxu0 0
        %7423 = vmatprep.subr.bf16.mxu0 0
        %7424 = vmatpush1.bf16.msra.mxu0 0
        %7425 = vmatprep.subr.bf16.mxu0 0
        %7426 = vmatpush1.bf16.msra.mxu0 0
        %7427 = vmatprep.mubr.bf16.mxu0 0
        %7428 = vmatmul.mubr.bf16.gmra.mrb[0].mxu0 %v7390
        %v7429 = vpop.f32.mrb[0].mxu0
        %v7430 = vadd.f32 0.0, %v7429
        %v7431 = vpop.f32.mrb[0].mxu0
        %v7432 = vpop.f32.mrb[0].mxu0
        %v7433 = vadd.f32 0.0, %v7432
        %v7434 = vpop.f32.mrb[0].mxu0
        %7435 = vmatprep.mubr.bf16.mxu0 0
        %7436 = vmatmul.mubr.bf16.gmra.mrb[0].mxu0 %v7393
        %v7437 = vpop.f32.mrb[0].mxu0
        %v7438 = vadd.f32 0.0, %v7437
        %v7439 = vpop.f32.mrb[0].mxu0
        %v7440 = vpop.f32.mrb[0].mxu0
        %v7441 = vpop.f32.mrb[0].mxu0
        %7442 = vdwg.mxu0
        %v7443 = vadd.f32 %v7366, %v7430
        %v7444 = vadd.f32 %v7367, %v7433
        %v7445 = vadd.f32 %v7368, %v7438
        %s7446 = scalar_lea.vmem %s9, 64
        %v7447 = vld [vmem:[%s7446] sm:$0xf]
        %v7448 = vld [vmem:[%s7446 + $0x4] sm:$0xf]
        %v7449 = vld [vmem:[%s7446 + $0x8] sm:$0xf]
        %v7450 = vld [vmem:[%s7446 + $0xc] sm:$0xf]
        %vm7451 = vsmask.f32 4352
        %v7452 = vrot.slane %v7146, 3
        %v7453 = vrot.slane %v7148, 4
        %v7454 = vor.u32 %v7452, %v7453
        %v7455 = vrot.slane %v7157, 3
        %v7456 = vrot.slane %v7153, 4
        %v7457 = vor.u32 %v7455, %v7456
        %v7458 = vsel %vm7451, %v7454, %v7457
        %v7463 = vunpack.c.l.b16 %v7447
        %v7464 = vunpack.c.l.b16 %v7448
        %v7465 = vunpack.c.l.b16 %v7449
        %v7466 = vunpack.c.l.b16 %v7450
        %v7467 = vpack.c.b16 %v7464, %v7463
        %v7468 = vpack.c.b16 %v7466, %v7465
        %v7472 = vsel %vm4295, %v7458, 0
        %v7475 = vsel %vm4295, %v7457, 0
        %7477 = vmatprep.subr.bf16.mxu0 0
        %7478 = vmatpush1.bf16.msra.mxu0 %v7467
        %7479 = vmatprep.subr.bf16.mxu0 0
        %7480 = vmatpush1.bf16.msra.mxu0 %v7468
        %7481 = vmatprep.subr.bf16.mxu0 0
        %7482 = vmatpush1.bf16.msra.mxu0 0
        %7483 = vmatprep.subr.bf16.mxu0 0
        %7484 = vmatpush1.bf16.msra.mxu0 0
        %7485 = vmatprep.subr.bf16.mxu0 0
        %7486 = vmatpush1.bf16.msra.mxu0 0
        %7487 = vmatprep.subr.bf16.mxu0 0
        %7488 = vmatpush1.bf16.msra.mxu0 0
        %7489 = vmatprep.subr.bf16.mxu0 0
        %7490 = vmatpush1.bf16.msra.mxu0 0
        %7491 = vmatprep.subr.bf16.mxu0 0
        %7492 = vmatpush1.bf16.msra.mxu0 0
        %7493 = vmatprep.subr.bf16.mxu0 0
        %7494 = vmatpush1.bf16.msra.mxu0 0
        %7495 = vmatprep.subr.bf16.mxu0 0
        %7496 = vmatpush1.bf16.msra.mxu0 0
        %7497 = vmatprep.subr.bf16.mxu0 0
        %7498 = vmatpush1.bf16.msra.mxu0 0
        %7499 = vmatprep.subr.bf16.mxu0 0
        %7500 = vmatpush1.bf16.msra.mxu0 0
        %7501 = vmatprep.subr.bf16.mxu0 0
        %7502 = vmatpush1.bf16.msra.mxu0 0
        %7503 = vmatprep.subr.bf16.mxu0 0
        %7504 = vmatpush1.bf16.msra.mxu0 0
        %7505 = vmatprep.subr.bf16.mxu0 0
        %7506 = vmatpush1.bf16.msra.mxu0 0
        %7507 = vmatprep.subr.bf16.mxu0 0
        %7508 = vmatpush1.bf16.msra.mxu0 0
        %7509 = vmatprep.mubr.bf16.mxu0 0
        %7510 = vmatmul.mubr.bf16.gmra.mrb[0].mxu0 %v7472
        %v7511 = vpop.f32.mrb[0].mxu0
        %v7512 = vadd.f32 0.0, %v7511
        %v7513 = vpop.f32.mrb[0].mxu0
        %v7514 = vpop.f32.mrb[0].mxu0
        %v7515 = vadd.f32 0.0, %v7514
        %v7516 = vpop.f32.mrb[0].mxu0
        %7517 = vmatprep.mubr.bf16.mxu0 0
        %7518 = vmatmul.mubr.bf16.gmra.mrb[0].mxu0 %v7475
        %v7519 = vpop.f32.mrb[0].mxu0
        %v7520 = vadd.f32 0.0, %v7519
        %v7521 = vpop.f32.mrb[0].mxu0
        %v7522 = vpop.f32.mrb[0].mxu0
        %v7523 = vpop.f32.mrb[0].mxu0
        %7524 = vdwg.mxu0
        %v7525 = vadd.f32 %v7443, %v7512
        %v7526 = vadd.f32 %v7444, %v7515
        %v7527 = vadd.f32 %v7445, %v7520
        %s7528 = scalar_lea.vmem %s9, 80
        %v7529 = vld [vmem:[%s7528] sm:$0xf]
        %v7530 = vld [vmem:[%s7528 + $0x4] sm:$0xf]
        %v7531 = vld [vmem:[%s7528 + $0x8] sm:$0xf]
        %v7532 = vld [vmem:[%s7528 + $0xc] sm:$0xf]
        %vm7533 = vcmask 1043456
        %v7534 = vrot.slane %v7133, 4
        %v7535 = vrot.slane %v7134, 4
        %v7536 = vsel %vm7533, %v7534, %v7535
        %v7541 = vunpack.c.l.b16 %v7529
        %v7542 = vunpack.c.l.b16 %v7530
        %v7543 = vunpack.c.l.b16 %v7531
        %v7544 = vunpack.c.l.b16 %v7532
        %v7545 = vpack.c.b16 %v7542, %v7541
        %v7546 = vpack.c.b16 %v7544, %v7543
        %v7550 = vsel %vm4295, %v7536, 0
        %v7553 = vsel %vm4295, %v7535, 0
        %7555 = vmatprep.subr.bf16.mxu0 0
        %7556 = vmatpush1.bf16.msra.mxu0 %v7545
        %7557 = vmatprep.subr.bf16.mxu0 0
        %7558 = vmatpush1.bf16.msra.mxu0 %v7546
        %7559 = vmatprep.subr.bf16.mxu0 0
        %7560 = vmatpush1.bf16.msra.mxu0 0
        %7561 = vmatprep.subr.bf16.mxu0 0
        %7562 = vmatpush1.bf16.msra.mxu0 0
        %7563 = vmatprep.subr.bf16.mxu0 0
        %7564 = vmatpush1.bf16.msra.mxu0 0
        %7565 = vmatprep.subr.bf16.mxu0 0
        %7566 = vmatpush1.bf16.msra.mxu0 0
        %7567 = vmatprep.subr.bf16.mxu0 0
        %7568 = vmatpush1.bf16.msra.mxu0 0
        %7569 = vmatprep.subr.bf16.mxu0 0
        %7570 = vmatpush1.bf16.msra.mxu0 0
        %7571 = vmatprep.subr.bf16.mxu0 0
        %7572 = vmatpush1.bf16.msra.mxu0 0
        %7573 = vmatprep.subr.bf16.mxu0 0
        %7574 = vmatpush1.bf16.msra.mxu0 0
        %7575 = vmatprep.subr.bf16.mxu0 0
        %7576 = vmatpush1.bf16.msra.mxu0 0
        %7577 = vmatprep.subr.bf16.mxu0 0
        %7578 = vmatpush1.bf16.msra.mxu0 0
        %7579 = vmatprep.subr.bf16.mxu0 0
        %7580 = vmatpush1.bf16.msra.mxu0 0
        %7581 = vmatprep.subr.bf16.mxu0 0
        %7582 = vmatpush1.bf16.msra.mxu0 0
        %7583 = vmatprep.subr.bf16.mxu0 0
        %7584 = vmatpush1.bf16.msra.mxu0 0
        %7585 = vmatprep.subr.bf16.mxu0 0
        %7586 = vmatpush1.bf16.msra.mxu0 0
        %7587 = vmatprep.mubr.bf16.mxu0 0
        %7588 = vmatmul.mubr.bf16.gmra.mrb[0].mxu0 %v7550
        %v7589 = vpop.f32.mrb[0].mxu0
        %v7590 = vadd.f32 0.0, %v7589
        %v7591 = vpop.f32.mrb[0].mxu0
        %v7592 = vpop.f32.mrb[0].mxu0
        %v7593 = vadd.f32 0.0, %v7592
        %v7594 = vpop.f32.mrb[0].mxu0
        %7595 = vmatprep.mubr.bf16.mxu0 0
        %7596 = vmatmul.mubr.bf16.gmra.mrb[0].mxu0 %v7553
        %v7597 = vpop.f32.mrb[0].mxu0
        %v7598 = vadd.f32 0.0, %v7597
        %v7599 = vpop.f32.mrb[0].mxu0
        %v7600 = vpop.f32.mrb[0].mxu0
        %v7601 = vpop.f32.mrb[0].mxu0
        %7602 = vdwg.mxu0
        %v7603 = vadd.f32 %v7525, %v7590
        %v7604 = vadd.f32 %v7526, %v7593
        %v7605 = vadd.f32 %v7527, %v7598
        %s7606 = scalar_lea.vmem %s9, 96
        %v7607 = vld [vmem:[%s7606] sm:$0xf]
        %v7608 = vld [vmem:[%s7606 + $0x4] sm:$0xf]
        %v7609 = vld [vmem:[%s7606 + $0x8] sm:$0xf]
        %v7610 = vld [vmem:[%s7606 + $0xc] sm:$0xf]
        %v7612 = vrot.slane %v7133, 6
        %v7613 = vrot.slane %v7134, 6
        %v7614 = vsel %vm6196, %v7612, %v7613
        %v7615 = vrot.slane %v7135, 6
        %v7616 = vsel %vm6196, %v7613, %v7615
        %v7621 = vunpack.c.l.b16 %v7607
        %v7622 = vunpack.c.l.b16 %v7608
        %v7623 = vunpack.c.l.b16 %v7609
        %v7624 = vunpack.c.l.b16 %v7610
        %v7625 = vpack.c.b16 %v7622, %v7621
        %v7626 = vpack.c.b16 %v7624, %v7623
        %v7630 = vsel %vm4295, %v7614, 0
        %v7633 = vsel %vm4295, %v7616, 0
        %7635 = vmatprep.subr.bf16.mxu0 0
        %7636 = vmatpush1.bf16.msra.mxu0 %v7625
        %7637 = vmatprep.subr.bf16.mxu0 0
        %7638 = vmatpush1.bf16.msra.mxu0 %v7626
        %7639 = vmatprep.subr.bf16.mxu0 0
        %7640 = vmatpush1.bf16.msra.mxu0 0
        %7641 = vmatprep.subr.bf16.mxu0 0
        %7642 = vmatpush1.bf16.msra.mxu0 0
        %7643 = vmatprep.subr.bf16.mxu0 0
        %7644 = vmatpush1.bf16.msra.mxu0 0
        %7645 = vmatprep.subr.bf16.mxu0 0
        %7646 = vmatpush1.bf16.msra.mxu0 0
        %7647 = vmatprep.subr.bf16.mxu0 0
        %7648 = vmatpush1.bf16.msra.mxu0 0
        %7649 = vmatprep.subr.bf16.mxu0 0
        %7650 = vmatpush1.bf16.msra.mxu0 0
        %7651 = vmatprep.subr.bf16.mxu0 0
        %7652 = vmatpush1.bf16.msra.mxu0 0
        %7653 = vmatprep.subr.bf16.mxu0 0
        %7654 = vmatpush1.bf16.msra.mxu0 0
        %7655 = vmatprep.subr.bf16.mxu0 0
        %7656 = vmatpush1.bf16.msra.mxu0 0
        %7657 = vmatprep.subr.bf16.mxu0 0
        %7658 = vmatpush1.bf16.msra.mxu0 0
        %7659 = vmatprep.subr.bf16.mxu0 0
        %7660 = vmatpush1.bf16.msra.mxu0 0
        %7661 = vmatprep.subr.bf16.mxu0 0
        %7662 = vmatpush1.bf16.msra.mxu0 0
        %7663 = vmatprep.subr.bf16.mxu0 0
        %7664 = vmatpush1.bf16.msra.mxu0 0
        %7665 = vmatprep.subr.bf16.mxu0 0
        %7666 = vmatpush1.bf16.msra.mxu0 0
        %7667 = vmatprep.mubr.bf16.mxu0 0
        %7668 = vmatmul.mubr.bf16.gmra.mrb[0].mxu0 %v7630
        %v7669 = vpop.f32.mrb[0].mxu0
        %v7670 = vadd.f32 0.0, %v7669
        %v7671 = vpop.f32.mrb[0].mxu0
        %v7672 = vpop.f32.mrb[0].mxu0
        %v7673 = vadd.f32 0.0, %v7672
        %v7674 = vpop.f32.mrb[0].mxu0
        %7675 = vmatprep.mubr.bf16.mxu0 0
        %7676 = vmatmul.mubr.bf16.gmra.mrb[0].mxu0 %v7633
        %v7677 = vpop.f32.mrb[0].mxu0
        %v7678 = vadd.f32 0.0, %v7677
        %v7679 = vpop.f32.mrb[0].mxu0
        %v7680 = vpop.f32.mrb[0].mxu0
        %v7681 = vpop.f32.mrb[0].mxu0
        %7682 = vdwg.mxu0
        %v7683 = vadd.f32 %v7603, %v7670
        %v7684 = vadd.f32 %v7604, %v7673
        %v7685 = vadd.f32 %v7605, %v7678
        %s7686 = scalar_lea.vmem %s9, 112
        %v7687 = vld [vmem:[%s7686] sm:$0xf]
        %v7688 = vld [vmem:[%s7686 + $0x4] sm:$0xf]
        %v7689 = vld [vmem:[%s7686 + $0x8] sm:$0xf]
        %v7690 = vld [vmem:[%s7686 + $0xc] sm:$0xf]
        %vm7691 = vsmask.f32 1280
        %v7692 = vrot.slane %v7146, 6
        %v7693 = vrot.slane %v7148, 7
        %v7694 = vor.u32 %v7692, %v7693
        %v7695 = vrot.slane %v7157, 6
        %v7696 = vrot.slane %v7153, 7
        %v7697 = vor.u32 %v7695, %v7696
        %v7698 = vsel %vm7691, %v7694, %v7697
        %v7700 = vshrl.u32 %v7135, 16
        %v7702 = vrot.slane %v7700, 6
        %v7703 = vshll.u32 %v7135, 16
        %v7705 = vrot.slane %v7703, 7
        %v7706 = vor.u32 %v7702, %v7705
        %v7707 = vsel %vm7691, %v7697, %v7706
        %v7712 = vunpack.c.l.b16 %v7687
        %v7713 = vunpack.c.l.b16 %v7688
        %v7714 = vunpack.c.l.b16 %v7689
        %v7715 = vunpack.c.l.b16 %v7690
        %v7716 = vpack.c.b16 %v7713, %v7712
        %v7717 = vpack.c.b16 %v7715, %v7714
        %v7721 = vsel %vm4295, %v7698, 0
        %v7724 = vsel %vm4295, %v7707, 0
        %7726 = vmatprep.subr.bf16.mxu0 0
        %7727 = vmatpush1.bf16.msra.mxu0 %v7716
        %7728 = vmatprep.subr.bf16.mxu0 0
        %7729 = vmatpush1.bf16.msra.mxu0 %v7717
        %7730 = vmatprep.subr.bf16.mxu0 0
        %7731 = vmatpush1.bf16.msra.mxu0 0
        %7732 = vmatprep.subr.bf16.mxu0 0
        %7733 = vmatpush1.bf16.msra.mxu0 0
        %7734 = vmatprep.subr.bf16.mxu0 0
        %7735 = vmatpush1.bf16.msra.mxu0 0
        %7736 = vmatprep.subr.bf16.mxu0 0
        %7737 = vmatpush1.bf16.msra.mxu0 0
        %7738 = vmatprep.subr.bf16.mxu0 0
        %7739 = vmatpush1.bf16.msra.mxu0 0
        %7740 = vmatprep.subr.bf16.mxu0 0
        %7741 = vmatpush1.bf16.msra.mxu0 0
        %7742 = vmatprep.subr.bf16.mxu0 0
        %7743 = vmatpush1.bf16.msra.mxu0 0
        %7744 = vmatprep.subr.bf16.mxu0 0
        %7745 = vmatpush1.bf16.msra.mxu0 0
        %7746 = vmatprep.subr.bf16.mxu0 0
        %7747 = vmatpush1.bf16.msra.mxu0 0
        %7748 = vmatprep.subr.bf16.mxu0 0
        %7749 = vmatpush1.bf16.msra.mxu0 0
        %7750 = vmatprep.subr.bf16.mxu0 0
        %7751 = vmatpush1.bf16.msra.mxu0 0
        %7752 = vmatprep.subr.bf16.mxu0 0
        %7753 = vmatpush1.bf16.msra.mxu0 0
        %7754 = vmatprep.subr.bf16.mxu0 0
        %7755 = vmatpush1.bf16.msra.mxu0 0
        %7756 = vmatprep.subr.bf16.mxu0 0
        %7757 = vmatpush1.bf16.msra.mxu0 0
        %7758 = vmatprep.mubr.bf16.mxu0 0
        %7759 = vmatmul.mubr.bf16.gmra.mrb[0].mxu0 %v7721
        %v7760 = vpop.f32.mrb[0].mxu0
        %v7761 = vadd.f32 0.0, %v7760
        %v7762 = vpop.f32.mrb[0].mxu0
        %v7763 = vpop.f32.mrb[0].mxu0
        %v7764 = vadd.f32 0.0, %v7763
        %v7765 = vpop.f32.mrb[0].mxu0
        %7766 = vmatprep.mubr.bf16.mxu0 0
        %7767 = vmatmul.mubr.bf16.gmra.mrb[0].mxu0 %v7724
        %v7768 = vpop.f32.mrb[0].mxu0
        %v7769 = vadd.f32 0.0, %v7768
        %v7770 = vpop.f32.mrb[0].mxu0
        %v7771 = vpop.f32.mrb[0].mxu0
        %v7772 = vpop.f32.mrb[0].mxu0
        %7773 = vdwg.mxu0
        %v7774 = vadd.f32 %v7683, %v7761
        %v7775 = vadd.f32 %v7684, %v7764
        %v7776 = vadd.f32 %v7685, %v7769
        %s7777 = scalar_lea.vmem %s9, 128
        %v7778 = vld [vmem:[%s7777] sm:$0xf]
        %v7779 = vld [vmem:[%s7777 + $0x4] sm:$0xf]
        %v7780 = vld [vmem:[%s7777 + $0x8] sm:$0xf]
        %v7781 = vld [vmem:[%s7777 + $0xc] sm:$0xf]
        %vm7782 = vcmask 1040384
        %v7783 = vrot.slane %v7133, 7
        %v7784 = vrot.slane %v7134, 7
        %v7785 = vsel %vm7782, %v7783, %v7784
        %v7786 = vrot.slane %v7135, 7
        %v7787 = vsel %vm7782, %v7784, %v7786
        %v7792 = vunpack.c.l.b16 %v7778
        %v7793 = vunpack.c.l.b16 %v7779
        %v7794 = vunpack.c.l.b16 %v7780
        %v7795 = vunpack.c.l.b16 %v7781
        %v7796 = vpack.c.b16 %v7793, %v7792
        %v7797 = vpack.c.b16 %v7795, %v7794
        %v7801 = vsel %vm4295, %v7785, 0
        %v7804 = vsel %vm4295, %v7787, 0
        %7806 = vmatprep.subr.bf16.mxu0 0
        %7807 = vmatpush1.bf16.msra.mxu0 %v7796
        %7808 = vmatprep.subr.bf16.mxu0 0
        %7809 = vmatpush1.bf16.msra.mxu0 %v7797
        %7810 = vmatprep.subr.bf16.mxu0 0
        %7811 = vmatpush1.bf16.msra.mxu0 0
        %7812 = vmatprep.subr.bf16.mxu0 0
        %7813 = vmatpush1.bf16.msra.mxu0 0
        %7814 = vmatprep.subr.bf16.mxu0 0
        %7815 = vmatpush1.bf16.msra.mxu0 0
        %7816 = vmatprep.subr.bf16.mxu0 0
        %7817 = vmatpush1.bf16.msra.mxu0 0
        %7818 = vmatprep.subr.bf16.mxu0 0
        %7819 = vmatpush1.bf16.msra.mxu0 0
        %7820 = vmatprep.subr.bf16.mxu0 0
        %7821 = vmatpush1.bf16.msra.mxu0 0
        %7822 = vmatprep.subr.bf16.mxu0 0
        %7823 = vmatpush1.bf16.msra.mxu0 0
        %7824 = vmatprep.subr.bf16.mxu0 0
        %7825 = vmatpush1.bf16.msra.mxu0 0
        %7826 = vmatprep.subr.bf16.mxu0 0
        %7827 = vmatpush1.bf16.msra.mxu0 0
        %7828 = vmatprep.subr.bf16.mxu0 0
        %7829 = vmatpush1.bf16.msra.mxu0 0
        %7830 = vmatprep.subr.bf16.mxu0 0
        %7831 = vmatpush1.bf16.msra.mxu0 0
        %7832 = vmatprep.subr.bf16.mxu0 0
        %7833 = vmatpush1.bf16.msra.mxu0 0
        %7834 = vmatprep.subr.bf16.mxu0 0
        %7835 = vmatpush1.bf16.msra.mxu0 0
        %7836 = vmatprep.subr.bf16.mxu0 0
        %7837 = vmatpush1.bf16.msra.mxu0 0
        %7838 = vmatprep.mubr.bf16.mxu0 0
        %7839 = vmatmul.mubr.bf16.gmra.mrb[0].mxu0 %v7801
        %v7840 = vpop.f32.mrb[0].mxu0
        %v7841 = vadd.f32 0.0, %v7840
        %v7842 = vpop.f32.mrb[0].mxu0
        %v7843 = vpop.f32.mrb[0].mxu0
        %v7844 = vadd.f32 0.0, %v7843
        %v7845 = vpop.f32.mrb[0].mxu0
        %7846 = vmatprep.mubr.bf16.mxu0 0
        %7847 = vmatmul.mubr.bf16.gmra.mrb[0].mxu0 %v7804
        %v7848 = vpop.f32.mrb[0].mxu0
        %v7849 = vadd.f32 0.0, %v7848
        %v7850 = vpop.f32.mrb[0].mxu0
        %v7851 = vpop.f32.mrb[0].mxu0
        %v7852 = vpop.f32.mrb[0].mxu0
        %7853 = vdwg.mxu0
        %v7854 = vadd.f32 %v7774, %v7841
        %v7855 = vadd.f32 %v7775, %v7844
        %v7856 = vadd.f32 %v7776, %v7849
        %v7857 = vld [vmem:[%s10] sm:$0x1]
        %v7859 = vlaneseq
        %v7860 = vshrl.u32 %v7859, 7
        %v7861 = vsub.s32 0, %v7860
        %v7862 = vrot.slane %v7857, %v7861
        %v7864 = vmul.f32 %v7854, %v7862
        %v7865 = vmul.f32 %v7855, %v7862
        %v7866 = vmul.f32 %v7856, %v7862
        %v7867 = vld [vmem:[%s11] sm:$0x1]
        %v7869 = vlaneseq
        %v7870 = vshrl.u32 %v7869, 7
        %v7871 = vsub.s32 0, %v7870
        %v7872 = vrot.slane %v7867, %v7871
        %v7874 = vadd.f32 %v7864, %v7872
        %v7875 = vadd.f32 %v7865, %v7872
        %v7876 = vadd.f32 %v7866, %v7872
        %v7877 = vmax.f32 %v7874, 0.0
        %v7878 = vmax.f32 %v7875, 0.0
        %v7879 = vmax.f32 %v7876, 0.0
        %v7880 = vpack.c.bf16 %v7878, %v7877
        %v7881 = vpack.c.bf16 %v7879, %v7879
        %v7882 = vld [vmem:[%s12] sm:$0xf]
        %v7883 = vld [vmem:[%s12 + $0x4] sm:$0xf]
        %v7884 = vld [vmem:[%s12 + $0x8] sm:$0x3]
        %v7888 = vunpack.c.l.b16 %v7882
        %v7889 = vunpack.c.l.b16 %v7883
        %v7890 = vunpack.c.l.b16 %v7884
        %v7891 = vpack.c.b16 %v7889, %v7888
        %v7892 = vpack.c.b16 %v7890, %v7890
        %vm7893 = vcmask 195584
        %v7895 = vsel %vm7893, %v7891, 0
        %v7898 = vsel %vm7893, %v7892, 0
        %v7901 = vsel %vm911, %v7881, 0
        %7903 = vmatprep.subr.bf16.mxu0 0
        %7904 = vmatpush1.bf16.msra.mxu0 %v7880
        %7905 = vmatprep.subr.bf16.mxu0 0
        %7906 = vmatpush1.bf16.msra.mxu0 %v7901
        %7907 = vmatprep.subr.bf16.mxu0 0
        %7908 = vmatpush1.bf16.msra.mxu0 0
        %7909 = vmatprep.subr.bf16.mxu0 0
        %7910 = vmatpush1.bf16.msra.mxu0 0
        %7911 = vmatprep.subr.bf16.mxu0 0
        %7912 = vmatpush1.bf16.msra.mxu0 0
        %7913 = vmatprep.subr.bf16.mxu0 0
        %7914 = vmatpush1.bf16.msra.mxu0 0
        %7915 = vmatprep.subr.bf16.mxu0 0
        %7916 = vmatpush1.bf16.msra.mxu0 0
        %7917 = vmatprep.subr.bf16.mxu0 0
        %7918 = vmatpush1.bf16.msra.mxu0 0
        %7919 = vmatprep.subr.bf16.mxu0 0
        %7920 = vmatpush1.bf16.msra.mxu0 0
        %7921 = vmatprep.subr.bf16.mxu0 0
        %7922 = vmatpush1.bf16.msra.mxu0 0
        %7923 = vmatprep.subr.bf16.mxu0 0
        %7924 = vmatpush1.bf16.msra.mxu0 0
        %7925 = vmatprep.subr.bf16.mxu0 0
        %7926 = vmatpush1.bf16.msra.mxu0 0
        %7927 = vmatprep.subr.bf16.mxu0 0
        %7928 = vmatpush1.bf16.msra.mxu0 0
        %7929 = vmatprep.subr.bf16.mxu0 0
        %7930 = vmatpush1.bf16.msra.mxu0 0
        %7931 = vmatprep.subr.bf16.mxu0 0
        %7932 = vmatpush1.bf16.msra.mxu0 0
        %7933 = vmatprep.subr.bf16.mxu0 0
        %7934 = vmatpush1.bf16.msra.mxu0 0
        %7935 = vmatprep.mubr.bf16.mxu0 0
        %7936 = vmatmul.mubr.bf16.gmra.mrb[0].mxu0 %v7895
        %v7937 = vpop.f32.mrb[0].mxu0
        %v7938 = vadd.f32 0.0, %v7937
        %v7939 = vpop.f32.mrb[0].mxu0
        %v7940 = vpop.f32.mrb[0].mxu0
        %v7941 = vadd.f32 0.0, %v7940
        %v7942 = vpop.f32.mrb[0].mxu0
        %7943 = vmatprep.mubr.bf16.mxu0 0
        %7944 = vmatmul.mubr.bf16.gmra.mrb[0].mxu0 %v7898
        %v7945 = vpop.f32.mrb[0].mxu0
        %v7946 = vadd.f32 0.0, %v7945
        %v7947 = vpop.f32.mrb[0].mxu0
        %v7948 = vpop.f32.mrb[0].mxu0
        %v7949 = vpop.f32.mrb[0].mxu0
        %7950 = vdwg.mxu0
        %s7951 = scalar_lea.vmem %s12, 12
        %v7952 = vld [vmem:[%s7951] sm:$0xf]
        %v7953 = vld [vmem:[%s7951 + $0x4] sm:$0xf]
        %v7954 = vld [vmem:[%s7951 + $0x8] sm:$0x3]
        %v7958 = vunpack.c.l.b16 %v7952
        %v7959 = vunpack.c.l.b16 %v7953
        %v7960 = vunpack.c.l.b16 %v7954
        %v7961 = vpack.c.b16 %v7959, %v7958
        %v7962 = vpack.c.b16 %v7960, %v7960
        %v7964 = vsel %vm7893, %v7961, 0
        %v7967 = vsel %vm7893, %v7962, 0
        %7969 = vmatprep.subr.bf16.mxu0 0
        %7970 = vmatpush1.bf16.msra.mxu0 %v7880
        %7971 = vmatprep.subr.bf16.mxu0 0
        %7972 = vmatpush1.bf16.msra.mxu0 %v7901
        %7973 = vmatprep.subr.bf16.mxu0 0
        %7974 = vmatpush1.bf16.msra.mxu0 0
        %7975 = vmatprep.subr.bf16.mxu0 0
        %7976 = vmatpush1.bf16.msra.mxu0 0
        %7977 = vmatprep.subr.bf16.mxu0 0
        %7978 = vmatpush1.bf16.msra.mxu0 0
        %7979 = vmatprep.subr.bf16.mxu0 0
        %7980 = vmatpush1.bf16.msra.mxu0 0
        %7981 = vmatprep.subr.bf16.mxu0 0
        %7982 = vmatpush1.bf16.msra.mxu0 0
        %7983 = vmatprep.subr.bf16.mxu0 0
        %7984 = vmatpush1.bf16.msra.mxu0 0
        %7985 = vmatprep.subr.bf16.mxu0 0
        %7986 = vmatpush1.bf16.msra.mxu0 0
        %7987 = vmatprep.subr.bf16.mxu0 0
        %7988 = vmatpush1.bf16.msra.mxu0 0
        %7989 = vmatprep.subr.bf16.mxu0 0
        %7990 = vmatpush1.bf16.msra.mxu0 0
        %7991 = vmatprep.subr.bf16.mxu0 0
        %7992 = vmatpush1.bf16.msra.mxu0 0
        %7993 = vmatprep.subr.bf16.mxu0 0
        %7994 = vmatpush1.bf16.msra.mxu0 0
        %7995 = vmatprep.subr.bf16.mxu0 0
        %7996 = vmatpush1.bf16.msra.mxu0 0
        %7997 = vmatprep.subr.bf16.mxu0 0
        %7998 = vmatpush1.bf16.msra.mxu0 0
        %7999 = vmatprep.subr.bf16.mxu0 0
        %8000 = vmatpush1.bf16.msra.mxu0 0
        %8001 = vmatprep.mubr.bf16.mxu0 0
        %8002 = vmatmul.mubr.bf16.gmra.mrb[0].mxu0 %v7964
        %v8003 = vpop.f32.mrb[0].mxu0
        %v8004 = vadd.f32 0.0, %v8003
        %v8005 = vpop.f32.mrb[0].mxu0
        %v8006 = vpop.f32.mrb[0].mxu0
        %v8007 = vadd.f32 0.0, %v8006
        %v8008 = vpop.f32.mrb[0].mxu0
        %8009 = vmatprep.mubr.bf16.mxu0 0
        %8010 = vmatmul.mubr.bf16.gmra.mrb[0].mxu0 %v7967
        %v8011 = vpop.f32.mrb[0].mxu0
        %v8012 = vadd.f32 0.0, %v8011
        %v8013 = vpop.f32.mrb[0].mxu0
        %v8014 = vpop.f32.mrb[0].mxu0
        %v8015 = vpop.f32.mrb[0].mxu0
        %8016 = vdwg.mxu0
        %v8017 = vmax.f32 %v7938, %v8004
        %v8018 = vmax.f32 %v7941, %v8007
        %v8019 = vmax.f32 %v7946, %v8012
        %s8020 = scalar_lea.vmem %s12, 24
        %v8021 = vld [vmem:[%s8020] sm:$0xf]
        %v8022 = vld [vmem:[%s8020 + $0x4] sm:$0xf]
        %v8023 = vld [vmem:[%s8020 + $0x8] sm:$0x3]
        %v8027 = vunpack.c.l.b16 %v8021
        %v8028 = vunpack.c.l.b16 %v8022
        %v8029 = vunpack.c.l.b16 %v8023
        %v8030 = vpack.c.b16 %v8028, %v8027
        %v8031 = vpack.c.b16 %v8029, %v8029
        %v8033 = vsel %vm7893, %v8030, 0
        %v8036 = vsel %vm7893, %v8031, 0
        %8038 = vmatprep.subr.bf16.mxu0 0
        %8039 = vmatpush1.bf16.msra.mxu0 %v7880
        %8040 = vmatprep.subr.bf16.mxu0 0
        %8041 = vmatpush1.bf16.msra.mxu0 %v7901
        %8042 = vmatprep.subr.bf16.mxu0 0
        %8043 = vmatpush1.bf16.msra.mxu0 0
        %8044 = vmatprep.subr.bf16.mxu0 0
        %8045 = vmatpush1.bf16.msra.mxu0 0
        %8046 = vmatprep.subr.bf16.mxu0 0
        %8047 = vmatpush1.bf16.msra.mxu0 0
        %8048 = vmatprep.subr.bf16.mxu0 0
        %8049 = vmatpush1.bf16.msra.mxu0 0
        %8050 = vmatprep.subr.bf16.mxu0 0
        %8051 = vmatpush1.bf16.msra.mxu0 0
        %8052 = vmatprep.subr.bf16.mxu0 0
        %8053 = vmatpush1.bf16.msra.mxu0 0
        %8054 = vmatprep.subr.bf16.mxu0 0
        %8055 = vmatpush1.bf16.msra.mxu0 0
        %8056 = vmatprep.subr.bf16.mxu0 0
        %8057 = vmatpush1.bf16.msra.mxu0 0
        %8058 = vmatprep.subr.bf16.mxu0 0
        %8059 = vmatpush1.bf16.msra.mxu0 0
        %8060 = vmatprep.subr.bf16.mxu0 0
        %8061 = vmatpush1.bf16.msra.mxu0 0
        %8062 = vmatprep.subr.bf16.mxu0 0
        %8063 = vmatpush1.bf16.msra.mxu0 0
        %8064 = vmatprep.subr.bf16.mxu0 0
        %8065 = vmatpush1.bf16.msra.mxu0 0
        %8066 = vmatprep.subr.bf16.mxu0 0
        %8067 = vmatpush1.bf16.msra.mxu0 0
        %8068 = vmatprep.subr.bf16.mxu0 0
        %8069 = vmatpush1.bf16.msra.mxu0 0
        %8070 = vmatprep.mubr.bf16.mxu0 0
        %8071 = vmatmul.mubr.bf16.gmra.mrb[0].mxu0 %v8033
        %v8072 = vpop.f32.mrb[0].mxu0
        %v8073 = vadd.f32 0.0, %v8072
        %v8074 = vpop.f32.mrb[0].mxu0
        %v8075 = vpop.f32.mrb[0].mxu0
        %v8076 = vadd.f32 0.0, %v8075
        %v8077 = vpop.f32.mrb[0].mxu0
        %8078 = vmatprep.mubr.bf16.mxu0 0
        %8079 = vmatmul.mubr.bf16.gmra.mrb[0].mxu0 %v8036
        %v8080 = vpop.f32.mrb[0].mxu0
        %v8081 = vadd.f32 0.0, %v8080
        %v8082 = vpop.f32.mrb[0].mxu0
        %v8083 = vpop.f32.mrb[0].mxu0
        %v8084 = vpop.f32.mrb[0].mxu0
        %8085 = vdwg.mxu0
        %v8086 = vmax.f32 %v8017, %v8073
        %v8087 = vmax.f32 %v8018, %v8076
        %v8088 = vmax.f32 %v8019, %v8081
        %s8089 = scalar_lea.vmem %s12, 36
        %v8090 = vld [vmem:[%s8089] sm:$0xf]
        %v8091 = vld [vmem:[%s8089 + $0x4] sm:$0xf]
        %v8092 = vld [vmem:[%s8089 + $0x8] sm:$0x3]
        %v8096 = vunpack.c.l.b16 %v8090
        %v8097 = vunpack.c.l.b16 %v8091
        %v8098 = vunpack.c.l.b16 %v8092
        %v8099 = vpack.c.b16 %v8097, %v8096
        %v8100 = vpack.c.b16 %v8098, %v8098
        %v8102 = vsel %vm7893, %v8099, 0
        %v8105 = vsel %vm7893, %v8100, 0
        %8107 = vmatprep.subr.bf16.mxu0 0
        %8108 = vmatpush1.bf16.msra.mxu0 %v7880
        %8109 = vmatprep.subr.bf16.mxu0 0
        %8110 = vmatpush1.bf16.msra.mxu0 %v7901
        %8111 = vmatprep.subr.bf16.mxu0 0
        %8112 = vmatpush1.bf16.msra.mxu0 0
        %8113 = vmatprep.subr.bf16.mxu0 0
        %8114 = vmatpush1.bf16.msra.mxu0 0
        %8115 = vmatprep.subr.bf16.mxu0 0
        %8116 = vmatpush1.bf16.msra.mxu0 0
        %8117 = vmatprep.subr.bf16.mxu0 0
        %8118 = vmatpush1.bf16.msra.mxu0 0
        %8119 = vmatprep.subr.bf16.mxu0 0
        %8120 = vmatpush1.bf16.msra.mxu0 0
        %8121 = vmatprep.subr.bf16.mxu0 0
        %8122 = vmatpush1.bf16.msra.mxu0 0
        %8123 = vmatprep.subr.bf16.mxu0 0
        %8124 = vmatpush1.bf16.msra.mxu0 0
        %8125 = vmatprep.subr.bf16.mxu0 0
        %8126 = vmatpush1.bf16.msra.mxu0 0
        %8127 = vmatprep.subr.bf16.mxu0 0
        %8128 = vmatpush1.bf16.msra.mxu0 0
        %8129 = vmatprep.subr.bf16.mxu0 0
        %8130 = vmatpush1.bf16.msra.mxu0 0
        %8131 = vmatprep.subr.bf16.mxu0 0
        %8132 = vmatpush1.bf16.msra.mxu0 0
        %8133 = vmatprep.subr.bf16.mxu0 0
        %8134 = vmatpush1.bf16.msra.mxu0 0
        %8135 = vmatprep.subr.bf16.mxu0 0
        %8136 = vmatpush1.bf16.msra.mxu0 0
        %8137 = vmatprep.subr.bf16.mxu0 0
        %8138 = vmatpush1.bf16.msra.mxu0 0
        %8139 = vmatprep.mubr.bf16.mxu0 0
        %8140 = vmatmul.mubr.bf16.gmra.mrb[0].mxu0 %v8102
        %v8141 = vpop.f32.mrb[0].mxu0
        %v8142 = vadd.f32 0.0, %v8141
        %v8143 = vpop.f32.mrb[0].mxu0
        %v8144 = vpop.f32.mrb[0].mxu0
        %v8145 = vadd.f32 0.0, %v8144
        %v8146 = vpop.f32.mrb[0].mxu0
        %8147 = vmatprep.mubr.bf16.mxu0 0
        %8148 = vmatmul.mubr.bf16.gmra.mrb[0].mxu0 %v8105
        %v8149 = vpop.f32.mrb[0].mxu0
        %v8150 = vadd.f32 0.0, %v8149
        %v8151 = vpop.f32.mrb[0].mxu0
        %v8152 = vpop.f32.mrb[0].mxu0
        %v8153 = vpop.f32.mrb[0].mxu0
        %8154 = vdwg.mxu0
        %v8155 = vmax.f32 %v8086, %v8142
        %v8156 = vmax.f32 %v8087, %v8145
        %v8157 = vmax.f32 %v8088, %v8150
        %v8158 = vpack.c.bf16 %v8156, %v8155
        %v8159 = vpack.c.bf16 %v8157, %v8157
        %v8160 = vld [vmem:[%s13] sm:$0xf]
        %v8161 = vld [vmem:[%s13 + $0x4] sm:$0xf]
        %v8162 = vld [vmem:[%s13 + $0x8] sm:$0xf]
        %v8163 = vld [vmem:[%s13 + $0xc] sm:$0xf]
        %s8164 = scalar_lea.vmem %s13, 16
        %v8165 = vld [vmem:[%s8164] sm:$0xf]
        %v8166 = vld [vmem:[%s8164 + $0x4] sm:$0xf]
        %v8167 = vld [vmem:[%s8164 + $0x8] sm:$0xf]
        %v8168 = vld [vmem:[%s8164 + $0xc] sm:$0xf]
        %v8170 = vshrl.u32 %v8158, 16
        %v8172 = vshll.u32 %v8158, 16
        %v8174 = vrot.slane %v8172, 1
        %v8175 = vor.u32 %v8170, %v8174
        %v8180 = vunpack.c.l.b16 %v8165
        %v8181 = vunpack.c.l.b16 %v8166
        %v8182 = vunpack.c.l.b16 %v8167
        %v8183 = vunpack.c.l.b16 %v8168
        %v8184 = vpack.c.b16 %v8181, %v8180
        %v8185 = vpack.c.b16 %v8183, %v8182
        %v8189 = vsel %vm4295, %v8175, 0
        %8191 = vmatprep.subr.bf16.mxu0 0
        %8192 = vmatpush1.bf16.msra.mxu0 %v8184
        %8193 = vmatprep.subr.bf16.mxu0 0
        %8194 = vmatpush1.bf16.msra.mxu0 %v8185
        %8195 = vmatprep.subr.bf16.mxu0 0
        %8196 = vmatpush1.bf16.msra.mxu0 0
        %8197 = vmatprep.subr.bf16.mxu0 0
        %8198 = vmatpush1.bf16.msra.mxu0 0
        %8199 = vmatprep.subr.bf16.mxu0 0
        %8200 = vmatpush1.bf16.msra.mxu0 0
        %8201 = vmatprep.subr.bf16.mxu0 0
        %8202 = vmatpush1.bf16.msra.mxu0 0
        %8203 = vmatprep.subr.bf16.mxu0 0
        %8204 = vmatpush1.bf16.msra.mxu0 0
        %8205 = vmatprep.subr.bf16.mxu0 0
        %8206 = vmatpush1.bf16.msra.mxu0 0
        %8207 = vmatprep.subr.bf16.mxu0 0
        %8208 = vmatpush1.bf16.msra.mxu0 0
        %8209 = vmatprep.subr.bf16.mxu0 0
        %8210 = vmatpush1.bf16.msra.mxu0 0
        %8211 = vmatprep.subr.bf16.mxu0 0
        %8212 = vmatpush1.bf16.msra.mxu0 0
        %8213 = vmatprep.subr.bf16.mxu0 0
        %8214 = vmatpush1.bf16.msra.mxu0 0
        %8215 = vmatprep.subr.bf16.mxu0 0
        %8216 = vmatpush1.bf16.msra.mxu0 0
        %8217 = vmatprep.subr.bf16.mxu0 0
        %8218 = vmatpush1.bf16.msra.mxu0 0
        %8219 = vmatprep.subr.bf16.mxu0 0
        %8220 = vmatpush1.bf16.msra.mxu0 0
        %8221 = vmatprep.subr.bf16.mxu0 0
        %8222 = vmatpush1.bf16.msra.mxu0 0
        %8223 = vmatprep.mubr.bf16.mxu0 0
        %8224 = vmatmul.mubr.bf16.gmra.mrb[0].mxu0 %v8189
        %v8225 = vpop.f32.mrb[0].mxu0
        %v8226 = vadd.f32 0.0, %v8225
        %v8227 = vpop.f32.mrb[0].mxu0
        %v8228 = vpop.f32.mrb[0].mxu0
        %v8229 = vpop.f32.mrb[0].mxu0
        %8230 = vdwg.mxu0
        %v8235 = vunpack.c.l.b16 %v8160
        %v8236 = vunpack.c.l.b16 %v8161
        %v8237 = vunpack.c.l.b16 %v8162
        %v8238 = vunpack.c.l.b16 %v8163
        %v8239 = vpack.c.b16 %v8236, %v8235
        %v8240 = vpack.c.b16 %v8238, %v8237
        %v8243 = vsel %vm4295, %v8158, 0
        %8245 = vmatprep.subr.bf16.mxu0 0
        %8246 = vmatpush1.bf16.msra.mxu0 %v8239
        %8247 = vmatprep.subr.bf16.mxu0 0
        %8248 = vmatpush1.bf16.msra.mxu0 %v8240
        %8249 = vmatprep.subr.bf16.mxu0 0
        %8250 = vmatpush1.bf16.msra.mxu0 0
        %8251 = vmatprep.subr.bf16.mxu0 0
        %8252 = vmatpush1.bf16.msra.mxu0 0
        %8253 = vmatprep.subr.bf16.mxu0 0
        %8254 = vmatpush1.bf16.msra.mxu0 0
        %8255 = vmatprep.subr.bf16.mxu0 0
        %8256 = vmatpush1.bf16.msra.mxu0 0
        %8257 = vmatprep.subr.bf16.mxu0 0
        %8258 = vmatpush1.bf16.msra.mxu0 0
        %8259 = vmatprep.subr.bf16.mxu0 0
        %8260 = vmatpush1.bf16.msra.mxu0 0
        %8261 = vmatprep.subr.bf16.mxu0 0
        %8262 = vmatpush1.bf16.msra.mxu0 0
        %8263 = vmatprep.subr.bf16.mxu0 0
        %8264 = vmatpush1.bf16.msra.mxu0 0
        %8265 = vmatprep.subr.bf16.mxu0 0
        %8266 = vmatpush1.bf16.msra.mxu0 0
        %8267 = vmatprep.subr.bf16.mxu0 0
        %8268 = vmatpush1.bf16.msra.mxu0 0
        %8269 = vmatprep.subr.bf16.mxu0 0
        %8270 = vmatpush1.bf16.msra.mxu0 0
        %8271 = vmatprep.subr.bf16.mxu0 0
        %8272 = vmatpush1.bf16.msra.mxu0 0
        %8273 = vmatprep.subr.bf16.mxu0 0
        %8274 = vmatpush1.bf16.msra.mxu0 0
        %8275 = vmatprep.subr.bf16.mxu0 0
        %8276 = vmatpush1.bf16.msra.mxu0 0
        %8277 = vmatprep.mubr.bf16.mxu0 0
        %8278 = vmatmul.mubr.bf16.gmra.mrb[0].mxu0 %v8243
        %v8279 = vpop.f32.mrb[0].mxu0
        %v8280 = vadd.f32 %v8226, %v8279
        %v8281 = vpop.f32.mrb[0].mxu0
        %v8282 = vpop.f32.mrb[0].mxu0
        %v8283 = vpop.f32.mrb[0].mxu0
        %8284 = vdwg.mxu0
        %s8285 = scalar_lea.vmem %s13, 32
        %v8286 = vld [vmem:[%s8285] sm:$0xf]
        %v8287 = vld [vmem:[%s8285 + $0x4] sm:$0xf]
        %v8288 = vld [vmem:[%s8285 + $0x8] sm:$0xf]
        %v8289 = vld [vmem:[%s8285 + $0xc] sm:$0xf]
        %v8291 = vrot.slane %v8158, 1
        %v8296 = vunpack.c.l.b16 %v8286
        %v8297 = vunpack.c.l.b16 %v8287
        %v8298 = vunpack.c.l.b16 %v8288
        %v8299 = vunpack.c.l.b16 %v8289
        %v8300 = vpack.c.b16 %v8297, %v8296
        %v8301 = vpack.c.b16 %v8299, %v8298
        %v8305 = vsel %vm4295, %v8291, 0
        %8307 = vmatprep.subr.bf16.mxu0 0
        %8308 = vmatpush1.bf16.msra.mxu0 %v8300
        %8309 = vmatprep.subr.bf16.mxu0 0
        %8310 = vmatpush1.bf16.msra.mxu0 %v8301
        %8311 = vmatprep.subr.bf16.mxu0 0
        %8312 = vmatpush1.bf16.msra.mxu0 0
        %8313 = vmatprep.subr.bf16.mxu0 0
        %8314 = vmatpush1.bf16.msra.mxu0 0
        %8315 = vmatprep.subr.bf16.mxu0 0
        %8316 = vmatpush1.bf16.msra.mxu0 0
        %8317 = vmatprep.subr.bf16.mxu0 0
        %8318 = vmatpush1.bf16.msra.mxu0 0
        %8319 = vmatprep.subr.bf16.mxu0 0
        %8320 = vmatpush1.bf16.msra.mxu0 0
        %8321 = vmatprep.subr.bf16.mxu0 0
        %8322 = vmatpush1.bf16.msra.mxu0 0
        %8323 = vmatprep.subr.bf16.mxu0 0
        %8324 = vmatpush1.bf16.msra.mxu0 0
        %8325 = vmatprep.subr.bf16.mxu0 0
        %8326 = vmatpush1.bf16.msra.mxu0 0
        %8327 = vmatprep.subr.bf16.mxu0 0
        %8328 = vmatpush1.bf16.msra.mxu0 0
        %8329 = vmatprep.subr.bf16.mxu0 0
        %8330 = vmatpush1.bf16.msra.mxu0 0
        %8331 = vmatprep.subr.bf16.mxu0 0
        %8332 = vmatpush1.bf16.msra.mxu0 0
        %8333 = vmatprep.subr.bf16.mxu0 0
        %8334 = vmatpush1.bf16.msra.mxu0 0
        %8335 = vmatprep.subr.bf16.mxu0 0
        %8336 = vmatpush1.bf16.msra.mxu0 0
        %8337 = vmatprep.subr.bf16.mxu0 0
        %8338 = vmatpush1.bf16.msra.mxu0 0
        %8339 = vmatprep.mubr.bf16.mxu0 0
        %8340 = vmatmul.mubr.bf16.gmra.mrb[0].mxu0 %v8305
        %v8341 = vpop.f32.mrb[0].mxu0
        %v8342 = vadd.f32 0.0, %v8341
        %v8343 = vpop.f32.mrb[0].mxu0
        %v8344 = vpop.f32.mrb[0].mxu0
        %v8345 = vpop.f32.mrb[0].mxu0
        %8346 = vdwg.mxu0
        %v8347 = vadd.f32 %v8280, %v8342
        %s8348 = scalar_lea.vmem %s13, 48
        %v8349 = vld [vmem:[%s8348] sm:$0xf]
        %v8350 = vld [vmem:[%s8348 + $0x4] sm:$0xf]
        %v8351 = vld [vmem:[%s8348 + $0x8] sm:$0xf]
        %v8352 = vld [vmem:[%s8348 + $0xc] sm:$0xf]
        %v8353 = vrot.slane %v8158, 2
        %v8358 = vunpack.c.l.b16 %v8349
        %v8359 = vunpack.c.l.b16 %v8350
        %v8360 = vunpack.c.l.b16 %v8351
        %v8361 = vunpack.c.l.b16 %v8352
        %v8362 = vpack.c.b16 %v8359, %v8358
        %v8363 = vpack.c.b16 %v8361, %v8360
        %v8367 = vsel %vm4295, %v8353, 0
        %8369 = vmatprep.subr.bf16.mxu0 0
        %8370 = vmatpush1.bf16.msra.mxu0 %v8362
        %8371 = vmatprep.subr.bf16.mxu0 0
        %8372 = vmatpush1.bf16.msra.mxu0 %v8363
        %8373 = vmatprep.subr.bf16.mxu0 0
        %8374 = vmatpush1.bf16.msra.mxu0 0
        %8375 = vmatprep.subr.bf16.mxu0 0
        %8376 = vmatpush1.bf16.msra.mxu0 0
        %8377 = vmatprep.subr.bf16.mxu0 0
        %8378 = vmatpush1.bf16.msra.mxu0 0
        %8379 = vmatprep.subr.bf16.mxu0 0
        %8380 = vmatpush1.bf16.msra.mxu0 0
        %8381 = vmatprep.subr.bf16.mxu0 0
        %8382 = vmatpush1.bf16.msra.mxu0 0
        %8383 = vmatprep.subr.bf16.mxu0 0
        %8384 = vmatpush1.bf16.msra.mxu0 0
        %8385 = vmatprep.subr.bf16.mxu0 0
        %8386 = vmatpush1.bf16.msra.mxu0 0
        %8387 = vmatprep.subr.bf16.mxu0 0
        %8388 = vmatpush1.bf16.msra.mxu0 0
        %8389 = vmatprep.subr.bf16.mxu0 0
        %8390 = vmatpush1.bf16.msra.mxu0 0
        %8391 = vmatprep.subr.bf16.mxu0 0
        %8392 = vmatpush1.bf16.msra.mxu0 0
        %8393 = vmatprep.subr.bf16.mxu0 0
        %8394 = vmatpush1.bf16.msra.mxu0 0
        %8395 = vmatprep.subr.bf16.mxu0 0
        %8396 = vmatpush1.bf16.msra.mxu0 0
        %8397 = vmatprep.subr.bf16.mxu0 0
        %8398 = vmatpush1.bf16.msra.mxu0 0
        %8399 = vmatprep.subr.bf16.mxu0 0
        %8400 = vmatpush1.bf16.msra.mxu0 0
        %8401 = vmatprep.mubr.bf16.mxu0 0
        %8402 = vmatmul.mubr.bf16.gmra.mrb[0].mxu0 %v8367
        %v8403 = vpop.f32.mrb[0].mxu0
        %v8404 = vadd.f32 0.0, %v8403
        %v8405 = vpop.f32.mrb[0].mxu0
        %v8406 = vpop.f32.mrb[0].mxu0
        %v8407 = vpop.f32.mrb[0].mxu0
        %8408 = vdwg.mxu0
        %v8409 = vadd.f32 %v8347, %v8404
        %s8410 = scalar_lea.vmem %s13, 64
        %v8411 = vld [vmem:[%s8410] sm:$0xf]
        %v8412 = vld [vmem:[%s8410 + $0x4] sm:$0xf]
        %v8413 = vld [vmem:[%s8410 + $0x8] sm:$0xf]
        %v8414 = vld [vmem:[%s8410 + $0xc] sm:$0xf]
        %v8415 = vrot.slane %v8170, 2
        %v8416 = vrot.slane %v8172, 3
        %v8417 = vor.u32 %v8415, %v8416
        %v8422 = vunpack.c.l.b16 %v8411
        %v8423 = vunpack.c.l.b16 %v8412
        %v8424 = vunpack.c.l.b16 %v8413
        %v8425 = vunpack.c.l.b16 %v8414
        %v8426 = vpack.c.b16 %v8423, %v8422
        %v8427 = vpack.c.b16 %v8425, %v8424
        %v8431 = vsel %vm4295, %v8417, 0
        %8433 = vmatprep.subr.bf16.mxu0 0
        %8434 = vmatpush1.bf16.msra.mxu0 %v8426
        %8435 = vmatprep.subr.bf16.mxu0 0
        %8436 = vmatpush1.bf16.msra.mxu0 %v8427
        %8437 = vmatprep.subr.bf16.mxu0 0
        %8438 = vmatpush1.bf16.msra.mxu0 0
        %8439 = vmatprep.subr.bf16.mxu0 0
        %8440 = vmatpush1.bf16.msra.mxu0 0
        %8441 = vmatprep.subr.bf16.mxu0 0
        %8442 = vmatpush1.bf16.msra.mxu0 0
        %8443 = vmatprep.subr.bf16.mxu0 0
        %8444 = vmatpush1.bf16.msra.mxu0 0
        %8445 = vmatprep.subr.bf16.mxu0 0
        %8446 = vmatpush1.bf16.msra.mxu0 0
        %8447 = vmatprep.subr.bf16.mxu0 0
        %8448 = vmatpush1.bf16.msra.mxu0 0
        %8449 = vmatprep.subr.bf16.mxu0 0
        %8450 = vmatpush1.bf16.msra.mxu0 0
        %8451 = vmatprep.subr.bf16.mxu0 0
        %8452 = vmatpush1.bf16.msra.mxu0 0
        %8453 = vmatprep.subr.bf16.mxu0 0
        %8454 = vmatpush1.bf16.msra.mxu0 0
        %8455 = vmatprep.subr.bf16.mxu0 0
        %8456 = vmatpush1.bf16.msra.mxu0 0
        %8457 = vmatprep.subr.bf16.mxu0 0
        %8458 = vmatpush1.bf16.msra.mxu0 0
        %8459 = vmatprep.subr.bf16.mxu0 0
        %8460 = vmatpush1.bf16.msra.mxu0 0
        %8461 = vmatprep.subr.bf16.mxu0 0
        %8462 = vmatpush1.bf16.msra.mxu0 0
        %8463 = vmatprep.subr.bf16.mxu0 0
        %8464 = vmatpush1.bf16.msra.mxu0 0
        %8465 = vmatprep.mubr.bf16.mxu0 0
        %8466 = vmatmul.mubr.bf16.gmra.mrb[0].mxu0 %v8431
        %v8467 = vpop.f32.mrb[0].mxu0
        %v8468 = vadd.f32 0.0, %v8467
        %v8469 = vpop.f32.mrb[0].mxu0
        %v8470 = vpop.f32.mrb[0].mxu0
        %v8471 = vpop.f32.mrb[0].mxu0
        %8472 = vdwg.mxu0
        %v8473 = vadd.f32 %v8409, %v8468
        %s8474 = scalar_lea.vmem %s13, 80
        %v8475 = vld [vmem:[%s8474] sm:$0xf]
        %v8476 = vld [vmem:[%s8474 + $0x4] sm:$0xf]
        %v8477 = vld [vmem:[%s8474 + $0x8] sm:$0xf]
        %v8478 = vld [vmem:[%s8474 + $0xc] sm:$0xf]
        %v8479 = vrot.slane %v8158, 3
        %v8484 = vunpack.c.l.b16 %v8475
        %v8485 = vunpack.c.l.b16 %v8476
        %v8486 = vunpack.c.l.b16 %v8477
        %v8487 = vunpack.c.l.b16 %v8478
        %v8488 = vpack.c.b16 %v8485, %v8484
        %v8489 = vpack.c.b16 %v8487, %v8486
        %v8493 = vsel %vm4295, %v8479, 0
        %8495 = vmatprep.subr.bf16.mxu0 0
        %8496 = vmatpush1.bf16.msra.mxu0 %v8488
        %8497 = vmatprep.subr.bf16.mxu0 0
        %8498 = vmatpush1.bf16.msra.mxu0 %v8489
        %8499 = vmatprep.subr.bf16.mxu0 0
        %8500 = vmatpush1.bf16.msra.mxu0 0
        %8501 = vmatprep.subr.bf16.mxu0 0
        %8502 = vmatpush1.bf16.msra.mxu0 0
        %8503 = vmatprep.subr.bf16.mxu0 0
        %8504 = vmatpush1.bf16.msra.mxu0 0
        %8505 = vmatprep.subr.bf16.mxu0 0
        %8506 = vmatpush1.bf16.msra.mxu0 0
        %8507 = vmatprep.subr.bf16.mxu0 0
        %8508 = vmatpush1.bf16.msra.mxu0 0
        %8509 = vmatprep.subr.bf16.mxu0 0
        %8510 = vmatpush1.bf16.msra.mxu0 0
        %8511 = vmatprep.subr.bf16.mxu0 0
        %8512 = vmatpush1.bf16.msra.mxu0 0
        %8513 = vmatprep.subr.bf16.mxu0 0
        %8514 = vmatpush1.bf16.msra.mxu0 0
        %8515 = vmatprep.subr.bf16.mxu0 0
        %8516 = vmatpush1.bf16.msra.mxu0 0
        %8517 = vmatprep.subr.bf16.mxu0 0
        %8518 = vmatpush1.bf16.msra.mxu0 0
        %8519 = vmatprep.subr.bf16.mxu0 0
        %8520 = vmatpush1.bf16.msra.mxu0 0
        %8521 = vmatprep.subr.bf16.mxu0 0
        %8522 = vmatpush1.bf16.msra.mxu0 0
        %8523 = vmatprep.subr.bf16.mxu0 0
        %8524 = vmatpush1.bf16.msra.mxu0 0
        %8525 = vmatprep.subr.bf16.mxu0 0
        %8526 = vmatpush1.bf16.msra.mxu0 0
        %8527 = vmatprep.mubr.bf16.mxu0 0
        %8528 = vmatmul.mubr.bf16.gmra.mrb[0].mxu0 %v8493
        %v8529 = vpop.f32.mrb[0].mxu0
        %v8530 = vadd.f32 0.0, %v8529
        %v8531 = vpop.f32.mrb[0].mxu0
        %v8532 = vpop.f32.mrb[0].mxu0
        %v8533 = vpop.f32.mrb[0].mxu0
        %8534 = vdwg.mxu0
        %v8535 = vadd.f32 %v8473, %v8530
        %s8536 = scalar_lea.vmem %s13, 96
        %v8537 = vld [vmem:[%s8536] sm:$0xf]
        %v8538 = vld [vmem:[%s8536 + $0x4] sm:$0xf]
        %v8539 = vld [vmem:[%s8536 + $0x8] sm:$0xf]
        %v8540 = vld [vmem:[%s8536 + $0xc] sm:$0xf]
        %v8541 = vrot.slane %v8158, 4
        %v8546 = vunpack.c.l.b16 %v8537
        %v8547 = vunpack.c.l.b16 %v8538
        %v8548 = vunpack.c.l.b16 %v8539
        %v8549 = vunpack.c.l.b16 %v8540
        %v8550 = vpack.c.b16 %v8547, %v8546
        %v8551 = vpack.c.b16 %v8549, %v8548
        %v8555 = vsel %vm4295, %v8541, 0
        %8557 = vmatprep.subr.bf16.mxu0 0
        %8558 = vmatpush1.bf16.msra.mxu0 %v8550
        %8559 = vmatprep.subr.bf16.mxu0 0
        %8560 = vmatpush1.bf16.msra.mxu0 %v8551
        %8561 = vmatprep.subr.bf16.mxu0 0
        %8562 = vmatpush1.bf16.msra.mxu0 0
        %8563 = vmatprep.subr.bf16.mxu0 0
        %8564 = vmatpush1.bf16.msra.mxu0 0
        %8565 = vmatprep.subr.bf16.mxu0 0
        %8566 = vmatpush1.bf16.msra.mxu0 0
        %8567 = vmatprep.subr.bf16.mxu0 0
        %8568 = vmatpush1.bf16.msra.mxu0 0
        %8569 = vmatprep.subr.bf16.mxu0 0
        %8570 = vmatpush1.bf16.msra.mxu0 0
        %8571 = vmatprep.subr.bf16.mxu0 0
        %8572 = vmatpush1.bf16.msra.mxu0 0
        %8573 = vmatprep.subr.bf16.mxu0 0
        %8574 = vmatpush1.bf16.msra.mxu0 0
        %8575 = vmatprep.subr.bf16.mxu0 0
        %8576 = vmatpush1.bf16.msra.mxu0 0
        %8577 = vmatprep.subr.bf16.mxu0 0
        %8578 = vmatpush1.bf16.msra.mxu0 0
        %8579 = vmatprep.subr.bf16.mxu0 0
        %8580 = vmatpush1.bf16.msra.mxu0 0
        %8581 = vmatprep.subr.bf16.mxu0 0
        %8582 = vmatpush1.bf16.msra.mxu0 0
        %8583 = vmatprep.subr.bf16.mxu0 0
        %8584 = vmatpush1.bf16.msra.mxu0 0
        %8585 = vmatprep.subr.bf16.mxu0 0
        %8586 = vmatpush1.bf16.msra.mxu0 0
        %8587 = vmatprep.subr.bf16.mxu0 0
        %8588 = vmatpush1.bf16.msra.mxu0 0
        %8589 = vmatprep.mubr.bf16.mxu0 0
        %8590 = vmatmul.mubr.bf16.gmra.mrb[0].mxu0 %v8555
        %v8591 = vpop.f32.mrb[0].mxu0
        %v8592 = vadd.f32 0.0, %v8591
        %v8593 = vpop.f32.mrb[0].mxu0
        %v8594 = vpop.f32.mrb[0].mxu0
        %v8595 = vpop.f32.mrb[0].mxu0
        %8596 = vdwg.mxu0
        %v8597 = vadd.f32 %v8535, %v8592
        %s8598 = scalar_lea.vmem %s13, 112
        %v8599 = vld [vmem:[%s8598] sm:$0xf]
        %v8600 = vld [vmem:[%s8598 + $0x4] sm:$0xf]
        %v8601 = vld [vmem:[%s8598 + $0x8] sm:$0xf]
        %v8602 = vld [vmem:[%s8598 + $0xc] sm:$0xf]
        %vm8603 = vsmask.f32 3328
        %v8604 = vrot.slane %v8170, 4
        %v8605 = vrot.slane %v8172, 5
        %v8606 = vor.u32 %v8604, %v8605
        %v8608 = vshll.u32 %v8159, 16
        %v8610 = vrot.slane %v8608, 5
        %v8611 = vsel %vm8603, %v8606, %v8610
        %v8616 = vunpack.c.l.b16 %v8599
        %v8617 = vunpack.c.l.b16 %v8600
        %v8618 = vunpack.c.l.b16 %v8601
        %v8619 = vunpack.c.l.b16 %v8602
        %v8620 = vpack.c.b16 %v8617, %v8616
        %v8621 = vpack.c.b16 %v8619, %v8618
        %v8625 = vsel %vm4295, %v8611, 0
        %8627 = vmatprep.subr.bf16.mxu0 0
        %8628 = vmatpush1.bf16.msra.mxu0 %v8620
        %8629 = vmatprep.subr.bf16.mxu0 0
        %8630 = vmatpush1.bf16.msra.mxu0 %v8621
        %8631 = vmatprep.subr.bf16.mxu0 0
        %8632 = vmatpush1.bf16.msra.mxu0 0
        %8633 = vmatprep.subr.bf16.mxu0 0
        %8634 = vmatpush1.bf16.msra.mxu0 0
        %8635 = vmatprep.subr.bf16.mxu0 0
        %8636 = vmatpush1.bf16.msra.mxu0 0
        %8637 = vmatprep.subr.bf16.mxu0 0
        %8638 = vmatpush1.bf16.msra.mxu0 0
        %8639 = vmatprep.subr.bf16.mxu0 0
        %8640 = vmatpush1.bf16.msra.mxu0 0
        %8641 = vmatprep.subr.bf16.mxu0 0
        %8642 = vmatpush1.bf16.msra.mxu0 0
        %8643 = vmatprep.subr.bf16.mxu0 0
        %8644 = vmatpush1.bf16.msra.mxu0 0
        %8645 = vmatprep.subr.bf16.mxu0 0
        %8646 = vmatpush1.bf16.msra.mxu0 0
        %8647 = vmatprep.subr.bf16.mxu0 0
        %8648 = vmatpush1.bf16.msra.mxu0 0
        %8649 = vmatprep.subr.bf16.mxu0 0
        %8650 = vmatpush1.bf16.msra.mxu0 0
        %8651 = vmatprep.subr.bf16.mxu0 0
        %8652 = vmatpush1.bf16.msra.mxu0 0
        %8653 = vmatprep.subr.bf16.mxu0 0
        %8654 = vmatpush1.bf16.msra.mxu0 0
        %8655 = vmatprep.subr.bf16.mxu0 0
        %8656 = vmatpush1.bf16.msra.mxu0 0
        %8657 = vmatprep.subr.bf16.mxu0 0
        %8658 = vmatpush1.bf16.msra.mxu0 0
        %8659 = vmatprep.mubr.bf16.mxu0 0
        %8660 = vmatmul.mubr.bf16.gmra.mrb[0].mxu0 %v8625
        %v8661 = vpop.f32.mrb[0].mxu0
        %v8662 = vadd.f32 0.0, %v8661
        %v8663 = vpop.f32.mrb[0].mxu0
        %v8664 = vpop.f32.mrb[0].mxu0
        %v8665 = vpop.f32.mrb[0].mxu0
        %8666 = vdwg.mxu0
        %v8667 = vadd.f32 %v8597, %v8662
        %s8668 = scalar_lea.vmem %s13, 128
        %v8669 = vld [vmem:[%s8668] sm:$0xf]
        %v8670 = vld [vmem:[%s8668 + $0x4] sm:$0xf]
        %v8671 = vld [vmem:[%s8668 + $0x8] sm:$0xf]
        %v8672 = vld [vmem:[%s8668 + $0xc] sm:$0xf]
        %v8674 = vrot.slane %v8158, 5
        %v8675 = vrot.slane %v8159, 5
        %v8676 = vsel %vm5928, %v8674, %v8675
        %v8681 = vunpack.c.l.b16 %v8669
        %v8682 = vunpack.c.l.b16 %v8670
        %v8683 = vunpack.c.l.b16 %v8671
        %v8684 = vunpack.c.l.b16 %v8672
        %v8685 = vpack.c.b16 %v8682, %v8681
        %v8686 = vpack.c.b16 %v8684, %v8683
        %v8690 = vsel %vm4295, %v8676, 0
        %8692 = vmatprep.subr.bf16.mxu0 0
        %8693 = vmatpush1.bf16.msra.mxu0 %v8685
        %8694 = vmatprep.subr.bf16.mxu0 0
        %8695 = vmatpush1.bf16.msra.mxu0 %v8686
        %8696 = vmatprep.subr.bf16.mxu0 0
        %8697 = vmatpush1.bf16.msra.mxu0 0
        %8698 = vmatprep.subr.bf16.mxu0 0
        %8699 = vmatpush1.bf16.msra.mxu0 0
        %8700 = vmatprep.subr.bf16.mxu0 0
        %8701 = vmatpush1.bf16.msra.mxu0 0
        %8702 = vmatprep.subr.bf16.mxu0 0
        %8703 = vmatpush1.bf16.msra.mxu0 0
        %8704 = vmatprep.subr.bf16.mxu0 0
        %8705 = vmatpush1.bf16.msra.mxu0 0
        %8706 = vmatprep.subr.bf16.mxu0 0
        %8707 = vmatpush1.bf16.msra.mxu0 0
        %8708 = vmatprep.subr.bf16.mxu0 0
        %8709 = vmatpush1.bf16.msra.mxu0 0
        %8710 = vmatprep.subr.bf16.mxu0 0
        %8711 = vmatpush1.bf16.msra.mxu0 0
        %8712 = vmatprep.subr.bf16.mxu0 0
        %8713 = vmatpush1.bf16.msra.mxu0 0
        %8714 = vmatprep.subr.bf16.mxu0 0
        %8715 = vmatpush1.bf16.msra.mxu0 0
        %8716 = vmatprep.subr.bf16.mxu0 0
        %8717 = vmatpush1.bf16.msra.mxu0 0
        %8718 = vmatprep.subr.bf16.mxu0 0
        %8719 = vmatpush1.bf16.msra.mxu0 0
        %8720 = vmatprep.subr.bf16.mxu0 0
        %8721 = vmatpush1.bf16.msra.mxu0 0
        %8722 = vmatprep.subr.bf16.mxu0 0
        %8723 = vmatpush1.bf16.msra.mxu0 0
        %8724 = vmatprep.mubr.bf16.mxu0 0
        %8725 = vmatmul.mubr.bf16.gmra.mrb[0].mxu0 %v8690
        %v8726 = vpop.f32.mrb[0].mxu0
        %v8727 = vadd.f32 0.0, %v8726
        %v8728 = vpop.f32.mrb[0].mxu0
        %v8729 = vpop.f32.mrb[0].mxu0
        %v8730 = vpop.f32.mrb[0].mxu0
        %8731 = vdwg.mxu0
        %v8732 = vadd.f32 %v8667, %v8727
        %v8733 = vld [vmem:[%s14] sm:$0x1]
        %v8735 = vlaneseq
        %v8736 = vshrl.u32 %v8735, 7
        %v8737 = vsub.s32 0, %v8736
        %v8738 = vrot.slane %v8733, %v8737
        %v8740 = vmul.f32 %v8732, %v8738
        %v8741 = vld [vmem:[%s15] sm:$0x1]
        %v8743 = vlaneseq
        %v8744 = vshrl.u32 %v8743, 7
        %v8745 = vsub.s32 0, %v8744
        %v8746 = vrot.slane %v8741, %v8745
        %v8748 = vadd.f32 %v8740, %v8746
        %v8749 = vmax.f32 %v8748, 0.0
        %v8751 = vrot.slane %v8749, 1
        %v8753 = vmax.f32 %v8749, %v8751
        %v8755 = vrot.slane %v8753, 4
        %v8757 = vmax.f32 %v8753, %v8755
        %v8758 = vpack.c.bf16 %v8757, %v8757
        %v8759 = vld [vmem:[%s16] sm:$0xf]
        %v8760 = vld [vmem:[%s16 + $0x4] sm:$0xf]
        %v8761 = vld [vmem:[%s16 + $0x8] sm:$0xf]
        %v8762 = vld [vmem:[%s16 + $0xc] sm:$0xf]
        %v8763 = vld [vmem:[%s17] sm:$0x1]
        %v8768 = vunpack.c.l.b16 %v8759
        %v8769 = vunpack.c.l.b16 %v8760
        %v8770 = vunpack.c.l.b16 %v8761
        %v8771 = vunpack.c.l.b16 %v8762
        %v8772 = vpack.c.b16 %v8769, %v8768
        %v8773 = vpack.c.b16 %v8771, %v8770
        %v8777 = vsel %vm4295, %v8758, 0
        %8779 = vmatprep.subr.bf16.mxu0 0
        %8780 = vmatpush1.bf16.msra.mxu0 %v8772
        %8781 = vmatprep.subr.bf16.mxu0 0
        %8782 = vmatpush1.bf16.msra.mxu0 %v8773
        %8783 = vmatprep.subr.bf16.mxu0 0
        %8784 = vmatpush1.bf16.msra.mxu0 0
        %8785 = vmatprep.subr.bf16.mxu0 0
        %8786 = vmatpush1.bf16.msra.mxu0 0
        %8787 = vmatprep.subr.bf16.mxu0 0
        %8788 = vmatpush1.bf16.msra.mxu0 0
        %8789 = vmatprep.subr.bf16.mxu0 0
        %8790 = vmatpush1.bf16.msra.mxu0 0
        %8791 = vmatprep.subr.bf16.mxu0 0
        %8792 = vmatpush1.bf16.msra.mxu0 0
        %8793 = vmatprep.subr.bf16.mxu0 0
        %8794 = vmatpush1.bf16.msra.mxu0 0
        %8795 = vmatprep.subr.bf16.mxu0 0
        %8796 = vmatpush1.bf16.msra.mxu0 0
        %8797 = vmatprep.subr.bf16.mxu0 0
        %8798 = vmatpush1.bf16.msra.mxu0 0
        %8799 = vmatprep.subr.bf16.mxu0 0
        %8800 = vmatpush1.bf16.msra.mxu0 0
        %8801 = vmatprep.subr.bf16.mxu0 0
        %8802 = vmatpush1.bf16.msra.mxu0 0
        %8803 = vmatprep.subr.bf16.mxu0 0
        %8804 = vmatpush1.bf16.msra.mxu0 0
        %8805 = vmatprep.subr.bf16.mxu0 0
        %8806 = vmatpush1.bf16.msra.mxu0 0
        %8807 = vmatprep.subr.bf16.mxu0 0
        %8808 = vmatpush1.bf16.msra.mxu0 0
        %8809 = vmatprep.subr.bf16.mxu0 0
        %8810 = vmatpush1.bf16.msra.mxu0 0
        %8811 = vmatprep.mubr.bf16.mxu0 0
        %8812 = vmatmul.mubr.bf16.gmra.mrb[0].mxu0 %v8777
        %v8813 = vpop.f32.mrb[0].mxu0
        %v8814 = vadd.f32 %v8763, %v8813
        %v8815 = vpop.f32.mrb[0].mxu0
        %v8816 = vpop.f32.mrb[0].mxu0
        %v8817 = vpop.f32.mrb[0].mxu0
        %8818 = vdwg.mxu0
        %vm8819 = vcmask 32768
        %8820 = vst.msk [vmem:[%s567] sm:$0x1] %vm8819, %v8814
        %s8821 = sand.u32 %s423, 1
        %s8822 = scalar_lea.sflag [#allocation3], %s8821
        %s8823 = sand.u32 %s423, 1
        %s8824 = scalar_lea.vmem [#allocation2], %s8823
        // Predicated region
        $region93: #{pretrain_forward.1} parent=91 // pred_check
          %p8825 = pneg %p433
        $region94: #{pretrain_forward.1} parent=91 // pred_check_branch
          %8827 = sbr.rel (%p8825) target = $region96
        $region95: #{pretrain_forward.1} parent=91 // pred_region
          %s8829 = ssub.s32 16, 16
          %8830 = vsyncadd %s8822, %s8829
          %s8831 = smul.addr %s32, 16
          %s8832 = scalar_lea.hbm %s18, %s8831
          %s8834 = sshll.u32 %s8824, 4
          %s8835 = int_to_ptr.vmem [resolvable:$true] %s8834
          %8837 = dma.vmem_to_hbm [thread:$0]  %s8835, 16, %s8832, %s8822
        $region96: #{pretrain_forward.1} parent=91 // pred_fallthru
          _
      $region92: #{pretrain_forward.1} parent=5 // pred_fallthru
        _
      %p8838 = scmp.le.s32.totalorder 2, %s27
      // Predicated region
      $region97: #{pretrain_forward.1} parent=5 // pred_check
        %p8839 = pneg %p8838
      $region98: #{pretrain_forward.1} parent=5 // pred_check_branch
        %8841 = sbr.rel (%p8839) target = $region100
      $region99: #{pretrain_forward.1} parent=5 // pred_region
        %s8842 = ssub.s32 %s27, 2
        // Predicated region
        $region101: #{pretrain_forward.1} parent=99 // pred_check
          %p8843 = pneg %p439
        $region102: #{pretrain_forward.1} parent=99 // pred_check_branch
          %8845 = sbr.rel (%p8843) target = $region104
        $region103: #{pretrain_forward.1} parent=99 // pred_region
          %s8846 = sand.u32 %s424, 1
          %s8847 = scalar_lea.sflag [#allocation3], %s8846
          %s8848 = sand.u32 %s424, 1
          %s8849 = scalar_lea.vmem [#allocation2], %s8848
          %8850 = dma.done %s8847, 16
        $region104: #{pretrain_forward.1} parent=99 // pred_fallthru
          _
      $region100: #{pretrain_forward.1} parent=5 // pred_fallthru
        _
    $region6: #{pretrain_forward.1} parent=1 // loop_footer
      %s31 = sadd.s32 1, %s27
    $region7: #{pretrain_forward.1} parent=1 // loop_footer_branch
      %26 = sbr.rel target = $region3
    $region8: #{pretrain_forward.1} parent=1 // loop_exit
      _
    %8851 = vsyncpa [#allocation3], 1
    %s8852 = scalar_lea.sflag [#allocation3], 1
    %8853 = vsyncpa %s8852, 1

</llo_original>
